<compile_context>
chip_gen: v6e
topology: v6e:2x2x1
jax: 0.10.0
libtpu: 0.0.40
codegen_flags: <defaults>
</compile_context>

<pallas_src>
import functools

import jax
import jax.numpy as jnp
from jax.experimental import pallas as pl
from jax.experimental.pallas import tpu as pltpu

_HIGHEST = jax.lax.Precision.HIGHEST


# ---------------------------------------------------------------------------
# small helpers
# ---------------------------------------------------------------------------
def _round_up(n, m):
    return ((n + m - 1) // m) * m


def _head_widths(ch, nc, reg_max, nk):
    c2 = max(16, ch[0] // 4, reg_max * 4)
    c3 = max(ch[0], min(nc, 100))
    c4 = max(ch[0] // 4, nk)
    return c2, c3, c4


def _pick_rows(H, W, bs, cap_m=1024):
    """Row-tile height for the fused conv kernel.

    Must divide H and keep the (th*W)-wide output blocks lane aligned
    ((th*W) % 128 == 0 or th == H).  Prefers >=4 grid steps (pipelining and
    both v7x TensorCores at bs=1) and a bounded matmul tile.
    """
    cands = [t for t in range(1, H + 1)
             if H % t == 0 and ((t * W) % 128 == 0 or t == H)]
    good = [t for t in cands if t * W <= cap_m and bs * (H // t) >= 4]
    if good:
        return max(good)
    fit = [t for t in cands if t * W <= cap_m]
    return max(fit) if fit else min(cands)


def _pick_anchor_tile(Apad, bs, cap=1024):
    """Largest 128-multiple divisor of Apad that still gives >=4 grid steps."""
    best = 128
    t = 128
    while t <= min(Apad, cap):
        if Apad % t == 0 and bs * (Apad // t) >= 4:
            best = t
        t += 128
    return best


# ---------------------------------------------------------------------------
# Pallas kernel: one detection level (fused cv2|cv3|cv4 branch stack)
# ---------------------------------------------------------------------------
def _level_conv_kernel(H, W, We, th, no,
                       x_ref, w1_ref, s1_ref, b1_ref, w2_ref, s2_ref, b2_ref,
                       w3_ref, b3_ref, cat_ref, xlvl_ref):
    """conv3x3(BN,SiLU) -> conv3x3(BN,SiLU) -> conv1x1 on one row tile.

    x_ref holds the whole zero-padded level input (VMEM resident across the
    row grid axis); the 3x3 taps are in-VMEM shifted slices, so no im2col
    slab ever hits HBM.
    """
    C = x_ref.shape[-1]
    Nf = w1_ref.shape[-1]
    r0 = pl.program_id(1) * th

    # ---- stage 1: 3x3 conv over (th+2) halo rows x We halo cols ------------
    xin = x_ref[pl.ds(r0, th + 4), :, :]                   # (th+4, We+2, C) bf16
    acc1 = None
    for dy in range(3):
        for dx in range(3):
            tap = xin[dy:dy + th + 2, dx:dx + We, :].reshape((th + 2) * We, C)
            part = jnp.dot(tap, w1_ref[3 * dy + dx],
                           preferred_element_type=jnp.float32)
            acc1 = part if acc1 is None else acc1 + part
    h1 = acc1 * s1_ref[...] + b1_ref[...]
    h1 = (h1 * jax.nn.sigmoid(h1)).reshape(th + 2, We, Nf)  # SiLU, f32
    # Rows / cols outside the valid HxW image are forced to exact zero: this
    # IS the zero padding the second conv expects.
    ri = jax.lax.broadcasted_iota(jnp.int32, (th + 2, We, Nf), 0) + r0
    ci = jax.lax.broadcasted_iota(jnp.int32, (th + 2, We, Nf), 1)
    h1 = jnp.where((ri >= 1) & (ri <= H) & (ci >= 1) & (ci <= W), h1, 0.0)

    # ---- stage 2: 3x3 conv on the VMEM-resident h1 tile --------------------
    acc2 = None
    for dy in range(3):
        for dx in range(3):
            tap = h1[dy:dy + th, dx:dx + W, :].reshape(th * W, Nf)
            part = jnp.dot(tap.astype(x_ref.dtype), w2_ref[3 * dy + dx],
                           preferred_element_type=jnp.float32)
            acc2 = part if acc2 is None else acc2 + part
    h2 = acc2 * s2_ref[...] + b2_ref[...]
    h2 = (h2 * jax.nn.sigmoid(h2)).astype(x_ref.dtype)      # bf16, (th*W, Nf)

    # ---- stage 3: fused 1x1 conv, channel-major straight off the MXU -------
    y = jax.lax.dot_general(w3_ref[...], h2, (((0,), (1,)), ((), ())),
                            preferred_element_type=jnp.float32)
    y = y + b3_ref[...]                                     # (Cpad, th*W)
    cat_ref[...] = y.astype(cat_ref.dtype)                  # bf16 decode slab
    xlvl_ref[...] = y[:no, :]                               # f32 raw Detect map


def _level_conv_pallas(xp2, p, *, no, H, W):
    """xp2: (bs, H+4, We+2, C) bf16 zero-padded input.

    Returns  cat  (bs, Cpad, H*W) bf16 (channel-major, feeds decode)
             xlvl (bs, no,  H*W) f32  (raw per-level Detect map).
    """
    bs, Hp4, Wp, C = xp2.shape
    We = Wp - 2
    Nf = p["w1"].shape[-1]
    Cpad = p["w3"].shape[-1]
    th = _pick_rows(H, W, bs)

    w1 = p["w1"].reshape(9, C, Nf).astype(xp2.dtype)
    w2 = p["w2"].reshape(9, Nf, Nf).astype(xp2.dtype)
    w3 = p["w3"].astype(xp2.dtype)
    s1 = p["s1"].reshape(1, Nf).astype(jnp.float32)
    b1 = p["b1"].reshape(1, Nf).astype(jnp.float32)
    s2 = p["s2"].reshape(1, Nf).astype(jnp.float32)
    b2 = p["b2"].reshape(1, Nf).astype(jnp.float32)
    b3 = p["b3"].reshape(Cpad, 1).astype(jnp.float32)

    # Grid-invariant operands: fetched once, keep a single VMEM copy.
    def _const_spec(shape):
        return pl.BlockSpec(shape, lambda *_: (0,) * len(shape),
                            pipeline_mode=pl.Buffered(1))

    # Explicit VMEM budget: resident input (x2) + weights + pipelined outputs
    # + in-kernel temporaries.  Only ever raises the default scoped limit and
    # stays below v7x's 64 MiB physical VMEM.
    est = (2 * Hp4 * Wp * C * 2
           + (9 * C * Nf + 9 * Nf * Nf + Nf * Cpad) * 2 + (4 * Nf + Cpad) * 4
           + 2 * (Cpad * th * W * 2 + no * th * W * 4)
           + (th + 4) * Wp * C * 2 + (th + 2) * We * Nf * 6
           + th * W * Nf * 8 + Cpad * th * W * 4)
    vmem_limit = int(min(56 * 2 ** 20, max(32 * 2 ** 20, 2 * est)))

    return pl.pallas_call(
        functools.partial(_level_conv_kernel, H, W, We, th, no),
        out_shape=(jax.ShapeDtypeStruct((bs, Cpad, H * W), jnp.bfloat16),
                   jax.ShapeDtypeStruct((bs, no, H * W), jnp.float32)),
        grid=(bs, H // th),
        in_specs=[
            pl.BlockSpec((pl.Squeezed(), Hp4, Wp, C), lambda b, r: (b, 0, 0, 0)),
            _const_spec((9, C, Nf)), _const_spec((1, Nf)), _const_spec((1, Nf)),
            _const_spec((9, Nf, Nf)), _const_spec((1, Nf)), _const_spec((1, Nf)),
            _const_spec((Nf, Cpad)), _const_spec((Cpad, 1)),
        ],
        out_specs=(pl.BlockSpec((pl.Squeezed(), Cpad, th * W), lambda b, r: (b, 0, r)),
                   pl.BlockSpec((pl.Squeezed(), no, th * W), lambda b, r: (b, 0, r))),
        compiler_params=pltpu.CompilerParams(
            dimension_semantics=("parallel", "parallel"),
            vmem_limit_bytes=vmem_limit),
    )(xp2, w1, s1, b1, w2, s2, b2, w3, b3)


# ---------------------------------------------------------------------------
# Pallas kernel: decode (DFL + dist2bbox + cls sigmoid + keypoint decode)
# ---------------------------------------------------------------------------
def _decode_kernel(reg_max, nc, kpt_shape, x_ref, anc_ref, str_ref, code_ref, o_ref):
    Kp, ndim = kpt_shape
    nk = Kp * ndim
    x = x_ref[...].astype(jnp.float32)              # (Cpad, tA)
    tA = x.shape[-1]
    strd = str_ref[...]                             # (1, tA)
    ax = anc_ref[0:1, :]
    ay = anc_ref[1:2, :]

    # --- DFL: per-side softmax expectation ---
    proj = jax.lax.broadcasted_iota(jnp.int32, (reg_max, tA), 0).astype(jnp.float32)
    dist = []
    for s in range(4):
        logits = x[s * reg_max:(s + 1) * reg_max, :]
        m = jnp.max(logits, axis=0, keepdims=True)
        e = jnp.exp(logits - m)
        # NOTE: pl.reciprocal(approx=True) would move this divide to the EUP,
        # but its reduced precision can exceed the 1e-2 check on near-cancelled
        # box centres, so the exact divide is kept.
        dist.append(jnp.sum(e * proj, axis=0, keepdims=True)
                    / jnp.sum(e, axis=0, keepdims=True))
    lt_x, lt_y, rb_x, rb_y = dist
    x1 = ax - lt_x
    y1 = ay - lt_y
    x2 = ax + rb_x
    y2 = ay + rb_y
    # dist2bbox (xywh) * stride -- stored with slice stores (no sublane concat).
    o_ref[0:1, :] = (x1 + x2) * 0.5 * strd
    o_ref[1:2, :] = (y1 + y2) * 0.5 * strd
    o_ref[2:3, :] = (x2 - x1) * strd
    o_ref[3:4, :] = (y2 - y1) * strd
    # --- class scores ---
    o_ref[4:4 + nc, :] = jax.nn.sigmoid(x[4 * reg_max:4 * reg_max + nc, :])
    # --- keypoints: interleaved x/y/vis rows handled with a row-code mask ---
    kpt = x[4 * reg_max + nc:4 * reg_max + nc + nk, :]
    code = code_ref[...]                            # (nk, 1), row % ndim
    add = jnp.where(code < 0.5, ax - 0.5, ay - 0.5)
    pk = (kpt * 2.0 + add) * strd
    if ndim == 3:
        pk = jnp.where(code > ndim - 1.5, jax.nn.sigmoid(kpt), pk)
    o_ref[4 + nc:4 + nc + nk, :] = pk


def _decode_pallas(cat, anchors, strides, reg_max, nc, kpt_shape):
    """cat: (bs, Cpad, A) bf16 channel-major [box, cls, kpt, pad] -> (bs, 4+nc+nk, A) f32."""
    bs, Cpad, A = cat.shape
    Kp, ndim = kpt_shape
    nk = Kp * ndim
    n_out = 4 + nc + nk
    Apad = _round_up(A, 128)
    if Apad != A:
        cat = jnp.pad(cat, ((0, 0), (0, 0), (0, Apad - A)))
        anchors = jnp.pad(anchors, ((0, 0), (0, Apad - A)))
        strides = jnp.pad(strides, ((0, 0), (0, Apad - A)), constant_values=1.0)
    tA = _pick_anchor_tile(Apad, bs)
    row_code = (jnp.arange(nk, dtype=jnp.float32) % ndim).reshape(nk, 1)
    y = pl.pallas_call(
        functools.partial(_decode_kernel, reg_max, nc, kpt_shape),
        out_shape=jax.ShapeDtypeStruct((bs, n_out, Apad), jnp.float32),
        grid=(bs, Apad // tA),
        in_specs=[
            pl.BlockSpec((pl.Squeezed(), Cpad, tA), lambda b, a: (b, 0, a)),
            pl.BlockSpec((2, tA), lambda b, a: (0, a)),
            pl.BlockSpec((1, tA), lambda b, a: (0, a)),
            pl.BlockSpec((nk, 1), lambda b, a: (0, 0), pipeline_mode=pl.Buffered(1)),
        ],
        out_specs=pl.BlockSpec((pl.Squeezed(), n_out, tA), lambda b, a: (b, 0, a)),
        compiler_params=pltpu.CompilerParams(
            dimension_semantics=("parallel", "parallel")),
    )(cat, anchors, strides, row_code)
    return y[:, :, :A] if Apad != A else y


# ---------------------------------------------------------------------------
# Pure-JAX references (same fused math / rounding; plus an unfused f32 model)
# ---------------------------------------------------------------------------
def _level_conv_ref(xp2, p, *, no, H, W):
    """Pure-JAX mirror of the Pallas level kernel (same fused math & rounding)."""
    bs = xp2.shape[0]
    dt = xp2.dtype

    def conv3(h_pad, w, s, b):   # h_pad: (bs, H+2, W+2, Cin), zero padded
        taps = [h_pad[:, dy:dy + H, dx:dx + W, :]
                for dy in range(3) for dx in range(3)]
        cols = jnp.stack(taps, axis=3).reshape(bs * H * W, -1)
        y = jnp.dot(cols, w.astype(dt), preferred_element_type=jnp.float32,
                    precision=_HIGHEST)
        y = y * s[None, :] + b[None, :]
        y = y * jax.nn.sigmoid(y)
        return y.astype(dt).reshape(bs, H, W, -1)

    xp1 = xp2[:, 1:H + 3, 1:W + 3, :]
    h1 = conv3(xp1, p["w1"], p["s1"], p["b1"])
    h1p = jnp.pad(h1, ((0, 0), (1, 1), (1, 1), (0, 0)))
    h2 = conv3(h1p, p["w2"], p["s2"], p["b2"])
    y3 = jnp.dot(h2.reshape(bs * H * W, -1), p["w3"].astype(dt),
                 preferred_element_type=jnp.float32,
                 precision=_HIGHEST) + p["b3"][None, :]
    y3 = y3.reshape(bs, H * W, -1)
    cat = jnp.transpose(y3, (0, 2, 1)).astype(dt)
    xlvl = jnp.transpose(y3[..., :no], (0, 2, 1)).astype(jnp.float32)
    return cat, xlvl


def _decode_ref(cat, anchors, strides, reg_max, nc, kpt_shape):
    cat = cat.astype(jnp.float32)
    bs, _, A = cat.shape
    Kp, ndim = kpt_shape
    nk = Kp * ndim
    box = cat[:, :4 * reg_max, :].reshape(bs, 4, reg_max, A)
    p = jax.nn.softmax(box, axis=2)
    proj = jnp.arange(reg_max, dtype=jnp.float32)[None, None, :, None]
    dist = jnp.sum(p * proj, axis=2)                       # (bs, 4, A)
    anc = anchors[None]                                    # (1, 2, A)
    lt, rb = dist[:, :2, :], dist[:, 2:, :]
    x1y1 = anc - lt
    x2y2 = anc + rb
    dbox = jnp.concatenate([(x1y1 + x2y2) * 0.5, x2y2 - x1y1], axis=1) * strides[None]
    cls = jax.nn.sigmoid(cat[:, 4 * reg_max:4 * reg_max + nc, :])
    kpt = cat[:, 4 * reg_max + nc:4 * reg_max + nc + nk, :].reshape(bs, Kp, ndim, A)
    kx = (kpt[:, :, 0, :] * 2.0 + (anchors[0] - 0.5)) * strides
    ky = (kpt[:, :, 1, :] * 2.0 + (anchors[1] - 0.5)) * strides
    parts = [kx[:, :, None, :], ky[:, :, None, :]]
    if ndim == 3:
        parts.append(jax.nn.sigmoid(kpt[:, :, 2, :])[:, :, None, :])
    pk = jnp.concatenate(parts, axis=2).reshape(bs, nk, A)
    return jnp.concatenate([dbox, cls, pk], axis=1)


def _im2col_3x3(x):
    """(bs, H, W, C) -> (bs, H*W, 9*C), zero padding 1, stride 1."""
    bs, H, W, C = x.shape
    xp = jnp.pad(x, ((0, 0), (1, 1), (1, 1), (0, 0)))
    taps = [xp[:, dy:dy + H, dx:dx + W, :] for dy in range(3) for dx in range(3)]
    return jnp.stack(taps, axis=3).reshape(bs, H * W, 9 * C)


# ---------------------------------------------------------------------------
# JAX glue shared by the Pallas and reference paths
# ---------------------------------------------------------------------------
def _make_anchors(feat_hw, level_strides, offset=0.5):
    pts, strs = [], []
    for (H, W), s in zip(feat_hw, level_strides):
        sx = jnp.arange(W, dtype=jnp.float32) + offset
        sy = jnp.arange(H, dtype=jnp.float32) + offset
        gy, gx = jnp.meshgrid(sy, sx, indexing="ij")
        pts.append(jnp.stack((gx, gy), axis=-1).reshape(-1, 2))
        strs.append(jnp.full((H * W, 1), s, dtype=jnp.float32))
    # Detect.forward transposes: anchors (2, A), strides (1, A)
    return jnp.concatenate(pts, 0).T, jnp.concatenate(strs, 0).T


def pose_forward(fused, xs, level_strides, reg_max, nc, kpt_shape,
                 level_fn, decode_fn, compute_dtype=jnp.bfloat16):
    """Inference path of Pose.forward (self.training == False), branch-fused."""
    bs = xs[0].shape[0]
    Kp, ndim = kpt_shape
    nk = Kp * ndim
    no = 4 * reg_max + nc
    feat_hw, cat_parts, x_levels = [], [], []
    for i, x_nchw in enumerate(xs):
        p = fused[i]
        # TODO(synk): take NHWC bf16 activations straight from the backbone so
        # this transpose + cast + pad staging pass disappears.
        x = jnp.transpose(x_nchw, (0, 2, 3, 1)).astype(compute_dtype)
        H, W = x.shape[1], x.shape[2]
        feat_hw.append((H, W))
        We = _round_up(W + 2, 16)     # halo cols, rounded so in-kernel reshapes stay tile-aligned
        xp2 = jnp.pad(x, ((0, 0), (2, 2), (2, We - W), (0, 0)))
        cat_lvl, xlvl = level_fn(xp2, p, no=no, H=H, W=W)
        cat_parts.append(cat_lvl)
        x_levels.append(xlvl.reshape(bs, no, H, W))        # torch x[i] (NCHW)
    cat = jnp.concatenate(cat_parts, axis=2)               # (bs, Cpad, A)
    kpt_raw = cat[:, no:no + nk, :].astype(jnp.float32)    # raw kpt logits
    anchors, strides_v = _make_anchors(feat_hw, level_strides)
    y = decode_fn(cat, anchors, strides_v, reg_max, nc, kpt_shape)
    return y, (x_levels, kpt_raw)


def pose_forward_unfused_f32(params, xs, level_strides, reg_max, nc, kpt_shape):
    """Straightforward per-branch f32 reference (mirrors the PyTorch module)."""
    def branch(p, x):
        bsz, H, W, _ = x.shape

        def conv3(h, w, s, b):
            c = _im2col_3x3(h).reshape(bsz * H * W, -1)
            y = jnp.dot(c, w, preferred_element_type=jnp.float32,
                        precision=_HIGHEST) * s + b
            y = y * jax.nn.sigmoid(y)
            return y.reshape(bsz, H, W, -1)

        h = conv3(x, p["w1"], p["s1"], p["b1"])
        h = conv3(h, p["w2"], p["s2"], p["b2"])
        y = jnp.dot(h.reshape(bsz * H * W, -1), p["w3"],
                    preferred_element_type=jnp.float32, precision=_HIGHEST) + p["b3"]
        return y.reshape(bsz, H * W, -1)

    feat_hw, parts = [], []
    for i, x_nchw in enumerate(xs):
        x = jnp.transpose(x_nchw, (0, 2, 3, 1))
        feat_hw.append((x.shape[1], x.shape[2]))
        box = branch(params["cv2"][i], x)
        cls = branch(params["cv3"][i], x)
        kpt = branch(params["cv4"][i], x)
        parts.append(jnp.transpose(jnp.concatenate([box, cls, kpt], -1), (0, 2, 1)))
    cat = jnp.concatenate(parts, axis=2)
    anchors, strides = _make_anchors(feat_hw, level_strides)
    return _decode_ref(cat, anchors, strides, reg_max, nc, kpt_shape)


# ---------------------------------------------------------------------------
# Parameter init (BN folded; Conv bias=False) and branch fusion
# ---------------------------------------------------------------------------
def init_params(key, ch, nc, reg_max, nk):
    c2, c3, c4 = _head_widths(ch, nc, reg_max, nk)

    def branch(k, cin, cmid, cout):
        ks = jax.random.split(k, 8)
        return {
            # 3x3 weights stored (tap, cin) flattened -> matches the tap order
            # used by both the kernel and the references.
            "w1": jax.random.normal(ks[0], (9 * cin, cmid), jnp.float32) / jnp.sqrt(9 * cin),
            "s1": 1.0 + 0.1 * jax.random.normal(ks[1], (cmid,), jnp.float32),
            "b1": 0.1 * jax.random.normal(ks[2], (cmid,), jnp.float32),
            "w2": jax.random.normal(ks[3], (9 * cmid, cmid), jnp.float32) / jnp.sqrt(9 * cmid),
            "s2": 1.0 + 0.1 * jax.random.normal(ks[4], (cmid,), jnp.float32),
            "b2": 0.1 * jax.random.normal(ks[5], (cmid,), jnp.float32),
            "w3": jax.random.normal(ks[6], (cmid, cout), jnp.float32) / jnp.sqrt(cmid),
            "b3": 0.1 * jax.random.normal(ks[7], (cout,), jnp.float32),
        }

    keys = jax.random.split(key, 3 * len(ch))
    params = {"cv2": [], "cv3": [], "cv4": []}
    for i, cin in enumerate(ch):
        params["cv2"].append(branch(keys[3 * i + 0], cin, c2, 4 * reg_max))
        params["cv3"].append(branch(keys[3 * i + 1], cin, c3, nc))
        params["cv4"].append(branch(keys[3 * i + 2], cin, c4, nk))
    return params


def fuse_params(params, ch, nc, reg_max, nk):
    """Fuse cv2/cv3/cv4 of each level into lane-dense weights.

    Stage 1 (shared input): concat along N.  Stages 2/3: per-tap block-diagonal
    (cross-branch terms are exact zeros -> numerically identical to unfused).
    Stage-3 output channels are ordered [box, cls, kpt] and zero-padded to a
    multiple of 128 so the channel-major store is aligned.
    """
    c2, c3, c4 = _head_widths(ch, nc, reg_max, nk)
    widths = (c2, c3, c4)
    offs = (0, c2, c2 + c3)
    Nf = c2 + c3 + c4
    nouts = (4 * reg_max, nc, nk)
    noffs = (0, 4 * reg_max, 4 * reg_max + nc)
    Cpad = _round_up(4 * reg_max + nc + nk, 128)
    fused = []
    for i in range(len(params["cv2"])):
        branches = (params["cv2"][i], params["cv3"][i], params["cv4"][i])
        w1 = jnp.concatenate([b["w1"] for b in branches], axis=1)
        s1 = jnp.concatenate([b["s1"] for b in branches], axis=0)
        b1 = jnp.concatenate([b["b1"] for b in branches], axis=0)
        s2 = jnp.concatenate([b["s2"] for b in branches], axis=0)
        b2 = jnp.concatenate([b["b2"] for b in branches], axis=0)
        w2 = jnp.zeros((9 * Nf, Nf), jnp.float32)
        for br, cj, oj in zip(branches, widths, offs):
            for t in range(9):
                w2 = w2.at[t * Nf + oj:t * Nf + oj + cj, oj:oj + cj].set(
                    br["w2"][t * cj:(t + 1) * cj, :])
        w3 = jnp.zeros((Nf, Cpad), jnp.float32)
        b3 = jnp.zeros((Cpad,), jnp.float32)
        for br, cj, oj, nj, noj in zip(branches, widths, offs, nouts, noffs):
            w3 = w3.at[oj:oj + cj, noj:noj + nj].set(br["w3"])
            b3 = b3.at[noj:noj + nj].set(br["b3"])
        fused.append(dict(w1=w1, s1=s1, b1=b1, w2=w2, s2=s2, b2=b2, w3=w3, b3=b3))
    return fused


# ---------------------------------------------------------------------------
if __name__ == "__main__":
    nc = 8
    kpt_shape = (17, 3)
    ch = (32, 64)
    reg_max = 16
    nk = kpt_shape[0] * kpt_shape[1]
    bs = 2
    spatial = ((16, 16), (8, 8))
    # TODO(synk): Detect.__init__ leaves self.stride = zeros (set by the model
    # builder in ultralytics); here we fix deterministic strides (8, 16).
    level_strides = (8.0, 16.0)

    key = jax.random.PRNGKey(0)
    kx, kp = jax.random.split(key)
    xs = []
    for cin, (H, W) in zip(ch, spatial):
        kx, sub = jax.random.split(kx)
        xs.append(jax.random.normal(sub, (bs, cin, H, W), jnp.float32))

    params = init_params(kp, ch, nc, reg_max, nk)
    fused = fuse_params(params, ch, nc, reg_max, nk)

    # --- Pallas path: fused per-level conv kernel + decode kernel (bf16 MXU) ---
    y, (x_levels, kpt_raw) = pose_forward(
        fused, xs, level_strides, reg_max, nc, kpt_shape,
        _level_conv_pallas, _decode_pallas, compute_dtype=jnp.bfloat16)
    y = jax.block_until_ready(y)

    # --- Reference 1: identical fused math / bf16 rounding, pure JAX ---
    y_ref, (_, kpt_raw_ref) = pose_forward(
        fused, xs, level_strides, reg_max, nc, kpt_shape,
        _level_conv_ref, _decode_ref, compute_dtype=jnp.bfloat16)

    # --- Reference 2: fused f32 vs original unfused per-branch f32 model ---
    y_f32, _ = pose_forward(
        fused, xs, level_strides, reg_max, nc, kpt_shape,
        _level_conv_ref, _decode_ref, compute_dtype=jnp.float32)
    y_unfused = pose_forward_unfused_f32(
        params, xs, level_strides, reg_max, nc, kpt_shape)

    A = sum(h * w for h, w in spatial)
    assert y.shape == (bs, 4 + nc + nk, A), y.shape
    assert len(x_levels) == len(ch)
    assert x_levels[0].shape == (bs, 4 * reg_max + nc) + spatial[0]
    assert kpt_raw.shape == (bs, nk, A)

    def rel_err(a, b):
        return float(jnp.max(jnp.abs(a - b) / (1.0 + jnp.abs(b))))

    err_kernel = rel_err(y, y_ref)
    err_kpt = rel_err(kpt_raw, kpt_raw_ref)
    err_fusion = rel_err(y_f32, y_unfused)
    assert err_kernel < 1e-2, f"pallas vs bf16 reference mismatch: {err_kernel}"
    assert err_kpt < 1e-2, f"raw keypoint mismatch: {err_kpt}"
    assert err_fusion < 1e-3, f"branch fusion vs unfused f32 mismatch: {err_fusion}"
    print("KERNEL_OK")
</pallas_src>

<mosaic_0001>
module attributes {stable_mosaic.version = 11 : i64} {
  func.func @_level_conv_kernel(%arg0: i32, %arg1: i32, %arg2: memref<1x20x34x32xbf16, #tpu.memory_space<vmem>>, %arg3: memref<9x32x147xbf16, #tpu.memory_space<vmem>>, %arg4: memref<1x147xf32, #tpu.memory_space<vmem>>, %arg5: memref<1x147xf32, #tpu.memory_space<vmem>>, %arg6: memref<9x147x147xbf16, #tpu.memory_space<vmem>>, %arg7: memref<1x147xf32, #tpu.memory_space<vmem>>, %arg8: memref<1x147xf32, #tpu.memory_space<vmem>>, %arg9: memref<147x128xbf16, #tpu.memory_space<vmem>>, %arg10: memref<128x1xf32, #tpu.memory_space<vmem>>, %arg11: memref<1x128x128xbf16, #tpu.memory_space<vmem>>, %arg12: memref<1x72x128xf32, #tpu.memory_space<vmem>>) attributes {dimension_semantics = [#tpu.dimension_semantics<parallel>, #tpu.dimension_semantics<parallel>], iteration_bounds = array<i64: 2, 2>, scalar_prefetch = 0 : i64, scratch_operands = 0 : i64, tpu.core_type = #tpu.core_type<tc>, window_params = [{transform_indices = @transform_0, window_bounds = array<i64: 1, 20, 34, 32>}, {pipeline_mode = #tpu.pipeline_mode<synchronous>, transform_indices = @transform_1, window_bounds = array<i64: 9, 32, 147>}, {pipeline_mode = #tpu.pipeline_mode<synchronous>, transform_indices = @transform_2, window_bounds = array<i64: 1, 147>}, {pipeline_mode = #tpu.pipeline_mode<synchronous>, transform_indices = @transform_3, window_bounds = array<i64: 1, 147>}, {pipeline_mode = #tpu.pipeline_mode<synchronous>, transform_indices = @transform_4, window_bounds = array<i64: 9, 147, 147>}, {pipeline_mode = #tpu.pipeline_mode<synchronous>, transform_indices = @transform_5, window_bounds = array<i64: 1, 147>}, {pipeline_mode = #tpu.pipeline_mode<synchronous>, transform_indices = @transform_6, window_bounds = array<i64: 1, 147>}, {pipeline_mode = #tpu.pipeline_mode<synchronous>, transform_indices = @transform_7, window_bounds = array<i64: 147, 128>}, {pipeline_mode = #tpu.pipeline_mode<synchronous>, transform_indices = @transform_8, window_bounds = array<i64: 128, 1>}, {transform_indices = @transform_9, window_bounds = array<i64: 1, 128, 128>}, {transform_indices = @transform_10, window_bounds = array<i64: 1, 72, 128>}]} {
    %c8_i32 = arith.constant 8 : i32
    %0 = arith.muli %arg1, %c8_i32 : i32
    %c0 = arith.constant 0 : index
    %1 = arith.index_cast %0 : i32 to index
    %c0_0 = arith.constant 0 : index
    %c0_1 = arith.constant 0 : index
    %2 = vector.load %arg2[%c0, %1, %c0_0, %c0_1] : memref<1x20x34x32xbf16, #tpu.memory_space<vmem>>, vector<1x12x34x32xbf16>
    %3 = vector.shape_cast %2 : vector<1x12x34x32xbf16> to vector<12x34x32xbf16>
    %4 = vector.extract_strided_slice %3 {offsets = [0, 0, 0], sizes = [10, 32, 32], strides = [1, 1, 1]} : vector<12x34x32xbf16> to vector<10x32x32xbf16>
    %5 = vector.shape_cast %4 : vector<10x32x32xbf16> to vector<320x32xbf16>
    %c0_2 = arith.constant 0 : index
    %c0_3 = arith.constant 0 : index
    %c0_4 = arith.constant 0 : index
    %6 = vector.load %arg3[%c0_2, %c0_3, %c0_4] : memref<9x32x147xbf16, #tpu.memory_space<vmem>>, vector<1x32x147xbf16>
    %7 = vector.shape_cast %6 : vector<1x32x147xbf16> to vector<32x147xbf16>
    %cst = arith.constant dense<0.000000e+00> : vector<320x147xf32>
    %8 = tpu.matmul %5, %7, %cst {dimension_numbers = #tpu.dot_dimension_numbers<[1], [0], [0], [1], [0, 0, 1, 1], [], []>} : vector<320x32xbf16>, vector<32x147xbf16>, vector<320x147xf32> -> vector<320x147xf32>
    %9 = vector.extract_strided_slice %3 {offsets = [0, 1, 0], sizes = [10, 32, 32], strides = [1, 1, 1]} : vector<12x34x32xbf16> to vector<10x32x32xbf16>
    %10 = vector.shape_cast %9 : vector<10x32x32xbf16> to vector<320x32xbf16>
    %c1 = arith.constant 1 : index
    %c0_5 = arith.constant 0 : index
    %c0_6 = arith.constant 0 : index
    %11 = vector.load %arg3[%c1, %c0_5, %c0_6] : memref<9x32x147xbf16, #tpu.memory_space<vmem>>, vector<1x32x147xbf16>
    %12 = vector.shape_cast %11 : vector<1x32x147xbf16> to vector<32x147xbf16>
    %cst_7 = arith.constant dense<0.000000e+00> : vector<320x147xf32>
    %13 = tpu.matmul %10, %12, %cst_7 {dimension_numbers = #tpu.dot_dimension_numbers<[1], [0], [0], [1], [0, 0, 1, 1], [], []>} : vector<320x32xbf16>, vector<32x147xbf16>, vector<320x147xf32> -> vector<320x147xf32>
    %14 = arith.addf %8, %13 : vector<320x147xf32>
    %15 = vector.extract_strided_slice %3 {offsets = [0, 2, 0], sizes = [10, 32, 32], strides = [1, 1, 1]} : vector<12x34x32xbf16> to vector<10x32x32xbf16>
    %16 = vector.shape_cast %15 : vector<10x32x32xbf16> to vector<320x32xbf16>
    %c2 = arith.constant 2 : index
    %c0_8 = arith.constant 0 : index
    %c0_9 = arith.constant 0 : index
    %17 = vector.load %arg3[%c2, %c0_8, %c0_9] : memref<9x32x147xbf16, #tpu.memory_space<vmem>>, vector<1x32x147xbf16>
    %18 = vector.shape_cast %17 : vector<1x32x147xbf16> to vector<32x147xbf16>
    %cst_10 = arith.constant dense<0.000000e+00> : vector<320x147xf32>
    %19 = tpu.matmul %16, %18, %cst_10 {dimension_numbers = #tpu.dot_dimension_numbers<[1], [0], [0], [1], [0, 0, 1, 1], [], []>} : vector<320x32xbf16>, vector<32x147xbf16>, vector<320x147xf32> -> vector<320x147xf32>
    %20 = arith.addf %14, %19 : vector<320x147xf32>
    %21 = vector.extract_strided_slice %3 {offsets = [1, 0, 0], sizes = [10, 32, 32], strides = [1, 1, 1]} : vector<12x34x32xbf16> to vector<10x32x32xbf16>
    %22 = vector.shape_cast %21 : vector<10x32x32xbf16> to vector<320x32xbf16>
    %c3 = arith.constant 3 : index
    %c0_11 = arith.constant 0 : index
    %c0_12 = arith.constant 0 : index
    %23 = vector.load %arg3[%c3, %c0_11, %c0_12] : memref<9x32x147xbf16, #tpu.memory_space<vmem>>, vector<1x32x147xbf16>
    %24 = vector.shape_cast %23 : vector<1x32x147xbf16> to vector<32x147xbf16>
    %cst_13 = arith.constant dense<0.000000e+00> : vector<320x147xf32>
    %25 = tpu.matmul %22, %24, %cst_13 {dimension_numbers = #tpu.dot_dimension_numbers<[1], [0], [0], [1], [0, 0, 1, 1], [], []>} : vector<320x32xbf16>, vector<32x147xbf16>, vector<320x147xf32> -> vector<320x147xf32>
    %26 = arith.addf %20, %25 : vector<320x147xf32>
    %27 = vector.extract_strided_slice %3 {offsets = [1, 1, 0], sizes = [10, 32, 32], strides = [1, 1, 1]} : vector<12x34x32xbf16> to vector<10x32x32xbf16>
    %28 = vector.shape_cast %27 : vector<10x32x32xbf16> to vector<320x32xbf16>
    %c4 = arith.constant 4 : index
    %c0_14 = arith.constant 0 : index
    %c0_15 = arith.constant 0 : index
    %29 = vector.load %arg3[%c4, %c0_14, %c0_15] : memref<9x32x147xbf16, #tpu.memory_space<vmem>>, vector<1x32x147xbf16>
    %30 = vector.shape_cast %29 : vector<1x32x147xbf16> to vector<32x147xbf16>
    %cst_16 = arith.constant dense<0.000000e+00> : vector<320x147xf32>
    %31 = tpu.matmul %28, %30, %cst_16 {dimension_numbers = #tpu.dot_dimension_numbers<[1], [0], [0], [1], [0, 0, 1, 1], [], []>} : vector<320x32xbf16>, vector<32x147xbf16>, vector<320x147xf32> -> vector<320x147xf32>
    %32 = arith.addf %26, %31 : vector<320x147xf32>
    %33 = vector.extract_strided_slice %3 {offsets = [1, 2, 0], sizes = [10, 32, 32], strides = [1, 1, 1]} : vector<12x34x32xbf16> to vector<10x32x32xbf16>
    %34 = vector.shape_cast %33 : vector<10x32x32xbf16> to vector<320x32xbf16>
    %c5 = arith.constant 5 : index
    %c0_17 = arith.constant 0 : index
    %c0_18 = arith.constant 0 : index
    %35 = vector.load %arg3[%c5, %c0_17, %c0_18] : memref<9x32x147xbf16, #tpu.memory_space<vmem>>, vector<1x32x147xbf16>
    %36 = vector.shape_cast %35 : vector<1x32x147xbf16> to vector<32x147xbf16>
    %cst_19 = arith.constant dense<0.000000e+00> : vector<320x147xf32>
    %37 = tpu.matmul %34, %36, %cst_19 {dimension_numbers = #tpu.dot_dimension_numbers<[1], [0], [0], [1], [0, 0, 1, 1], [], []>} : vector<320x32xbf16>, vector<32x147xbf16>, vector<320x147xf32> -> vector<320x147xf32>
    %38 = arith.addf %32, %37 : vector<320x147xf32>
    %39 = vector.extract_strided_slice %3 {offsets = [2, 0, 0], sizes = [10, 32, 32], strides = [1, 1, 1]} : vector<12x34x32xbf16> to vector<10x32x32xbf16>
    %40 = vector.shape_cast %39 : vector<10x32x32xbf16> to vector<320x32xbf16>
    %c6 = arith.constant 6 : index
    %c0_20 = arith.constant 0 : index
    %c0_21 = arith.constant 0 : index
    %41 = vector.load %arg3[%c6, %c0_20, %c0_21] : memref<9x32x147xbf16, #tpu.memory_space<vmem>>, vector<1x32x147xbf16>
    %42 = vector.shape_cast %41 : vector<1x32x147xbf16> to vector<32x147xbf16>
    %cst_22 = arith.constant dense<0.000000e+00> : vector<320x147xf32>
    %43 = tpu.matmul %40, %42, %cst_22 {dimension_numbers = #tpu.dot_dimension_numbers<[1], [0], [0], [1], [0, 0, 1, 1], [], []>} : vector<320x32xbf16>, vector<32x147xbf16>, vector<320x147xf32> -> vector<320x147xf32>
    %44 = arith.addf %38, %43 : vector<320x147xf32>
    %45 = vector.extract_strided_slice %3 {offsets = [2, 1, 0], sizes = [10, 32, 32], strides = [1, 1, 1]} : vector<12x34x32xbf16> to vector<10x32x32xbf16>
    %46 = vector.shape_cast %45 : vector<10x32x32xbf16> to vector<320x32xbf16>
    %c7 = arith.constant 7 : index
    %c0_23 = arith.constant 0 : index
    %c0_24 = arith.constant 0 : index
    %47 = vector.load %arg3[%c7, %c0_23, %c0_24] : memref<9x32x147xbf16, #tpu.memory_space<vmem>>, vector<1x32x147xbf16>
    %48 = vector.shape_cast %47 : vector<1x32x147xbf16> to vector<32x147xbf16>
    %cst_25 = arith.constant dense<0.000000e+00> : vector<320x147xf32>
    %49 = tpu.matmul %46, %48, %cst_25 {dimension_numbers = #tpu.dot_dimension_numbers<[1], [0], [0], [1], [0, 0, 1, 1], [], []>} : vector<320x32xbf16>, vector<32x147xbf16>, vector<320x147xf32> -> vector<320x147xf32>
    %50 = arith.addf %44, %49 : vector<320x147xf32>
    %51 = vector.extract_strided_slice %3 {offsets = [2, 2, 0], sizes = [10, 32, 32], strides = [1, 1, 1]} : vector<12x34x32xbf16> to vector<10x32x32xbf16>
    %52 = vector.shape_cast %51 : vector<10x32x32xbf16> to vector<320x32xbf16>
    %c8 = arith.constant 8 : index
    %c0_26 = arith.constant 0 : index
    %c0_27 = arith.constant 0 : index
    %53 = vector.load %arg3[%c8, %c0_26, %c0_27] : memref<9x32x147xbf16, #tpu.memory_space<vmem>>, vector<1x32x147xbf16>
    %54 = vector.shape_cast %53 : vector<1x32x147xbf16> to vector<32x147xbf16>
    %cst_28 = arith.constant dense<0.000000e+00> : vector<320x147xf32>
    %55 = tpu.matmul %52, %54, %cst_28 {dimension_numbers = #tpu.dot_dimension_numbers<[1], [0], [0], [1], [0, 0, 1, 1], [], []>} : vector<320x32xbf16>, vector<32x147xbf16>, vector<320x147xf32> -> vector<320x147xf32>
    %56 = arith.addf %50, %55 : vector<320x147xf32>
    %c0_29 = arith.constant 0 : index
    %c0_30 = arith.constant 0 : index
    %57 = vector.load %arg4[%c0_29, %c0_30] : memref<1x147xf32, #tpu.memory_space<vmem>>, vector<1x147xf32>
    %58 = vector.broadcast %57 : vector<1x147xf32> to vector<320x147xf32>
    %59 = arith.mulf %56, %58 : vector<320x147xf32>
    %c0_31 = arith.constant 0 : index
    %c0_32 = arith.constant 0 : index
    %60 = vector.load %arg5[%c0_31, %c0_32] : memref<1x147xf32, #tpu.memory_space<vmem>>, vector<1x147xf32>
    %61 = vector.broadcast %60 : vector<1x147xf32> to vector<320x147xf32>
    %62 = arith.addf %59, %61 : vector<320x147xf32>
    %63 = arith.negf %62 : vector<320x147xf32>
    %64 = math.exp %63 : vector<320x147xf32>
    %cst_33 = arith.constant 1.000000e+00 : f32
    %65 = vector.broadcast %cst_33 : f32 to vector<320x147xf32>
    %66 = arith.addf %65, %64 : vector<320x147xf32>
    %67 = arith.divf %65, %66 : vector<320x147xf32>
    %68 = arith.mulf %62, %67 : vector<320x147xf32>
    %69 = vector.shape_cast %68 : vector<320x147xf32> to vector<10x32x147xf32>
    %70 = tpu.iota {dimensions = array<i32: 0>} : vector<10x32x147xi32>
    %71 = vector.broadcast %0 : i32 to vector<10x32x147xi32>
    %72 = arith.addi %70, %71 : vector<10x32x147xi32>
    %73 = tpu.iota {dimensions = array<i32: 1>} : vector<10x32x147xi32>
    %c1_i32 = arith.constant 1 : i32
    %74 = vector.broadcast %c1_i32 : i32 to vector<10x32x147xi32>
    %75 = arith.cmpi sge, %72, %74 : vector<10x32x147xi32>
    %c16_i32 = arith.constant 16 : i32
    %76 = vector.broadcast %c16_i32 : i32 to vector<10x32x147xi32>
    %77 = arith.cmpi sle, %72, %76 : vector<10x32x147xi32>
    %78 = arith.andi %75, %77 : vector<10x32x147xi1>
    %c1_i32_34 = arith.constant 1 : i32
    %79 = vector.broadcast %c1_i32_34 : i32 to vector<10x32x147xi32>
    %80 = arith.cmpi sge, %73, %79 : vector<10x32x147xi32>
    %81 = arith.andi %78, %80 : vector<10x32x147xi1>
    %c16_i32_35 = arith.constant 16 : i32
    %82 = vector.broadcast %c16_i32_35 : i32 to vector<10x32x147xi32>
    %83 = arith.cmpi sle, %73, %82 : vector<10x32x147xi32>
    %84 = arith.andi %81, %83 : vector<10x32x147xi1>
    %cst_36 = arith.constant 0.000000e+00 : f32
    %85 = vector.broadcast %cst_36 : f32 to vector<10x32x147xf32>
    %86 = arith.select %84, %69, %85 : vector<10x32x147xi1>, vector<10x32x147xf32>
    %87 = vector.extract_strided_slice %86 {offsets = [0, 0, 0], sizes = [8, 16, 147], strides = [1, 1, 1]} : vector<10x32x147xf32> to vector<8x16x147xf32>
    %88 = vector.shape_cast %87 : vector<8x16x147xf32> to vector<128x147xf32>
    %89 = arith.truncf %88 : vector<128x147xf32> to vector<128x147xbf16>
    %c0_37 = arith.constant 0 : index
    %c0_38 = arith.constant 0 : index
    %c0_39 = arith.constant 0 : index
    %90 = vector.load %arg6[%c0_37, %c0_38, %c0_39] : memref<9x147x147xbf16, #tpu.memory_space<vmem>>, vector<1x147x147xbf16>
    %91 = vector.shape_cast %90 : vector<1x147x147xbf16> to vector<147x147xbf16>
    %cst_40 = arith.constant dense<0.000000e+00> : vector<128x147xf32>
    %92 = tpu.matmul %89, %91, %cst_40 {dimension_numbers = #tpu.dot_dimension_numbers<[1], [0], [0], [1], [0, 0, 1, 1], [], []>} : vector<128x147xbf16>, vector<147x147xbf16>, vector<128x147xf32> -> vector<128x147xf32>
    %93 = vector.extract_strided_slice %86 {offsets = [0, 1, 0], sizes = [8, 16, 147], strides = [1, 1, 1]} : vector<10x32x147xf32> to vector<8x16x147xf32>
    %94 = vector.shape_cast %93 : vector<8x16x147xf32> to vector<128x147xf32>
    %95 = arith.truncf %94 : vector<128x147xf32> to vector<128x147xbf16>
    %c1_41 = arith.constant 1 : index
    %c0_42 = arith.constant 0 : index
    %c0_43 = arith.constant 0 : index
    %96 = vector.load %arg6[%c1_41, %c0_42, %c0_43] : memref<9x147x147xbf16, #tpu.memory_space<vmem>>, vector<1x147x147xbf16>
    %97 = vector.shape_cast %96 : vector<1x147x147xbf16> to vector<147x147xbf16>
    %cst_44 = arith.constant dense<0.000000e+00> : vector<128x147xf32>
    %98 = tpu.matmul %95, %97, %cst_44 {dimension_numbers = #tpu.dot_dimension_numbers<[1], [0], [0], [1], [0, 0, 1, 1], [], []>} : vector<128x147xbf16>, vector<147x147xbf16>, vector<128x147xf32> -> vector<128x147xf32>
    %99 = arith.addf %92, %98 : vector<128x147xf32>
    %100 = vector.extract_strided_slice %86 {offsets = [0, 2, 0], sizes = [8, 16, 147], strides = [1, 1, 1]} : vector<10x32x147xf32> to vector<8x16x147xf32>
    %101 = vector.shape_cast %100 : vector<8x16x147xf32> to vector<128x147xf32>
    %102 = arith.truncf %101 : vector<128x147xf32> to vector<128x147xbf16>
    %c2_45 = arith.constant 2 : index
    %c0_46 = arith.constant 0 : index
    %c0_47 = arith.constant 0 : index
    %103 = vector.load %arg6[%c2_45, %c0_46, %c0_47] : memref<9x147x147xbf16, #tpu.memory_space<vmem>>, vector<1x147x147xbf16>
    %104 = vector.shape_cast %103 : vector<1x147x147xbf16> to vector<147x147xbf16>
    %cst_48 = arith.constant dense<0.000000e+00> : vector<128x147xf32>
    %105 = tpu.matmul %102, %104, %cst_48 {dimension_numbers = #tpu.dot_dimension_numbers<[1], [0], [0], [1], [0, 0, 1, 1], [], []>} : vector<128x147xbf16>, vector<147x147xbf16>, vector<128x147xf32> -> vector<128x147xf32>
    %106 = arith.addf %99, %105 : vector<128x147xf32>
    %107 = vector.extract_strided_slice %86 {offsets = [1, 0, 0], sizes = [8, 16, 147], strides = [1, 1, 1]} : vector<10x32x147xf32> to vector<8x16x147xf32>
    %108 = vector.shape_cast %107 : vector<8x16x147xf32> to vector<128x147xf32>
    %109 = arith.truncf %108 : vector<128x147xf32> to vector<128x147xbf16>
    %c3_49 = arith.constant 3 : index
    %c0_50 = arith.constant 0 : index
    %c0_51 = arith.constant 0 : index
    %110 = vector.load %arg6[%c3_49, %c0_50, %c0_51] : memref<9x147x147xbf16, #tpu.memory_space<vmem>>, vector<1x147x147xbf16>
    %111 = vector.shape_cast %110 : vector<1x147x147xbf16> to vector<147x147xbf16>
    %cst_52 = arith.constant dense<0.000000e+00> : vector<128x147xf32>
    %112 = tpu.matmul %109, %111, %cst_52 {dimension_numbers = #tpu.dot_dimension_numbers<[1], [0], [0], [1], [0, 0, 1, 1], [], []>} : vector<128x147xbf16>, vector<147x147xbf16>, vector<128x147xf32> -> vector<128x147xf32>
    %113 = arith.addf %106, %112 : vector<128x147xf32>
    %114 = vector.extract_strided_slice %86 {offsets = [1, 1, 0], sizes = [8, 16, 147], strides = [1, 1, 1]} : vector<10x32x147xf32> to vector<8x16x147xf32>
    %115 = vector.shape_cast %114 : vector<8x16x147xf32> to vector<128x147xf32>
    %116 = arith.truncf %115 : vector<128x147xf32> to vector<128x147xbf16>
    %c4_53 = arith.constant 4 : index
    %c0_54 = arith.constant 0 : index
    %c0_55 = arith.constant 0 : index
    %117 = vector.load %arg6[%c4_53, %c0_54, %c0_55] : memref<9x147x147xbf16, #tpu.memory_space<vmem>>, vector<1x147x147xbf16>
    %118 = vector.shape_cast %117 : vector<1x147x147xbf16> to vector<147x147xbf16>
    %cst_56 = arith.constant dense<0.000000e+00> : vector<128x147xf32>
    %119 = tpu.matmul %116, %118, %cst_56 {dimension_numbers = #tpu.dot_dimension_numbers<[1], [0], [0], [1], [0, 0, 1, 1], [], []>} : vector<128x147xbf16>, vector<147x147xbf16>, vector<128x147xf32> -> vector<128x147xf32>
    %120 = arith.addf %113, %119 : vector<128x147xf32>
    %121 = vector.extract_strided_slice %86 {offsets = [1, 2, 0], sizes = [8, 16, 147], strides = [1, 1, 1]} : vector<10x32x147xf32> to vector<8x16x147xf32>
    %122 = vector.shape_cast %121 : vector<8x16x147xf32> to vector<128x147xf32>
    %123 = arith.truncf %122 : vector<128x147xf32> to vector<128x147xbf16>
    %c5_57 = arith.constant 5 : index
    %c0_58 = arith.constant 0 : index
    %c0_59 = arith.constant 0 : index
    %124 = vector.load %arg6[%c5_57, %c0_58, %c0_59] : memref<9x147x147xbf16, #tpu.memory_space<vmem>>, vector<1x147x147xbf16>
    %125 = vector.shape_cast %124 : vector<1x147x147xbf16> to vector<147x147xbf16>
    %cst_60 = arith.constant dense<0.000000e+00> : vector<128x147xf32>
    %126 = tpu.matmul %123, %125, %cst_60 {dimension_numbers = #tpu.dot_dimension_numbers<[1], [0], [0], [1], [0, 0, 1, 1], [], []>} : vector<128x147xbf16>, vector<147x147xbf16>, vector<128x147xf32> -> vector<128x147xf32>
    %127 = arith.addf %120, %126 : vector<128x147xf32>
    %128 = vector.extract_strided_slice %86 {offsets = [2, 0, 0], sizes = [8, 16, 147], strides = [1, 1, 1]} : vector<10x32x147xf32> to vector<8x16x147xf32>
    %129 = vector.shape_cast %128 : vector<8x16x147xf32> to vector<128x147xf32>
    %130 = arith.truncf %129 : vector<128x147xf32> to vector<128x147xbf16>
    %c6_61 = arith.constant 6 : index
    %c0_62 = arith.constant 0 : index
    %c0_63 = arith.constant 0 : index
    %131 = vector.load %arg6[%c6_61, %c0_62, %c0_63] : memref<9x147x147xbf16, #tpu.memory_space<vmem>>, vector<1x147x147xbf16>
    %132 = vector.shape_cast %131 : vector<1x147x147xbf16> to vector<147x147xbf16>
    %cst_64 = arith.constant dense<0.000000e+00> : vector<128x147xf32>
    %133 = tpu.matmul %130, %132, %cst_64 {dimension_numbers = #tpu.dot_dimension_numbers<[1], [0], [0], [1], [0, 0, 1, 1], [], []>} : vector<128x147xbf16>, vector<147x147xbf16>, vector<128x147xf32> -> vector<128x147xf32>
    %134 = arith.addf %127, %133 : vector<128x147xf32>
    %135 = vector.extract_strided_slice %86 {offsets = [2, 1, 0], sizes = [8, 16, 147], strides = [1, 1, 1]} : vector<10x32x147xf32> to vector<8x16x147xf32>
    %136 = vector.shape_cast %135 : vector<8x16x147xf32> to vector<128x147xf32>
    %137 = arith.truncf %136 : vector<128x147xf32> to vector<128x147xbf16>
    %c7_65 = arith.constant 7 : index
    %c0_66 = arith.constant 0 : index
    %c0_67 = arith.constant 0 : index
    %138 = vector.load %arg6[%c7_65, %c0_66, %c0_67] : memref<9x147x147xbf16, #tpu.memory_space<vmem>>, vector<1x147x147xbf16>
    %139 = vector.shape_cast %138 : vector<1x147x147xbf16> to vector<147x147xbf16>
    %cst_68 = arith.constant dense<0.000000e+00> : vector<128x147xf32>
    %140 = tpu.matmul %137, %139, %cst_68 {dimension_numbers = #tpu.dot_dimension_numbers<[1], [0], [0], [1], [0, 0, 1, 1], [], []>} : vector<128x147xbf16>, vector<147x147xbf16>, vector<128x147xf32> -> vector<128x147xf32>
    %141 = arith.addf %134, %140 : vector<128x147xf32>
    %142 = vector.extract_strided_slice %86 {offsets = [2, 2, 0], sizes = [8, 16, 147], strides = [1, 1, 1]} : vector<10x32x147xf32> to vector<8x16x147xf32>
    %143 = vector.shape_cast %142 : vector<8x16x147xf32> to vector<128x147xf32>
    %144 = arith.truncf %143 : vector<128x147xf32> to vector<128x147xbf16>
    %c8_69 = arith.constant 8 : index
    %c0_70 = arith.constant 0 : index
    %c0_71 = arith.constant 0 : index
    %145 = vector.load %arg6[%c8_69, %c0_70, %c0_71] : memref<9x147x147xbf16, #tpu.memory_space<vmem>>, vector<1x147x147xbf16>
    %146 = vector.shape_cast %145 : vector<1x147x147xbf16> to vector<147x147xbf16>
    %cst_72 = arith.constant dense<0.000000e+00> : vector<128x147xf32>
    %147 = tpu.matmul %144, %146, %cst_72 {dimension_numbers = #tpu.dot_dimension_numbers<[1], [0], [0], [1], [0, 0, 1, 1], [], []>} : vector<128x147xbf16>, vector<147x147xbf16>, vector<128x147xf32> -> vector<128x147xf32>
    %148 = arith.addf %141, %147 : vector<128x147xf32>
    %c0_73 = arith.constant 0 : index
    %c0_74 = arith.constant 0 : index
    %149 = vector.load %arg7[%c0_73, %c0_74] : memref<1x147xf32, #tpu.memory_space<vmem>>, vector<1x147xf32>
    %150 = vector.broadcast %149 : vector<1x147xf32> to vector<128x147xf32>
    %151 = arith.mulf %148, %150 : vector<128x147xf32>
    %c0_75 = arith.constant 0 : index
    %c0_76 = arith.constant 0 : index
    %152 = vector.load %arg8[%c0_75, %c0_76] : memref<1x147xf32, #tpu.memory_space<vmem>>, vector<1x147xf32>
    %153 = vector.broadcast %152 : vector<1x147xf32> to vector<128x147xf32>
    %154 = arith.addf %151, %153 : vector<128x147xf32>
    %155 = arith.negf %154 : vector<128x147xf32>
    %156 = math.exp %155 : vector<128x147xf32>
    %cst_77 = arith.constant 1.000000e+00 : f32
    %157 = vector.broadcast %cst_77 : f32 to vector<128x147xf32>
    %158 = arith.addf %157, %156 : vector<128x147xf32>
    %159 = arith.divf %157, %158 : vector<128x147xf32>
    %160 = arith.mulf %154, %159 : vector<128x147xf32>
    %161 = arith.truncf %160 : vector<128x147xf32> to vector<128x147xbf16>
    %c0_78 = arith.constant 0 : index
    %c0_79 = arith.constant 0 : index
    %162 = vector.load %arg9[%c0_78, %c0_79] : memref<147x128xbf16, #tpu.memory_space<vmem>>, vector<147x128xbf16>
    %cst_80 = arith.constant dense<0.000000e+00> : vector<128x128xf32>
    %163 = tpu.matmul %162, %161, %cst_80 {dimension_numbers = #tpu.dot_dimension_numbers<[0], [1], [1], [0], [0, 1, 1, 0], [], []>} : vector<147x128xbf16>, vector<128x147xbf16>, vector<128x128xf32> -> vector<128x128xf32>
    %c0_81 = arith.constant 0 : index
    %c0_82 = arith.constant 0 : index
    %164 = vector.load %arg10[%c0_81, %c0_82] : memref<128x1xf32, #tpu.memory_space<vmem>>, vector<128x1xf32>
    %165 = vector.broadcast %164 : vector<128x1xf32> to vector<128x128xf32>
    %166 = arith.addf %163, %165 : vector<128x128xf32>
    %167 = arith.truncf %166 : vector<128x128xf32> to vector<128x128xbf16>
    %c0_83 = arith.constant 0 : index
    %c0_84 = arith.constant 0 : index
    %c0_85 = arith.constant 0 : index
    %168 = vector.load %arg11[%c0_83, %c0_84, %c0_85] : memref<1x128x128xbf16, #tpu.memory_space<vmem>>, vector<1x128x128xbf16>
    %169 = vector.shape_cast %168 : vector<1x128x128xbf16> to vector<128x128xbf16>
    %170 = vector.shape_cast %167 : vector<128x128xbf16> to vector<1x128x128xbf16>
    tpu.vector_store %arg11[%c0_83, %c0_84, %c0_85], %170 {strides = array<i32>} : memref<1x128x128xbf16, #tpu.memory_space<vmem>>, vector<1x128x128xbf16>,
    %171 = vector.extract_strided_slice %166 {offsets = [0, 0], sizes = [72, 128], strides = [1, 1]} : vector<128x128xf32> to vector<72x128xf32>
    %c0_86 = arith.constant 0 : index
    %c0_87 = arith.constant 0 : index
    %c0_88 = arith.constant 0 : index
    %172 = vector.load %arg12[%c0_86, %c0_87, %c0_88] : memref<1x72x128xf32, #tpu.memory_space<vmem>>, vector<1x72x128xf32>
    %173 = vector.shape_cast %172 : vector<1x72x128xf32> to vector<72x128xf32>
    %174 = vector.shape_cast %171 : vector<72x128xf32> to vector<1x72x128xf32>
    tpu.vector_store %arg12[%c0_86, %c0_87, %c0_88], %174 {strides = array<i32>} : memref<1x72x128xf32, #tpu.memory_space<vmem>>, vector<1x72x128xf32>,
    return
  }
  func.func @transform_0(%arg0: i32, %arg1: i32) -> (i32, i32, i32, i32) {
    %c0_i32 = arith.constant 0 : i32
    %c0_i32_0 = arith.constant 0 : i32
    %c0_i32_1 = arith.constant 0 : i32
    %c0_i32_2 = arith.constant 0 : i32
    return %arg0, %c0_i32, %c0_i32_0, %c0_i32_1 : i32, i32, i32, i32
  }
  func.func @transform_1(%arg0: i32, %arg1: i32) -> (i32, i32, i32) {
    %c0_i32 = arith.constant 0 : i32
    %c0_i32_0 = arith.constant 0 : i32
    %c0_i32_1 = arith.constant 0 : i32
    %c0_i32_2 = arith.constant 0 : i32
    return %c0_i32, %c0_i32_0, %c0_i32_1 : i32, i32, i32
  }
  func.func @transform_2(%arg0: i32, %arg1: i32) -> (i32, i32) {
    %c0_i32 = arith.constant 0 : i32
    %c0_i32_0 = arith.constant 0 : i32
    %c0_i32_1 = arith.constant 0 : i32
    return %c0_i32, %c0_i32_0 : i32, i32
  }
  func.func @transform_3(%arg0: i32, %arg1: i32) -> (i32, i32) {
    %c0_i32 = arith.constant 0 : i32
    %c0_i32_0 = arith.constant 0 : i32
    %c0_i32_1 = arith.constant 0 : i32
    return %c0_i32, %c0_i32_0 : i32, i32
  }
  func.func @transform_4(%arg0: i32, %arg1: i32) -> (i32, i32, i32) {
    %c0_i32 = arith.constant 0 : i32
    %c0_i32_0 = arith.constant 0 : i32
    %c0_i32_1 = arith.constant 0 : i32
    %c0_i32_2 = arith.constant 0 : i32
    return %c0_i32, %c0_i32_0, %c0_i32_1 : i32, i32, i32
  }
  func.func @transform_5(%arg0: i32, %arg1: i32) -> (i32, i32) {
    %c0_i32 = arith.constant 0 : i32
    %c0_i32_0 = arith.constant 0 : i32
    %c0_i32_1 = arith.constant 0 : i32
    return %c0_i32, %c0_i32_0 : i32, i32
  }
  func.func @transform_6(%arg0: i32, %arg1: i32) -> (i32, i32) {
    %c0_i32 = arith.constant 0 : i32
    %c0_i32_0 = arith.constant 0 : i32
    %c0_i32_1 = arith.constant 0 : i32
    return %c0_i32, %c0_i32_0 : i32, i32
  }
  func.func @transform_7(%arg0: i32, %arg1: i32) -> (i32, i32) {
    %c0_i32 = arith.constant 0 : i32
    %c0_i32_0 = arith.constant 0 : i32
    %c0_i32_1 = arith.constant 0 : i32
    return %c0_i32, %c0_i32_0 : i32, i32
  }
  func.func @transform_8(%arg0: i32, %arg1: i32) -> (i32, i32) {
    %c0_i32 = arith.constant 0 : i32
    %c0_i32_0 = arith.constant 0 : i32
    %c0_i32_1 = arith.constant 0 : i32
    return %c0_i32, %c0_i32_0 : i32, i32
  }
  func.func @transform_9(%arg0: i32, %arg1: i32) -> (i32, i32, i32) {
    %c0_i32 = arith.constant 0 : i32
    %c0_i32_0 = arith.constant 0 : i32
    return %arg0, %c0_i32, %arg1 : i32, i32, i32
  }
  func.func @transform_10(%arg0: i32, %arg1: i32) -> (i32, i32, i32) {
    %c0_i32 = arith.constant 0 : i32
    %c0_i32_0 = arith.constant 0 : i32
    return %arg0, %c0_i32, %arg1 : i32, i32, i32
  }
}

</mosaic_0001>

<llo_original>
// kernel: tpu_custom_call.1
$region0: #{tpu_custom_call.1}
  #allocation0 [shape = 'u32[]', space=smem, size = 0x4, offset = 0x4, fixed_abs, tag = 'smem constant byte address 0x4 - core index']
  #allocation1 [shape = 'u32[144,128]{1,0:T(1,128)}', space=vmem, size = 0x12000, scoped, tag = 'internal scratch']
  %s0 = inlined_call_operand.vmem [shape: bf16[2,20,34,32], index: 0, kind: input, shape index: {}]
  %s1 = inlined_call_operand.hbm [shape: bf16[9,32,147], index: 1, kind: input, shape index: {}]
  %s2 = inlined_call_operand.vmem [shape: f32[1,147], index: 2, kind: input, shape index: {}]
  %s3 = inlined_call_operand.vmem [shape: f32[1,147], index: 3, kind: input, shape index: {}]
  %s4 = inlined_call_operand.vmem [shape: bf16[9,147,147], index: 4, kind: input, shape index: {}]
  %s5 = inlined_call_operand.vmem [shape: f32[1,147], index: 5, kind: input, shape index: {}]
  %s6 = inlined_call_operand.vmem [shape: f32[1,147], index: 6, kind: input, shape index: {}]
  %s7 = inlined_call_operand.vmem [shape: bf16[147,128], index: 7, kind: input, shape index: {}]
  %s8 = inlined_call_operand.vmem [shape: f32[128,1], index: 8, kind: input, shape index: {}]
  %s9 = inlined_call_operand.hbm [shape: bf16[2,128,256], index: 9, kind: output, shape index: {0}]
  %s10 = inlined_call_operand.hbm [shape: f32[2,72,256], index: 10, kind: output, shape index: {1}]
  %11 = xla_tuple %s9, %s10
  %s12 = sld [smem:[#allocation0]]
  $region81: #{tpu_custom_call.1} parent=0
    _
  %s14 = ssub.s32 1, %s12
  %s15 = scalar_select 0, %s14, %s12
  $region1: #{tpu_custom_call.1} parent=0
    #allocation2 [shape = 'u8[147456]{0}', space=vmem, size = 0x24000, scoped, tag = 'input window, operand 1, single buffered']
    #allocation3 [shape = 's32[2]{0}', space=sflag, size = 0x8, scoped, tag = 'scoped memory for tpu_custom_call.1']
    #allocation4 [shape = 's32[2]{0}', space=sflag, size = 0x8, scoped, tag = 'scoped memory for tpu_custom_call.1']
    #allocation5 [shape = 'u8[65536]{0}', space=vmem, size = 0x10000, scoped, tag = 'output window, operand 0']
    #allocation6 [shape = 'u8[73728]{0}', space=vmem, size = 0x12000, scoped, tag = 'output window, operand 1']
    #allocation7 [shape = 's32[2]{0}', space=sflag, size = 0x8, scoped, tag = 'scoped memory for tpu_custom_call.1']
    %16 = vsyncpa [#allocation3], 0
    %17 = vsyncpa [#allocation4], 0
    %s18 = scalar_lea.sflag [#allocation4], 1
    %19 = vsyncpa %s18, 0
    %20 = vsyncpa [#allocation7], 0
    %s21 = scalar_lea.sflag [#allocation7], 1
    %22 = vsyncpa %s21, 0
    loop: start=0, step=1, limit=6
    $region2: #{tpu_custom_call.1} parent=1 // loop_pre_header
      _
    $region3: #{tpu_custom_call.1} parent=1 // loop_header
      %s24 = sphi 0, %s28
      %p25 = scmp.ge.s32.totalorder %s24, 6
      %s31 = sphi 0, %s43
      %s32 = sphi 0, %s39
      %s33 = sphi 0, %s31
      %s34 = sphi 0, %s32
      %s35 = sphi 0, %s33
      %s36 = sphi 0, %s34
      %s46 = sphi 0, %s48
      %s49 = sphi 0, %s46
      %s50 = sphi 0, %s49
      %s66 = sphi 0, %s50
      %s70 = sphi 0, %s70
      %s72 = sphi 0, %s70
      %s73 = sphi 0, %s72
      %s87 = sphi 0, %s73
      %s91 = sphi 0, %s91
      %s93 = sphi 0, %s91
      %s94 = sphi 0, %s93
      %s108 = sphi 0, %s94
      %s112 = sphi 0, %s112
      %s114 = sphi 0, %s112
      %s115 = sphi 0, %s114
      %s129 = sphi 0, %s115
      %s133 = sphi 0, %s133
      %s135 = sphi 0, %s133
      %s136 = sphi 0, %s135
      %s150 = sphi 0, %s136
      %s154 = sphi 0, %s154
      %s156 = sphi 0, %s154
      %s157 = sphi 0, %s156
      %s171 = sphi 0, %s157
      %s175 = sphi 0, %s175
      %s177 = sphi 0, %s175
      %s178 = sphi 0, %s177
      %s192 = sphi 0, %s178
      %s196 = sphi 0, %s196
      %s198 = sphi 0, %s196
      %s199 = sphi 0, %s198
      %s213 = sphi 0, %s199
      %s217 = sphi 0, %s217
      %s219 = sphi 0, %s217
      %s220 = sphi 0, %s219
      %s234 = sphi 0, %s220
      %s242 = sphi 0, %s244
      %s245 = sphi 0, %s242
      %s246 = sphi 0, %s245
      %s262 = sphi 0, %s246
      %s270 = sphi 0, %s272
      %s273 = sphi 0, %s270
      %s274 = sphi 0, %s273
      %s290 = sphi 0, %s274
    $region4: #{tpu_custom_call.1} parent=1 // loop_header_branch
      %27 = sbr.rel (%p25) target = $region8
    $region5: #{tpu_custom_call.1} parent=1 // loop_body
      %s29 = ssub.s32 %s24, 1
      %s30 = ssub.s32 %s24, 2
      %s37 = sadd.s32 1, %s32
      %p38 = scmp.ge.s32.totalorder %s37, 2
      %s39 = scalar_select %p38, 0, %s37
      %s40 = sadd.s32 1, %s31
      %s41 = scalar_select %p38, %s40, %s31
      %p42 = scmp.ge.s32.totalorder %s41, 2
      %s43 = scalar_select %p42, 0, %s41
      %s44 = ssub.s32 %s31, %s43
      %p45 = scmp.eq.s32.totalorder %s44, 0
      %s47 = sadd.s32 %s46, 1
      %s48 = scalar_select %p45, %s46, %s47
      %p51 = pneg %p45
      %p52 = scmp.eq.s32.totalorder %s24, 3
      %p53 = por %p51, %p52
      %p54 = scmp.ne.s32.totalorder %s46, %s49
      %p55 = scmp.eq.s32.totalorder %s24, 0
      %p56 = por %p54, %p55
      %p57 = scmp.ne.s32.totalorder %s46, %s49
      %p58 = scmp.eq.s32.totalorder %s29, 3
      %p59 = por %p57, %p58
      %p60 = scmp.ne.s32.totalorder %s49, %s50
      %p61 = scmp.eq.s32.totalorder %s29, 0
      %p62 = por %p60, %p61
      %p63 = scmp.ne.s32.totalorder %s49, %s50
      %p64 = scmp.eq.s32.totalorder %s30, 3
      %p65 = por %p63, %p64
      %p67 = scmp.ne.s32.totalorder %s50, %s66
      %p68 = scmp.eq.s32.totalorder %s30, 0
      %p69 = por %p67, %p68
      %s71 = sadd.s32 %s70, 1
      %p74 = scmp.eq.s32.totalorder %s24, 3
      %p75 = scmp.ne.s32.totalorder %s70, %s72
      %p76 = scmp.eq.s32.totalorder %s24, 0
      %p77 = por %p75, %p76
      %p78 = scmp.ne.s32.totalorder %s70, %s72
      %p79 = scmp.eq.s32.totalorder %s29, 3
      %p80 = por %p78, %p79
      %p81 = scmp.ne.s32.totalorder %s72, %s73
      %p82 = scmp.eq.s32.totalorder %s29, 0
      %p83 = por %p81, %p82
      %p84 = scmp.ne.s32.totalorder %s72, %s73
      %p85 = scmp.eq.s32.totalorder %s30, 3
      %p86 = por %p84, %p85
      %p88 = scmp.ne.s32.totalorder %s73, %s87
      %p89 = scmp.eq.s32.totalorder %s30, 0
      %p90 = por %p88, %p89
      %s92 = sadd.s32 %s91, 1
      %p95 = scmp.eq.s32.totalorder %s24, 3
      %p96 = scmp.ne.s32.totalorder %s91, %s93
      %p97 = scmp.eq.s32.totalorder %s24, 0
      %p98 = por %p96, %p97
      %p99 = scmp.ne.s32.totalorder %s91, %s93
      %p100 = scmp.eq.s32.totalorder %s29, 3
      %p101 = por %p99, %p100
      %p102 = scmp.ne.s32.totalorder %s93, %s94
      %p103 = scmp.eq.s32.totalorder %s29, 0
      %p104 = por %p102, %p103
      %p105 = scmp.ne.s32.totalorder %s93, %s94
      %p106 = scmp.eq.s32.totalorder %s30, 3
      %p107 = por %p105, %p106
      %p109 = scmp.ne.s32.totalorder %s94, %s108
      %p110 = scmp.eq.s32.totalorder %s30, 0
      %p111 = por %p109, %p110
      %s113 = sadd.s32 %s112, 1
      %p116 = scmp.eq.s32.totalorder %s24, 3
      %p117 = scmp.ne.s32.totalorder %s112, %s114
      %p118 = scmp.eq.s32.totalorder %s24, 0
      %p119 = por %p117, %p118
      %p120 = scmp.ne.s32.totalorder %s112, %s114
      %p121 = scmp.eq.s32.totalorder %s29, 3
      %p122 = por %p120, %p121
      %p123 = scmp.ne.s32.totalorder %s114, %s115
      %p124 = scmp.eq.s32.totalorder %s29, 0
      %p125 = por %p123, %p124
      %p126 = scmp.ne.s32.totalorder %s114, %s115
      %p127 = scmp.eq.s32.totalorder %s30, 3
      %p128 = por %p126, %p127
      %p130 = scmp.ne.s32.totalorder %s115, %s129
      %p131 = scmp.eq.s32.totalorder %s30, 0
      %p132 = por %p130, %p131
      %s134 = sadd.s32 %s133, 1
      %p137 = scmp.eq.s32.totalorder %s24, 3
      %p138 = scmp.ne.s32.totalorder %s133, %s135
      %p139 = scmp.eq.s32.totalorder %s24, 0
      %p140 = por %p138, %p139
      %p141 = scmp.ne.s32.totalorder %s133, %s135
      %p142 = scmp.eq.s32.totalorder %s29, 3
      %p143 = por %p141, %p142
      %p144 = scmp.ne.s32.totalorder %s135, %s136
      %p145 = scmp.eq.s32.totalorder %s29, 0
      %p146 = por %p144, %p145
      %p147 = scmp.ne.s32.totalorder %s135, %s136
      %p148 = scmp.eq.s32.totalorder %s30, 3
      %p149 = por %p147, %p148
      %p151 = scmp.ne.s32.totalorder %s136, %s150
      %p152 = scmp.eq.s32.totalorder %s30, 0
      %p153 = por %p151, %p152
      %s155 = sadd.s32 %s154, 1
      %p158 = scmp.eq.s32.totalorder %s24, 3
      %p159 = scmp.ne.s32.totalorder %s154, %s156
      %p160 = scmp.eq.s32.totalorder %s24, 0
      %p161 = por %p159, %p160
      %p162 = scmp.ne.s32.totalorder %s154, %s156
      %p163 = scmp.eq.s32.totalorder %s29, 3
      %p164 = por %p162, %p163
      %p165 = scmp.ne.s32.totalorder %s156, %s157
      %p166 = scmp.eq.s32.totalorder %s29, 0
      %p167 = por %p165, %p166
      %p168 = scmp.ne.s32.totalorder %s156, %s157
      %p169 = scmp.eq.s32.totalorder %s30, 3
      %p170 = por %p168, %p169
      %p172 = scmp.ne.s32.totalorder %s157, %s171
      %p173 = scmp.eq.s32.totalorder %s30, 0
      %p174 = por %p172, %p173
      %s176 = sadd.s32 %s175, 1
      %p179 = scmp.eq.s32.totalorder %s24, 3
      %p180 = scmp.ne.s32.totalorder %s175, %s177
      %p181 = scmp.eq.s32.totalorder %s24, 0
      %p182 = por %p180, %p181
      %p183 = scmp.ne.s32.totalorder %s175, %s177
      %p184 = scmp.eq.s32.totalorder %s29, 3
      %p185 = por %p183, %p184
      %p186 = scmp.ne.s32.totalorder %s177, %s178
      %p187 = scmp.eq.s32.totalorder %s29, 0
      %p188 = por %p186, %p187
      %p189 = scmp.ne.s32.totalorder %s177, %s178
      %p190 = scmp.eq.s32.totalorder %s30, 3
      %p191 = por %p189, %p190
      %p193 = scmp.ne.s32.totalorder %s178, %s192
      %p194 = scmp.eq.s32.totalorder %s30, 0
      %p195 = por %p193, %p194
      %s197 = sadd.s32 %s196, 1
      %p200 = scmp.eq.s32.totalorder %s24, 3
      %p201 = scmp.ne.s32.totalorder %s196, %s198
      %p202 = scmp.eq.s32.totalorder %s24, 0
      %p203 = por %p201, %p202
      %p204 = scmp.ne.s32.totalorder %s196, %s198
      %p205 = scmp.eq.s32.totalorder %s29, 3
      %p206 = por %p204, %p205
      %p207 = scmp.ne.s32.totalorder %s198, %s199
      %p208 = scmp.eq.s32.totalorder %s29, 0
      %p209 = por %p207, %p208
      %p210 = scmp.ne.s32.totalorder %s198, %s199
      %p211 = scmp.eq.s32.totalorder %s30, 3
      %p212 = por %p210, %p211
      %p214 = scmp.ne.s32.totalorder %s199, %s213
      %p215 = scmp.eq.s32.totalorder %s30, 0
      %p216 = por %p214, %p215
      %s218 = sadd.s32 %s217, 1
      %p221 = scmp.eq.s32.totalorder %s24, 3
      %p222 = scmp.ne.s32.totalorder %s217, %s219
      %p223 = scmp.eq.s32.totalorder %s24, 0
      %p224 = por %p222, %p223
      %p225 = scmp.ne.s32.totalorder %s217, %s219
      %p226 = scmp.eq.s32.totalorder %s29, 3
      %p227 = por %p225, %p226
      %p228 = scmp.ne.s32.totalorder %s219, %s220
      %p229 = scmp.eq.s32.totalorder %s29, 0
      %p230 = por %p228, %p229
      %p231 = scmp.ne.s32.totalorder %s219, %s220
      %p232 = scmp.eq.s32.totalorder %s30, 3
      %p233 = por %p231, %p232
      %p235 = scmp.ne.s32.totalorder %s220, %s234
      %p236 = scmp.eq.s32.totalorder %s30, 0
      %p237 = por %p235, %p236
      %s238 = ssub.s32 %s31, %s43
      %s239 = ssub.s32 %s32, %s39
      %s240 = sor.u32 %s238, %s239
      %p241 = scmp.eq.s32.totalorder %s240, 0
      %s243 = sadd.s32 %s242, 1
      %s244 = scalar_select %p241, %s242, %s243
      %p247 = pneg %p241
      %p248 = scmp.eq.s32.totalorder %s24, 3
      %p249 = por %p247, %p248
      %p250 = scmp.ne.s32.totalorder %s242, %s245
      %p251 = scmp.eq.s32.totalorder %s24, 0
      %p252 = por %p250, %p251
      %p253 = scmp.ne.s32.totalorder %s242, %s245
      %p254 = scmp.eq.s32.totalorder %s29, 3
      %p255 = por %p253, %p254
      %p256 = scmp.ne.s32.totalorder %s245, %s246
      %p257 = scmp.eq.s32.totalorder %s29, 0
      %p258 = por %p256, %p257
      %p259 = scmp.ne.s32.totalorder %s245, %s246
      %p260 = scmp.eq.s32.totalorder %s30, 3
      %p261 = por %p259, %p260
      %p263 = scmp.ne.s32.totalorder %s246, %s262
      %p264 = scmp.eq.s32.totalorder %s30, 0
      %p265 = por %p263, %p264
      %s266 = ssub.s32 %s31, %s43
      %s267 = ssub.s32 %s32, %s39
      %s268 = sor.u32 %s266, %s267
      %p269 = scmp.eq.s32.totalorder %s268, 0
      %s271 = sadd.s32 %s270, 1
      %s272 = scalar_select %p269, %s270, %s271
      %p275 = pneg %p269
      %p276 = scmp.eq.s32.totalorder %s24, 3
      %p277 = por %p275, %p276
      %p278 = scmp.ne.s32.totalorder %s270, %s273
      %p279 = scmp.eq.s32.totalorder %s24, 0
      %p280 = por %p278, %p279
      %p281 = scmp.ne.s32.totalorder %s270, %s273
      %p282 = scmp.eq.s32.totalorder %s29, 3
      %p283 = por %p281, %p282
      %p284 = scmp.ne.s32.totalorder %s273, %s274
      %p285 = scmp.eq.s32.totalorder %s29, 0
      %p286 = por %p284, %p285
      %p287 = scmp.ne.s32.totalorder %s273, %s274
      %p288 = scmp.eq.s32.totalorder %s30, 3
      %p289 = por %p287, %p288
      %p291 = scmp.ne.s32.totalorder %s274, %s290
      %p292 = scmp.eq.s32.totalorder %s30, 0
      %p293 = por %p291, %p292
      %p294 = scmp.le.s32.totalorder 1, %s24
      %p295 = scmp.lt.s32.totalorder %s24, 5
      %p296 = pnand %p294, %p295
      %p297 = pneg %p296
      // Predicated region
      $region9: #{tpu_custom_call.1} parent=5 // pred_check
        _
      $region10: #{tpu_custom_call.1} parent=5 // pred_check_branch
        %299 = sbr.rel (%p296) target = $region12
      $region11: #{tpu_custom_call.1} parent=5 // pred_region
        %s300 = ssub.s32 %s24, 1
        // Predicated region
        $region13: #{tpu_custom_call.1} parent=11 // pred_check
          %p301 = pneg %p83
        $region14: #{tpu_custom_call.1} parent=11 // pred_check_branch
          %303 = sbr.rel (%p301) target = $region16
        $region15: #{tpu_custom_call.1} parent=11 // pred_region
          %s305 = ssub.s32 4608, 4608
          %306 = vsyncadd [#allocation3], %s305
          %s307 = sshll.u32 [#allocation2], 4
          %s308 = int_to_ptr.vmem [resolvable:$true] %s307
          %313 = dma.hbm_to_vmem [thread:$0]  %s1, 4608, %s308, [#allocation3], 128, 128, 8
        $region16: #{tpu_custom_call.1} parent=11 // pred_fallthru
          _
        // Predicated region
        $region17: #{tpu_custom_call.1} parent=11 // pred_check
          %p314 = pneg %p104
        $region18: #{tpu_custom_call.1} parent=11 // pred_check_branch
          %316 = sbr.rel (%p314) target = $region20
        $region19: #{tpu_custom_call.1} parent=11 // pred_region
          _
        $region20: #{tpu_custom_call.1} parent=11 // pred_fallthru
          _
        // Predicated region
        $region21: #{tpu_custom_call.1} parent=11 // pred_check
          %p317 = pneg %p125
        $region22: #{tpu_custom_call.1} parent=11 // pred_check_branch
          %319 = sbr.rel (%p317) target = $region24
        $region23: #{tpu_custom_call.1} parent=11 // pred_region
          _
        $region24: #{tpu_custom_call.1} parent=11 // pred_fallthru
          _
        // Predicated region
        $region25: #{tpu_custom_call.1} parent=11 // pred_check
          %p320 = pneg %p146
        $region26: #{tpu_custom_call.1} parent=11 // pred_check_branch
          %322 = sbr.rel (%p320) target = $region28
        $region27: #{tpu_custom_call.1} parent=11 // pred_region
          _
        $region28: #{tpu_custom_call.1} parent=11 // pred_fallthru
          _
        // Predicated region
        $region29: #{tpu_custom_call.1} parent=11 // pred_check
          %p323 = pneg %p167
        $region30: #{tpu_custom_call.1} parent=11 // pred_check_branch
          %325 = sbr.rel (%p323) target = $region32
        $region31: #{tpu_custom_call.1} parent=11 // pred_region
          _
        $region32: #{tpu_custom_call.1} parent=11 // pred_fallthru
          _
        // Predicated region
        $region33: #{tpu_custom_call.1} parent=11 // pred_check
          %p326 = pneg %p188
        $region34: #{tpu_custom_call.1} parent=11 // pred_check_branch
          %328 = sbr.rel (%p326) target = $region36
        $region35: #{tpu_custom_call.1} parent=11 // pred_region
          _
        $region36: #{tpu_custom_call.1} parent=11 // pred_fallthru
          _
        // Predicated region
        $region37: #{tpu_custom_call.1} parent=11 // pred_check
          %p329 = pneg %p209
        $region38: #{tpu_custom_call.1} parent=11 // pred_check_branch
          %331 = sbr.rel (%p329) target = $region40
        $region39: #{tpu_custom_call.1} parent=11 // pred_region
          _
        $region40: #{tpu_custom_call.1} parent=11 // pred_fallthru
          _
        // Predicated region
        $region41: #{tpu_custom_call.1} parent=11 // pred_check
          %p332 = pneg %p230
        $region42: #{tpu_custom_call.1} parent=11 // pred_check_branch
          %334 = sbr.rel (%p332) target = $region44
        $region43: #{tpu_custom_call.1} parent=11 // pred_region
          _
        $region44: #{tpu_custom_call.1} parent=11 // pred_fallthru
          _
      $region12: #{tpu_custom_call.1} parent=5 // pred_fallthru
        _
      %p335 = scmp.lt.s32.totalorder %s24, 4
      // Predicated region
      $region45: #{tpu_custom_call.1} parent=5 // pred_check
        %p336 = pneg %p335
      $region46: #{tpu_custom_call.1} parent=5 // pred_check_branch
        %338 = sbr.rel (%p336) target = $region48
      $region47: #{tpu_custom_call.1} parent=5 // pred_region
        // Predicated region
        $region49: #{tpu_custom_call.1} parent=47 // pred_check
          %p339 = pneg %p56
        $region50: #{tpu_custom_call.1} parent=47 // pred_check_branch
          %341 = sbr.rel (%p339) target = $region52
        $region51: #{tpu_custom_call.1} parent=47 // pred_region
          %p342 = scmp.lt.s32.totalorder %s31, 1
          %s343 = scalar_select %p342, %s31, 1
          %s344 = smul.addr %s343, 100
          %s345 = smul.addr %s344, 4
          %s346 = scalar_lea.vmem %s0, %s345
        $region52: #{tpu_custom_call.1} parent=47 // pred_fallthru
          _
      $region48: #{tpu_custom_call.1} parent=5 // pred_fallthru
        _
      %p347 = scmp.le.s32.totalorder 1, %s24
      %p348 = scmp.lt.s32.totalorder %s24, 5
      %p349 = pnand %p347, %p348
      %p350 = pneg %p349
      // Predicated region
      $region53: #{tpu_custom_call.1} parent=5 // pred_check
        _
      $region54: #{tpu_custom_call.1} parent=5 // pred_check_branch
        %352 = sbr.rel (%p349) target = $region56
      $region55: #{tpu_custom_call.1} parent=5 // pred_region
        %s353 = ssub.s32 %s24, 1
        // Predicated region
        $region57: #{tpu_custom_call.1} parent=55 // pred_check
          %p354 = pneg %p83
        $region58: #{tpu_custom_call.1} parent=55 // pred_check_branch
          %356 = sbr.rel (%p354) target = $region60
        $region59: #{tpu_custom_call.1} parent=55 // pred_region
          %357 = dma.done [#allocation3], 4608
        $region60: #{tpu_custom_call.1} parent=55 // pred_fallthru
          _
        %p358 = scmp.lt.s32.totalorder %s33, 1
        %s359 = scalar_select %p358, %s33, 1
        %s360 = smul.addr %s359, 100
        %s361 = smul.addr %s360, 4
        %s362 = scalar_lea.vmem %s0, %s361
        %p363 = pneg %p62
        %p364 = pneg %p59
        %p365 = pneg %p83
        %p366 = pneg %p80
        %p367 = pneg %p104
        %p368 = pneg %p101
        %p369 = pneg %p125
        %p370 = pneg %p122
        %p371 = pneg %p146
        %p372 = pneg %p143
        %p373 = pneg %p167
        %p374 = pneg %p164
        %p375 = pneg %p188
        %p376 = pneg %p185
        %p377 = pneg %p209
        %p378 = pneg %p206
        %p379 = pneg %p230
        %p380 = pneg %p227
        %p381 = pneg %p258
        %p382 = pneg %p255
        %s383 = sand.u32 %s245, 1
        %s384 = scalar_lea.sflag [#allocation4], %s383
        %s385 = sand.u32 %s245, 1
        %s386 = smul.addr %s385, 64
        %s387 = scalar_lea.vmem [#allocation5], %s386
        %p388 = pneg %p286
        %p389 = pneg %p283
        %s390 = sand.u32 %s273, 1
        %s391 = scalar_lea.sflag [#allocation7], %s390
        %s392 = sand.u32 %s273, 1
        %s393 = smul.addr %s392, 72
        %s394 = scalar_lea.vmem [#allocation6], %s393
        %p395 = scmp.lt.s32.totalorder %s33, 1
        %s396 = scalar_select %p395, %s33, 1
        %s397 = smul.addr %s396, 100
        %s398 = smul.addr %s397, 4
        %s399 = scalar_lea.vmem %s0, %s398
        %s401 = smul.u32 %s34, 8
        %s402 = smul.u32 %s401, 5
        %s403 = smul.addr %s402, 4
        %s404 = scalar_lea.vmem %s399, %s403
        %v405 = vld [vmem:[%s404] sm:$0xf]
        %v406 = vld [vmem:[%s404 + $0x4] sm:$0xf]
        %v407 = vld [vmem:[%s404 + $0x8] sm:$0xf]
        %v408 = vld [vmem:[%s404 + $0xc] sm:$0xf]
        %v409 = vld [vmem:[%s404 + $0x10] sm:$0x1]
        %v410 = vld [vmem:[%s404 + $0x14] sm:$0xf]
        %v411 = vld [vmem:[%s404 + $0x18] sm:$0xf]
        %v412 = vld [vmem:[%s404 + $0x1c] sm:$0xf]
        %v413 = vld [vmem:[%s404 + $0x20] sm:$0xf]
        %v414 = vld [vmem:[%s404 + $0x24] sm:$0x1]
        %v415 = vld [vmem:[%s404 + $0x28] sm:$0xf]
        %v416 = vld [vmem:[%s404 + $0x2c] sm:$0xf]
        %v417 = vld [vmem:[%s404 + $0x30] sm:$0xf]
        %v418 = vld [vmem:[%s404 + $0x34] sm:$0xf]
        %v419 = vld [vmem:[%s404 + $0x38] sm:$0x1]
        %v420 = vld [vmem:[%s404 + $0x3c] sm:$0xf]
        %v421 = vld [vmem:[%s404 + $0x40] sm:$0xf]
        %v422 = vld [vmem:[%s404 + $0x44] sm:$0xf]
        %v423 = vld [vmem:[%s404 + $0x48] sm:$0xf]
        %v424 = vld [vmem:[%s404 + $0x4c] sm:$0x1]
        %v425 = vld [vmem:[%s404 + $0x50] sm:$0xf]
        %v426 = vld [vmem:[%s404 + $0x54] sm:$0xf]
        %v427 = vld [vmem:[%s404 + $0x58] sm:$0xf]
        %v428 = vld [vmem:[%s404 + $0x5c] sm:$0xf]
        %v429 = vld [vmem:[%s404 + $0x60] sm:$0x1]
        %v430 = vld [vmem:[%s404 + $0x64] sm:$0xf]
        %v431 = vld [vmem:[%s404 + $0x68] sm:$0xf]
        %v432 = vld [vmem:[%s404 + $0x6c] sm:$0xf]
        %v433 = vld [vmem:[%s404 + $0x70] sm:$0xf]
        %v434 = vld [vmem:[%s404 + $0x74] sm:$0x1]
        %v435 = vld [vmem:[%s404 + $0x78] sm:$0xf]
        %v436 = vld [vmem:[%s404 + $0x7c] sm:$0xf]
        %v437 = vld [vmem:[%s404 + $0x80] sm:$0xf]
        %v438 = vld [vmem:[%s404 + $0x84] sm:$0xf]
        %v439 = vld [vmem:[%s404 + $0x88] sm:$0x1]
        %v440 = vld [vmem:[%s404 + $0x8c] sm:$0xf]
        %v441 = vld [vmem:[%s404 + $0x90] sm:$0xf]
        %v442 = vld [vmem:[%s404 + $0x94] sm:$0xf]
        %v443 = vld [vmem:[%s404 + $0x98] sm:$0xf]
        %v444 = vld [vmem:[%s404 + $0x9c] sm:$0x1]
        %v445 = vld [vmem:[%s404 + $0xa0] sm:$0xf]
        %v446 = vld [vmem:[%s404 + $0xa4] sm:$0xf]
        %v447 = vld [vmem:[%s404 + $0xa8] sm:$0xf]
        %v448 = vld [vmem:[%s404 + $0xac] sm:$0xf]
        %v449 = vld [vmem:[%s404 + $0xb0] sm:$0x1]
        %v450 = vld [vmem:[%s404 + $0xb4] sm:$0xf]
        %v451 = vld [vmem:[%s404 + $0xb8] sm:$0xf]
        %v452 = vld [vmem:[%s404 + $0xbc] sm:$0xf]
        %v453 = vld [vmem:[%s404 + $0xc0] sm:$0xf]
        %v454 = vld [vmem:[%s404 + $0xc4] sm:$0x1]
        %v455 = vld [vmem:[%s404 + $0xc8] sm:$0xf]
        %v456 = vld [vmem:[%s404 + $0xcc] sm:$0xf]
        %v457 = vld [vmem:[%s404 + $0xd0] sm:$0xf]
        %v458 = vld [vmem:[%s404 + $0xd4] sm:$0xf]
        %v459 = vld [vmem:[%s404 + $0xd8] sm:$0x1]
        %v460 = vld [vmem:[%s404 + $0xdc] sm:$0xf]
        %v461 = vld [vmem:[%s404 + $0xe0] sm:$0xf]
        %v462 = vld [vmem:[%s404 + $0xe4] sm:$0xf]
        %v463 = vld [vmem:[%s404 + $0xe8] sm:$0xf]
        %v464 = vld [vmem:[%s404 + $0xec] sm:$0x1]
        %v465 = vld [vmem:[#allocation2] sm:$0xff]
        %v466 = vld [vmem:[#allocation2 + $0x8] sm:$0xff]
        %v467 = vld [vmem:[#allocation2 + $0x10] sm:$0xff]
        %v468 = vld [vmem:[#allocation2 + $0x18] sm:$0xff]
        %vm469 = vsmask.f32 3328
        %vm470 = vsmask.f32 7440
        %vm471 = vmor %vm469, %vm470
        %v473 = vshrl.u32 %v405, 16
        %v475 = vrot.slane %v473, 4
        %v476 = vshll.u32 %v405, 16
        %v478 = vrot.slane %v476, 5
        %v479 = vor.u32 %v475, %v478
        %v480 = vrot.slane %v479, 4
        %v482 = vshll.u32 %v406, 16
        %v484 = vrot.slane %v482, 5
        %v485 = vsel %vm471, %v480, %v484
        %v486 = vshrl.u32 %v406, 16
        %v488 = vrot.slane %v486, 4
        %v489 = vor.u32 %v488, %v484
        %v490 = vrot.slane %v489, 4
        %v492 = vshll.u32 %v407, 16
        %v494 = vrot.slane %v492, 5
        %v495 = vsel %vm471, %v490, %v494
        %v496 = vshrl.u32 %v407, 16
        %v498 = vrot.slane %v496, 4
        %v499 = vor.u32 %v498, %v494
        %v500 = vrot.slane %v499, 4
        %v502 = vshll.u32 %v408, 16
        %v504 = vrot.slane %v502, 5
        %v505 = vsel %vm471, %v500, %v504
        %v506 = vshrl.u32 %v408, 16
        %v508 = vrot.slane %v506, 4
        %v509 = vor.u32 %v508, %v504
        %v510 = vrot.slane %v509, 4
        %v512 = vshll.u32 %v409, 16
        %v514 = vrot.slane %v512, 5
        %v515 = vsel %vm471, %v510, %v514
        %v517 = vshrl.u32 %v410, 16
        %v519 = vrot.slane %v517, 4
        %v520 = vshll.u32 %v410, 16
        %v522 = vrot.slane %v520, 5
        %v523 = vor.u32 %v519, %v522
        %v524 = vrot.slane %v523, 4
        %v526 = vshll.u32 %v411, 16
        %v528 = vrot.slane %v526, 5
        %v529 = vsel %vm471, %v524, %v528
        %v530 = vshrl.u32 %v411, 16
        %v532 = vrot.slane %v530, 4
        %v533 = vor.u32 %v532, %v528
        %v534 = vrot.slane %v533, 4
        %v536 = vshll.u32 %v412, 16
        %v538 = vrot.slane %v536, 5
        %v539 = vsel %vm471, %v534, %v538
        %v540 = vshrl.u32 %v412, 16
        %v542 = vrot.slane %v540, 4
        %v543 = vor.u32 %v542, %v538
        %v544 = vrot.slane %v543, 4
        %v546 = vshll.u32 %v413, 16
        %v548 = vrot.slane %v546, 5
        %v549 = vsel %vm471, %v544, %v548
        %v550 = vshrl.u32 %v413, 16
        %v552 = vrot.slane %v550, 4
        %v553 = vor.u32 %v552, %v548
        %v554 = vrot.slane %v553, 4
        %v556 = vshll.u32 %v414, 16
        %v558 = vrot.slane %v556, 5
        %v559 = vsel %vm471, %v554, %v558
        %v561 = vshrl.u32 %v415, 16
        %v563 = vrot.slane %v561, 4
        %v564 = vshll.u32 %v415, 16
        %v566 = vrot.slane %v564, 5
        %v567 = vor.u32 %v563, %v566
        %v568 = vrot.slane %v567, 4
        %v570 = vshll.u32 %v416, 16
        %v572 = vrot.slane %v570, 5
        %v573 = vsel %vm471, %v568, %v572
        %v574 = vshrl.u32 %v416, 16
        %v576 = vrot.slane %v574, 4
        %v577 = vor.u32 %v576, %v572
        %v578 = vrot.slane %v577, 4
        %v580 = vshll.u32 %v417, 16
        %v582 = vrot.slane %v580, 5
        %v583 = vsel %vm471, %v578, %v582
        %v584 = vshrl.u32 %v417, 16
        %v586 = vrot.slane %v584, 4
        %v587 = vor.u32 %v586, %v582
        %v588 = vrot.slane %v587, 4
        %v590 = vshll.u32 %v418, 16
        %v592 = vrot.slane %v590, 5
        %v593 = vsel %vm471, %v588, %v592
        %v594 = vshrl.u32 %v418, 16
        %v596 = vrot.slane %v594, 4
        %v597 = vor.u32 %v596, %v592
        %v598 = vrot.slane %v597, 4
        %v600 = vshll.u32 %v419, 16
        %v602 = vrot.slane %v600, 5
        %v603 = vsel %vm471, %v598, %v602
        %v605 = vshrl.u32 %v420, 16
        %v607 = vrot.slane %v605, 4
        %v608 = vshll.u32 %v420, 16
        %v610 = vrot.slane %v608, 5
        %v611 = vor.u32 %v607, %v610
        %v612 = vrot.slane %v611, 4
        %v614 = vshll.u32 %v421, 16
        %v616 = vrot.slane %v614, 5
        %v617 = vsel %vm471, %v612, %v616
        %v618 = vshrl.u32 %v421, 16
        %v620 = vrot.slane %v618, 4
        %v621 = vor.u32 %v620, %v616
        %v622 = vrot.slane %v621, 4
        %v624 = vshll.u32 %v422, 16
        %v626 = vrot.slane %v624, 5
        %v627 = vsel %vm471, %v622, %v626
        %v628 = vshrl.u32 %v422, 16
        %v630 = vrot.slane %v628, 4
        %v631 = vor.u32 %v630, %v626
        %v632 = vrot.slane %v631, 4
        %v634 = vshll.u32 %v423, 16
        %v636 = vrot.slane %v634, 5
        %v637 = vsel %vm471, %v632, %v636
        %v638 = vshrl.u32 %v423, 16
        %v640 = vrot.slane %v638, 4
        %v641 = vor.u32 %v640, %v636
        %v642 = vrot.slane %v641, 4
        %v644 = vshll.u32 %v424, 16
        %v646 = vrot.slane %v644, 5
        %v647 = vsel %vm471, %v642, %v646
        %v649 = vshrl.u32 %v425, 16
        %v651 = vrot.slane %v649, 4
        %v652 = vshll.u32 %v425, 16
        %v654 = vrot.slane %v652, 5
        %v655 = vor.u32 %v651, %v654
        %v656 = vrot.slane %v655, 4
        %v658 = vshll.u32 %v426, 16
        %v660 = vrot.slane %v658, 5
        %v661 = vsel %vm471, %v656, %v660
        %v662 = vshrl.u32 %v426, 16
        %v664 = vrot.slane %v662, 4
        %v665 = vor.u32 %v664, %v660
        %v666 = vrot.slane %v665, 4
        %v668 = vshll.u32 %v427, 16
        %v670 = vrot.slane %v668, 5
        %v671 = vsel %vm471, %v666, %v670
        %v672 = vshrl.u32 %v427, 16
        %v674 = vrot.slane %v672, 4
        %v675 = vor.u32 %v674, %v670
        %v676 = vrot.slane %v675, 4
        %v678 = vshll.u32 %v428, 16
        %v680 = vrot.slane %v678, 5
        %v681 = vsel %vm471, %v676, %v680
        %v682 = vshrl.u32 %v428, 16
        %v684 = vrot.slane %v682, 4
        %v685 = vor.u32 %v684, %v680
        %v686 = vrot.slane %v685, 4
        %v688 = vshll.u32 %v429, 16
        %v690 = vrot.slane %v688, 5
        %v691 = vsel %vm471, %v686, %v690
        %v693 = vshrl.u32 %v430, 16
        %v695 = vrot.slane %v693, 4
        %v696 = vshll.u32 %v430, 16
        %v698 = vrot.slane %v696, 5
        %v699 = vor.u32 %v695, %v698
        %v700 = vrot.slane %v699, 4
        %v702 = vshll.u32 %v431, 16
        %v704 = vrot.slane %v702, 5
        %v705 = vsel %vm471, %v700, %v704
        %v706 = vshrl.u32 %v431, 16
        %v708 = vrot.slane %v706, 4
        %v709 = vor.u32 %v708, %v704
        %v710 = vrot.slane %v709, 4
        %v712 = vshll.u32 %v432, 16
        %v714 = vrot.slane %v712, 5
        %v715 = vsel %vm471, %v710, %v714
        %v716 = vshrl.u32 %v432, 16
        %v718 = vrot.slane %v716, 4
        %v719 = vor.u32 %v718, %v714
        %v720 = vrot.slane %v719, 4
        %v722 = vshll.u32 %v433, 16
        %v724 = vrot.slane %v722, 5
        %v725 = vsel %vm471, %v720, %v724
        %v726 = vshrl.u32 %v433, 16
        %v728 = vrot.slane %v726, 4
        %v729 = vor.u32 %v728, %v724
        %v730 = vrot.slane %v729, 4
        %v732 = vshll.u32 %v434, 16
        %v734 = vrot.slane %v732, 5
        %v735 = vsel %vm471, %v730, %v734
        %v737 = vshrl.u32 %v435, 16
        %v739 = vrot.slane %v737, 4
        %v740 = vshll.u32 %v435, 16
        %v742 = vrot.slane %v740, 5
        %v743 = vor.u32 %v739, %v742
        %v744 = vrot.slane %v743, 4
        %v746 = vshll.u32 %v436, 16
        %v748 = vrot.slane %v746, 5
        %v749 = vsel %vm471, %v744, %v748
        %v750 = vshrl.u32 %v436, 16
        %v752 = vrot.slane %v750, 4
        %v753 = vor.u32 %v752, %v748
        %v754 = vrot.slane %v753, 4
        %v756 = vshll.u32 %v437, 16
        %v758 = vrot.slane %v756, 5
        %v759 = vsel %vm471, %v754, %v758
        %v760 = vshrl.u32 %v437, 16
        %v762 = vrot.slane %v760, 4
        %v763 = vor.u32 %v762, %v758
        %v764 = vrot.slane %v763, 4
        %v766 = vshll.u32 %v438, 16
        %v768 = vrot.slane %v766, 5
        %v769 = vsel %vm471, %v764, %v768
        %v770 = vshrl.u32 %v438, 16
        %v772 = vrot.slane %v770, 4
        %v773 = vor.u32 %v772, %v768
        %v774 = vrot.slane %v773, 4
        %v776 = vshll.u32 %v439, 16
        %v778 = vrot.slane %v776, 5
        %v779 = vsel %vm471, %v774, %v778
        %v781 = vshrl.u32 %v440, 16
        %v783 = vrot.slane %v781, 4
        %v784 = vshll.u32 %v440, 16
        %v786 = vrot.slane %v784, 5
        %v787 = vor.u32 %v783, %v786
        %v788 = vrot.slane %v787, 4
        %v790 = vshll.u32 %v441, 16
        %v792 = vrot.slane %v790, 5
        %v793 = vsel %vm471, %v788, %v792
        %v794 = vshrl.u32 %v441, 16
        %v796 = vrot.slane %v794, 4
        %v797 = vor.u32 %v796, %v792
        %v798 = vrot.slane %v797, 4
        %v800 = vshll.u32 %v442, 16
        %v802 = vrot.slane %v800, 5
        %v803 = vsel %vm471, %v798, %v802
        %v804 = vshrl.u32 %v442, 16
        %v806 = vrot.slane %v804, 4
        %v807 = vor.u32 %v806, %v802
        %v808 = vrot.slane %v807, 4
        %v810 = vshll.u32 %v443, 16
        %v812 = vrot.slane %v810, 5
        %v813 = vsel %vm471, %v808, %v812
        %v814 = vshrl.u32 %v443, 16
        %v816 = vrot.slane %v814, 4
        %v817 = vor.u32 %v816, %v812
        %v818 = vrot.slane %v817, 4
        %v820 = vshll.u32 %v444, 16
        %v822 = vrot.slane %v820, 5
        %v823 = vsel %vm471, %v818, %v822
        %v825 = vshrl.u32 %v445, 16
        %v827 = vrot.slane %v825, 4
        %v828 = vshll.u32 %v445, 16
        %v830 = vrot.slane %v828, 5
        %v831 = vor.u32 %v827, %v830
        %v832 = vrot.slane %v831, 4
        %v834 = vshll.u32 %v446, 16
        %v836 = vrot.slane %v834, 5
        %v837 = vsel %vm471, %v832, %v836
        %v838 = vshrl.u32 %v446, 16
        %v840 = vrot.slane %v838, 4
        %v841 = vor.u32 %v840, %v836
        %v842 = vrot.slane %v841, 4
        %v844 = vshll.u32 %v447, 16
        %v846 = vrot.slane %v844, 5
        %v847 = vsel %vm471, %v842, %v846
        %v848 = vshrl.u32 %v447, 16
        %v850 = vrot.slane %v848, 4
        %v851 = vor.u32 %v850, %v846
        %v852 = vrot.slane %v851, 4
        %v854 = vshll.u32 %v448, 16
        %v856 = vrot.slane %v854, 5
        %v857 = vsel %vm471, %v852, %v856
        %v858 = vshrl.u32 %v448, 16
        %v860 = vrot.slane %v858, 4
        %v861 = vor.u32 %v860, %v856
        %v862 = vrot.slane %v861, 4
        %v864 = vshll.u32 %v449, 16
        %v866 = vrot.slane %v864, 5
        %v867 = vsel %vm471, %v862, %v866
        %v869 = vshrl.u32 %v450, 16
        %v871 = vrot.slane %v869, 4
        %v872 = vshll.u32 %v450, 16
        %v874 = vrot.slane %v872, 5
        %v875 = vor.u32 %v871, %v874
        %v876 = vrot.slane %v875, 4
        %v878 = vshll.u32 %v451, 16
        %v880 = vrot.slane %v878, 5
        %v881 = vsel %vm471, %v876, %v880
        %v882 = vshrl.u32 %v451, 16
        %v884 = vrot.slane %v882, 4
        %v885 = vor.u32 %v884, %v880
        %v886 = vrot.slane %v885, 4
        %v888 = vshll.u32 %v452, 16
        %v890 = vrot.slane %v888, 5
        %v891 = vsel %vm471, %v886, %v890
        %v892 = vshrl.u32 %v452, 16
        %v894 = vrot.slane %v892, 4
        %v895 = vor.u32 %v894, %v890
        %v896 = vrot.slane %v895, 4
        %v898 = vshll.u32 %v453, 16
        %v900 = vrot.slane %v898, 5
        %v901 = vsel %vm471, %v896, %v900
        %v902 = vshrl.u32 %v453, 16
        %v904 = vrot.slane %v902, 4
        %v905 = vor.u32 %v904, %v900
        %v906 = vrot.slane %v905, 4
        %v908 = vshll.u32 %v454, 16
        %v910 = vrot.slane %v908, 5
        %v911 = vsel %vm471, %v906, %v910
        %s912 = scalar_lea.vmem [#allocation2], 32
        %v913 = vld [vmem:[%s912] sm:$0xff]
        %v914 = vld [vmem:[%s912 + $0x8] sm:$0xff]
        %v915 = vld [vmem:[%s912 + $0x10] sm:$0xff]
        %v916 = vld [vmem:[%s912 + $0x18] sm:$0xff]
        %v917 = vunpack.c.l.b16 %v485
        %v918 = vunpack.c.l.b16 %v495
        %v919 = vunpack.c.l.b16 %v505
        %v920 = vunpack.c.l.b16 %v515
        %v921 = vunpack.c.l.b16 %v529
        %v922 = vunpack.c.l.b16 %v539
        %v923 = vunpack.c.l.b16 %v549
        %v924 = vunpack.c.l.b16 %v559
        %v925 = vunpack.c.l.b16 %v573
        %v926 = vunpack.c.l.b16 %v583
        %v927 = vunpack.c.l.b16 %v593
        %v928 = vunpack.c.l.b16 %v603
        %v929 = vunpack.c.l.b16 %v617
        %v930 = vunpack.c.l.b16 %v627
        %v931 = vunpack.c.l.b16 %v637
        %v932 = vunpack.c.l.b16 %v647
        %v933 = vunpack.c.l.b16 %v661
        %v934 = vunpack.c.l.b16 %v671
        %v935 = vunpack.c.l.b16 %v681
        %v936 = vunpack.c.l.b16 %v691
        %v937 = vunpack.c.l.b16 %v705
        %v938 = vunpack.c.l.b16 %v715
        %v939 = vunpack.c.l.b16 %v725
        %v940 = vunpack.c.l.b16 %v735
        %v941 = vunpack.c.l.b16 %v749
        %v942 = vunpack.c.l.b16 %v759
        %v943 = vunpack.c.l.b16 %v769
        %v944 = vunpack.c.l.b16 %v779
        %v945 = vunpack.c.l.b16 %v793
        %v946 = vunpack.c.l.b16 %v803
        %v947 = vunpack.c.l.b16 %v813
        %v948 = vunpack.c.l.b16 %v823
        %v949 = vunpack.c.l.b16 %v837
        %v950 = vunpack.c.l.b16 %v847
        %v951 = vunpack.c.l.b16 %v857
        %v952 = vunpack.c.l.b16 %v867
        %v953 = vunpack.c.l.b16 %v881
        %v954 = vunpack.c.l.b16 %v891
        %v955 = vunpack.c.l.b16 %v901
        %v956 = vunpack.c.l.b16 %v911
        %v957 = vpack.c.b16 %v918, %v917
        %v958 = vpack.c.b16 %v920, %v919
        %v959 = vpack.c.b16 %v922, %v921
        %v960 = vpack.c.b16 %v924, %v923
        %v961 = vpack.c.b16 %v926, %v925
        %v962 = vpack.c.b16 %v928, %v927
        %v963 = vpack.c.b16 %v930, %v929
        %v964 = vpack.c.b16 %v932, %v931
        %v965 = vpack.c.b16 %v934, %v933
        %v966 = vpack.c.b16 %v936, %v935
        %v967 = vpack.c.b16 %v938, %v937
        %v968 = vpack.c.b16 %v940, %v939
        %v969 = vpack.c.b16 %v942, %v941
        %v970 = vpack.c.b16 %v944, %v943
        %v971 = vpack.c.b16 %v946, %v945
        %v972 = vpack.c.b16 %v948, %v947
        %v973 = vpack.c.b16 %v950, %v949
        %v974 = vpack.c.b16 %v952, %v951
        %v975 = vpack.c.b16 %v954, %v953
        %v976 = vpack.c.b16 %v956, %v955
        %v981 = vunpack.c.l.b16 %v913
        %v982 = vunpack.c.h.b16 %v913
        %v983 = vunpack.c.l.b16 %v914
        %v984 = vunpack.c.h.b16 %v914
        %v985 = vunpack.c.l.b16 %v915
        %v986 = vunpack.c.h.b16 %v915
        %v987 = vunpack.c.l.b16 %v916
        %v988 = vunpack.c.h.b16 %v916
        %v989 = vpack.c.b16 %v983, %v981
        %v990 = vpack.c.b16 %v984, %v982
        %v991 = vpack.c.b16 %v987, %v985
        %v992 = vpack.c.b16 %v988, %v986
        %vm997 = vcmask 261120
        %v999 = vsel %vm997, %v957, 0
        %v1002 = vsel %vm997, %v958, 0
        %v1005 = vsel %vm997, %v959, 0
        %v1008 = vsel %vm997, %v960, 0
        %v1011 = vsel %vm997, %v961, 0
        %v1014 = vsel %vm997, %v962, 0
        %v1017 = vsel %vm997, %v963, 0
        %v1020 = vsel %vm997, %v964, 0
        %v1023 = vsel %vm997, %v965, 0
        %v1026 = vsel %vm997, %v966, 0
        %v1029 = vsel %vm997, %v967, 0
        %v1032 = vsel %vm997, %v968, 0
        %v1035 = vsel %vm997, %v969, 0
        %v1038 = vsel %vm997, %v970, 0
        %v1041 = vsel %vm997, %v971, 0
        %v1044 = vsel %vm997, %v972, 0
        %v1047 = vsel %vm997, %v973, 0
        %v1050 = vsel %vm997, %v974, 0
        %v1053 = vsel %vm997, %v975, 0
        %v1056 = vsel %vm997, %v976, 0
        %1058 = vmatprep.subr.bf16.mxu0 0
        %1059 = vmatpush1.bf16.msra.mxu0 0
        %1060 = vmatprep.subr.bf16.mxu0 0
        %1061 = vmatpush1.bf16.msra.mxu0 0
        %1062 = vmatprep.subr.bf16.mxu0 0
        %1063 = vmatpush1.bf16.msra.mxu0 0
        %1064 = vmatprep.subr.bf16.mxu0 0
        %1065 = vmatpush1.bf16.msra.mxu0 0
        %1066 = vmatprep.subr.bf16.mxu0 0
        %1067 = vmatpush1.bf16.msra.mxu0 0
        %1068 = vmatprep.subr.bf16.mxu0 0
        %1069 = vmatpush1.bf16.msra.mxu0 0
        %1070 = vmatprep.subr.bf16.mxu0 %v992
        %1071 = vmatpush1.bf16.msra.mxu0 %v991
        %1072 = vmatprep.subr.bf16.mxu0 %v990
        %1073 = vmatpush1.bf16.msra.mxu0 %v989
        %1074 = vmatprep.subr.bf16.mxu0 0
        %1075 = vmatpush2.bf16.msra.mxu0 0
        %1076 = vmatprep.subr.bf16.mxu0 0
        %1077 = vmatpush2.bf16.msra.mxu0 0
        %1078 = vmatprep.subr.bf16.mxu0 0
        %1079 = vmatpush2.bf16.msra.mxu0 0
        %1080 = vmatprep.subr.bf16.mxu0 0
        %1081 = vmatpush2.bf16.msra.mxu0 0
        %1082 = vmatprep.subr.bf16.mxu0 0
        %1083 = vmatpush2.bf16.msra.mxu0 0
        %1084 = vmatprep.subr.bf16.mxu0 0
        %1085 = vmatpush2.bf16.msra.mxu0 0
        %1086 = vmatprep.subr.bf16.mxu0 0
        %1087 = vmatpush2.bf16.msra.mxu0 0
        %1088 = vmatprep.subr.bf16.mxu0 0
        %1089 = vmatpush2.bf16.msra.mxu0 0
        %1090 = vmatprep.mubr.bf16.mxu0 0
        %1091 = vmatmul.mubr.bf16.gmra.mxu0 %v999
        %v1092 = vpop.f32.mrf.mxu0
        %v1093 = vadd.f32 0.0, %v1092
        %v1094 = vpop.f32.mrf.mxu0
        %v1095 = vadd.f32 0.0, %v1094
        %v1096 = vpop.f32.mrf.mxu0
        %v1097 = vadd.f32 0.0, %v1096
        %v1098 = vpop.f32.mrf.mxu0
        %v1099 = vadd.f32 0.0, %v1098
        %1100 = vmatprep.mubr.bf16.mxu0 0
        %1101 = vmatmul.mubr.bf16.gmra.mxu0 %v1002
        %v1102 = vpop.f32.mrf.mxu0
        %v1103 = vadd.f32 0.0, %v1102
        %v1104 = vpop.f32.mrf.mxu0
        %v1105 = vadd.f32 0.0, %v1104
        %v1106 = vpop.f32.mrf.mxu0
        %v1107 = vpop.f32.mrf.mxu0
        %1108 = vmatprep.mubr.bf16.mxu0 0
        %1109 = vmatmul.mubr.bf16.gmra.mxu0 %v1005
        %v1110 = vpop.f32.mrf.mxu0
        %v1111 = vadd.f32 0.0, %v1110
        %v1112 = vpop.f32.mrf.mxu0
        %v1113 = vadd.f32 0.0, %v1112
        %v1114 = vpop.f32.mrf.mxu0
        %v1115 = vadd.f32 0.0, %v1114
        %v1116 = vpop.f32.mrf.mxu0
        %v1117 = vadd.f32 0.0, %v1116
        %1118 = vmatprep.mubr.bf16.mxu0 0
        %1119 = vmatmul.mubr.bf16.gmra.mxu0 %v1008
        %v1120 = vpop.f32.mrf.mxu0
        %v1121 = vadd.f32 0.0, %v1120
        %v1122 = vpop.f32.mrf.mxu0
        %v1123 = vadd.f32 0.0, %v1122
        %v1124 = vpop.f32.mrf.mxu0
        %v1125 = vpop.f32.mrf.mxu0
        %1126 = vmatprep.mubr.bf16.mxu0 0
        %1127 = vmatmul.mubr.bf16.gmra.mxu0 %v1011
        %v1128 = vpop.f32.mrf.mxu0
        %v1129 = vadd.f32 0.0, %v1128
        %v1130 = vpop.f32.mrf.mxu0
        %v1131 = vadd.f32 0.0, %v1130
        %v1132 = vpop.f32.mrf.mxu0
        %v1133 = vadd.f32 0.0, %v1132
        %v1134 = vpop.f32.mrf.mxu0
        %v1135 = vadd.f32 0.0, %v1134
        %1136 = vmatprep.mubr.bf16.mxu0 0
        %1137 = vmatmul.mubr.bf16.gmra.mxu0 %v1014
        %v1138 = vpop.f32.mrf.mxu0
        %v1139 = vadd.f32 0.0, %v1138
        %v1140 = vpop.f32.mrf.mxu0
        %v1141 = vadd.f32 0.0, %v1140
        %v1142 = vpop.f32.mrf.mxu0
        %v1143 = vpop.f32.mrf.mxu0
        %1144 = vmatprep.mubr.bf16.mxu0 0
        %1145 = vmatmul.mubr.bf16.gmra.mxu0 %v1017
        %v1146 = vpop.f32.mrf.mxu0
        %v1147 = vadd.f32 0.0, %v1146
        %v1148 = vpop.f32.mrf.mxu0
        %v1149 = vadd.f32 0.0, %v1148
        %v1150 = vpop.f32.mrf.mxu0
        %v1151 = vadd.f32 0.0, %v1150
        %v1152 = vpop.f32.mrf.mxu0
        %v1153 = vadd.f32 0.0, %v1152
        %1154 = vmatprep.mubr.bf16.mxu0 0
        %1155 = vmatmul.mubr.bf16.gmra.mxu0 %v1020
        %v1156 = vpop.f32.mrf.mxu0
        %v1157 = vadd.f32 0.0, %v1156
        %v1158 = vpop.f32.mrf.mxu0
        %v1159 = vadd.f32 0.0, %v1158
        %v1160 = vpop.f32.mrf.mxu0
        %v1161 = vpop.f32.mrf.mxu0
        %1162 = vmatprep.mubr.bf16.mxu0 0
        %1163 = vmatmul.mubr.bf16.gmra.mxu0 %v1023
        %v1164 = vpop.f32.mrf.mxu0
        %v1165 = vadd.f32 0.0, %v1164
        %v1166 = vpop.f32.mrf.mxu0
        %v1167 = vadd.f32 0.0, %v1166
        %v1168 = vpop.f32.mrf.mxu0
        %v1169 = vadd.f32 0.0, %v1168
        %v1170 = vpop.f32.mrf.mxu0
        %v1171 = vadd.f32 0.0, %v1170
        %1172 = vmatprep.mubr.bf16.mxu0 0
        %1173 = vmatmul.mubr.bf16.gmra.mxu0 %v1026
        %v1174 = vpop.f32.mrf.mxu0
        %v1175 = vadd.f32 0.0, %v1174
        %v1176 = vpop.f32.mrf.mxu0
        %v1177 = vadd.f32 0.0, %v1176
        %v1178 = vpop.f32.mrf.mxu0
        %v1179 = vpop.f32.mrf.mxu0
        %1180 = vmatprep.mubr.bf16.mxu0 0
        %1181 = vmatmul.mubr.bf16.gmra.mxu0 %v1029
        %v1182 = vpop.f32.mrf.mxu0
        %v1183 = vadd.f32 0.0, %v1182
        %v1184 = vpop.f32.mrf.mxu0
        %v1185 = vadd.f32 0.0, %v1184
        %v1186 = vpop.f32.mrf.mxu0
        %v1187 = vadd.f32 0.0, %v1186
        %v1188 = vpop.f32.mrf.mxu0
        %v1189 = vadd.f32 0.0, %v1188
        %1190 = vmatprep.mubr.bf16.mxu0 0
        %1191 = vmatmul.mubr.bf16.gmra.mxu0 %v1032
        %v1192 = vpop.f32.mrf.mxu0
        %v1193 = vadd.f32 0.0, %v1192
        %v1194 = vpop.f32.mrf.mxu0
        %v1195 = vadd.f32 0.0, %v1194
        %v1196 = vpop.f32.mrf.mxu0
        %v1197 = vpop.f32.mrf.mxu0
        %1198 = vmatprep.mubr.bf16.mxu0 0
        %1199 = vmatmul.mubr.bf16.gmra.mxu0 %v1035
        %v1200 = vpop.f32.mrf.mxu0
        %v1201 = vadd.f32 0.0, %v1200
        %v1202 = vpop.f32.mrf.mxu0
        %v1203 = vadd.f32 0.0, %v1202
        %v1204 = vpop.f32.mrf.mxu0
        %v1205 = vadd.f32 0.0, %v1204
        %v1206 = vpop.f32.mrf.mxu0
        %v1207 = vadd.f32 0.0, %v1206
        %1208 = vmatprep.mubr.bf16.mxu0 0
        %1209 = vmatmul.mubr.bf16.gmra.mxu0 %v1038
        %v1210 = vpop.f32.mrf.mxu0
        %v1211 = vadd.f32 0.0, %v1210
        %v1212 = vpop.f32.mrf.mxu0
        %v1213 = vadd.f32 0.0, %v1212
        %v1214 = vpop.f32.mrf.mxu0
        %v1215 = vpop.f32.mrf.mxu0
        %1216 = vmatprep.mubr.bf16.mxu0 0
        %1217 = vmatmul.mubr.bf16.gmra.mxu0 %v1041
        %v1218 = vpop.f32.mrf.mxu0
        %v1219 = vadd.f32 0.0, %v1218
        %v1220 = vpop.f32.mrf.mxu0
        %v1221 = vadd.f32 0.0, %v1220
        %v1222 = vpop.f32.mrf.mxu0
        %v1223 = vadd.f32 0.0, %v1222
        %v1224 = vpop.f32.mrf.mxu0
        %v1225 = vadd.f32 0.0, %v1224
        %1226 = vmatprep.mubr.bf16.mxu0 0
        %1227 = vmatmul.mubr.bf16.gmra.mxu0 %v1044
        %v1228 = vpop.f32.mrf.mxu0
        %v1229 = vadd.f32 0.0, %v1228
        %v1230 = vpop.f32.mrf.mxu0
        %v1231 = vadd.f32 0.0, %v1230
        %v1232 = vpop.f32.mrf.mxu0
        %v1233 = vpop.f32.mrf.mxu0
        %1234 = vmatprep.mubr.bf16.mxu0 0
        %1235 = vmatmul.mubr.bf16.gmra.mxu0 %v1047
        %v1236 = vpop.f32.mrf.mxu0
        %v1237 = vadd.f32 0.0, %v1236
        %v1238 = vpop.f32.mrf.mxu0
        %v1239 = vadd.f32 0.0, %v1238
        %v1240 = vpop.f32.mrf.mxu0
        %v1241 = vadd.f32 0.0, %v1240
        %v1242 = vpop.f32.mrf.mxu0
        %v1243 = vadd.f32 0.0, %v1242
        %1244 = vmatprep.mubr.bf16.mxu0 0
        %1245 = vmatmul.mubr.bf16.gmra.mxu0 %v1050
        %v1246 = vpop.f32.mrf.mxu0
        %v1247 = vadd.f32 0.0, %v1246
        %v1248 = vpop.f32.mrf.mxu0
        %v1249 = vadd.f32 0.0, %v1248
        %v1250 = vpop.f32.mrf.mxu0
        %v1251 = vpop.f32.mrf.mxu0
        %1252 = vmatprep.mubr.bf16.mxu0 0
        %1253 = vmatmul.mubr.bf16.gmra.mxu0 %v1053
        %v1254 = vpop.f32.mrf.mxu0
        %v1255 = vadd.f32 0.0, %v1254
        %v1256 = vpop.f32.mrf.mxu0
        %v1257 = vadd.f32 0.0, %v1256
        %v1258 = vpop.f32.mrf.mxu0
        %v1259 = vadd.f32 0.0, %v1258
        %v1260 = vpop.f32.mrf.mxu0
        %v1261 = vadd.f32 0.0, %v1260
        %1262 = vmatprep.mubr.bf16.mxu0 0
        %1263 = vmatmul.mubr.bf16.gmra.mxu0 %v1056
        %v1264 = vpop.f32.mrf.mxu0
        %v1265 = vadd.f32 0.0, %v1264
        %v1266 = vpop.f32.mrf.mxu0
        %v1267 = vadd.f32 0.0, %v1266
        %v1268 = vpop.f32.mrf.mxu0
        %v1269 = vpop.f32.mrf.mxu0
        %1270 = vdwg.mxu0
        %v1311 = vunpack.c.l.b16 %v405
        %v1312 = vunpack.c.l.b16 %v406
        %v1313 = vunpack.c.l.b16 %v407
        %v1314 = vunpack.c.l.b16 %v408
        %v1315 = vunpack.c.l.b16 %v410
        %v1316 = vunpack.c.l.b16 %v411
        %v1317 = vunpack.c.l.b16 %v412
        %v1318 = vunpack.c.l.b16 %v413
        %v1319 = vunpack.c.l.b16 %v415
        %v1320 = vunpack.c.l.b16 %v416
        %v1321 = vunpack.c.l.b16 %v417
        %v1322 = vunpack.c.l.b16 %v418
        %v1323 = vunpack.c.l.b16 %v420
        %v1324 = vunpack.c.l.b16 %v421
        %v1325 = vunpack.c.l.b16 %v422
        %v1326 = vunpack.c.l.b16 %v423
        %v1327 = vunpack.c.l.b16 %v425
        %v1328 = vunpack.c.l.b16 %v426
        %v1329 = vunpack.c.l.b16 %v427
        %v1330 = vunpack.c.l.b16 %v428
        %v1331 = vunpack.c.l.b16 %v430
        %v1332 = vunpack.c.l.b16 %v431
        %v1333 = vunpack.c.l.b16 %v432
        %v1334 = vunpack.c.l.b16 %v433
        %v1335 = vunpack.c.l.b16 %v435
        %v1336 = vunpack.c.l.b16 %v436
        %v1337 = vunpack.c.l.b16 %v437
        %v1338 = vunpack.c.l.b16 %v438
        %v1339 = vunpack.c.l.b16 %v440
        %v1340 = vunpack.c.l.b16 %v441
        %v1341 = vunpack.c.l.b16 %v442
        %v1342 = vunpack.c.l.b16 %v443
        %v1343 = vunpack.c.l.b16 %v445
        %v1344 = vunpack.c.l.b16 %v446
        %v1345 = vunpack.c.l.b16 %v447
        %v1346 = vunpack.c.l.b16 %v448
        %v1347 = vunpack.c.l.b16 %v450
        %v1348 = vunpack.c.l.b16 %v451
        %v1349 = vunpack.c.l.b16 %v452
        %v1350 = vunpack.c.l.b16 %v453
        %v1351 = vpack.c.b16 %v1312, %v1311
        %v1352 = vpack.c.b16 %v1314, %v1313
        %v1353 = vpack.c.b16 %v1316, %v1315
        %v1354 = vpack.c.b16 %v1318, %v1317
        %v1355 = vpack.c.b16 %v1320, %v1319
        %v1356 = vpack.c.b16 %v1322, %v1321
        %v1357 = vpack.c.b16 %v1324, %v1323
        %v1358 = vpack.c.b16 %v1326, %v1325
        %v1359 = vpack.c.b16 %v1328, %v1327
        %v1360 = vpack.c.b16 %v1330, %v1329
        %v1361 = vpack.c.b16 %v1332, %v1331
        %v1362 = vpack.c.b16 %v1334, %v1333
        %v1363 = vpack.c.b16 %v1336, %v1335
        %v1364 = vpack.c.b16 %v1338, %v1337
        %v1365 = vpack.c.b16 %v1340, %v1339
        %v1366 = vpack.c.b16 %v1342, %v1341
        %v1367 = vpack.c.b16 %v1344, %v1343
        %v1368 = vpack.c.b16 %v1346, %v1345
        %v1369 = vpack.c.b16 %v1348, %v1347
        %v1370 = vpack.c.b16 %v1350, %v1349
        %v1375 = vunpack.c.l.b16 %v465
        %v1376 = vunpack.c.h.b16 %v465
        %v1377 = vunpack.c.l.b16 %v466
        %v1378 = vunpack.c.h.b16 %v466
        %v1379 = vunpack.c.l.b16 %v467
        %v1380 = vunpack.c.h.b16 %v467
        %v1381 = vunpack.c.l.b16 %v468
        %v1382 = vunpack.c.h.b16 %v468
        %v1383 = vpack.c.b16 %v1377, %v1375
        %v1384 = vpack.c.b16 %v1378, %v1376
        %v1385 = vpack.c.b16 %v1381, %v1379
        %v1386 = vpack.c.b16 %v1382, %v1380
        %v1392 = vsel %vm997, %v1351, 0
        %v1395 = vsel %vm997, %v1352, 0
        %v1398 = vsel %vm997, %v1353, 0
        %v1401 = vsel %vm997, %v1354, 0
        %v1404 = vsel %vm997, %v1355, 0
        %v1407 = vsel %vm997, %v1356, 0
        %v1410 = vsel %vm997, %v1357, 0
        %v1413 = vsel %vm997, %v1358, 0
        %v1416 = vsel %vm997, %v1359, 0
        %v1419 = vsel %vm997, %v1360, 0
        %v1422 = vsel %vm997, %v1361, 0
        %v1425 = vsel %vm997, %v1362, 0
        %v1428 = vsel %vm997, %v1363, 0
        %v1431 = vsel %vm997, %v1364, 0
        %v1434 = vsel %vm997, %v1365, 0
        %v1437 = vsel %vm997, %v1366, 0
        %v1440 = vsel %vm997, %v1367, 0
        %v1443 = vsel %vm997, %v1368, 0
        %v1446 = vsel %vm997, %v1369, 0
        %v1449 = vsel %vm997, %v1370, 0
        %1451 = vmatprep.subr.bf16.mxu0 0
        %1452 = vmatpush1.bf16.msra.mxu0 0
        %1453 = vmatprep.subr.bf16.mxu0 0
        %1454 = vmatpush1.bf16.msra.mxu0 0
        %1455 = vmatprep.subr.bf16.mxu0 0
        %1456 = vmatpush1.bf16.msra.mxu0 0
        %1457 = vmatprep.subr.bf16.mxu0 0
        %1458 = vmatpush1.bf16.msra.mxu0 0
        %1459 = vmatprep.subr.bf16.mxu0 0
        %1460 = vmatpush1.bf16.msra.mxu0 0
        %1461 = vmatprep.subr.bf16.mxu0 0
        %1462 = vmatpush1.bf16.msra.mxu0 0
        %1463 = vmatprep.subr.bf16.mxu0 %v1386
        %1464 = vmatpush1.bf16.msra.mxu0 %v1385
        %1465 = vmatprep.subr.bf16.mxu0 %v1384
        %1466 = vmatpush1.bf16.msra.mxu0 %v1383
        %1467 = vmatprep.subr.bf16.mxu0 0
        %1468 = vmatpush2.bf16.msra.mxu0 0
        %1469 = vmatprep.subr.bf16.mxu0 0
        %1470 = vmatpush2.bf16.msra.mxu0 0
        %1471 = vmatprep.subr.bf16.mxu0 0
        %1472 = vmatpush2.bf16.msra.mxu0 0
        %1473 = vmatprep.subr.bf16.mxu0 0
        %1474 = vmatpush2.bf16.msra.mxu0 0
        %1475 = vmatprep.subr.bf16.mxu0 0
        %1476 = vmatpush2.bf16.msra.mxu0 0
        %1477 = vmatprep.subr.bf16.mxu0 0
        %1478 = vmatpush2.bf16.msra.mxu0 0
        %1479 = vmatprep.subr.bf16.mxu0 0
        %1480 = vmatpush2.bf16.msra.mxu0 0
        %1481 = vmatprep.subr.bf16.mxu0 0
        %1482 = vmatpush2.bf16.msra.mxu0 0
        %1483 = vmatprep.mubr.bf16.mxu0 0
        %1484 = vmatmul.mubr.bf16.gmra.mxu0 %v1392
        %v1485 = vpop.f32.mrf.mxu0
        %v1486 = vadd.f32 %v1093, %v1485
        %v1487 = vpop.f32.mrf.mxu0
        %v1488 = vadd.f32 %v1095, %v1487
        %v1489 = vpop.f32.mrf.mxu0
        %v1490 = vadd.f32 %v1097, %v1489
        %v1491 = vpop.f32.mrf.mxu0
        %v1492 = vadd.f32 %v1099, %v1491
        %1493 = vmatprep.mubr.bf16.mxu0 0
        %1494 = vmatmul.mubr.bf16.gmra.mxu0 %v1395
        %v1495 = vpop.f32.mrf.mxu0
        %v1496 = vadd.f32 %v1103, %v1495
        %v1497 = vpop.f32.mrf.mxu0
        %v1498 = vadd.f32 %v1105, %v1497
        %v1499 = vpop.f32.mrf.mxu0
        %v1500 = vpop.f32.mrf.mxu0
        %1501 = vmatprep.mubr.bf16.mxu0 0
        %1502 = vmatmul.mubr.bf16.gmra.mxu0 %v1398
        %v1503 = vpop.f32.mrf.mxu0
        %v1504 = vadd.f32 %v1111, %v1503
        %v1505 = vpop.f32.mrf.mxu0
        %v1506 = vadd.f32 %v1113, %v1505
        %v1507 = vpop.f32.mrf.mxu0
        %v1508 = vadd.f32 %v1115, %v1507
        %v1509 = vpop.f32.mrf.mxu0
        %v1510 = vadd.f32 %v1117, %v1509
        %1511 = vmatprep.mubr.bf16.mxu0 0
        %1512 = vmatmul.mubr.bf16.gmra.mxu0 %v1401
        %v1513 = vpop.f32.mrf.mxu0
        %v1514 = vadd.f32 %v1121, %v1513
        %v1515 = vpop.f32.mrf.mxu0
        %v1516 = vadd.f32 %v1123, %v1515
        %v1517 = vpop.f32.mrf.mxu0
        %v1518 = vpop.f32.mrf.mxu0
        %1519 = vmatprep.mubr.bf16.mxu0 0
        %1520 = vmatmul.mubr.bf16.gmra.mxu0 %v1404
        %v1521 = vpop.f32.mrf.mxu0
        %v1522 = vadd.f32 %v1129, %v1521
        %v1523 = vpop.f32.mrf.mxu0
        %v1524 = vadd.f32 %v1131, %v1523
        %v1525 = vpop.f32.mrf.mxu0
        %v1526 = vadd.f32 %v1133, %v1525
        %v1527 = vpop.f32.mrf.mxu0
        %v1528 = vadd.f32 %v1135, %v1527
        %1529 = vmatprep.mubr.bf16.mxu0 0
        %1530 = vmatmul.mubr.bf16.gmra.mxu0 %v1407
        %v1531 = vpop.f32.mrf.mxu0
        %v1532 = vadd.f32 %v1139, %v1531
        %v1533 = vpop.f32.mrf.mxu0
        %v1534 = vadd.f32 %v1141, %v1533
        %v1535 = vpop.f32.mrf.mxu0
        %v1536 = vpop.f32.mrf.mxu0
        %1537 = vmatprep.mubr.bf16.mxu0 0
        %1538 = vmatmul.mubr.bf16.gmra.mxu0 %v1410
        %v1539 = vpop.f32.mrf.mxu0
        %v1540 = vadd.f32 %v1147, %v1539
        %v1541 = vpop.f32.mrf.mxu0
        %v1542 = vadd.f32 %v1149, %v1541
        %v1543 = vpop.f32.mrf.mxu0
        %v1544 = vadd.f32 %v1151, %v1543
        %v1545 = vpop.f32.mrf.mxu0
        %v1546 = vadd.f32 %v1153, %v1545
        %1547 = vmatprep.mubr.bf16.mxu0 0
        %1548 = vmatmul.mubr.bf16.gmra.mxu0 %v1413
        %v1549 = vpop.f32.mrf.mxu0
        %v1550 = vadd.f32 %v1157, %v1549
        %v1551 = vpop.f32.mrf.mxu0
        %v1552 = vadd.f32 %v1159, %v1551
        %v1553 = vpop.f32.mrf.mxu0
        %v1554 = vpop.f32.mrf.mxu0
        %1555 = vmatprep.mubr.bf16.mxu0 0
        %1556 = vmatmul.mubr.bf16.gmra.mxu0 %v1416
        %v1557 = vpop.f32.mrf.mxu0
        %v1558 = vadd.f32 %v1165, %v1557
        %v1559 = vpop.f32.mrf.mxu0
        %v1560 = vadd.f32 %v1167, %v1559
        %v1561 = vpop.f32.mrf.mxu0
        %v1562 = vadd.f32 %v1169, %v1561
        %v1563 = vpop.f32.mrf.mxu0
        %v1564 = vadd.f32 %v1171, %v1563
        %1565 = vmatprep.mubr.bf16.mxu0 0
        %1566 = vmatmul.mubr.bf16.gmra.mxu0 %v1419
        %v1567 = vpop.f32.mrf.mxu0
        %v1568 = vadd.f32 %v1175, %v1567
        %v1569 = vpop.f32.mrf.mxu0
        %v1570 = vadd.f32 %v1177, %v1569
        %v1571 = vpop.f32.mrf.mxu0
        %v1572 = vpop.f32.mrf.mxu0
        %1573 = vmatprep.mubr.bf16.mxu0 0
        %1574 = vmatmul.mubr.bf16.gmra.mxu0 %v1422
        %v1575 = vpop.f32.mrf.mxu0
        %v1576 = vadd.f32 %v1183, %v1575
        %v1577 = vpop.f32.mrf.mxu0
        %v1578 = vadd.f32 %v1185, %v1577
        %v1579 = vpop.f32.mrf.mxu0
        %v1580 = vadd.f32 %v1187, %v1579
        %v1581 = vpop.f32.mrf.mxu0
        %v1582 = vadd.f32 %v1189, %v1581
        %1583 = vmatprep.mubr.bf16.mxu0 0
        %1584 = vmatmul.mubr.bf16.gmra.mxu0 %v1425
        %v1585 = vpop.f32.mrf.mxu0
        %v1586 = vadd.f32 %v1193, %v1585
        %v1587 = vpop.f32.mrf.mxu0
        %v1588 = vadd.f32 %v1195, %v1587
        %v1589 = vpop.f32.mrf.mxu0
        %v1590 = vpop.f32.mrf.mxu0
        %1591 = vmatprep.mubr.bf16.mxu0 0
        %1592 = vmatmul.mubr.bf16.gmra.mxu0 %v1428
        %v1593 = vpop.f32.mrf.mxu0
        %v1594 = vadd.f32 %v1201, %v1593
        %v1595 = vpop.f32.mrf.mxu0
        %v1596 = vadd.f32 %v1203, %v1595
        %v1597 = vpop.f32.mrf.mxu0
        %v1598 = vadd.f32 %v1205, %v1597
        %v1599 = vpop.f32.mrf.mxu0
        %v1600 = vadd.f32 %v1207, %v1599
        %1601 = vmatprep.mubr.bf16.mxu0 0
        %1602 = vmatmul.mubr.bf16.gmra.mxu0 %v1431
        %v1603 = vpop.f32.mrf.mxu0
        %v1604 = vadd.f32 %v1211, %v1603
        %v1605 = vpop.f32.mrf.mxu0
        %v1606 = vadd.f32 %v1213, %v1605
        %v1607 = vpop.f32.mrf.mxu0
        %v1608 = vpop.f32.mrf.mxu0
        %1609 = vmatprep.mubr.bf16.mxu0 0
        %1610 = vmatmul.mubr.bf16.gmra.mxu0 %v1434
        %v1611 = vpop.f32.mrf.mxu0
        %v1612 = vadd.f32 %v1219, %v1611
        %v1613 = vpop.f32.mrf.mxu0
        %v1614 = vadd.f32 %v1221, %v1613
        %v1615 = vpop.f32.mrf.mxu0
        %v1616 = vadd.f32 %v1223, %v1615
        %v1617 = vpop.f32.mrf.mxu0
        %v1618 = vadd.f32 %v1225, %v1617
        %1619 = vmatprep.mubr.bf16.mxu0 0
        %1620 = vmatmul.mubr.bf16.gmra.mxu0 %v1437
        %v1621 = vpop.f32.mrf.mxu0
        %v1622 = vadd.f32 %v1229, %v1621
        %v1623 = vpop.f32.mrf.mxu0
        %v1624 = vadd.f32 %v1231, %v1623
        %v1625 = vpop.f32.mrf.mxu0
        %v1626 = vpop.f32.mrf.mxu0
        %1627 = vmatprep.mubr.bf16.mxu0 0
        %1628 = vmatmul.mubr.bf16.gmra.mxu0 %v1440
        %v1629 = vpop.f32.mrf.mxu0
        %v1630 = vadd.f32 %v1237, %v1629
        %v1631 = vpop.f32.mrf.mxu0
        %v1632 = vadd.f32 %v1239, %v1631
        %v1633 = vpop.f32.mrf.mxu0
        %v1634 = vadd.f32 %v1241, %v1633
        %v1635 = vpop.f32.mrf.mxu0
        %v1636 = vadd.f32 %v1243, %v1635
        %1637 = vmatprep.mubr.bf16.mxu0 0
        %1638 = vmatmul.mubr.bf16.gmra.mxu0 %v1443
        %v1639 = vpop.f32.mrf.mxu0
        %v1640 = vadd.f32 %v1247, %v1639
        %v1641 = vpop.f32.mrf.mxu0
        %v1642 = vadd.f32 %v1249, %v1641
        %v1643 = vpop.f32.mrf.mxu0
        %v1644 = vpop.f32.mrf.mxu0
        %1645 = vmatprep.mubr.bf16.mxu0 0
        %1646 = vmatmul.mubr.bf16.gmra.mxu0 %v1446
        %v1647 = vpop.f32.mrf.mxu0
        %v1648 = vadd.f32 %v1255, %v1647
        %v1649 = vpop.f32.mrf.mxu0
        %v1650 = vadd.f32 %v1257, %v1649
        %v1651 = vpop.f32.mrf.mxu0
        %v1652 = vadd.f32 %v1259, %v1651
        %v1653 = vpop.f32.mrf.mxu0
        %v1654 = vadd.f32 %v1261, %v1653
        %1655 = vmatprep.mubr.bf16.mxu0 0
        %1656 = vmatmul.mubr.bf16.gmra.mxu0 %v1449
        %v1657 = vpop.f32.mrf.mxu0
        %v1658 = vadd.f32 %v1265, %v1657
        %v1659 = vpop.f32.mrf.mxu0
        %v1660 = vadd.f32 %v1267, %v1659
        %v1661 = vpop.f32.mrf.mxu0
        %v1662 = vpop.f32.mrf.mxu0
        %1663 = vdwg.mxu0
        %vm1674 = vcmask 1042432
        %vm1675 = vcmask 1046532
        %vm1676 = vmor %vm1674, %vm1675
        %v1677 = vrot.slane %v405, 5
        %v1678 = vrot.slane %v1677, 4
        %v1679 = vrot.slane %v406, 5
        %v1680 = vsel %vm1676, %v1678, %v1679
        %v1681 = vrot.slane %v1679, 4
        %v1682 = vrot.slane %v407, 5
        %v1683 = vsel %vm1676, %v1681, %v1682
        %v1684 = vrot.slane %v1682, 4
        %v1685 = vrot.slane %v408, 5
        %v1686 = vsel %vm1676, %v1684, %v1685
        %v1687 = vrot.slane %v1685, 4
        %v1688 = vrot.slane %v409, 5
        %v1689 = vsel %vm1676, %v1687, %v1688
        %v1690 = vrot.slane %v410, 5
        %v1691 = vrot.slane %v1690, 4
        %v1692 = vrot.slane %v411, 5
        %v1693 = vsel %vm1676, %v1691, %v1692
        %v1694 = vrot.slane %v1692, 4
        %v1695 = vrot.slane %v412, 5
        %v1696 = vsel %vm1676, %v1694, %v1695
        %v1697 = vrot.slane %v1695, 4
        %v1698 = vrot.slane %v413, 5
        %v1699 = vsel %vm1676, %v1697, %v1698
        %v1700 = vrot.slane %v1698, 4
        %v1701 = vrot.slane %v414, 5
        %v1702 = vsel %vm1676, %v1700, %v1701
        %v1703 = vrot.slane %v415, 5
        %v1704 = vrot.slane %v1703, 4
        %v1705 = vrot.slane %v416, 5
        %v1706 = vsel %vm1676, %v1704, %v1705
        %v1707 = vrot.slane %v1705, 4
        %v1708 = vrot.slane %v417, 5
        %v1709 = vsel %vm1676, %v1707, %v1708
        %v1710 = vrot.slane %v1708, 4
        %v1711 = vrot.slane %v418, 5
        %v1712 = vsel %vm1676, %v1710, %v1711
        %v1713 = vrot.slane %v1711, 4
        %v1714 = vrot.slane %v419, 5
        %v1715 = vsel %vm1676, %v1713, %v1714
        %v1716 = vrot.slane %v420, 5
        %v1717 = vrot.slane %v1716, 4
        %v1718 = vrot.slane %v421, 5
        %v1719 = vsel %vm1676, %v1717, %v1718
        %v1720 = vrot.slane %v1718, 4
        %v1721 = vrot.slane %v422, 5
        %v1722 = vsel %vm1676, %v1720, %v1721
        %v1723 = vrot.slane %v1721, 4
        %v1724 = vrot.slane %v423, 5
        %v1725 = vsel %vm1676, %v1723, %v1724
        %v1726 = vrot.slane %v1724, 4
        %v1727 = vrot.slane %v424, 5
        %v1728 = vsel %vm1676, %v1726, %v1727
        %v1729 = vrot.slane %v425, 5
        %v1730 = vrot.slane %v1729, 4
        %v1731 = vrot.slane %v426, 5
        %v1732 = vsel %vm1676, %v1730, %v1731
        %v1733 = vrot.slane %v1731, 4
        %v1734 = vrot.slane %v427, 5
        %v1735 = vsel %vm1676, %v1733, %v1734
        %v1736 = vrot.slane %v1734, 4
        %v1737 = vrot.slane %v428, 5
        %v1738 = vsel %vm1676, %v1736, %v1737
        %v1739 = vrot.slane %v1737, 4
        %v1740 = vrot.slane %v429, 5
        %v1741 = vsel %vm1676, %v1739, %v1740
        %v1742 = vrot.slane %v430, 5
        %v1743 = vrot.slane %v1742, 4
        %v1744 = vrot.slane %v431, 5
        %v1745 = vsel %vm1676, %v1743, %v1744
        %v1746 = vrot.slane %v1744, 4
        %v1747 = vrot.slane %v432, 5
        %v1748 = vsel %vm1676, %v1746, %v1747
        %v1749 = vrot.slane %v1747, 4
        %v1750 = vrot.slane %v433, 5
        %v1751 = vsel %vm1676, %v1749, %v1750
        %v1752 = vrot.slane %v1750, 4
        %v1753 = vrot.slane %v434, 5
        %v1754 = vsel %vm1676, %v1752, %v1753
        %v1755 = vrot.slane %v435, 5
        %v1756 = vrot.slane %v1755, 4
        %v1757 = vrot.slane %v436, 5
        %v1758 = vsel %vm1676, %v1756, %v1757
        %v1759 = vrot.slane %v1757, 4
        %v1760 = vrot.slane %v437, 5
        %v1761 = vsel %vm1676, %v1759, %v1760
        %v1762 = vrot.slane %v1760, 4
        %v1763 = vrot.slane %v438, 5
        %v1764 = vsel %vm1676, %v1762, %v1763
        %v1765 = vrot.slane %v1763, 4
        %v1766 = vrot.slane %v439, 5
        %v1767 = vsel %vm1676, %v1765, %v1766
        %v1768 = vrot.slane %v440, 5
        %v1769 = vrot.slane %v1768, 4
        %v1770 = vrot.slane %v441, 5
        %v1771 = vsel %vm1676, %v1769, %v1770
        %v1772 = vrot.slane %v1770, 4
        %v1773 = vrot.slane %v442, 5
        %v1774 = vsel %vm1676, %v1772, %v1773
        %v1775 = vrot.slane %v1773, 4
        %v1776 = vrot.slane %v443, 5
        %v1777 = vsel %vm1676, %v1775, %v1776
        %v1778 = vrot.slane %v1776, 4
        %v1779 = vrot.slane %v444, 5
        %v1780 = vsel %vm1676, %v1778, %v1779
        %v1781 = vrot.slane %v445, 5
        %v1782 = vrot.slane %v1781, 4
        %v1783 = vrot.slane %v446, 5
        %v1784 = vsel %vm1676, %v1782, %v1783
        %v1785 = vrot.slane %v1783, 4
        %v1786 = vrot.slane %v447, 5
        %v1787 = vsel %vm1676, %v1785, %v1786
        %v1788 = vrot.slane %v1786, 4
        %v1789 = vrot.slane %v448, 5
        %v1790 = vsel %vm1676, %v1788, %v1789
        %v1791 = vrot.slane %v1789, 4
        %v1792 = vrot.slane %v449, 5
        %v1793 = vsel %vm1676, %v1791, %v1792
        %v1794 = vrot.slane %v450, 5
        %v1795 = vrot.slane %v1794, 4
        %v1796 = vrot.slane %v451, 5
        %v1797 = vsel %vm1676, %v1795, %v1796
        %v1798 = vrot.slane %v1796, 4
        %v1799 = vrot.slane %v452, 5
        %v1800 = vsel %vm1676, %v1798, %v1799
        %v1801 = vrot.slane %v1799, 4
        %v1802 = vrot.slane %v453, 5
        %v1803 = vsel %vm1676, %v1801, %v1802
        %v1804 = vrot.slane %v1802, 4
        %v1805 = vrot.slane %v454, 5
        %v1806 = vsel %vm1676, %v1804, %v1805
        %s1807 = scalar_lea.vmem [#allocation2], 64
        %v1808 = vld [vmem:[%s1807] sm:$0xff]
        %v1809 = vld [vmem:[%s1807 + $0x8] sm:$0xff]
        %v1810 = vld [vmem:[%s1807 + $0x10] sm:$0xff]
        %v1811 = vld [vmem:[%s1807 + $0x18] sm:$0xff]
        %v1812 = vunpack.c.l.b16 %v1680
        %v1813 = vunpack.c.l.b16 %v1683
        %v1814 = vunpack.c.l.b16 %v1686
        %v1815 = vunpack.c.l.b16 %v1689
        %v1816 = vunpack.c.l.b16 %v1693
        %v1817 = vunpack.c.l.b16 %v1696
        %v1818 = vunpack.c.l.b16 %v1699
        %v1819 = vunpack.c.l.b16 %v1702
        %v1820 = vunpack.c.l.b16 %v1706
        %v1821 = vunpack.c.l.b16 %v1709
        %v1822 = vunpack.c.l.b16 %v1712
        %v1823 = vunpack.c.l.b16 %v1715
        %v1824 = vunpack.c.l.b16 %v1719
        %v1825 = vunpack.c.l.b16 %v1722
        %v1826 = vunpack.c.l.b16 %v1725
        %v1827 = vunpack.c.l.b16 %v1728
        %v1828 = vunpack.c.l.b16 %v1732
        %v1829 = vunpack.c.l.b16 %v1735
        %v1830 = vunpack.c.l.b16 %v1738
        %v1831 = vunpack.c.l.b16 %v1741
        %v1832 = vunpack.c.l.b16 %v1745
        %v1833 = vunpack.c.l.b16 %v1748
        %v1834 = vunpack.c.l.b16 %v1751
        %v1835 = vunpack.c.l.b16 %v1754
        %v1836 = vunpack.c.l.b16 %v1758
        %v1837 = vunpack.c.l.b16 %v1761
        %v1838 = vunpack.c.l.b16 %v1764
        %v1839 = vunpack.c.l.b16 %v1767
        %v1840 = vunpack.c.l.b16 %v1771
        %v1841 = vunpack.c.l.b16 %v1774
        %v1842 = vunpack.c.l.b16 %v1777
        %v1843 = vunpack.c.l.b16 %v1780
        %v1844 = vunpack.c.l.b16 %v1784
        %v1845 = vunpack.c.l.b16 %v1787
        %v1846 = vunpack.c.l.b16 %v1790
        %v1847 = vunpack.c.l.b16 %v1793
        %v1848 = vunpack.c.l.b16 %v1797
        %v1849 = vunpack.c.l.b16 %v1800
        %v1850 = vunpack.c.l.b16 %v1803
        %v1851 = vunpack.c.l.b16 %v1806
        %v1852 = vpack.c.b16 %v1813, %v1812
        %v1853 = vpack.c.b16 %v1815, %v1814
        %v1854 = vpack.c.b16 %v1817, %v1816
        %v1855 = vpack.c.b16 %v1819, %v1818
        %v1856 = vpack.c.b16 %v1821, %v1820
        %v1857 = vpack.c.b16 %v1823, %v1822
        %v1858 = vpack.c.b16 %v1825, %v1824
        %v1859 = vpack.c.b16 %v1827, %v1826
        %v1860 = vpack.c.b16 %v1829, %v1828
        %v1861 = vpack.c.b16 %v1831, %v1830
        %v1862 = vpack.c.b16 %v1833, %v1832
        %v1863 = vpack.c.b16 %v1835, %v1834
        %v1864 = vpack.c.b16 %v1837, %v1836
        %v1865 = vpack.c.b16 %v1839, %v1838
        %v1866 = vpack.c.b16 %v1841, %v1840
        %v1867 = vpack.c.b16 %v1843, %v1842
        %v1868 = vpack.c.b16 %v1845, %v1844
        %v1869 = vpack.c.b16 %v1847, %v1846
        %v1870 = vpack.c.b16 %v1849, %v1848
        %v1871 = vpack.c.b16 %v1851, %v1850
        %v1876 = vunpack.c.l.b16 %v1808
        %v1877 = vunpack.c.h.b16 %v1808
        %v1878 = vunpack.c.l.b16 %v1809
        %v1879 = vunpack.c.h.b16 %v1809
        %v1880 = vunpack.c.l.b16 %v1810
        %v1881 = vunpack.c.h.b16 %v1810
        %v1882 = vunpack.c.l.b16 %v1811
        %v1883 = vunpack.c.h.b16 %v1811
        %v1884 = vpack.c.b16 %v1878, %v1876
        %v1885 = vpack.c.b16 %v1879, %v1877
        %v1886 = vpack.c.b16 %v1882, %v1880
        %v1887 = vpack.c.b16 %v1883, %v1881
        %v1893 = vsel %vm997, %v1852, 0
        %v1896 = vsel %vm997, %v1853, 0
        %v1899 = vsel %vm997, %v1854, 0
        %v1902 = vsel %vm997, %v1855, 0
        %v1905 = vsel %vm997, %v1856, 0
        %v1908 = vsel %vm997, %v1857, 0
        %v1911 = vsel %vm997, %v1858, 0
        %v1914 = vsel %vm997, %v1859, 0
        %v1917 = vsel %vm997, %v1860, 0
        %v1920 = vsel %vm997, %v1861, 0
        %v1923 = vsel %vm997, %v1862, 0
        %v1926 = vsel %vm997, %v1863, 0
        %v1929 = vsel %vm997, %v1864, 0
        %v1932 = vsel %vm997, %v1865, 0
        %v1935 = vsel %vm997, %v1866, 0
        %v1938 = vsel %vm997, %v1867, 0
        %v1941 = vsel %vm997, %v1868, 0
        %v1944 = vsel %vm997, %v1869, 0
        %v1947 = vsel %vm997, %v1870, 0
        %v1950 = vsel %vm997, %v1871, 0
        %1952 = vmatprep.subr.bf16.mxu0 0
        %1953 = vmatpush1.bf16.msra.mxu0 0
        %1954 = vmatprep.subr.bf16.mxu0 0
        %1955 = vmatpush1.bf16.msra.mxu0 0
        %1956 = vmatprep.subr.bf16.mxu0 0
        %1957 = vmatpush1.bf16.msra.mxu0 0
        %1958 = vmatprep.subr.bf16.mxu0 0
        %1959 = vmatpush1.bf16.msra.mxu0 0
        %1960 = vmatprep.subr.bf16.mxu0 0
        %1961 = vmatpush1.bf16.msra.mxu0 0
        %1962 = vmatprep.subr.bf16.mxu0 0
        %1963 = vmatpush1.bf16.msra.mxu0 0
        %1964 = vmatprep.subr.bf16.mxu0 %v1887
        %1965 = vmatpush1.bf16.msra.mxu0 %v1886
        %1966 = vmatprep.subr.bf16.mxu0 %v1885
        %1967 = vmatpush1.bf16.msra.mxu0 %v1884
        %1968 = vmatprep.subr.bf16.mxu0 0
        %1969 = vmatpush2.bf16.msra.mxu0 0
        %1970 = vmatprep.subr.bf16.mxu0 0
        %1971 = vmatpush2.bf16.msra.mxu0 0
        %1972 = vmatprep.subr.bf16.mxu0 0
        %1973 = vmatpush2.bf16.msra.mxu0 0
        %1974 = vmatprep.subr.bf16.mxu0 0
        %1975 = vmatpush2.bf16.msra.mxu0 0
        %1976 = vmatprep.subr.bf16.mxu0 0
        %1977 = vmatpush2.bf16.msra.mxu0 0
        %1978 = vmatprep.subr.bf16.mxu0 0
        %1979 = vmatpush2.bf16.msra.mxu0 0
        %1980 = vmatprep.subr.bf16.mxu0 0
        %1981 = vmatpush2.bf16.msra.mxu0 0
        %1982 = vmatprep.subr.bf16.mxu0 0
        %1983 = vmatpush2.bf16.msra.mxu0 0
        %1984 = vmatprep.mubr.bf16.mxu0 0
        %1985 = vmatmul.mubr.bf16.gmra.mxu0 %v1893
        %v1986 = vpop.f32.mrf.mxu0
        %v1987 = vadd.f32 0.0, %v1986
        %v1988 = vpop.f32.mrf.mxu0
        %v1989 = vadd.f32 0.0, %v1988
        %v1990 = vpop.f32.mrf.mxu0
        %v1991 = vadd.f32 0.0, %v1990
        %v1992 = vpop.f32.mrf.mxu0
        %v1993 = vadd.f32 0.0, %v1992
        %1994 = vmatprep.mubr.bf16.mxu0 0
        %1995 = vmatmul.mubr.bf16.gmra.mxu0 %v1896
        %v1996 = vpop.f32.mrf.mxu0
        %v1997 = vadd.f32 0.0, %v1996
        %v1998 = vpop.f32.mrf.mxu0
        %v1999 = vadd.f32 0.0, %v1998
        %v2000 = vpop.f32.mrf.mxu0
        %v2001 = vpop.f32.mrf.mxu0
        %2002 = vmatprep.mubr.bf16.mxu0 0
        %2003 = vmatmul.mubr.bf16.gmra.mxu0 %v1899
        %v2004 = vpop.f32.mrf.mxu0
        %v2005 = vadd.f32 0.0, %v2004
        %v2006 = vpop.f32.mrf.mxu0
        %v2007 = vadd.f32 0.0, %v2006
        %v2008 = vpop.f32.mrf.mxu0
        %v2009 = vadd.f32 0.0, %v2008
        %v2010 = vpop.f32.mrf.mxu0
        %v2011 = vadd.f32 0.0, %v2010
        %2012 = vmatprep.mubr.bf16.mxu0 0
        %2013 = vmatmul.mubr.bf16.gmra.mxu0 %v1902
        %v2014 = vpop.f32.mrf.mxu0
        %v2015 = vadd.f32 0.0, %v2014
        %v2016 = vpop.f32.mrf.mxu0
        %v2017 = vadd.f32 0.0, %v2016
        %v2018 = vpop.f32.mrf.mxu0
        %v2019 = vpop.f32.mrf.mxu0
        %2020 = vmatprep.mubr.bf16.mxu0 0
        %2021 = vmatmul.mubr.bf16.gmra.mxu0 %v1905
        %v2022 = vpop.f32.mrf.mxu0
        %v2023 = vadd.f32 0.0, %v2022
        %v2024 = vpop.f32.mrf.mxu0
        %v2025 = vadd.f32 0.0, %v2024
        %v2026 = vpop.f32.mrf.mxu0
        %v2027 = vadd.f32 0.0, %v2026
        %v2028 = vpop.f32.mrf.mxu0
        %v2029 = vadd.f32 0.0, %v2028
        %2030 = vmatprep.mubr.bf16.mxu0 0
        %2031 = vmatmul.mubr.bf16.gmra.mxu0 %v1908
        %v2032 = vpop.f32.mrf.mxu0
        %v2033 = vadd.f32 0.0, %v2032
        %v2034 = vpop.f32.mrf.mxu0
        %v2035 = vadd.f32 0.0, %v2034
        %v2036 = vpop.f32.mrf.mxu0
        %v2037 = vpop.f32.mrf.mxu0
        %2038 = vmatprep.mubr.bf16.mxu0 0
        %2039 = vmatmul.mubr.bf16.gmra.mxu0 %v1911
        %v2040 = vpop.f32.mrf.mxu0
        %v2041 = vadd.f32 0.0, %v2040
        %v2042 = vpop.f32.mrf.mxu0
        %v2043 = vadd.f32 0.0, %v2042
        %v2044 = vpop.f32.mrf.mxu0
        %v2045 = vadd.f32 0.0, %v2044
        %v2046 = vpop.f32.mrf.mxu0
        %v2047 = vadd.f32 0.0, %v2046
        %2048 = vmatprep.mubr.bf16.mxu0 0
        %2049 = vmatmul.mubr.bf16.gmra.mxu0 %v1914
        %v2050 = vpop.f32.mrf.mxu0
        %v2051 = vadd.f32 0.0, %v2050
        %v2052 = vpop.f32.mrf.mxu0
        %v2053 = vadd.f32 0.0, %v2052
        %v2054 = vpop.f32.mrf.mxu0
        %v2055 = vpop.f32.mrf.mxu0
        %2056 = vmatprep.mubr.bf16.mxu0 0
        %2057 = vmatmul.mubr.bf16.gmra.mxu0 %v1917
        %v2058 = vpop.f32.mrf.mxu0
        %v2059 = vadd.f32 0.0, %v2058
        %v2060 = vpop.f32.mrf.mxu0
        %v2061 = vadd.f32 0.0, %v2060
        %v2062 = vpop.f32.mrf.mxu0
        %v2063 = vadd.f32 0.0, %v2062
        %v2064 = vpop.f32.mrf.mxu0
        %v2065 = vadd.f32 0.0, %v2064
        %2066 = vmatprep.mubr.bf16.mxu0 0
        %2067 = vmatmul.mubr.bf16.gmra.mxu0 %v1920
        %v2068 = vpop.f32.mrf.mxu0
        %v2069 = vadd.f32 0.0, %v2068
        %v2070 = vpop.f32.mrf.mxu0
        %v2071 = vadd.f32 0.0, %v2070
        %v2072 = vpop.f32.mrf.mxu0
        %v2073 = vpop.f32.mrf.mxu0
        %2074 = vmatprep.mubr.bf16.mxu0 0
        %2075 = vmatmul.mubr.bf16.gmra.mxu0 %v1923
        %v2076 = vpop.f32.mrf.mxu0
        %v2077 = vadd.f32 0.0, %v2076
        %v2078 = vpop.f32.mrf.mxu0
        %v2079 = vadd.f32 0.0, %v2078
        %v2080 = vpop.f32.mrf.mxu0
        %v2081 = vadd.f32 0.0, %v2080
        %v2082 = vpop.f32.mrf.mxu0
        %v2083 = vadd.f32 0.0, %v2082
        %2084 = vmatprep.mubr.bf16.mxu0 0
        %2085 = vmatmul.mubr.bf16.gmra.mxu0 %v1926
        %v2086 = vpop.f32.mrf.mxu0
        %v2087 = vadd.f32 0.0, %v2086
        %v2088 = vpop.f32.mrf.mxu0
        %v2089 = vadd.f32 0.0, %v2088
        %v2090 = vpop.f32.mrf.mxu0
        %v2091 = vpop.f32.mrf.mxu0
        %2092 = vmatprep.mubr.bf16.mxu0 0
        %2093 = vmatmul.mubr.bf16.gmra.mxu0 %v1929
        %v2094 = vpop.f32.mrf.mxu0
        %v2095 = vadd.f32 0.0, %v2094
        %v2096 = vpop.f32.mrf.mxu0
        %v2097 = vadd.f32 0.0, %v2096
        %v2098 = vpop.f32.mrf.mxu0
        %v2099 = vadd.f32 0.0, %v2098
        %v2100 = vpop.f32.mrf.mxu0
        %v2101 = vadd.f32 0.0, %v2100
        %2102 = vmatprep.mubr.bf16.mxu0 0
        %2103 = vmatmul.mubr.bf16.gmra.mxu0 %v1932
        %v2104 = vpop.f32.mrf.mxu0
        %v2105 = vadd.f32 0.0, %v2104
        %v2106 = vpop.f32.mrf.mxu0
        %v2107 = vadd.f32 0.0, %v2106
        %v2108 = vpop.f32.mrf.mxu0
        %v2109 = vpop.f32.mrf.mxu0
        %2110 = vmatprep.mubr.bf16.mxu0 0
        %2111 = vmatmul.mubr.bf16.gmra.mxu0 %v1935
        %v2112 = vpop.f32.mrf.mxu0
        %v2113 = vadd.f32 0.0, %v2112
        %v2114 = vpop.f32.mrf.mxu0
        %v2115 = vadd.f32 0.0, %v2114
        %v2116 = vpop.f32.mrf.mxu0
        %v2117 = vadd.f32 0.0, %v2116
        %v2118 = vpop.f32.mrf.mxu0
        %v2119 = vadd.f32 0.0, %v2118
        %2120 = vmatprep.mubr.bf16.mxu0 0
        %2121 = vmatmul.mubr.bf16.gmra.mxu0 %v1938
        %v2122 = vpop.f32.mrf.mxu0
        %v2123 = vadd.f32 0.0, %v2122
        %v2124 = vpop.f32.mrf.mxu0
        %v2125 = vadd.f32 0.0, %v2124
        %v2126 = vpop.f32.mrf.mxu0
        %v2127 = vpop.f32.mrf.mxu0
        %2128 = vmatprep.mubr.bf16.mxu0 0
        %2129 = vmatmul.mubr.bf16.gmra.mxu0 %v1941
        %v2130 = vpop.f32.mrf.mxu0
        %v2131 = vadd.f32 0.0, %v2130
        %v2132 = vpop.f32.mrf.mxu0
        %v2133 = vadd.f32 0.0, %v2132
        %v2134 = vpop.f32.mrf.mxu0
        %v2135 = vadd.f32 0.0, %v2134
        %v2136 = vpop.f32.mrf.mxu0
        %v2137 = vadd.f32 0.0, %v2136
        %2138 = vmatprep.mubr.bf16.mxu0 0
        %2139 = vmatmul.mubr.bf16.gmra.mxu0 %v1944
        %v2140 = vpop.f32.mrf.mxu0
        %v2141 = vadd.f32 0.0, %v2140
        %v2142 = vpop.f32.mrf.mxu0
        %v2143 = vadd.f32 0.0, %v2142
        %v2144 = vpop.f32.mrf.mxu0
        %v2145 = vpop.f32.mrf.mxu0
        %2146 = vmatprep.mubr.bf16.mxu0 0
        %2147 = vmatmul.mubr.bf16.gmra.mxu0 %v1947
        %v2148 = vpop.f32.mrf.mxu0
        %v2149 = vadd.f32 0.0, %v2148
        %v2150 = vpop.f32.mrf.mxu0
        %v2151 = vadd.f32 0.0, %v2150
        %v2152 = vpop.f32.mrf.mxu0
        %v2153 = vadd.f32 0.0, %v2152
        %v2154 = vpop.f32.mrf.mxu0
        %v2155 = vadd.f32 0.0, %v2154
        %2156 = vmatprep.mubr.bf16.mxu0 0
        %2157 = vmatmul.mubr.bf16.gmra.mxu0 %v1950
        %v2158 = vpop.f32.mrf.mxu0
        %v2159 = vadd.f32 0.0, %v2158
        %v2160 = vpop.f32.mrf.mxu0
        %v2161 = vadd.f32 0.0, %v2160
        %v2162 = vpop.f32.mrf.mxu0
        %v2163 = vpop.f32.mrf.mxu0
        %2164 = vdwg.mxu0
        %v2165 = vadd.f32 %v1486, %v1987
        %v2166 = vadd.f32 %v1488, %v1989
        %v2167 = vadd.f32 %v1490, %v1991
        %v2168 = vadd.f32 %v1492, %v1993
        %v2169 = vadd.f32 %v1496, %v1997
        %v2170 = vadd.f32 %v1498, %v1999
        %v2171 = vadd.f32 %v1504, %v2005
        %v2172 = vadd.f32 %v1506, %v2007
        %v2173 = vadd.f32 %v1508, %v2009
        %v2174 = vadd.f32 %v1510, %v2011
        %v2175 = vadd.f32 %v1514, %v2015
        %v2176 = vadd.f32 %v1516, %v2017
        %v2177 = vadd.f32 %v1522, %v2023
        %v2178 = vadd.f32 %v1524, %v2025
        %v2179 = vadd.f32 %v1526, %v2027
        %v2180 = vadd.f32 %v1528, %v2029
        %v2181 = vadd.f32 %v1532, %v2033
        %v2182 = vadd.f32 %v1534, %v2035
        %v2183 = vadd.f32 %v1540, %v2041
        %v2184 = vadd.f32 %v1542, %v2043
        %v2185 = vadd.f32 %v1544, %v2045
        %v2186 = vadd.f32 %v1546, %v2047
        %v2187 = vadd.f32 %v1550, %v2051
        %v2188 = vadd.f32 %v1552, %v2053
        %v2189 = vadd.f32 %v1558, %v2059
        %v2190 = vadd.f32 %v1560, %v2061
        %v2191 = vadd.f32 %v1562, %v2063
        %v2192 = vadd.f32 %v1564, %v2065
        %v2193 = vadd.f32 %v1568, %v2069
        %v2194 = vadd.f32 %v1570, %v2071
        %v2195 = vadd.f32 %v1576, %v2077
        %v2196 = vadd.f32 %v1578, %v2079
        %v2197 = vadd.f32 %v1580, %v2081
        %v2198 = vadd.f32 %v1582, %v2083
        %v2199 = vadd.f32 %v1586, %v2087
        %v2200 = vadd.f32 %v1588, %v2089
        %v2201 = vadd.f32 %v1594, %v2095
        %v2202 = vadd.f32 %v1596, %v2097
        %v2203 = vadd.f32 %v1598, %v2099
        %v2204 = vadd.f32 %v1600, %v2101
        %v2205 = vadd.f32 %v1604, %v2105
        %v2206 = vadd.f32 %v1606, %v2107
        %v2207 = vadd.f32 %v1612, %v2113
        %v2208 = vadd.f32 %v1614, %v2115
        %v2209 = vadd.f32 %v1616, %v2117
        %v2210 = vadd.f32 %v1618, %v2119
        %v2211 = vadd.f32 %v1622, %v2123
        %v2212 = vadd.f32 %v1624, %v2125
        %v2213 = vadd.f32 %v1630, %v2131
        %v2214 = vadd.f32 %v1632, %v2133
        %v2215 = vadd.f32 %v1634, %v2135
        %v2216 = vadd.f32 %v1636, %v2137
        %v2217 = vadd.f32 %v1640, %v2141
        %v2218 = vadd.f32 %v1642, %v2143
        %v2219 = vadd.f32 %v1648, %v2149
        %v2220 = vadd.f32 %v1650, %v2151
        %v2221 = vadd.f32 %v1652, %v2153
        %v2222 = vadd.f32 %v1654, %v2155
        %v2223 = vadd.f32 %v1658, %v2159
        %v2224 = vadd.f32 %v1660, %v2161
        %s2225 = scalar_lea.vmem [#allocation2], 96
        %v2226 = vld [vmem:[%s2225] sm:$0xff]
        %v2227 = vld [vmem:[%s2225 + $0x8] sm:$0xff]
        %v2228 = vld [vmem:[%s2225 + $0x10] sm:$0xff]
        %v2229 = vld [vmem:[%s2225 + $0x18] sm:$0xff]
        %v2234 = vunpack.c.l.b16 %v455
        %v2235 = vunpack.c.l.b16 %v456
        %v2236 = vunpack.c.l.b16 %v457
        %v2237 = vunpack.c.l.b16 %v458
        %v2238 = vpack.c.b16 %v2235, %v2234
        %v2239 = vpack.c.b16 %v2237, %v2236
        %v2244 = vunpack.c.l.b16 %v2226
        %v2245 = vunpack.c.h.b16 %v2226
        %v2246 = vunpack.c.l.b16 %v2227
        %v2247 = vunpack.c.h.b16 %v2227
        %v2248 = vunpack.c.l.b16 %v2228
        %v2249 = vunpack.c.h.b16 %v2228
        %v2250 = vunpack.c.l.b16 %v2229
        %v2251 = vunpack.c.h.b16 %v2229
        %v2252 = vpack.c.b16 %v2246, %v2244
        %v2253 = vpack.c.b16 %v2247, %v2245
        %v2254 = vpack.c.b16 %v2250, %v2248
        %v2255 = vpack.c.b16 %v2251, %v2249
        %v2261 = vsel %vm997, %v2238, 0
        %v2264 = vsel %vm997, %v2239, 0
        %2266 = vmatprep.subr.bf16.mxu0 0
        %2267 = vmatpush1.bf16.msra.mxu0 0
        %2268 = vmatprep.subr.bf16.mxu0 0
        %2269 = vmatpush1.bf16.msra.mxu0 0
        %2270 = vmatprep.subr.bf16.mxu0 0
        %2271 = vmatpush1.bf16.msra.mxu0 0
        %2272 = vmatprep.subr.bf16.mxu0 0
        %2273 = vmatpush1.bf16.msra.mxu0 0
        %2274 = vmatprep.subr.bf16.mxu0 0
        %2275 = vmatpush1.bf16.msra.mxu0 0
        %2276 = vmatprep.subr.bf16.mxu0 0
        %2277 = vmatpush1.bf16.msra.mxu0 0
        %2278 = vmatprep.subr.bf16.mxu0 %v2255
        %2279 = vmatpush1.bf16.msra.mxu0 %v2254
        %2280 = vmatprep.subr.bf16.mxu0 %v2253
        %2281 = vmatpush1.bf16.msra.mxu0 %v2252
        %2282 = vmatprep.subr.bf16.mxu0 0
        %2283 = vmatpush2.bf16.msra.mxu0 0
        %2284 = vmatprep.subr.bf16.mxu0 0
        %2285 = vmatpush2.bf16.msra.mxu0 0
        %2286 = vmatprep.subr.bf16.mxu0 0
        %2287 = vmatpush2.bf16.msra.mxu0 0
        %2288 = vmatprep.subr.bf16.mxu0 0
        %2289 = vmatpush2.bf16.msra.mxu0 0
        %2290 = vmatprep.subr.bf16.mxu0 0
        %2291 = vmatpush2.bf16.msra.mxu0 0
        %2292 = vmatprep.subr.bf16.mxu0 0
        %2293 = vmatpush2.bf16.msra.mxu0 0
        %2294 = vmatprep.subr.bf16.mxu0 0
        %2295 = vmatpush2.bf16.msra.mxu0 0
        %2296 = vmatprep.subr.bf16.mxu0 0
        %2297 = vmatpush2.bf16.msra.mxu0 0
        %2298 = vmatprep.mubr.bf16.mxu0 0
        %2299 = vmatmul.mubr.bf16.gmra.mxu0 %v1398
        %v2300 = vpop.f32.mrf.mxu0
        %v2301 = vadd.f32 0.0, %v2300
        %v2302 = vpop.f32.mrf.mxu0
        %v2303 = vadd.f32 0.0, %v2302
        %v2304 = vpop.f32.mrf.mxu0
        %v2305 = vadd.f32 0.0, %v2304
        %v2306 = vpop.f32.mrf.mxu0
        %v2307 = vadd.f32 0.0, %v2306
        %2308 = vmatprep.mubr.bf16.mxu0 0
        %2309 = vmatmul.mubr.bf16.gmra.mxu0 %v1401
        %v2310 = vpop.f32.mrf.mxu0
        %v2311 = vadd.f32 0.0, %v2310
        %v2312 = vpop.f32.mrf.mxu0
        %v2313 = vadd.f32 0.0, %v2312
        %v2314 = vpop.f32.mrf.mxu0
        %v2315 = vpop.f32.mrf.mxu0
        %2316 = vmatprep.mubr.bf16.mxu0 0
        %2317 = vmatmul.mubr.bf16.gmra.mxu0 %v1404
        %v2318 = vpop.f32.mrf.mxu0
        %v2319 = vadd.f32 0.0, %v2318
        %v2320 = vpop.f32.mrf.mxu0
        %v2321 = vadd.f32 0.0, %v2320
        %v2322 = vpop.f32.mrf.mxu0
        %v2323 = vadd.f32 0.0, %v2322
        %v2324 = vpop.f32.mrf.mxu0
        %v2325 = vadd.f32 0.0, %v2324
        %2326 = vmatprep.mubr.bf16.mxu0 0
        %2327 = vmatmul.mubr.bf16.gmra.mxu0 %v1407
        %v2328 = vpop.f32.mrf.mxu0
        %v2329 = vadd.f32 0.0, %v2328
        %v2330 = vpop.f32.mrf.mxu0
        %v2331 = vadd.f32 0.0, %v2330
        %v2332 = vpop.f32.mrf.mxu0
        %v2333 = vpop.f32.mrf.mxu0
        %2334 = vmatprep.mubr.bf16.mxu0 0
        %2335 = vmatmul.mubr.bf16.gmra.mxu0 %v1410
        %v2336 = vpop.f32.mrf.mxu0
        %v2337 = vadd.f32 0.0, %v2336
        %v2338 = vpop.f32.mrf.mxu0
        %v2339 = vadd.f32 0.0, %v2338
        %v2340 = vpop.f32.mrf.mxu0
        %v2341 = vadd.f32 0.0, %v2340
        %v2342 = vpop.f32.mrf.mxu0
        %v2343 = vadd.f32 0.0, %v2342
        %2344 = vmatprep.mubr.bf16.mxu0 0
        %2345 = vmatmul.mubr.bf16.gmra.mxu0 %v1413
        %v2346 = vpop.f32.mrf.mxu0
        %v2347 = vadd.f32 0.0, %v2346
        %v2348 = vpop.f32.mrf.mxu0
        %v2349 = vadd.f32 0.0, %v2348
        %v2350 = vpop.f32.mrf.mxu0
        %v2351 = vpop.f32.mrf.mxu0
        %2352 = vmatprep.mubr.bf16.mxu0 0
        %2353 = vmatmul.mubr.bf16.gmra.mxu0 %v1416
        %v2354 = vpop.f32.mrf.mxu0
        %v2355 = vadd.f32 0.0, %v2354
        %v2356 = vpop.f32.mrf.mxu0
        %v2357 = vadd.f32 0.0, %v2356
        %v2358 = vpop.f32.mrf.mxu0
        %v2359 = vadd.f32 0.0, %v2358
        %v2360 = vpop.f32.mrf.mxu0
        %v2361 = vadd.f32 0.0, %v2360
        %2362 = vmatprep.mubr.bf16.mxu0 0
        %2363 = vmatmul.mubr.bf16.gmra.mxu0 %v1419
        %v2364 = vpop.f32.mrf.mxu0
        %v2365 = vadd.f32 0.0, %v2364
        %v2366 = vpop.f32.mrf.mxu0
        %v2367 = vadd.f32 0.0, %v2366
        %v2368 = vpop.f32.mrf.mxu0
        %v2369 = vpop.f32.mrf.mxu0
        %2370 = vmatprep.mubr.bf16.mxu0 0
        %2371 = vmatmul.mubr.bf16.gmra.mxu0 %v1422
        %v2372 = vpop.f32.mrf.mxu0
        %v2373 = vadd.f32 0.0, %v2372
        %v2374 = vpop.f32.mrf.mxu0
        %v2375 = vadd.f32 0.0, %v2374
        %v2376 = vpop.f32.mrf.mxu0
        %v2377 = vadd.f32 0.0, %v2376
        %v2378 = vpop.f32.mrf.mxu0
        %v2379 = vadd.f32 0.0, %v2378
        %2380 = vmatprep.mubr.bf16.mxu0 0
        %2381 = vmatmul.mubr.bf16.gmra.mxu0 %v1425
        %v2382 = vpop.f32.mrf.mxu0
        %v2383 = vadd.f32 0.0, %v2382
        %v2384 = vpop.f32.mrf.mxu0
        %v2385 = vadd.f32 0.0, %v2384
        %v2386 = vpop.f32.mrf.mxu0
        %v2387 = vpop.f32.mrf.mxu0
        %2388 = vmatprep.mubr.bf16.mxu0 0
        %2389 = vmatmul.mubr.bf16.gmra.mxu0 %v1428
        %v2390 = vpop.f32.mrf.mxu0
        %v2391 = vadd.f32 0.0, %v2390
        %v2392 = vpop.f32.mrf.mxu0
        %v2393 = vadd.f32 0.0, %v2392
        %v2394 = vpop.f32.mrf.mxu0
        %v2395 = vadd.f32 0.0, %v2394
        %v2396 = vpop.f32.mrf.mxu0
        %v2397 = vadd.f32 0.0, %v2396
        %2398 = vmatprep.mubr.bf16.mxu0 0
        %2399 = vmatmul.mubr.bf16.gmra.mxu0 %v1431
        %v2400 = vpop.f32.mrf.mxu0
        %v2401 = vadd.f32 0.0, %v2400
        %v2402 = vpop.f32.mrf.mxu0
        %v2403 = vadd.f32 0.0, %v2402
        %v2404 = vpop.f32.mrf.mxu0
        %v2405 = vpop.f32.mrf.mxu0
        %2406 = vmatprep.mubr.bf16.mxu0 0
        %2407 = vmatmul.mubr.bf16.gmra.mxu0 %v1434
        %v2408 = vpop.f32.mrf.mxu0
        %v2409 = vadd.f32 0.0, %v2408
        %v2410 = vpop.f32.mrf.mxu0
        %v2411 = vadd.f32 0.0, %v2410
        %v2412 = vpop.f32.mrf.mxu0
        %v2413 = vadd.f32 0.0, %v2412
        %v2414 = vpop.f32.mrf.mxu0
        %v2415 = vadd.f32 0.0, %v2414
        %2416 = vmatprep.mubr.bf16.mxu0 0
        %2417 = vmatmul.mubr.bf16.gmra.mxu0 %v1437
        %v2418 = vpop.f32.mrf.mxu0
        %v2419 = vadd.f32 0.0, %v2418
        %v2420 = vpop.f32.mrf.mxu0
        %v2421 = vadd.f32 0.0, %v2420
        %v2422 = vpop.f32.mrf.mxu0
        %v2423 = vpop.f32.mrf.mxu0
        %2424 = vmatprep.mubr.bf16.mxu0 0
        %2425 = vmatmul.mubr.bf16.gmra.mxu0 %v1440
        %v2426 = vpop.f32.mrf.mxu0
        %v2427 = vadd.f32 0.0, %v2426
        %v2428 = vpop.f32.mrf.mxu0
        %v2429 = vadd.f32 0.0, %v2428
        %v2430 = vpop.f32.mrf.mxu0
        %v2431 = vadd.f32 0.0, %v2430
        %v2432 = vpop.f32.mrf.mxu0
        %v2433 = vadd.f32 0.0, %v2432
        %2434 = vmatprep.mubr.bf16.mxu0 0
        %2435 = vmatmul.mubr.bf16.gmra.mxu0 %v1443
        %v2436 = vpop.f32.mrf.mxu0
        %v2437 = vadd.f32 0.0, %v2436
        %v2438 = vpop.f32.mrf.mxu0
        %v2439 = vadd.f32 0.0, %v2438
        %v2440 = vpop.f32.mrf.mxu0
        %v2441 = vpop.f32.mrf.mxu0
        %2442 = vmatprep.mubr.bf16.mxu0 0
        %2443 = vmatmul.mubr.bf16.gmra.mxu0 %v1446
        %v2444 = vpop.f32.mrf.mxu0
        %v2445 = vadd.f32 0.0, %v2444
        %v2446 = vpop.f32.mrf.mxu0
        %v2447 = vadd.f32 0.0, %v2446
        %v2448 = vpop.f32.mrf.mxu0
        %v2449 = vadd.f32 0.0, %v2448
        %v2450 = vpop.f32.mrf.mxu0
        %v2451 = vadd.f32 0.0, %v2450
        %2452 = vmatprep.mubr.bf16.mxu0 0
        %2453 = vmatmul.mubr.bf16.gmra.mxu0 %v1449
        %v2454 = vpop.f32.mrf.mxu0
        %v2455 = vadd.f32 0.0, %v2454
        %v2456 = vpop.f32.mrf.mxu0
        %v2457 = vadd.f32 0.0, %v2456
        %v2458 = vpop.f32.mrf.mxu0
        %v2459 = vpop.f32.mrf.mxu0
        %2460 = vmatprep.mubr.bf16.mxu0 0
        %2461 = vmatmul.mubr.bf16.gmra.mxu0 %v2261
        %v2462 = vpop.f32.mrf.mxu0
        %v2463 = vadd.f32 0.0, %v2462
        %v2464 = vpop.f32.mrf.mxu0
        %v2465 = vadd.f32 0.0, %v2464
        %v2466 = vpop.f32.mrf.mxu0
        %v2467 = vadd.f32 0.0, %v2466
        %v2468 = vpop.f32.mrf.mxu0
        %v2469 = vadd.f32 0.0, %v2468
        %2470 = vmatprep.mubr.bf16.mxu0 0
        %2471 = vmatmul.mubr.bf16.gmra.mxu0 %v2264
        %v2472 = vpop.f32.mrf.mxu0
        %v2473 = vadd.f32 0.0, %v2472
        %v2474 = vpop.f32.mrf.mxu0
        %v2475 = vadd.f32 0.0, %v2474
        %v2476 = vpop.f32.mrf.mxu0
        %v2477 = vpop.f32.mrf.mxu0
        %2478 = vdwg.mxu0
        %v2479 = vadd.f32 %v2165, %v2301
        %v2480 = vadd.f32 %v2166, %v2303
        %v2481 = vadd.f32 %v2167, %v2305
        %v2482 = vadd.f32 %v2168, %v2307
        %v2483 = vadd.f32 %v2169, %v2311
        %v2484 = vadd.f32 %v2170, %v2313
        %v2485 = vadd.f32 %v2171, %v2319
        %v2486 = vadd.f32 %v2172, %v2321
        %v2487 = vadd.f32 %v2173, %v2323
        %v2488 = vadd.f32 %v2174, %v2325
        %v2489 = vadd.f32 %v2175, %v2329
        %v2490 = vadd.f32 %v2176, %v2331
        %v2491 = vadd.f32 %v2177, %v2337
        %v2492 = vadd.f32 %v2178, %v2339
        %v2493 = vadd.f32 %v2179, %v2341
        %v2494 = vadd.f32 %v2180, %v2343
        %v2495 = vadd.f32 %v2181, %v2347
        %v2496 = vadd.f32 %v2182, %v2349
        %v2497 = vadd.f32 %v2183, %v2355
        %v2498 = vadd.f32 %v2184, %v2357
        %v2499 = vadd.f32 %v2185, %v2359
        %v2500 = vadd.f32 %v2186, %v2361
        %v2501 = vadd.f32 %v2187, %v2365
        %v2502 = vadd.f32 %v2188, %v2367
        %v2503 = vadd.f32 %v2189, %v2373
        %v2504 = vadd.f32 %v2190, %v2375
        %v2505 = vadd.f32 %v2191, %v2377
        %v2506 = vadd.f32 %v2192, %v2379
        %v2507 = vadd.f32 %v2193, %v2383
        %v2508 = vadd.f32 %v2194, %v2385
        %v2509 = vadd.f32 %v2195, %v2391
        %v2510 = vadd.f32 %v2196, %v2393
        %v2511 = vadd.f32 %v2197, %v2395
        %v2512 = vadd.f32 %v2198, %v2397
        %v2513 = vadd.f32 %v2199, %v2401
        %v2514 = vadd.f32 %v2200, %v2403
        %v2515 = vadd.f32 %v2201, %v2409
        %v2516 = vadd.f32 %v2202, %v2411
        %v2517 = vadd.f32 %v2203, %v2413
        %v2518 = vadd.f32 %v2204, %v2415
        %v2519 = vadd.f32 %v2205, %v2419
        %v2520 = vadd.f32 %v2206, %v2421
        %v2521 = vadd.f32 %v2207, %v2427
        %v2522 = vadd.f32 %v2208, %v2429
        %v2523 = vadd.f32 %v2209, %v2431
        %v2524 = vadd.f32 %v2210, %v2433
        %v2525 = vadd.f32 %v2211, %v2437
        %v2526 = vadd.f32 %v2212, %v2439
        %v2527 = vadd.f32 %v2213, %v2445
        %v2528 = vadd.f32 %v2214, %v2447
        %v2529 = vadd.f32 %v2215, %v2449
        %v2530 = vadd.f32 %v2216, %v2451
        %v2531 = vadd.f32 %v2217, %v2455
        %v2532 = vadd.f32 %v2218, %v2457
        %v2533 = vadd.f32 %v2219, %v2463
        %v2534 = vadd.f32 %v2220, %v2465
        %v2535 = vadd.f32 %v2221, %v2467
        %v2536 = vadd.f32 %v2222, %v2469
        %v2537 = vadd.f32 %v2223, %v2473
        %v2538 = vadd.f32 %v2224, %v2475
        %v2540 = vshrl.u32 %v455, 16
        %v2542 = vrot.slane %v2540, 4
        %v2543 = vshll.u32 %v455, 16
        %v2545 = vrot.slane %v2543, 5
        %v2546 = vor.u32 %v2542, %v2545
        %v2547 = vrot.slane %v2546, 4
        %v2549 = vshll.u32 %v456, 16
        %v2551 = vrot.slane %v2549, 5
        %v2552 = vsel %vm471, %v2547, %v2551
        %v2553 = vshrl.u32 %v456, 16
        %v2555 = vrot.slane %v2553, 4
        %v2556 = vor.u32 %v2555, %v2551
        %v2557 = vrot.slane %v2556, 4
        %v2559 = vshll.u32 %v457, 16
        %v2561 = vrot.slane %v2559, 5
        %v2562 = vsel %vm471, %v2557, %v2561
        %v2563 = vshrl.u32 %v457, 16
        %v2565 = vrot.slane %v2563, 4
        %v2566 = vor.u32 %v2565, %v2561
        %v2567 = vrot.slane %v2566, 4
        %v2569 = vshll.u32 %v458, 16
        %v2571 = vrot.slane %v2569, 5
        %v2572 = vsel %vm471, %v2567, %v2571
        %v2573 = vshrl.u32 %v458, 16
        %v2575 = vrot.slane %v2573, 4
        %v2576 = vor.u32 %v2575, %v2571
        %v2577 = vrot.slane %v2576, 4
        %v2579 = vshll.u32 %v459, 16
        %v2581 = vrot.slane %v2579, 5
        %v2582 = vsel %vm471, %v2577, %v2581
        %s2583 = scalar_lea.vmem [#allocation2], 128
        %v2584 = vld [vmem:[%s2583] sm:$0xff]
        %v2585 = vld [vmem:[%s2583 + $0x8] sm:$0xff]
        %v2586 = vld [vmem:[%s2583 + $0x10] sm:$0xff]
        %v2587 = vld [vmem:[%s2583 + $0x18] sm:$0xff]
        %v2588 = vunpack.c.l.b16 %v2552
        %v2589 = vunpack.c.l.b16 %v2562
        %v2590 = vunpack.c.l.b16 %v2572
        %v2591 = vunpack.c.l.b16 %v2582
        %v2592 = vpack.c.b16 %v2589, %v2588
        %v2593 = vpack.c.b16 %v2591, %v2590
        %v2598 = vunpack.c.l.b16 %v2584
        %v2599 = vunpack.c.h.b16 %v2584
        %v2600 = vunpack.c.l.b16 %v2585
        %v2601 = vunpack.c.h.b16 %v2585
        %v2602 = vunpack.c.l.b16 %v2586
        %v2603 = vunpack.c.h.b16 %v2586
        %v2604 = vunpack.c.l.b16 %v2587
        %v2605 = vunpack.c.h.b16 %v2587
        %v2606 = vpack.c.b16 %v2600, %v2598
        %v2607 = vpack.c.b16 %v2601, %v2599
        %v2608 = vpack.c.b16 %v2604, %v2602
        %v2609 = vpack.c.b16 %v2605, %v2603
        %v2615 = vsel %vm997, %v2592, 0
        %v2618 = vsel %vm997, %v2593, 0
        %2620 = vmatprep.subr.bf16.mxu0 0
        %2621 = vmatpush1.bf16.msra.mxu0 0
        %2622 = vmatprep.subr.bf16.mxu0 0
        %2623 = vmatpush1.bf16.msra.mxu0 0
        %2624 = vmatprep.subr.bf16.mxu0 0
        %2625 = vmatpush1.bf16.msra.mxu0 0
        %2626 = vmatprep.subr.bf16.mxu0 0
        %2627 = vmatpush1.bf16.msra.mxu0 0
        %2628 = vmatprep.subr.bf16.mxu0 0
        %2629 = vmatpush1.bf16.msra.mxu0 0
        %2630 = vmatprep.subr.bf16.mxu0 0
        %2631 = vmatpush1.bf16.msra.mxu0 0
        %2632 = vmatprep.subr.bf16.mxu0 %v2609
        %2633 = vmatpush1.bf16.msra.mxu0 %v2608
        %2634 = vmatprep.subr.bf16.mxu0 %v2607
        %2635 = vmatpush1.bf16.msra.mxu0 %v2606
        %2636 = vmatprep.subr.bf16.mxu0 0
        %2637 = vmatpush2.bf16.msra.mxu0 0
        %2638 = vmatprep.subr.bf16.mxu0 0
        %2639 = vmatpush2.bf16.msra.mxu0 0
        %2640 = vmatprep.subr.bf16.mxu0 0
        %2641 = vmatpush2.bf16.msra.mxu0 0
        %2642 = vmatprep.subr.bf16.mxu0 0
        %2643 = vmatpush2.bf16.msra.mxu0 0
        %2644 = vmatprep.subr.bf16.mxu0 0
        %2645 = vmatpush2.bf16.msra.mxu0 0
        %2646 = vmatprep.subr.bf16.mxu0 0
        %2647 = vmatpush2.bf16.msra.mxu0 0
        %2648 = vmatprep.subr.bf16.mxu0 0
        %2649 = vmatpush2.bf16.msra.mxu0 0
        %2650 = vmatprep.subr.bf16.mxu0 0
        %2651 = vmatpush2.bf16.msra.mxu0 0
        %2652 = vmatprep.mubr.bf16.mxu0 0
        %2653 = vmatmul.mubr.bf16.gmra.mxu0 %v1005
        %v2654 = vpop.f32.mrf.mxu0
        %v2655 = vadd.f32 0.0, %v2654
        %v2656 = vpop.f32.mrf.mxu0
        %v2657 = vadd.f32 0.0, %v2656
        %v2658 = vpop.f32.mrf.mxu0
        %v2659 = vadd.f32 0.0, %v2658
        %v2660 = vpop.f32.mrf.mxu0
        %v2661 = vadd.f32 0.0, %v2660
        %2662 = vmatprep.mubr.bf16.mxu0 0
        %2663 = vmatmul.mubr.bf16.gmra.mxu0 %v1008
        %v2664 = vpop.f32.mrf.mxu0
        %v2665 = vadd.f32 0.0, %v2664
        %v2666 = vpop.f32.mrf.mxu0
        %v2667 = vadd.f32 0.0, %v2666
        %v2668 = vpop.f32.mrf.mxu0
        %v2669 = vpop.f32.mrf.mxu0
        %2670 = vmatprep.mubr.bf16.mxu0 0
        %2671 = vmatmul.mubr.bf16.gmra.mxu0 %v1011
        %v2672 = vpop.f32.mrf.mxu0
        %v2673 = vadd.f32 0.0, %v2672
        %v2674 = vpop.f32.mrf.mxu0
        %v2675 = vadd.f32 0.0, %v2674
        %v2676 = vpop.f32.mrf.mxu0
        %v2677 = vadd.f32 0.0, %v2676
        %v2678 = vpop.f32.mrf.mxu0
        %v2679 = vadd.f32 0.0, %v2678
        %2680 = vmatprep.mubr.bf16.mxu0 0
        %2681 = vmatmul.mubr.bf16.gmra.mxu0 %v1014
        %v2682 = vpop.f32.mrf.mxu0
        %v2683 = vadd.f32 0.0, %v2682
        %v2684 = vpop.f32.mrf.mxu0
        %v2685 = vadd.f32 0.0, %v2684
        %v2686 = vpop.f32.mrf.mxu0
        %v2687 = vpop.f32.mrf.mxu0
        %2688 = vmatprep.mubr.bf16.mxu0 0
        %2689 = vmatmul.mubr.bf16.gmra.mxu0 %v1017
        %v2690 = vpop.f32.mrf.mxu0
        %v2691 = vadd.f32 0.0, %v2690
        %v2692 = vpop.f32.mrf.mxu0
        %v2693 = vadd.f32 0.0, %v2692
        %v2694 = vpop.f32.mrf.mxu0
        %v2695 = vadd.f32 0.0, %v2694
        %v2696 = vpop.f32.mrf.mxu0
        %v2697 = vadd.f32 0.0, %v2696
        %2698 = vmatprep.mubr.bf16.mxu0 0
        %2699 = vmatmul.mubr.bf16.gmra.mxu0 %v1020
        %v2700 = vpop.f32.mrf.mxu0
        %v2701 = vadd.f32 0.0, %v2700
        %v2702 = vpop.f32.mrf.mxu0
        %v2703 = vadd.f32 0.0, %v2702
        %v2704 = vpop.f32.mrf.mxu0
        %v2705 = vpop.f32.mrf.mxu0
        %2706 = vmatprep.mubr.bf16.mxu0 0
        %2707 = vmatmul.mubr.bf16.gmra.mxu0 %v1023
        %v2708 = vpop.f32.mrf.mxu0
        %v2709 = vadd.f32 0.0, %v2708
        %v2710 = vpop.f32.mrf.mxu0
        %v2711 = vadd.f32 0.0, %v2710
        %v2712 = vpop.f32.mrf.mxu0
        %v2713 = vadd.f32 0.0, %v2712
        %v2714 = vpop.f32.mrf.mxu0
        %v2715 = vadd.f32 0.0, %v2714
        %2716 = vmatprep.mubr.bf16.mxu0 0
        %2717 = vmatmul.mubr.bf16.gmra.mxu0 %v1026
        %v2718 = vpop.f32.mrf.mxu0
        %v2719 = vadd.f32 0.0, %v2718
        %v2720 = vpop.f32.mrf.mxu0
        %v2721 = vadd.f32 0.0, %v2720
        %v2722 = vpop.f32.mrf.mxu0
        %v2723 = vpop.f32.mrf.mxu0
        %2724 = vmatprep.mubr.bf16.mxu0 0
        %2725 = vmatmul.mubr.bf16.gmra.mxu0 %v1029
        %v2726 = vpop.f32.mrf.mxu0
        %v2727 = vadd.f32 0.0, %v2726
        %v2728 = vpop.f32.mrf.mxu0
        %v2729 = vadd.f32 0.0, %v2728
        %v2730 = vpop.f32.mrf.mxu0
        %v2731 = vadd.f32 0.0, %v2730
        %v2732 = vpop.f32.mrf.mxu0
        %v2733 = vadd.f32 0.0, %v2732
        %2734 = vmatprep.mubr.bf16.mxu0 0
        %2735 = vmatmul.mubr.bf16.gmra.mxu0 %v1032
        %v2736 = vpop.f32.mrf.mxu0
        %v2737 = vadd.f32 0.0, %v2736
        %v2738 = vpop.f32.mrf.mxu0
        %v2739 = vadd.f32 0.0, %v2738
        %v2740 = vpop.f32.mrf.mxu0
        %v2741 = vpop.f32.mrf.mxu0
        %2742 = vmatprep.mubr.bf16.mxu0 0
        %2743 = vmatmul.mubr.bf16.gmra.mxu0 %v1035
        %v2744 = vpop.f32.mrf.mxu0
        %v2745 = vadd.f32 0.0, %v2744
        %v2746 = vpop.f32.mrf.mxu0
        %v2747 = vadd.f32 0.0, %v2746
        %v2748 = vpop.f32.mrf.mxu0
        %v2749 = vadd.f32 0.0, %v2748
        %v2750 = vpop.f32.mrf.mxu0
        %v2751 = vadd.f32 0.0, %v2750
        %2752 = vmatprep.mubr.bf16.mxu0 0
        %2753 = vmatmul.mubr.bf16.gmra.mxu0 %v1038
        %v2754 = vpop.f32.mrf.mxu0
        %v2755 = vadd.f32 0.0, %v2754
        %v2756 = vpop.f32.mrf.mxu0
        %v2757 = vadd.f32 0.0, %v2756
        %v2758 = vpop.f32.mrf.mxu0
        %v2759 = vpop.f32.mrf.mxu0
        %2760 = vmatprep.mubr.bf16.mxu0 0
        %2761 = vmatmul.mubr.bf16.gmra.mxu0 %v1041
        %v2762 = vpop.f32.mrf.mxu0
        %v2763 = vadd.f32 0.0, %v2762
        %v2764 = vpop.f32.mrf.mxu0
        %v2765 = vadd.f32 0.0, %v2764
        %v2766 = vpop.f32.mrf.mxu0
        %v2767 = vadd.f32 0.0, %v2766
        %v2768 = vpop.f32.mrf.mxu0
        %v2769 = vadd.f32 0.0, %v2768
        %2770 = vmatprep.mubr.bf16.mxu0 0
        %2771 = vmatmul.mubr.bf16.gmra.mxu0 %v1044
        %v2772 = vpop.f32.mrf.mxu0
        %v2773 = vadd.f32 0.0, %v2772
        %v2774 = vpop.f32.mrf.mxu0
        %v2775 = vadd.f32 0.0, %v2774
        %v2776 = vpop.f32.mrf.mxu0
        %v2777 = vpop.f32.mrf.mxu0
        %2778 = vmatprep.mubr.bf16.mxu0 0
        %2779 = vmatmul.mubr.bf16.gmra.mxu0 %v1047
        %v2780 = vpop.f32.mrf.mxu0
        %v2781 = vadd.f32 0.0, %v2780
        %v2782 = vpop.f32.mrf.mxu0
        %v2783 = vadd.f32 0.0, %v2782
        %v2784 = vpop.f32.mrf.mxu0
        %v2785 = vadd.f32 0.0, %v2784
        %v2786 = vpop.f32.mrf.mxu0
        %v2787 = vadd.f32 0.0, %v2786
        %2788 = vmatprep.mubr.bf16.mxu0 0
        %2789 = vmatmul.mubr.bf16.gmra.mxu0 %v1050
        %v2790 = vpop.f32.mrf.mxu0
        %v2791 = vadd.f32 0.0, %v2790
        %v2792 = vpop.f32.mrf.mxu0
        %v2793 = vadd.f32 0.0, %v2792
        %v2794 = vpop.f32.mrf.mxu0
        %v2795 = vpop.f32.mrf.mxu0
        %2796 = vmatprep.mubr.bf16.mxu0 0
        %2797 = vmatmul.mubr.bf16.gmra.mxu0 %v1053
        %v2798 = vpop.f32.mrf.mxu0
        %v2799 = vadd.f32 0.0, %v2798
        %v2800 = vpop.f32.mrf.mxu0
        %v2801 = vadd.f32 0.0, %v2800
        %v2802 = vpop.f32.mrf.mxu0
        %v2803 = vadd.f32 0.0, %v2802
        %v2804 = vpop.f32.mrf.mxu0
        %v2805 = vadd.f32 0.0, %v2804
        %2806 = vmatprep.mubr.bf16.mxu0 0
        %2807 = vmatmul.mubr.bf16.gmra.mxu0 %v1056
        %v2808 = vpop.f32.mrf.mxu0
        %v2809 = vadd.f32 0.0, %v2808
        %v2810 = vpop.f32.mrf.mxu0
        %v2811 = vadd.f32 0.0, %v2810
        %v2812 = vpop.f32.mrf.mxu0
        %v2813 = vpop.f32.mrf.mxu0
        %2814 = vmatprep.mubr.bf16.mxu0 0
        %2815 = vmatmul.mubr.bf16.gmra.mxu0 %v2615
        %v2816 = vpop.f32.mrf.mxu0
        %v2817 = vadd.f32 0.0, %v2816
        %v2818 = vpop.f32.mrf.mxu0
        %v2819 = vadd.f32 0.0, %v2818
        %v2820 = vpop.f32.mrf.mxu0
        %v2821 = vadd.f32 0.0, %v2820
        %v2822 = vpop.f32.mrf.mxu0
        %v2823 = vadd.f32 0.0, %v2822
        %2824 = vmatprep.mubr.bf16.mxu0 0
        %2825 = vmatmul.mubr.bf16.gmra.mxu0 %v2618
        %v2826 = vpop.f32.mrf.mxu0
        %v2827 = vadd.f32 0.0, %v2826
        %v2828 = vpop.f32.mrf.mxu0
        %v2829 = vadd.f32 0.0, %v2828
        %v2830 = vpop.f32.mrf.mxu0
        %v2831 = vpop.f32.mrf.mxu0
        %2832 = vdwg.mxu0
        %v2833 = vadd.f32 %v2479, %v2655
        %v2834 = vadd.f32 %v2480, %v2657
        %v2835 = vadd.f32 %v2481, %v2659
        %v2836 = vadd.f32 %v2482, %v2661
        %v2837 = vadd.f32 %v2483, %v2665
        %v2838 = vadd.f32 %v2484, %v2667
        %v2839 = vadd.f32 %v2485, %v2673
        %v2840 = vadd.f32 %v2486, %v2675
        %v2841 = vadd.f32 %v2487, %v2677
        %v2842 = vadd.f32 %v2488, %v2679
        %v2843 = vadd.f32 %v2489, %v2683
        %v2844 = vadd.f32 %v2490, %v2685
        %v2845 = vadd.f32 %v2491, %v2691
        %v2846 = vadd.f32 %v2492, %v2693
        %v2847 = vadd.f32 %v2493, %v2695
        %v2848 = vadd.f32 %v2494, %v2697
        %v2849 = vadd.f32 %v2495, %v2701
        %v2850 = vadd.f32 %v2496, %v2703
        %v2851 = vadd.f32 %v2497, %v2709
        %v2852 = vadd.f32 %v2498, %v2711
        %v2853 = vadd.f32 %v2499, %v2713
        %v2854 = vadd.f32 %v2500, %v2715
        %v2855 = vadd.f32 %v2501, %v2719
        %v2856 = vadd.f32 %v2502, %v2721
        %v2857 = vadd.f32 %v2503, %v2727
        %v2858 = vadd.f32 %v2504, %v2729
        %v2859 = vadd.f32 %v2505, %v2731
        %v2860 = vadd.f32 %v2506, %v2733
        %v2861 = vadd.f32 %v2507, %v2737
        %v2862 = vadd.f32 %v2508, %v2739
        %v2863 = vadd.f32 %v2509, %v2745
        %v2864 = vadd.f32 %v2510, %v2747
        %v2865 = vadd.f32 %v2511, %v2749
        %v2866 = vadd.f32 %v2512, %v2751
        %v2867 = vadd.f32 %v2513, %v2755
        %v2868 = vadd.f32 %v2514, %v2757
        %v2869 = vadd.f32 %v2515, %v2763
        %v2870 = vadd.f32 %v2516, %v2765
        %v2871 = vadd.f32 %v2517, %v2767
        %v2872 = vadd.f32 %v2518, %v2769
        %v2873 = vadd.f32 %v2519, %v2773
        %v2874 = vadd.f32 %v2520, %v2775
        %v2875 = vadd.f32 %v2521, %v2781
        %v2876 = vadd.f32 %v2522, %v2783
        %v2877 = vadd.f32 %v2523, %v2785
        %v2878 = vadd.f32 %v2524, %v2787
        %v2879 = vadd.f32 %v2525, %v2791
        %v2880 = vadd.f32 %v2526, %v2793
        %v2881 = vadd.f32 %v2527, %v2799
        %v2882 = vadd.f32 %v2528, %v2801
        %v2883 = vadd.f32 %v2529, %v2803
        %v2884 = vadd.f32 %v2530, %v2805
        %v2885 = vadd.f32 %v2531, %v2809
        %v2886 = vadd.f32 %v2532, %v2811
        %v2887 = vadd.f32 %v2533, %v2817
        %v2888 = vadd.f32 %v2534, %v2819
        %v2889 = vadd.f32 %v2535, %v2821
        %v2890 = vadd.f32 %v2536, %v2823
        %v2891 = vadd.f32 %v2537, %v2827
        %v2892 = vadd.f32 %v2538, %v2829
        %v2894 = vrot.slane %v455, 5
        %v2895 = vrot.slane %v2894, 4
        %v2896 = vrot.slane %v456, 5
        %v2897 = vsel %vm1676, %v2895, %v2896
        %v2898 = vrot.slane %v2896, 4
        %v2899 = vrot.slane %v457, 5
        %v2900 = vsel %vm1676, %v2898, %v2899
        %v2901 = vrot.slane %v2899, 4
        %v2902 = vrot.slane %v458, 5
        %v2903 = vsel %vm1676, %v2901, %v2902
        %v2904 = vrot.slane %v2902, 4
        %v2905 = vrot.slane %v459, 5
        %v2906 = vsel %vm1676, %v2904, %v2905
        %s2907 = scalar_lea.vmem [#allocation2], 160
        %v2908 = vld [vmem:[%s2907] sm:$0xff]
        %v2909 = vld [vmem:[%s2907 + $0x8] sm:$0xff]
        %v2910 = vld [vmem:[%s2907 + $0x10] sm:$0xff]
        %v2911 = vld [vmem:[%s2907 + $0x18] sm:$0xff]
        %v2912 = vunpack.c.l.b16 %v2897
        %v2913 = vunpack.c.l.b16 %v2900
        %v2914 = vunpack.c.l.b16 %v2903
        %v2915 = vunpack.c.l.b16 %v2906
        %v2916 = vpack.c.b16 %v2913, %v2912
        %v2917 = vpack.c.b16 %v2915, %v2914
        %v2922 = vunpack.c.l.b16 %v2908
        %v2923 = vunpack.c.h.b16 %v2908
        %v2924 = vunpack.c.l.b16 %v2909
        %v2925 = vunpack.c.h.b16 %v2909
        %v2926 = vunpack.c.l.b16 %v2910
        %v2927 = vunpack.c.h.b16 %v2910
        %v2928 = vunpack.c.l.b16 %v2911
        %v2929 = vunpack.c.h.b16 %v2911
        %v2930 = vpack.c.b16 %v2924, %v2922
        %v2931 = vpack.c.b16 %v2925, %v2923
        %v2932 = vpack.c.b16 %v2928, %v2926
        %v2933 = vpack.c.b16 %v2929, %v2927
        %v2939 = vsel %vm997, %v2916, 0
        %v2942 = vsel %vm997, %v2917, 0
        %2944 = vmatprep.subr.bf16.mxu0 0
        %2945 = vmatpush1.bf16.msra.mxu0 0
        %2946 = vmatprep.subr.bf16.mxu0 0
        %2947 = vmatpush1.bf16.msra.mxu0 0
        %2948 = vmatprep.subr.bf16.mxu0 0
        %2949 = vmatpush1.bf16.msra.mxu0 0
        %2950 = vmatprep.subr.bf16.mxu0 0
        %2951 = vmatpush1.bf16.msra.mxu0 0
        %2952 = vmatprep.subr.bf16.mxu0 0
        %2953 = vmatpush1.bf16.msra.mxu0 0
        %2954 = vmatprep.subr.bf16.mxu0 0
        %2955 = vmatpush1.bf16.msra.mxu0 0
        %2956 = vmatprep.subr.bf16.mxu0 %v2933
        %2957 = vmatpush1.bf16.msra.mxu0 %v2932
        %2958 = vmatprep.subr.bf16.mxu0 %v2931
        %2959 = vmatpush1.bf16.msra.mxu0 %v2930
        %2960 = vmatprep.subr.bf16.mxu0 0
        %2961 = vmatpush2.bf16.msra.mxu0 0
        %2962 = vmatprep.subr.bf16.mxu0 0
        %2963 = vmatpush2.bf16.msra.mxu0 0
        %2964 = vmatprep.subr.bf16.mxu0 0
        %2965 = vmatpush2.bf16.msra.mxu0 0
        %2966 = vmatprep.subr.bf16.mxu0 0
        %2967 = vmatpush2.bf16.msra.mxu0 0
        %2968 = vmatprep.subr.bf16.mxu0 0
        %2969 = vmatpush2.bf16.msra.mxu0 0
        %2970 = vmatprep.subr.bf16.mxu0 0
        %2971 = vmatpush2.bf16.msra.mxu0 0
        %2972 = vmatprep.subr.bf16.mxu0 0
        %2973 = vmatpush2.bf16.msra.mxu0 0
        %2974 = vmatprep.subr.bf16.mxu0 0
        %2975 = vmatpush2.bf16.msra.mxu0 0
        %2976 = vmatprep.mubr.bf16.mxu0 0
        %2977 = vmatmul.mubr.bf16.gmra.mxu0 %v1899
        %v2978 = vpop.f32.mrf.mxu0
        %v2979 = vadd.f32 0.0, %v2978
        %v2980 = vpop.f32.mrf.mxu0
        %v2981 = vadd.f32 0.0, %v2980
        %v2982 = vpop.f32.mrf.mxu0
        %v2983 = vadd.f32 0.0, %v2982
        %v2984 = vpop.f32.mrf.mxu0
        %v2985 = vadd.f32 0.0, %v2984
        %2986 = vmatprep.mubr.bf16.mxu0 0
        %2987 = vmatmul.mubr.bf16.gmra.mxu0 %v1902
        %v2988 = vpop.f32.mrf.mxu0
        %v2989 = vadd.f32 0.0, %v2988
        %v2990 = vpop.f32.mrf.mxu0
        %v2991 = vadd.f32 0.0, %v2990
        %v2992 = vpop.f32.mrf.mxu0
        %v2993 = vpop.f32.mrf.mxu0
        %2994 = vmatprep.mubr.bf16.mxu0 0
        %2995 = vmatmul.mubr.bf16.gmra.mxu0 %v1905
        %v2996 = vpop.f32.mrf.mxu0
        %v2997 = vadd.f32 0.0, %v2996
        %v2998 = vpop.f32.mrf.mxu0
        %v2999 = vadd.f32 0.0, %v2998
        %v3000 = vpop.f32.mrf.mxu0
        %v3001 = vadd.f32 0.0, %v3000
        %v3002 = vpop.f32.mrf.mxu0
        %v3003 = vadd.f32 0.0, %v3002
        %3004 = vmatprep.mubr.bf16.mxu0 0
        %3005 = vmatmul.mubr.bf16.gmra.mxu0 %v1908
        %v3006 = vpop.f32.mrf.mxu0
        %v3007 = vadd.f32 0.0, %v3006
        %v3008 = vpop.f32.mrf.mxu0
        %v3009 = vadd.f32 0.0, %v3008
        %v3010 = vpop.f32.mrf.mxu0
        %v3011 = vpop.f32.mrf.mxu0
        %3012 = vmatprep.mubr.bf16.mxu0 0
        %3013 = vmatmul.mubr.bf16.gmra.mxu0 %v1911
        %v3014 = vpop.f32.mrf.mxu0
        %v3015 = vadd.f32 0.0, %v3014
        %v3016 = vpop.f32.mrf.mxu0
        %v3017 = vadd.f32 0.0, %v3016
        %v3018 = vpop.f32.mrf.mxu0
        %v3019 = vadd.f32 0.0, %v3018
        %v3020 = vpop.f32.mrf.mxu0
        %v3021 = vadd.f32 0.0, %v3020
        %3022 = vmatprep.mubr.bf16.mxu0 0
        %3023 = vmatmul.mubr.bf16.gmra.mxu0 %v1914
        %v3024 = vpop.f32.mrf.mxu0
        %v3025 = vadd.f32 0.0, %v3024
        %v3026 = vpop.f32.mrf.mxu0
        %v3027 = vadd.f32 0.0, %v3026
        %v3028 = vpop.f32.mrf.mxu0
        %v3029 = vpop.f32.mrf.mxu0
        %3030 = vmatprep.mubr.bf16.mxu0 0
        %3031 = vmatmul.mubr.bf16.gmra.mxu0 %v1917
        %v3032 = vpop.f32.mrf.mxu0
        %v3033 = vadd.f32 0.0, %v3032
        %v3034 = vpop.f32.mrf.mxu0
        %v3035 = vadd.f32 0.0, %v3034
        %v3036 = vpop.f32.mrf.mxu0
        %v3037 = vadd.f32 0.0, %v3036
        %v3038 = vpop.f32.mrf.mxu0
        %v3039 = vadd.f32 0.0, %v3038
        %3040 = vmatprep.mubr.bf16.mxu0 0
        %3041 = vmatmul.mubr.bf16.gmra.mxu0 %v1920
        %v3042 = vpop.f32.mrf.mxu0
        %v3043 = vadd.f32 0.0, %v3042
        %v3044 = vpop.f32.mrf.mxu0
        %v3045 = vadd.f32 0.0, %v3044
        %v3046 = vpop.f32.mrf.mxu0
        %v3047 = vpop.f32.mrf.mxu0
        %3048 = vmatprep.mubr.bf16.mxu0 0
        %3049 = vmatmul.mubr.bf16.gmra.mxu0 %v1923
        %v3050 = vpop.f32.mrf.mxu0
        %v3051 = vadd.f32 0.0, %v3050
        %v3052 = vpop.f32.mrf.mxu0
        %v3053 = vadd.f32 0.0, %v3052
        %v3054 = vpop.f32.mrf.mxu0
        %v3055 = vadd.f32 0.0, %v3054
        %v3056 = vpop.f32.mrf.mxu0
        %v3057 = vadd.f32 0.0, %v3056
        %3058 = vmatprep.mubr.bf16.mxu0 0
        %3059 = vmatmul.mubr.bf16.gmra.mxu0 %v1926
        %v3060 = vpop.f32.mrf.mxu0
        %v3061 = vadd.f32 0.0, %v3060
        %v3062 = vpop.f32.mrf.mxu0
        %v3063 = vadd.f32 0.0, %v3062
        %v3064 = vpop.f32.mrf.mxu0
        %v3065 = vpop.f32.mrf.mxu0
        %3066 = vmatprep.mubr.bf16.mxu0 0
        %3067 = vmatmul.mubr.bf16.gmra.mxu0 %v1929
        %v3068 = vpop.f32.mrf.mxu0
        %v3069 = vadd.f32 0.0, %v3068
        %v3070 = vpop.f32.mrf.mxu0
        %v3071 = vadd.f32 0.0, %v3070
        %v3072 = vpop.f32.mrf.mxu0
        %v3073 = vadd.f32 0.0, %v3072
        %v3074 = vpop.f32.mrf.mxu0
        %v3075 = vadd.f32 0.0, %v3074
        %3076 = vmatprep.mubr.bf16.mxu0 0
        %3077 = vmatmul.mubr.bf16.gmra.mxu0 %v1932
        %v3078 = vpop.f32.mrf.mxu0
        %v3079 = vadd.f32 0.0, %v3078
        %v3080 = vpop.f32.mrf.mxu0
        %v3081 = vadd.f32 0.0, %v3080
        %v3082 = vpop.f32.mrf.mxu0
        %v3083 = vpop.f32.mrf.mxu0
        %3084 = vmatprep.mubr.bf16.mxu0 0
        %3085 = vmatmul.mubr.bf16.gmra.mxu0 %v1935
        %v3086 = vpop.f32.mrf.mxu0
        %v3087 = vadd.f32 0.0, %v3086
        %v3088 = vpop.f32.mrf.mxu0
        %v3089 = vadd.f32 0.0, %v3088
        %v3090 = vpop.f32.mrf.mxu0
        %v3091 = vadd.f32 0.0, %v3090
        %v3092 = vpop.f32.mrf.mxu0
        %v3093 = vadd.f32 0.0, %v3092
        %3094 = vmatprep.mubr.bf16.mxu0 0
        %3095 = vmatmul.mubr.bf16.gmra.mxu0 %v1938
        %v3096 = vpop.f32.mrf.mxu0
        %v3097 = vadd.f32 0.0, %v3096
        %v3098 = vpop.f32.mrf.mxu0
        %v3099 = vadd.f32 0.0, %v3098
        %v3100 = vpop.f32.mrf.mxu0
        %v3101 = vpop.f32.mrf.mxu0
        %3102 = vmatprep.mubr.bf16.mxu0 0
        %3103 = vmatmul.mubr.bf16.gmra.mxu0 %v1941
        %v3104 = vpop.f32.mrf.mxu0
        %v3105 = vadd.f32 0.0, %v3104
        %v3106 = vpop.f32.mrf.mxu0
        %v3107 = vadd.f32 0.0, %v3106
        %v3108 = vpop.f32.mrf.mxu0
        %v3109 = vadd.f32 0.0, %v3108
        %v3110 = vpop.f32.mrf.mxu0
        %v3111 = vadd.f32 0.0, %v3110
        %3112 = vmatprep.mubr.bf16.mxu0 0
        %3113 = vmatmul.mubr.bf16.gmra.mxu0 %v1944
        %v3114 = vpop.f32.mrf.mxu0
        %v3115 = vadd.f32 0.0, %v3114
        %v3116 = vpop.f32.mrf.mxu0
        %v3117 = vadd.f32 0.0, %v3116
        %v3118 = vpop.f32.mrf.mxu0
        %v3119 = vpop.f32.mrf.mxu0
        %3120 = vmatprep.mubr.bf16.mxu0 0
        %3121 = vmatmul.mubr.bf16.gmra.mxu0 %v1947
        %v3122 = vpop.f32.mrf.mxu0
        %v3123 = vadd.f32 0.0, %v3122
        %v3124 = vpop.f32.mrf.mxu0
        %v3125 = vadd.f32 0.0, %v3124
        %v3126 = vpop.f32.mrf.mxu0
        %v3127 = vadd.f32 0.0, %v3126
        %v3128 = vpop.f32.mrf.mxu0
        %v3129 = vadd.f32 0.0, %v3128
        %3130 = vmatprep.mubr.bf16.mxu0 0
        %3131 = vmatmul.mubr.bf16.gmra.mxu0 %v1950
        %v3132 = vpop.f32.mrf.mxu0
        %v3133 = vadd.f32 0.0, %v3132
        %v3134 = vpop.f32.mrf.mxu0
        %v3135 = vadd.f32 0.0, %v3134
        %v3136 = vpop.f32.mrf.mxu0
        %v3137 = vpop.f32.mrf.mxu0
        %3138 = vmatprep.mubr.bf16.mxu0 0
        %3139 = vmatmul.mubr.bf16.gmra.mxu0 %v2939
        %v3140 = vpop.f32.mrf.mxu0
        %v3141 = vadd.f32 0.0, %v3140
        %v3142 = vpop.f32.mrf.mxu0
        %v3143 = vadd.f32 0.0, %v3142
        %v3144 = vpop.f32.mrf.mxu0
        %v3145 = vadd.f32 0.0, %v3144
        %v3146 = vpop.f32.mrf.mxu0
        %v3147 = vadd.f32 0.0, %v3146
        %3148 = vmatprep.mubr.bf16.mxu0 0
        %3149 = vmatmul.mubr.bf16.gmra.mxu0 %v2942
        %v3150 = vpop.f32.mrf.mxu0
        %v3151 = vadd.f32 0.0, %v3150
        %v3152 = vpop.f32.mrf.mxu0
        %v3153 = vadd.f32 0.0, %v3152
        %v3154 = vpop.f32.mrf.mxu0
        %v3155 = vpop.f32.mrf.mxu0
        %3156 = vdwg.mxu0
        %v3157 = vadd.f32 %v2833, %v2979
        %v3158 = vadd.f32 %v2834, %v2981
        %v3159 = vadd.f32 %v2835, %v2983
        %v3160 = vadd.f32 %v2836, %v2985
        %v3161 = vadd.f32 %v2837, %v2989
        %v3162 = vadd.f32 %v2838, %v2991
        %v3163 = vadd.f32 %v2839, %v2997
        %v3164 = vadd.f32 %v2840, %v2999
        %v3165 = vadd.f32 %v2841, %v3001
        %v3166 = vadd.f32 %v2842, %v3003
        %v3167 = vadd.f32 %v2843, %v3007
        %v3168 = vadd.f32 %v2844, %v3009
        %v3169 = vadd.f32 %v2845, %v3015
        %v3170 = vadd.f32 %v2846, %v3017
        %v3171 = vadd.f32 %v2847, %v3019
        %v3172 = vadd.f32 %v2848, %v3021
        %v3173 = vadd.f32 %v2849, %v3025
        %v3174 = vadd.f32 %v2850, %v3027
        %v3175 = vadd.f32 %v2851, %v3033
        %v3176 = vadd.f32 %v2852, %v3035
        %v3177 = vadd.f32 %v2853, %v3037
        %v3178 = vadd.f32 %v2854, %v3039
        %v3179 = vadd.f32 %v2855, %v3043
        %v3180 = vadd.f32 %v2856, %v3045
        %v3181 = vadd.f32 %v2857, %v3051
        %v3182 = vadd.f32 %v2858, %v3053
        %v3183 = vadd.f32 %v2859, %v3055
        %v3184 = vadd.f32 %v2860, %v3057
        %v3185 = vadd.f32 %v2861, %v3061
        %v3186 = vadd.f32 %v2862, %v3063
        %v3187 = vadd.f32 %v2863, %v3069
        %v3188 = vadd.f32 %v2864, %v3071
        %v3189 = vadd.f32 %v2865, %v3073
        %v3190 = vadd.f32 %v2866, %v3075
        %v3191 = vadd.f32 %v2867, %v3079
        %v3192 = vadd.f32 %v2868, %v3081
        %v3193 = vadd.f32 %v2869, %v3087
        %v3194 = vadd.f32 %v2870, %v3089
        %v3195 = vadd.f32 %v2871, %v3091
        %v3196 = vadd.f32 %v2872, %v3093
        %v3197 = vadd.f32 %v2873, %v3097
        %v3198 = vadd.f32 %v2874, %v3099
        %v3199 = vadd.f32 %v2875, %v3105
        %v3200 = vadd.f32 %v2876, %v3107
        %v3201 = vadd.f32 %v2877, %v3109
        %v3202 = vadd.f32 %v2878, %v3111
        %v3203 = vadd.f32 %v2879, %v3115
        %v3204 = vadd.f32 %v2880, %v3117
        %v3205 = vadd.f32 %v2881, %v3123
        %v3206 = vadd.f32 %v2882, %v3125
        %v3207 = vadd.f32 %v2883, %v3127
        %v3208 = vadd.f32 %v2884, %v3129
        %v3209 = vadd.f32 %v2885, %v3133
        %v3210 = vadd.f32 %v2886, %v3135
        %v3211 = vadd.f32 %v2887, %v3141
        %v3212 = vadd.f32 %v2888, %v3143
        %v3213 = vadd.f32 %v2889, %v3145
        %v3214 = vadd.f32 %v2890, %v3147
        %v3215 = vadd.f32 %v2891, %v3151
        %v3216 = vadd.f32 %v2892, %v3153
        %s3217 = scalar_lea.vmem [#allocation2], 192
        %v3218 = vld [vmem:[%s3217] sm:$0xff]
        %v3219 = vld [vmem:[%s3217 + $0x8] sm:$0xff]
        %v3220 = vld [vmem:[%s3217 + $0x10] sm:$0xff]
        %v3221 = vld [vmem:[%s3217 + $0x18] sm:$0xff]
        %v3226 = vunpack.c.l.b16 %v460
        %v3227 = vunpack.c.l.b16 %v461
        %v3228 = vunpack.c.l.b16 %v462
        %v3229 = vunpack.c.l.b16 %v463
        %v3230 = vpack.c.b16 %v3227, %v3226
        %v3231 = vpack.c.b16 %v3229, %v3228
        %v3236 = vunpack.c.l.b16 %v3218
        %v3237 = vunpack.c.h.b16 %v3218
        %v3238 = vunpack.c.l.b16 %v3219
        %v3239 = vunpack.c.h.b16 %v3219
        %v3240 = vunpack.c.l.b16 %v3220
        %v3241 = vunpack.c.h.b16 %v3220
        %v3242 = vunpack.c.l.b16 %v3221
        %v3243 = vunpack.c.h.b16 %v3221
        %v3244 = vpack.c.b16 %v3238, %v3236
        %v3245 = vpack.c.b16 %v3239, %v3237
        %v3246 = vpack.c.b16 %v3242, %v3240
        %v3247 = vpack.c.b16 %v3243, %v3241
        %v3253 = vsel %vm997, %v3230, 0
        %v3256 = vsel %vm997, %v3231, 0
        %3258 = vmatprep.subr.bf16.mxu0 0
        %3259 = vmatpush1.bf16.msra.mxu0 0
        %3260 = vmatprep.subr.bf16.mxu0 0
        %3261 = vmatpush1.bf16.msra.mxu0 0
        %3262 = vmatprep.subr.bf16.mxu0 0
        %3263 = vmatpush1.bf16.msra.mxu0 0
        %3264 = vmatprep.subr.bf16.mxu0 0
        %3265 = vmatpush1.bf16.msra.mxu0 0
        %3266 = vmatprep.subr.bf16.mxu0 0
        %3267 = vmatpush1.bf16.msra.mxu0 0
        %3268 = vmatprep.subr.bf16.mxu0 0
        %3269 = vmatpush1.bf16.msra.mxu0 0
        %3270 = vmatprep.subr.bf16.mxu0 %v3247
        %3271 = vmatpush1.bf16.msra.mxu0 %v3246
        %3272 = vmatprep.subr.bf16.mxu0 %v3245
        %3273 = vmatpush1.bf16.msra.mxu0 %v3244
        %3274 = vmatprep.subr.bf16.mxu0 0
        %3275 = vmatpush2.bf16.msra.mxu0 0
        %3276 = vmatprep.subr.bf16.mxu0 0
        %3277 = vmatpush2.bf16.msra.mxu0 0
        %3278 = vmatprep.subr.bf16.mxu0 0
        %3279 = vmatpush2.bf16.msra.mxu0 0
        %3280 = vmatprep.subr.bf16.mxu0 0
        %3281 = vmatpush2.bf16.msra.mxu0 0
        %3282 = vmatprep.subr.bf16.mxu0 0
        %3283 = vmatpush2.bf16.msra.mxu0 0
        %3284 = vmatprep.subr.bf16.mxu0 0
        %3285 = vmatpush2.bf16.msra.mxu0 0
        %3286 = vmatprep.subr.bf16.mxu0 0
        %3287 = vmatpush2.bf16.msra.mxu0 0
        %3288 = vmatprep.subr.bf16.mxu0 0
        %3289 = vmatpush2.bf16.msra.mxu0 0
        %3290 = vmatprep.mubr.bf16.mxu0 0
        %3291 = vmatmul.mubr.bf16.gmra.mxu0 %v1404
        %v3292 = vpop.f32.mrf.mxu0
        %v3293 = vadd.f32 0.0, %v3292
        %v3294 = vpop.f32.mrf.mxu0
        %v3295 = vadd.f32 0.0, %v3294
        %v3296 = vpop.f32.mrf.mxu0
        %v3297 = vadd.f32 0.0, %v3296
        %v3298 = vpop.f32.mrf.mxu0
        %v3299 = vadd.f32 0.0, %v3298
        %3300 = vmatprep.mubr.bf16.mxu0 0
        %3301 = vmatmul.mubr.bf16.gmra.mxu0 %v1407
        %v3302 = vpop.f32.mrf.mxu0
        %v3303 = vadd.f32 0.0, %v3302
        %v3304 = vpop.f32.mrf.mxu0
        %v3305 = vadd.f32 0.0, %v3304
        %v3306 = vpop.f32.mrf.mxu0
        %v3307 = vpop.f32.mrf.mxu0
        %3308 = vmatprep.mubr.bf16.mxu0 0
        %3309 = vmatmul.mubr.bf16.gmra.mxu0 %v1410
        %v3310 = vpop.f32.mrf.mxu0
        %v3311 = vadd.f32 0.0, %v3310
        %v3312 = vpop.f32.mrf.mxu0
        %v3313 = vadd.f32 0.0, %v3312
        %v3314 = vpop.f32.mrf.mxu0
        %v3315 = vadd.f32 0.0, %v3314
        %v3316 = vpop.f32.mrf.mxu0
        %v3317 = vadd.f32 0.0, %v3316
        %3318 = vmatprep.mubr.bf16.mxu0 0
        %3319 = vmatmul.mubr.bf16.gmra.mxu0 %v1413
        %v3320 = vpop.f32.mrf.mxu0
        %v3321 = vadd.f32 0.0, %v3320
        %v3322 = vpop.f32.mrf.mxu0
        %v3323 = vadd.f32 0.0, %v3322
        %v3324 = vpop.f32.mrf.mxu0
        %v3325 = vpop.f32.mrf.mxu0
        %3326 = vmatprep.mubr.bf16.mxu0 0
        %3327 = vmatmul.mubr.bf16.gmra.mxu0 %v1416
        %v3328 = vpop.f32.mrf.mxu0
        %v3329 = vadd.f32 0.0, %v3328
        %v3330 = vpop.f32.mrf.mxu0
        %v3331 = vadd.f32 0.0, %v3330
        %v3332 = vpop.f32.mrf.mxu0
        %v3333 = vadd.f32 0.0, %v3332
        %v3334 = vpop.f32.mrf.mxu0
        %v3335 = vadd.f32 0.0, %v3334
        %3336 = vmatprep.mubr.bf16.mxu0 0
        %3337 = vmatmul.mubr.bf16.gmra.mxu0 %v1419
        %v3338 = vpop.f32.mrf.mxu0
        %v3339 = vadd.f32 0.0, %v3338
        %v3340 = vpop.f32.mrf.mxu0
        %v3341 = vadd.f32 0.0, %v3340
        %v3342 = vpop.f32.mrf.mxu0
        %v3343 = vpop.f32.mrf.mxu0
        %3344 = vmatprep.mubr.bf16.mxu0 0
        %3345 = vmatmul.mubr.bf16.gmra.mxu0 %v1422
        %v3346 = vpop.f32.mrf.mxu0
        %v3347 = vadd.f32 0.0, %v3346
        %v3348 = vpop.f32.mrf.mxu0
        %v3349 = vadd.f32 0.0, %v3348
        %v3350 = vpop.f32.mrf.mxu0
        %v3351 = vadd.f32 0.0, %v3350
        %v3352 = vpop.f32.mrf.mxu0
        %v3353 = vadd.f32 0.0, %v3352
        %3354 = vmatprep.mubr.bf16.mxu0 0
        %3355 = vmatmul.mubr.bf16.gmra.mxu0 %v1425
        %v3356 = vpop.f32.mrf.mxu0
        %v3357 = vadd.f32 0.0, %v3356
        %v3358 = vpop.f32.mrf.mxu0
        %v3359 = vadd.f32 0.0, %v3358
        %v3360 = vpop.f32.mrf.mxu0
        %v3361 = vpop.f32.mrf.mxu0
        %3362 = vmatprep.mubr.bf16.mxu0 0
        %3363 = vmatmul.mubr.bf16.gmra.mxu0 %v1428
        %v3364 = vpop.f32.mrf.mxu0
        %v3365 = vadd.f32 0.0, %v3364
        %v3366 = vpop.f32.mrf.mxu0
        %v3367 = vadd.f32 0.0, %v3366
        %v3368 = vpop.f32.mrf.mxu0
        %v3369 = vadd.f32 0.0, %v3368
        %v3370 = vpop.f32.mrf.mxu0
        %v3371 = vadd.f32 0.0, %v3370
        %3372 = vmatprep.mubr.bf16.mxu0 0
        %3373 = vmatmul.mubr.bf16.gmra.mxu0 %v1431
        %v3374 = vpop.f32.mrf.mxu0
        %v3375 = vadd.f32 0.0, %v3374
        %v3376 = vpop.f32.mrf.mxu0
        %v3377 = vadd.f32 0.0, %v3376
        %v3378 = vpop.f32.mrf.mxu0
        %v3379 = vpop.f32.mrf.mxu0
        %3380 = vmatprep.mubr.bf16.mxu0 0
        %3381 = vmatmul.mubr.bf16.gmra.mxu0 %v1434
        %v3382 = vpop.f32.mrf.mxu0
        %v3383 = vadd.f32 0.0, %v3382
        %v3384 = vpop.f32.mrf.mxu0
        %v3385 = vadd.f32 0.0, %v3384
        %v3386 = vpop.f32.mrf.mxu0
        %v3387 = vadd.f32 0.0, %v3386
        %v3388 = vpop.f32.mrf.mxu0
        %v3389 = vadd.f32 0.0, %v3388
        %3390 = vmatprep.mubr.bf16.mxu0 0
        %3391 = vmatmul.mubr.bf16.gmra.mxu0 %v1437
        %v3392 = vpop.f32.mrf.mxu0
        %v3393 = vadd.f32 0.0, %v3392
        %v3394 = vpop.f32.mrf.mxu0
        %v3395 = vadd.f32 0.0, %v3394
        %v3396 = vpop.f32.mrf.mxu0
        %v3397 = vpop.f32.mrf.mxu0
        %3398 = vmatprep.mubr.bf16.mxu0 0
        %3399 = vmatmul.mubr.bf16.gmra.mxu0 %v1440
        %v3400 = vpop.f32.mrf.mxu0
        %v3401 = vadd.f32 0.0, %v3400
        %v3402 = vpop.f32.mrf.mxu0
        %v3403 = vadd.f32 0.0, %v3402
        %v3404 = vpop.f32.mrf.mxu0
        %v3405 = vadd.f32 0.0, %v3404
        %v3406 = vpop.f32.mrf.mxu0
        %v3407 = vadd.f32 0.0, %v3406
        %3408 = vmatprep.mubr.bf16.mxu0 0
        %3409 = vmatmul.mubr.bf16.gmra.mxu0 %v1443
        %v3410 = vpop.f32.mrf.mxu0
        %v3411 = vadd.f32 0.0, %v3410
        %v3412 = vpop.f32.mrf.mxu0
        %v3413 = vadd.f32 0.0, %v3412
        %v3414 = vpop.f32.mrf.mxu0
        %v3415 = vpop.f32.mrf.mxu0
        %3416 = vmatprep.mubr.bf16.mxu0 0
        %3417 = vmatmul.mubr.bf16.gmra.mxu0 %v1446
        %v3418 = vpop.f32.mrf.mxu0
        %v3419 = vadd.f32 0.0, %v3418
        %v3420 = vpop.f32.mrf.mxu0
        %v3421 = vadd.f32 0.0, %v3420
        %v3422 = vpop.f32.mrf.mxu0
        %v3423 = vadd.f32 0.0, %v3422
        %v3424 = vpop.f32.mrf.mxu0
        %v3425 = vadd.f32 0.0, %v3424
        %3426 = vmatprep.mubr.bf16.mxu0 0
        %3427 = vmatmul.mubr.bf16.gmra.mxu0 %v1449
        %v3428 = vpop.f32.mrf.mxu0
        %v3429 = vadd.f32 0.0, %v3428
        %v3430 = vpop.f32.mrf.mxu0
        %v3431 = vadd.f32 0.0, %v3430
        %v3432 = vpop.f32.mrf.mxu0
        %v3433 = vpop.f32.mrf.mxu0
        %3434 = vmatprep.mubr.bf16.mxu0 0
        %3435 = vmatmul.mubr.bf16.gmra.mxu0 %v2261
        %v3436 = vpop.f32.mrf.mxu0
        %v3437 = vadd.f32 0.0, %v3436
        %v3438 = vpop.f32.mrf.mxu0
        %v3439 = vadd.f32 0.0, %v3438
        %v3440 = vpop.f32.mrf.mxu0
        %v3441 = vadd.f32 0.0, %v3440
        %v3442 = vpop.f32.mrf.mxu0
        %v3443 = vadd.f32 0.0, %v3442
        %3444 = vmatprep.mubr.bf16.mxu0 0
        %3445 = vmatmul.mubr.bf16.gmra.mxu0 %v2264
        %v3446 = vpop.f32.mrf.mxu0
        %v3447 = vadd.f32 0.0, %v3446
        %v3448 = vpop.f32.mrf.mxu0
        %v3449 = vadd.f32 0.0, %v3448
        %v3450 = vpop.f32.mrf.mxu0
        %v3451 = vpop.f32.mrf.mxu0
        %3452 = vmatprep.mubr.bf16.mxu0 0
        %3453 = vmatmul.mubr.bf16.gmra.mxu0 %v3253
        %v3454 = vpop.f32.mrf.mxu0
        %v3455 = vadd.f32 0.0, %v3454
        %v3456 = vpop.f32.mrf.mxu0
        %v3457 = vadd.f32 0.0, %v3456
        %v3458 = vpop.f32.mrf.mxu0
        %v3459 = vadd.f32 0.0, %v3458
        %v3460 = vpop.f32.mrf.mxu0
        %v3461 = vadd.f32 0.0, %v3460
        %3462 = vmatprep.mubr.bf16.mxu0 0
        %3463 = vmatmul.mubr.bf16.gmra.mxu0 %v3256
        %v3464 = vpop.f32.mrf.mxu0
        %v3465 = vadd.f32 0.0, %v3464
        %v3466 = vpop.f32.mrf.mxu0
        %v3467 = vadd.f32 0.0, %v3466
        %v3468 = vpop.f32.mrf.mxu0
        %v3469 = vpop.f32.mrf.mxu0
        %3470 = vdwg.mxu0
        %v3471 = vadd.f32 %v3157, %v3293
        %v3472 = vadd.f32 %v3158, %v3295
        %v3473 = vadd.f32 %v3159, %v3297
        %v3474 = vadd.f32 %v3160, %v3299
        %v3475 = vadd.f32 %v3161, %v3303
        %v3476 = vadd.f32 %v3162, %v3305
        %v3477 = vadd.f32 %v3163, %v3311
        %v3478 = vadd.f32 %v3164, %v3313
        %v3479 = vadd.f32 %v3165, %v3315
        %v3480 = vadd.f32 %v3166, %v3317
        %v3481 = vadd.f32 %v3167, %v3321
        %v3482 = vadd.f32 %v3168, %v3323
        %v3483 = vadd.f32 %v3169, %v3329
        %v3484 = vadd.f32 %v3170, %v3331
        %v3485 = vadd.f32 %v3171, %v3333
        %v3486 = vadd.f32 %v3172, %v3335
        %v3487 = vadd.f32 %v3173, %v3339
        %v3488 = vadd.f32 %v3174, %v3341
        %v3489 = vadd.f32 %v3175, %v3347
        %v3490 = vadd.f32 %v3176, %v3349
        %v3491 = vadd.f32 %v3177, %v3351
        %v3492 = vadd.f32 %v3178, %v3353
        %v3493 = vadd.f32 %v3179, %v3357
        %v3494 = vadd.f32 %v3180, %v3359
        %v3495 = vadd.f32 %v3181, %v3365
        %v3496 = vadd.f32 %v3182, %v3367
        %v3497 = vadd.f32 %v3183, %v3369
        %v3498 = vadd.f32 %v3184, %v3371
        %v3499 = vadd.f32 %v3185, %v3375
        %v3500 = vadd.f32 %v3186, %v3377
        %v3501 = vadd.f32 %v3187, %v3383
        %v3502 = vadd.f32 %v3188, %v3385
        %v3503 = vadd.f32 %v3189, %v3387
        %v3504 = vadd.f32 %v3190, %v3389
        %v3505 = vadd.f32 %v3191, %v3393
        %v3506 = vadd.f32 %v3192, %v3395
        %v3507 = vadd.f32 %v3193, %v3401
        %v3508 = vadd.f32 %v3194, %v3403
        %v3509 = vadd.f32 %v3195, %v3405
        %v3510 = vadd.f32 %v3196, %v3407
        %v3511 = vadd.f32 %v3197, %v3411
        %v3512 = vadd.f32 %v3198, %v3413
        %v3513 = vadd.f32 %v3199, %v3419
        %v3514 = vadd.f32 %v3200, %v3421
        %v3515 = vadd.f32 %v3201, %v3423
        %v3516 = vadd.f32 %v3202, %v3425
        %v3517 = vadd.f32 %v3203, %v3429
        %v3518 = vadd.f32 %v3204, %v3431
        %v3519 = vadd.f32 %v3205, %v3437
        %v3520 = vadd.f32 %v3206, %v3439
        %v3521 = vadd.f32 %v3207, %v3441
        %v3522 = vadd.f32 %v3208, %v3443
        %v3523 = vadd.f32 %v3209, %v3447
        %v3524 = vadd.f32 %v3210, %v3449
        %v3525 = vadd.f32 %v3211, %v3455
        %v3526 = vadd.f32 %v3212, %v3457
        %v3527 = vadd.f32 %v3213, %v3459
        %v3528 = vadd.f32 %v3214, %v3461
        %v3529 = vadd.f32 %v3215, %v3465
        %v3530 = vadd.f32 %v3216, %v3467
        %v3532 = vshrl.u32 %v460, 16
        %v3534 = vrot.slane %v3532, 4
        %v3535 = vshll.u32 %v460, 16
        %v3537 = vrot.slane %v3535, 5
        %v3538 = vor.u32 %v3534, %v3537
        %v3539 = vrot.slane %v3538, 4
        %v3541 = vshll.u32 %v461, 16
        %v3543 = vrot.slane %v3541, 5
        %v3544 = vsel %vm471, %v3539, %v3543
        %v3545 = vshrl.u32 %v461, 16
        %v3547 = vrot.slane %v3545, 4
        %v3548 = vor.u32 %v3547, %v3543
        %v3549 = vrot.slane %v3548, 4
        %v3551 = vshll.u32 %v462, 16
        %v3553 = vrot.slane %v3551, 5
        %v3554 = vsel %vm471, %v3549, %v3553
        %v3555 = vshrl.u32 %v462, 16
        %v3557 = vrot.slane %v3555, 4
        %v3558 = vor.u32 %v3557, %v3553
        %v3559 = vrot.slane %v3558, 4
        %v3561 = vshll.u32 %v463, 16
        %v3563 = vrot.slane %v3561, 5
        %v3564 = vsel %vm471, %v3559, %v3563
        %v3565 = vshrl.u32 %v463, 16
        %v3567 = vrot.slane %v3565, 4
        %v3568 = vor.u32 %v3567, %v3563
        %v3569 = vrot.slane %v3568, 4
        %v3571 = vshll.u32 %v464, 16
        %v3573 = vrot.slane %v3571, 5
        %v3574 = vsel %vm471, %v3569, %v3573
        %s3575 = scalar_lea.vmem [#allocation2], 224
        %v3576 = vld [vmem:[%s3575] sm:$0xff]
        %v3577 = vld [vmem:[%s3575 + $0x8] sm:$0xff]
        %v3578 = vld [vmem:[%s3575 + $0x10] sm:$0xff]
        %v3579 = vld [vmem:[%s3575 + $0x18] sm:$0xff]
        %v3580 = vunpack.c.l.b16 %v3544
        %v3581 = vunpack.c.l.b16 %v3554
        %v3582 = vunpack.c.l.b16 %v3564
        %v3583 = vunpack.c.l.b16 %v3574
        %v3584 = vpack.c.b16 %v3581, %v3580
        %v3585 = vpack.c.b16 %v3583, %v3582
        %v3590 = vunpack.c.l.b16 %v3576
        %v3591 = vunpack.c.h.b16 %v3576
        %v3592 = vunpack.c.l.b16 %v3577
        %v3593 = vunpack.c.h.b16 %v3577
        %v3594 = vunpack.c.l.b16 %v3578
        %v3595 = vunpack.c.h.b16 %v3578
        %v3596 = vunpack.c.l.b16 %v3579
        %v3597 = vunpack.c.h.b16 %v3579
        %v3598 = vpack.c.b16 %v3592, %v3590
        %v3599 = vpack.c.b16 %v3593, %v3591
        %v3600 = vpack.c.b16 %v3596, %v3594
        %v3601 = vpack.c.b16 %v3597, %v3595
        %v3607 = vsel %vm997, %v3584, 0
        %v3610 = vsel %vm997, %v3585, 0
        %3612 = vmatprep.subr.bf16.mxu0 0
        %3613 = vmatpush1.bf16.msra.mxu0 0
        %3614 = vmatprep.subr.bf16.mxu0 0
        %3615 = vmatpush1.bf16.msra.mxu0 0
        %3616 = vmatprep.subr.bf16.mxu0 0
        %3617 = vmatpush1.bf16.msra.mxu0 0
        %3618 = vmatprep.subr.bf16.mxu0 0
        %3619 = vmatpush1.bf16.msra.mxu0 0
        %3620 = vmatprep.subr.bf16.mxu0 0
        %3621 = vmatpush1.bf16.msra.mxu0 0
        %3622 = vmatprep.subr.bf16.mxu0 0
        %3623 = vmatpush1.bf16.msra.mxu0 0
        %3624 = vmatprep.subr.bf16.mxu0 %v3601
        %3625 = vmatpush1.bf16.msra.mxu0 %v3600
        %3626 = vmatprep.subr.bf16.mxu0 %v3599
        %3627 = vmatpush1.bf16.msra.mxu0 %v3598
        %3628 = vmatprep.subr.bf16.mxu0 0
        %3629 = vmatpush2.bf16.msra.mxu0 0
        %3630 = vmatprep.subr.bf16.mxu0 0
        %3631 = vmatpush2.bf16.msra.mxu0 0
        %3632 = vmatprep.subr.bf16.mxu0 0
        %3633 = vmatpush2.bf16.msra.mxu0 0
        %3634 = vmatprep.subr.bf16.mxu0 0
        %3635 = vmatpush2.bf16.msra.mxu0 0
        %3636 = vmatprep.subr.bf16.mxu0 0
        %3637 = vmatpush2.bf16.msra.mxu0 0
        %3638 = vmatprep.subr.bf16.mxu0 0
        %3639 = vmatpush2.bf16.msra.mxu0 0
        %3640 = vmatprep.subr.bf16.mxu0 0
        %3641 = vmatpush2.bf16.msra.mxu0 0
        %3642 = vmatprep.subr.bf16.mxu0 0
        %3643 = vmatpush2.bf16.msra.mxu0 0
        %3644 = vmatprep.mubr.bf16.mxu0 0
        %3645 = vmatmul.mubr.bf16.gmra.mxu0 %v1011
        %v3646 = vpop.f32.mrf.mxu0
        %v3647 = vadd.f32 0.0, %v3646
        %v3648 = vpop.f32.mrf.mxu0
        %v3649 = vadd.f32 0.0, %v3648
        %v3650 = vpop.f32.mrf.mxu0
        %v3651 = vadd.f32 0.0, %v3650
        %v3652 = vpop.f32.mrf.mxu0
        %v3653 = vadd.f32 0.0, %v3652
        %3654 = vmatprep.mubr.bf16.mxu0 0
        %3655 = vmatmul.mubr.bf16.gmra.mxu0 %v1014
        %v3656 = vpop.f32.mrf.mxu0
        %v3657 = vadd.f32 0.0, %v3656
        %v3658 = vpop.f32.mrf.mxu0
        %v3659 = vadd.f32 0.0, %v3658
        %v3660 = vpop.f32.mrf.mxu0
        %v3661 = vpop.f32.mrf.mxu0
        %3662 = vmatprep.mubr.bf16.mxu0 0
        %3663 = vmatmul.mubr.bf16.gmra.mxu0 %v1017
        %v3664 = vpop.f32.mrf.mxu0
        %v3665 = vadd.f32 0.0, %v3664
        %v3666 = vpop.f32.mrf.mxu0
        %v3667 = vadd.f32 0.0, %v3666
        %v3668 = vpop.f32.mrf.mxu0
        %v3669 = vadd.f32 0.0, %v3668
        %v3670 = vpop.f32.mrf.mxu0
        %v3671 = vadd.f32 0.0, %v3670
        %3672 = vmatprep.mubr.bf16.mxu0 0
        %3673 = vmatmul.mubr.bf16.gmra.mxu0 %v1020
        %v3674 = vpop.f32.mrf.mxu0
        %v3675 = vadd.f32 0.0, %v3674
        %v3676 = vpop.f32.mrf.mxu0
        %v3677 = vadd.f32 0.0, %v3676
        %v3678 = vpop.f32.mrf.mxu0
        %v3679 = vpop.f32.mrf.mxu0
        %3680 = vmatprep.mubr.bf16.mxu0 0
        %3681 = vmatmul.mubr.bf16.gmra.mxu0 %v1023
        %v3682 = vpop.f32.mrf.mxu0
        %v3683 = vadd.f32 0.0, %v3682
        %v3684 = vpop.f32.mrf.mxu0
        %v3685 = vadd.f32 0.0, %v3684
        %v3686 = vpop.f32.mrf.mxu0
        %v3687 = vadd.f32 0.0, %v3686
        %v3688 = vpop.f32.mrf.mxu0
        %v3689 = vadd.f32 0.0, %v3688
        %3690 = vmatprep.mubr.bf16.mxu0 0
        %3691 = vmatmul.mubr.bf16.gmra.mxu0 %v1026
        %v3692 = vpop.f32.mrf.mxu0
        %v3693 = vadd.f32 0.0, %v3692
        %v3694 = vpop.f32.mrf.mxu0
        %v3695 = vadd.f32 0.0, %v3694
        %v3696 = vpop.f32.mrf.mxu0
        %v3697 = vpop.f32.mrf.mxu0
        %3698 = vmatprep.mubr.bf16.mxu0 0
        %3699 = vmatmul.mubr.bf16.gmra.mxu0 %v1029
        %v3700 = vpop.f32.mrf.mxu0
        %v3701 = vadd.f32 0.0, %v3700
        %v3702 = vpop.f32.mrf.mxu0
        %v3703 = vadd.f32 0.0, %v3702
        %v3704 = vpop.f32.mrf.mxu0
        %v3705 = vadd.f32 0.0, %v3704
        %v3706 = vpop.f32.mrf.mxu0
        %v3707 = vadd.f32 0.0, %v3706
        %3708 = vmatprep.mubr.bf16.mxu0 0
        %3709 = vmatmul.mubr.bf16.gmra.mxu0 %v1032
        %v3710 = vpop.f32.mrf.mxu0
        %v3711 = vadd.f32 0.0, %v3710
        %v3712 = vpop.f32.mrf.mxu0
        %v3713 = vadd.f32 0.0, %v3712
        %v3714 = vpop.f32.mrf.mxu0
        %v3715 = vpop.f32.mrf.mxu0
        %3716 = vmatprep.mubr.bf16.mxu0 0
        %3717 = vmatmul.mubr.bf16.gmra.mxu0 %v1035
        %v3718 = vpop.f32.mrf.mxu0
        %v3719 = vadd.f32 0.0, %v3718
        %v3720 = vpop.f32.mrf.mxu0
        %v3721 = vadd.f32 0.0, %v3720
        %v3722 = vpop.f32.mrf.mxu0
        %v3723 = vadd.f32 0.0, %v3722
        %v3724 = vpop.f32.mrf.mxu0
        %v3725 = vadd.f32 0.0, %v3724
        %3726 = vmatprep.mubr.bf16.mxu0 0
        %3727 = vmatmul.mubr.bf16.gmra.mxu0 %v1038
        %v3728 = vpop.f32.mrf.mxu0
        %v3729 = vadd.f32 0.0, %v3728
        %v3730 = vpop.f32.mrf.mxu0
        %v3731 = vadd.f32 0.0, %v3730
        %v3732 = vpop.f32.mrf.mxu0
        %v3733 = vpop.f32.mrf.mxu0
        %3734 = vmatprep.mubr.bf16.mxu0 0
        %3735 = vmatmul.mubr.bf16.gmra.mxu0 %v1041
        %v3736 = vpop.f32.mrf.mxu0
        %v3737 = vadd.f32 0.0, %v3736
        %v3738 = vpop.f32.mrf.mxu0
        %v3739 = vadd.f32 0.0, %v3738
        %v3740 = vpop.f32.mrf.mxu0
        %v3741 = vadd.f32 0.0, %v3740
        %v3742 = vpop.f32.mrf.mxu0
        %v3743 = vadd.f32 0.0, %v3742
        %3744 = vmatprep.mubr.bf16.mxu0 0
        %3745 = vmatmul.mubr.bf16.gmra.mxu0 %v1044
        %v3746 = vpop.f32.mrf.mxu0
        %v3747 = vadd.f32 0.0, %v3746
        %v3748 = vpop.f32.mrf.mxu0
        %v3749 = vadd.f32 0.0, %v3748
        %v3750 = vpop.f32.mrf.mxu0
        %v3751 = vpop.f32.mrf.mxu0
        %3752 = vmatprep.mubr.bf16.mxu0 0
        %3753 = vmatmul.mubr.bf16.gmra.mxu0 %v1047
        %v3754 = vpop.f32.mrf.mxu0
        %v3755 = vadd.f32 0.0, %v3754
        %v3756 = vpop.f32.mrf.mxu0
        %v3757 = vadd.f32 0.0, %v3756
        %v3758 = vpop.f32.mrf.mxu0
        %v3759 = vadd.f32 0.0, %v3758
        %v3760 = vpop.f32.mrf.mxu0
        %v3761 = vadd.f32 0.0, %v3760
        %3762 = vmatprep.mubr.bf16.mxu0 0
        %3763 = vmatmul.mubr.bf16.gmra.mxu0 %v1050
        %v3764 = vpop.f32.mrf.mxu0
        %v3765 = vadd.f32 0.0, %v3764
        %v3766 = vpop.f32.mrf.mxu0
        %v3767 = vadd.f32 0.0, %v3766
        %v3768 = vpop.f32.mrf.mxu0
        %v3769 = vpop.f32.mrf.mxu0
        %3770 = vmatprep.mubr.bf16.mxu0 0
        %3771 = vmatmul.mubr.bf16.gmra.mxu0 %v1053
        %v3772 = vpop.f32.mrf.mxu0
        %v3773 = vadd.f32 0.0, %v3772
        %v3774 = vpop.f32.mrf.mxu0
        %v3775 = vadd.f32 0.0, %v3774
        %v3776 = vpop.f32.mrf.mxu0
        %v3777 = vadd.f32 0.0, %v3776
        %v3778 = vpop.f32.mrf.mxu0
        %v3779 = vadd.f32 0.0, %v3778
        %3780 = vmatprep.mubr.bf16.mxu0 0
        %3781 = vmatmul.mubr.bf16.gmra.mxu0 %v1056
        %v3782 = vpop.f32.mrf.mxu0
        %v3783 = vadd.f32 0.0, %v3782
        %v3784 = vpop.f32.mrf.mxu0
        %v3785 = vadd.f32 0.0, %v3784
        %v3786 = vpop.f32.mrf.mxu0
        %v3787 = vpop.f32.mrf.mxu0
        %3788 = vmatprep.mubr.bf16.mxu0 0
        %3789 = vmatmul.mubr.bf16.gmra.mxu0 %v2615
        %v3790 = vpop.f32.mrf.mxu0
        %v3791 = vadd.f32 0.0, %v3790
        %v3792 = vpop.f32.mrf.mxu0
        %v3793 = vadd.f32 0.0, %v3792
        %v3794 = vpop.f32.mrf.mxu0
        %v3795 = vadd.f32 0.0, %v3794
        %v3796 = vpop.f32.mrf.mxu0
        %v3797 = vadd.f32 0.0, %v3796
        %3798 = vmatprep.mubr.bf16.mxu0 0
        %3799 = vmatmul.mubr.bf16.gmra.mxu0 %v2618
        %v3800 = vpop.f32.mrf.mxu0
        %v3801 = vadd.f32 0.0, %v3800
        %v3802 = vpop.f32.mrf.mxu0
        %v3803 = vadd.f32 0.0, %v3802
        %v3804 = vpop.f32.mrf.mxu0
        %v3805 = vpop.f32.mrf.mxu0
        %3806 = vmatprep.mubr.bf16.mxu0 0
        %3807 = vmatmul.mubr.bf16.gmra.mxu0 %v3607
        %v3808 = vpop.f32.mrf.mxu0
        %v3809 = vadd.f32 0.0, %v3808
        %v3810 = vpop.f32.mrf.mxu0
        %v3811 = vadd.f32 0.0, %v3810
        %v3812 = vpop.f32.mrf.mxu0
        %v3813 = vadd.f32 0.0, %v3812
        %v3814 = vpop.f32.mrf.mxu0
        %v3815 = vadd.f32 0.0, %v3814
        %3816 = vmatprep.mubr.bf16.mxu0 0
        %3817 = vmatmul.mubr.bf16.gmra.mxu0 %v3610
        %v3818 = vpop.f32.mrf.mxu0
        %v3819 = vadd.f32 0.0, %v3818
        %v3820 = vpop.f32.mrf.mxu0
        %v3821 = vadd.f32 0.0, %v3820
        %v3822 = vpop.f32.mrf.mxu0
        %v3823 = vpop.f32.mrf.mxu0
        %3824 = vdwg.mxu0
        %v3825 = vadd.f32 %v3471, %v3647
        %v3826 = vadd.f32 %v3472, %v3649
        %v3827 = vadd.f32 %v3473, %v3651
        %v3828 = vadd.f32 %v3474, %v3653
        %v3829 = vadd.f32 %v3475, %v3657
        %v3830 = vadd.f32 %v3476, %v3659
        %v3831 = vadd.f32 %v3477, %v3665
        %v3832 = vadd.f32 %v3478, %v3667
        %v3833 = vadd.f32 %v3479, %v3669
        %v3834 = vadd.f32 %v3480, %v3671
        %v3835 = vadd.f32 %v3481, %v3675
        %v3836 = vadd.f32 %v3482, %v3677
        %v3837 = vadd.f32 %v3483, %v3683
        %v3838 = vadd.f32 %v3484, %v3685
        %v3839 = vadd.f32 %v3485, %v3687
        %v3840 = vadd.f32 %v3486, %v3689
        %v3841 = vadd.f32 %v3487, %v3693
        %v3842 = vadd.f32 %v3488, %v3695
        %v3843 = vadd.f32 %v3489, %v3701
        %v3844 = vadd.f32 %v3490, %v3703
        %v3845 = vadd.f32 %v3491, %v3705
        %v3846 = vadd.f32 %v3492, %v3707
        %v3847 = vadd.f32 %v3493, %v3711
        %v3848 = vadd.f32 %v3494, %v3713
        %v3849 = vadd.f32 %v3495, %v3719
        %v3850 = vadd.f32 %v3496, %v3721
        %v3851 = vadd.f32 %v3497, %v3723
        %v3852 = vadd.f32 %v3498, %v3725
        %v3853 = vadd.f32 %v3499, %v3729
        %v3854 = vadd.f32 %v3500, %v3731
        %v3855 = vadd.f32 %v3501, %v3737
        %v3856 = vadd.f32 %v3502, %v3739
        %v3857 = vadd.f32 %v3503, %v3741
        %v3858 = vadd.f32 %v3504, %v3743
        %v3859 = vadd.f32 %v3505, %v3747
        %v3860 = vadd.f32 %v3506, %v3749
        %v3861 = vadd.f32 %v3507, %v3755
        %v3862 = vadd.f32 %v3508, %v3757
        %v3863 = vadd.f32 %v3509, %v3759
        %v3864 = vadd.f32 %v3510, %v3761
        %v3865 = vadd.f32 %v3511, %v3765
        %v3866 = vadd.f32 %v3512, %v3767
        %v3867 = vadd.f32 %v3513, %v3773
        %v3868 = vadd.f32 %v3514, %v3775
        %v3869 = vadd.f32 %v3515, %v3777
        %v3870 = vadd.f32 %v3516, %v3779
        %v3871 = vadd.f32 %v3517, %v3783
        %v3872 = vadd.f32 %v3518, %v3785
        %v3873 = vadd.f32 %v3519, %v3791
        %v3874 = vadd.f32 %v3520, %v3793
        %v3875 = vadd.f32 %v3521, %v3795
        %v3876 = vadd.f32 %v3522, %v3797
        %v3877 = vadd.f32 %v3523, %v3801
        %v3878 = vadd.f32 %v3524, %v3803
        %v3879 = vadd.f32 %v3525, %v3809
        %v3880 = vadd.f32 %v3526, %v3811
        %v3881 = vadd.f32 %v3527, %v3813
        %v3882 = vadd.f32 %v3528, %v3815
        %v3883 = vadd.f32 %v3529, %v3819
        %v3884 = vadd.f32 %v3530, %v3821
        %v3886 = vrot.slane %v460, 5
        %v3887 = vrot.slane %v3886, 4
        %v3888 = vrot.slane %v461, 5
        %v3889 = vsel %vm1676, %v3887, %v3888
        %v3890 = vrot.slane %v3888, 4
        %v3891 = vrot.slane %v462, 5
        %v3892 = vsel %vm1676, %v3890, %v3891
        %v3893 = vrot.slane %v3891, 4
        %v3894 = vrot.slane %v463, 5
        %v3895 = vsel %vm1676, %v3893, %v3894
        %v3896 = vrot.slane %v3894, 4
        %v3897 = vrot.slane %v464, 5
        %v3898 = vsel %vm1676, %v3896, %v3897
        %s3899 = scalar_lea.vmem [#allocation2], 256
        %v3900 = vld [vmem:[%s3899] sm:$0xff]
        %v3901 = vld [vmem:[%s3899 + $0x8] sm:$0xff]
        %v3902 = vld [vmem:[%s3899 + $0x10] sm:$0xff]
        %v3903 = vld [vmem:[%s3899 + $0x18] sm:$0xff]
        %v3904 = vunpack.c.l.b16 %v3889
        %v3905 = vunpack.c.l.b16 %v3892
        %v3906 = vunpack.c.l.b16 %v3895
        %v3907 = vunpack.c.l.b16 %v3898
        %v3908 = vpack.c.b16 %v3905, %v3904
        %v3909 = vpack.c.b16 %v3907, %v3906
        %v3914 = vunpack.c.l.b16 %v3900
        %v3915 = vunpack.c.h.b16 %v3900
        %v3916 = vunpack.c.l.b16 %v3901
        %v3917 = vunpack.c.h.b16 %v3901
        %v3918 = vunpack.c.l.b16 %v3902
        %v3919 = vunpack.c.h.b16 %v3902
        %v3920 = vunpack.c.l.b16 %v3903
        %v3921 = vunpack.c.h.b16 %v3903
        %v3922 = vpack.c.b16 %v3916, %v3914
        %v3923 = vpack.c.b16 %v3917, %v3915
        %v3924 = vpack.c.b16 %v3920, %v3918
        %v3925 = vpack.c.b16 %v3921, %v3919
        %v3931 = vsel %vm997, %v3908, 0
        %v3934 = vsel %vm997, %v3909, 0
        %3936 = vmatprep.subr.bf16.mxu0 0
        %3937 = vmatpush1.bf16.msra.mxu0 0
        %3938 = vmatprep.subr.bf16.mxu0 0
        %3939 = vmatpush1.bf16.msra.mxu0 0
        %3940 = vmatprep.subr.bf16.mxu0 0
        %3941 = vmatpush1.bf16.msra.mxu0 0
        %3942 = vmatprep.subr.bf16.mxu0 0
        %3943 = vmatpush1.bf16.msra.mxu0 0
        %3944 = vmatprep.subr.bf16.mxu0 0
        %3945 = vmatpush1.bf16.msra.mxu0 0
        %3946 = vmatprep.subr.bf16.mxu0 0
        %3947 = vmatpush1.bf16.msra.mxu0 0
        %3948 = vmatprep.subr.bf16.mxu0 %v3925
        %3949 = vmatpush1.bf16.msra.mxu0 %v3924
        %3950 = vmatprep.subr.bf16.mxu0 %v3923
        %3951 = vmatpush1.bf16.msra.mxu0 %v3922
        %3952 = vmatprep.subr.bf16.mxu0 0
        %3953 = vmatpush2.bf16.msra.mxu0 0
        %3954 = vmatprep.subr.bf16.mxu0 0
        %3955 = vmatpush2.bf16.msra.mxu0 0
        %3956 = vmatprep.subr.bf16.mxu0 0
        %3957 = vmatpush2.bf16.msra.mxu0 0
        %3958 = vmatprep.subr.bf16.mxu0 0
        %3959 = vmatpush2.bf16.msra.mxu0 0
        %3960 = vmatprep.subr.bf16.mxu0 0
        %3961 = vmatpush2.bf16.msra.mxu0 0
        %3962 = vmatprep.subr.bf16.mxu0 0
        %3963 = vmatpush2.bf16.msra.mxu0 0
        %3964 = vmatprep.subr.bf16.mxu0 0
        %3965 = vmatpush2.bf16.msra.mxu0 0
        %3966 = vmatprep.subr.bf16.mxu0 0
        %3967 = vmatpush2.bf16.msra.mxu0 0
        %3968 = vmatprep.mubr.bf16.mxu0 0
        %3969 = vmatmul.mubr.bf16.gmra.mxu0 %v1905
        %v3970 = vpop.f32.mrf.mxu0
        %v3971 = vadd.f32 0.0, %v3970
        %v3972 = vpop.f32.mrf.mxu0
        %v3973 = vadd.f32 0.0, %v3972
        %v3974 = vpop.f32.mrf.mxu0
        %v3975 = vadd.f32 0.0, %v3974
        %v3976 = vpop.f32.mrf.mxu0
        %v3977 = vadd.f32 0.0, %v3976
        %3978 = vmatprep.mubr.bf16.mxu0 0
        %3979 = vmatmul.mubr.bf16.gmra.mxu0 %v1908
        %v3980 = vpop.f32.mrf.mxu0
        %v3981 = vadd.f32 0.0, %v3980
        %v3982 = vpop.f32.mrf.mxu0
        %v3983 = vadd.f32 0.0, %v3982
        %v3984 = vpop.f32.mrf.mxu0
        %v3985 = vpop.f32.mrf.mxu0
        %3986 = vmatprep.mubr.bf16.mxu0 0
        %3987 = vmatmul.mubr.bf16.gmra.mxu0 %v1911
        %v3988 = vpop.f32.mrf.mxu0
        %v3989 = vadd.f32 0.0, %v3988
        %v3990 = vpop.f32.mrf.mxu0
        %v3991 = vadd.f32 0.0, %v3990
        %v3992 = vpop.f32.mrf.mxu0
        %v3993 = vadd.f32 0.0, %v3992
        %v3994 = vpop.f32.mrf.mxu0
        %v3995 = vadd.f32 0.0, %v3994
        %3996 = vmatprep.mubr.bf16.mxu0 0
        %3997 = vmatmul.mubr.bf16.gmra.mxu0 %v1914
        %v3998 = vpop.f32.mrf.mxu0
        %v3999 = vadd.f32 0.0, %v3998
        %v4000 = vpop.f32.mrf.mxu0
        %v4001 = vadd.f32 0.0, %v4000
        %v4002 = vpop.f32.mrf.mxu0
        %v4003 = vpop.f32.mrf.mxu0
        %4004 = vmatprep.mubr.bf16.mxu0 0
        %4005 = vmatmul.mubr.bf16.gmra.mxu0 %v1917
        %v4006 = vpop.f32.mrf.mxu0
        %v4007 = vadd.f32 0.0, %v4006
        %v4008 = vpop.f32.mrf.mxu0
        %v4009 = vadd.f32 0.0, %v4008
        %v4010 = vpop.f32.mrf.mxu0
        %v4011 = vadd.f32 0.0, %v4010
        %v4012 = vpop.f32.mrf.mxu0
        %v4013 = vadd.f32 0.0, %v4012
        %4014 = vmatprep.mubr.bf16.mxu0 0
        %4015 = vmatmul.mubr.bf16.gmra.mxu0 %v1920
        %v4016 = vpop.f32.mrf.mxu0
        %v4017 = vadd.f32 0.0, %v4016
        %v4018 = vpop.f32.mrf.mxu0
        %v4019 = vadd.f32 0.0, %v4018
        %v4020 = vpop.f32.mrf.mxu0
        %v4021 = vpop.f32.mrf.mxu0
        %4022 = vmatprep.mubr.bf16.mxu0 0
        %4023 = vmatmul.mubr.bf16.gmra.mxu0 %v1923
        %v4024 = vpop.f32.mrf.mxu0
        %v4025 = vadd.f32 0.0, %v4024
        %v4026 = vpop.f32.mrf.mxu0
        %v4027 = vadd.f32 0.0, %v4026
        %v4028 = vpop.f32.mrf.mxu0
        %v4029 = vadd.f32 0.0, %v4028
        %v4030 = vpop.f32.mrf.mxu0
        %v4031 = vadd.f32 0.0, %v4030
        %4032 = vmatprep.mubr.bf16.mxu0 0
        %4033 = vmatmul.mubr.bf16.gmra.mxu0 %v1926
        %v4034 = vpop.f32.mrf.mxu0
        %v4035 = vadd.f32 0.0, %v4034
        %v4036 = vpop.f32.mrf.mxu0
        %v4037 = vadd.f32 0.0, %v4036
        %v4038 = vpop.f32.mrf.mxu0
        %v4039 = vpop.f32.mrf.mxu0
        %4040 = vmatprep.mubr.bf16.mxu0 0
        %4041 = vmatmul.mubr.bf16.gmra.mxu0 %v1929
        %v4042 = vpop.f32.mrf.mxu0
        %v4043 = vadd.f32 0.0, %v4042
        %v4044 = vpop.f32.mrf.mxu0
        %v4045 = vadd.f32 0.0, %v4044
        %v4046 = vpop.f32.mrf.mxu0
        %v4047 = vadd.f32 0.0, %v4046
        %v4048 = vpop.f32.mrf.mxu0
        %v4049 = vadd.f32 0.0, %v4048
        %4050 = vmatprep.mubr.bf16.mxu0 0
        %4051 = vmatmul.mubr.bf16.gmra.mxu0 %v1932
        %v4052 = vpop.f32.mrf.mxu0
        %v4053 = vadd.f32 0.0, %v4052
        %v4054 = vpop.f32.mrf.mxu0
        %v4055 = vadd.f32 0.0, %v4054
        %v4056 = vpop.f32.mrf.mxu0
        %v4057 = vpop.f32.mrf.mxu0
        %4058 = vmatprep.mubr.bf16.mxu0 0
        %4059 = vmatmul.mubr.bf16.gmra.mxu0 %v1935
        %v4060 = vpop.f32.mrf.mxu0
        %v4061 = vadd.f32 0.0, %v4060
        %v4062 = vpop.f32.mrf.mxu0
        %v4063 = vadd.f32 0.0, %v4062
        %v4064 = vpop.f32.mrf.mxu0
        %v4065 = vadd.f32 0.0, %v4064
        %v4066 = vpop.f32.mrf.mxu0
        %v4067 = vadd.f32 0.0, %v4066
        %4068 = vmatprep.mubr.bf16.mxu0 0
        %4069 = vmatmul.mubr.bf16.gmra.mxu0 %v1938
        %v4070 = vpop.f32.mrf.mxu0
        %v4071 = vadd.f32 0.0, %v4070
        %v4072 = vpop.f32.mrf.mxu0
        %v4073 = vadd.f32 0.0, %v4072
        %v4074 = vpop.f32.mrf.mxu0
        %v4075 = vpop.f32.mrf.mxu0
        %4076 = vmatprep.mubr.bf16.mxu0 0
        %4077 = vmatmul.mubr.bf16.gmra.mxu0 %v1941
        %v4078 = vpop.f32.mrf.mxu0
        %v4079 = vadd.f32 0.0, %v4078
        %v4080 = vpop.f32.mrf.mxu0
        %v4081 = vadd.f32 0.0, %v4080
        %v4082 = vpop.f32.mrf.mxu0
        %v4083 = vadd.f32 0.0, %v4082
        %v4084 = vpop.f32.mrf.mxu0
        %v4085 = vadd.f32 0.0, %v4084
        %4086 = vmatprep.mubr.bf16.mxu0 0
        %4087 = vmatmul.mubr.bf16.gmra.mxu0 %v1944
        %v4088 = vpop.f32.mrf.mxu0
        %v4089 = vadd.f32 0.0, %v4088
        %v4090 = vpop.f32.mrf.mxu0
        %v4091 = vadd.f32 0.0, %v4090
        %v4092 = vpop.f32.mrf.mxu0
        %v4093 = vpop.f32.mrf.mxu0
        %4094 = vmatprep.mubr.bf16.mxu0 0
        %4095 = vmatmul.mubr.bf16.gmra.mxu0 %v1947
        %v4096 = vpop.f32.mrf.mxu0
        %v4097 = vadd.f32 0.0, %v4096
        %v4098 = vpop.f32.mrf.mxu0
        %v4099 = vadd.f32 0.0, %v4098
        %v4100 = vpop.f32.mrf.mxu0
        %v4101 = vadd.f32 0.0, %v4100
        %v4102 = vpop.f32.mrf.mxu0
        %v4103 = vadd.f32 0.0, %v4102
        %4104 = vmatprep.mubr.bf16.mxu0 0
        %4105 = vmatmul.mubr.bf16.gmra.mxu0 %v1950
        %v4106 = vpop.f32.mrf.mxu0
        %v4107 = vadd.f32 0.0, %v4106
        %v4108 = vpop.f32.mrf.mxu0
        %v4109 = vadd.f32 0.0, %v4108
        %v4110 = vpop.f32.mrf.mxu0
        %v4111 = vpop.f32.mrf.mxu0
        %4112 = vmatprep.mubr.bf16.mxu0 0
        %4113 = vmatmul.mubr.bf16.gmra.mxu0 %v2939
        %v4114 = vpop.f32.mrf.mxu0
        %v4115 = vadd.f32 0.0, %v4114
        %v4116 = vpop.f32.mrf.mxu0
        %v4117 = vadd.f32 0.0, %v4116
        %v4118 = vpop.f32.mrf.mxu0
        %v4119 = vadd.f32 0.0, %v4118
        %v4120 = vpop.f32.mrf.mxu0
        %v4121 = vadd.f32 0.0, %v4120
        %4122 = vmatprep.mubr.bf16.mxu0 0
        %4123 = vmatmul.mubr.bf16.gmra.mxu0 %v2942
        %v4124 = vpop.f32.mrf.mxu0
        %v4125 = vadd.f32 0.0, %v4124
        %v4126 = vpop.f32.mrf.mxu0
        %v4127 = vadd.f32 0.0, %v4126
        %v4128 = vpop.f32.mrf.mxu0
        %v4129 = vpop.f32.mrf.mxu0
        %4130 = vmatprep.mubr.bf16.mxu0 0
        %4131 = vmatmul.mubr.bf16.gmra.mxu0 %v3931
        %v4132 = vpop.f32.mrf.mxu0
        %v4133 = vadd.f32 0.0, %v4132
        %v4134 = vpop.f32.mrf.mxu0
        %v4135 = vadd.f32 0.0, %v4134
        %v4136 = vpop.f32.mrf.mxu0
        %v4137 = vadd.f32 0.0, %v4136
        %v4138 = vpop.f32.mrf.mxu0
        %v4139 = vadd.f32 0.0, %v4138
        %4140 = vmatprep.mubr.bf16.mxu0 0
        %4141 = vmatmul.mubr.bf16.gmra.mxu0 %v3934
        %v4142 = vpop.f32.mrf.mxu0
        %v4143 = vadd.f32 0.0, %v4142
        %v4144 = vpop.f32.mrf.mxu0
        %v4145 = vadd.f32 0.0, %v4144
        %v4146 = vpop.f32.mrf.mxu0
        %v4147 = vpop.f32.mrf.mxu0
        %4148 = vdwg.mxu0
        %v4149 = vadd.f32 %v3825, %v3971
        %v4150 = vadd.f32 %v3826, %v3973
        %v4151 = vadd.f32 %v3827, %v3975
        %v4152 = vadd.f32 %v3828, %v3977
        %v4153 = vadd.f32 %v3829, %v3981
        %v4154 = vadd.f32 %v3830, %v3983
        %v4155 = vadd.f32 %v3831, %v3989
        %v4156 = vadd.f32 %v3832, %v3991
        %v4157 = vadd.f32 %v3833, %v3993
        %v4158 = vadd.f32 %v3834, %v3995
        %v4159 = vadd.f32 %v3835, %v3999
        %v4160 = vadd.f32 %v3836, %v4001
        %v4161 = vadd.f32 %v3837, %v4007
        %v4162 = vadd.f32 %v3838, %v4009
        %v4163 = vadd.f32 %v3839, %v4011
        %v4164 = vadd.f32 %v3840, %v4013
        %v4165 = vadd.f32 %v3841, %v4017
        %v4166 = vadd.f32 %v3842, %v4019
        %v4167 = vadd.f32 %v3843, %v4025
        %v4168 = vadd.f32 %v3844, %v4027
        %v4169 = vadd.f32 %v3845, %v4029
        %v4170 = vadd.f32 %v3846, %v4031
        %v4171 = vadd.f32 %v3847, %v4035
        %v4172 = vadd.f32 %v3848, %v4037
        %v4173 = vadd.f32 %v3849, %v4043
        %v4174 = vadd.f32 %v3850, %v4045
        %v4175 = vadd.f32 %v3851, %v4047
        %v4176 = vadd.f32 %v3852, %v4049
        %v4177 = vadd.f32 %v3853, %v4053
        %v4178 = vadd.f32 %v3854, %v4055
        %v4179 = vadd.f32 %v3855, %v4061
        %v4180 = vadd.f32 %v3856, %v4063
        %v4181 = vadd.f32 %v3857, %v4065
        %v4182 = vadd.f32 %v3858, %v4067
        %v4183 = vadd.f32 %v3859, %v4071
        %v4184 = vadd.f32 %v3860, %v4073
        %v4185 = vadd.f32 %v3861, %v4079
        %v4186 = vadd.f32 %v3862, %v4081
        %v4187 = vadd.f32 %v3863, %v4083
        %v4188 = vadd.f32 %v3864, %v4085
        %v4189 = vadd.f32 %v3865, %v4089
        %v4190 = vadd.f32 %v3866, %v4091
        %v4191 = vadd.f32 %v3867, %v4097
        %v4192 = vadd.f32 %v3868, %v4099
        %v4193 = vadd.f32 %v3869, %v4101
        %v4194 = vadd.f32 %v3870, %v4103
        %v4195 = vadd.f32 %v3871, %v4107
        %v4196 = vadd.f32 %v3872, %v4109
        %v4197 = vadd.f32 %v3873, %v4115
        %v4198 = vadd.f32 %v3874, %v4117
        %v4199 = vadd.f32 %v3875, %v4119
        %v4200 = vadd.f32 %v3876, %v4121
        %v4201 = vadd.f32 %v3877, %v4125
        %v4202 = vadd.f32 %v3878, %v4127
        %v4203 = vadd.f32 %v3879, %v4133
        %v4204 = vadd.f32 %v3880, %v4135
        %v4205 = vadd.f32 %v3881, %v4137
        %v4206 = vadd.f32 %v3882, %v4139
        %v4207 = vadd.f32 %v3883, %v4143
        %v4208 = vadd.f32 %v3884, %v4145
        %v4209 = vld [vmem:[%s2] sm:$0x3]
        %v4211 = vlaneseq
        %v4212 = vshrl.u32 %v4211, 7
        %v4213 = vsub.s32 0, %v4212
        %v4214 = vrot.slane %v4209, %v4213
        %v4215 = vlaneseq
        %v4216 = vshrl.u32 %v4215, 7
        %v4217 = vsub.s32 1, %v4216
        %v4218 = vrot.slane %v4209, %v4217
        %v4221 = vmul.f32 %v4149, %v4214
        %v4222 = vmul.f32 %v4150, %v4218
        %v4223 = vmul.f32 %v4151, %v4214
        %v4224 = vmul.f32 %v4152, %v4218
        %v4225 = vmul.f32 %v4153, %v4214
        %v4226 = vmul.f32 %v4154, %v4218
        %v4227 = vmul.f32 %v4155, %v4214
        %v4228 = vmul.f32 %v4156, %v4218
        %v4229 = vmul.f32 %v4157, %v4214
        %v4230 = vmul.f32 %v4158, %v4218
        %v4231 = vmul.f32 %v4159, %v4214
        %v4232 = vmul.f32 %v4160, %v4218
        %v4233 = vmul.f32 %v4161, %v4214
        %v4234 = vmul.f32 %v4162, %v4218
        %v4235 = vmul.f32 %v4163, %v4214
        %v4236 = vmul.f32 %v4164, %v4218
        %v4237 = vmul.f32 %v4165, %v4214
        %v4238 = vmul.f32 %v4166, %v4218
        %v4239 = vmul.f32 %v4167, %v4214
        %v4240 = vmul.f32 %v4168, %v4218
        %v4241 = vmul.f32 %v4169, %v4214
        %v4242 = vmul.f32 %v4170, %v4218
        %v4243 = vmul.f32 %v4171, %v4214
        %v4244 = vmul.f32 %v4172, %v4218
        %v4245 = vmul.f32 %v4173, %v4214
        %v4246 = vmul.f32 %v4174, %v4218
        %v4247 = vmul.f32 %v4175, %v4214
        %v4248 = vmul.f32 %v4176, %v4218
        %v4249 = vmul.f32 %v4177, %v4214
        %v4250 = vmul.f32 %v4178, %v4218
        %v4251 = vmul.f32 %v4179, %v4214
        %v4252 = vmul.f32 %v4180, %v4218
        %v4253 = vmul.f32 %v4181, %v4214
        %v4254 = vmul.f32 %v4182, %v4218
        %v4255 = vmul.f32 %v4183, %v4214
        %v4256 = vmul.f32 %v4184, %v4218
        %v4257 = vmul.f32 %v4185, %v4214
        %v4258 = vmul.f32 %v4186, %v4218
        %v4259 = vmul.f32 %v4187, %v4214
        %v4260 = vmul.f32 %v4188, %v4218
        %v4261 = vmul.f32 %v4189, %v4214
        %v4262 = vmul.f32 %v4190, %v4218
        %v4263 = vmul.f32 %v4191, %v4214
        %v4264 = vmul.f32 %v4192, %v4218
        %v4265 = vmul.f32 %v4193, %v4214
        %v4266 = vmul.f32 %v4194, %v4218
        %v4267 = vmul.f32 %v4195, %v4214
        %v4268 = vmul.f32 %v4196, %v4218
        %v4269 = vmul.f32 %v4197, %v4214
        %v4270 = vmul.f32 %v4198, %v4218
        %v4271 = vmul.f32 %v4199, %v4214
        %v4272 = vmul.f32 %v4200, %v4218
        %v4273 = vmul.f32 %v4201, %v4214
        %v4274 = vmul.f32 %v4202, %v4218
        %v4275 = vmul.f32 %v4203, %v4214
        %v4276 = vmul.f32 %v4204, %v4218
        %v4277 = vmul.f32 %v4205, %v4214
        %v4278 = vmul.f32 %v4206, %v4218
        %v4279 = vmul.f32 %v4207, %v4214
        %v4280 = vmul.f32 %v4208, %v4218
        %v4281 = vld [vmem:[%s3] sm:$0x3]
        %v4283 = vlaneseq
        %v4284 = vshrl.u32 %v4283, 7
        %v4285 = vsub.s32 0, %v4284
        %v4286 = vrot.slane %v4281, %v4285
        %v4287 = vlaneseq
        %v4288 = vshrl.u32 %v4287, 7
        %v4289 = vsub.s32 1, %v4288
        %v4290 = vrot.slane %v4281, %v4289
        %v4293 = vadd.f32 %v4221, %v4286
        %v4294 = vadd.f32 %v4222, %v4290
        %v4295 = vadd.f32 %v4223, %v4286
        %v4296 = vadd.f32 %v4224, %v4290
        %v4297 = vadd.f32 %v4225, %v4286
        %v4298 = vadd.f32 %v4226, %v4290
        %v4299 = vadd.f32 %v4227, %v4286
        %v4300 = vadd.f32 %v4228, %v4290
        %v4301 = vadd.f32 %v4229, %v4286
        %v4302 = vadd.f32 %v4230, %v4290
        %v4303 = vadd.f32 %v4231, %v4286
        %v4304 = vadd.f32 %v4232, %v4290
        %v4305 = vadd.f32 %v4233, %v4286
        %v4306 = vadd.f32 %v4234, %v4290
        %v4307 = vadd.f32 %v4235, %v4286
        %v4308 = vadd.f32 %v4236, %v4290
        %v4309 = vadd.f32 %v4237, %v4286
        %v4310 = vadd.f32 %v4238, %v4290
        %v4311 = vadd.f32 %v4239, %v4286
        %v4312 = vadd.f32 %v4240, %v4290
        %v4313 = vadd.f32 %v4241, %v4286
        %v4314 = vadd.f32 %v4242, %v4290
        %v4315 = vadd.f32 %v4243, %v4286
        %v4316 = vadd.f32 %v4244, %v4290
        %v4317 = vadd.f32 %v4245, %v4286
        %v4318 = vadd.f32 %v4246, %v4290
        %v4319 = vadd.f32 %v4247, %v4286
        %v4320 = vadd.f32 %v4248, %v4290
        %v4321 = vadd.f32 %v4249, %v4286
        %v4322 = vadd.f32 %v4250, %v4290
        %v4323 = vadd.f32 %v4251, %v4286
        %v4324 = vadd.f32 %v4252, %v4290
        %v4325 = vadd.f32 %v4253, %v4286
        %v4326 = vadd.f32 %v4254, %v4290
        %v4327 = vadd.f32 %v4255, %v4286
        %v4328 = vadd.f32 %v4256, %v4290
        %v4329 = vadd.f32 %v4257, %v4286
        %v4330 = vadd.f32 %v4258, %v4290
        %v4331 = vadd.f32 %v4259, %v4286
        %v4332 = vadd.f32 %v4260, %v4290
        %v4333 = vadd.f32 %v4261, %v4286
        %v4334 = vadd.f32 %v4262, %v4290
        %v4335 = vadd.f32 %v4263, %v4286
        %v4336 = vadd.f32 %v4264, %v4290
        %v4337 = vadd.f32 %v4265, %v4286
        %v4338 = vadd.f32 %v4266, %v4290
        %v4339 = vadd.f32 %v4267, %v4286
        %v4340 = vadd.f32 %v4268, %v4290
        %v4341 = vadd.f32 %v4269, %v4286
        %v4342 = vadd.f32 %v4270, %v4290
        %v4343 = vadd.f32 %v4271, %v4286
        %v4344 = vadd.f32 %v4272, %v4290
        %v4345 = vadd.f32 %v4273, %v4286
        %v4346 = vadd.f32 %v4274, %v4290
        %v4347 = vadd.f32 %v4275, %v4286
        %v4348 = vadd.f32 %v4276, %v4290
        %v4349 = vadd.f32 %v4277, %v4286
        %v4350 = vadd.f32 %v4278, %v4290
        %v4351 = vadd.f32 %v4279, %v4286
        %v4352 = vadd.f32 %v4280, %v4290
        %v4353 = vxor.u32 %v4293, 2147483648
        %v4354 = vxor.u32 %v4294, 2147483648
        %v4355 = vxor.u32 %v4295, 2147483648
        %v4356 = vxor.u32 %v4296, 2147483648
        %v4357 = vxor.u32 %v4297, 2147483648
        %v4358 = vxor.u32 %v4298, 2147483648
        %v4359 = vxor.u32 %v4299, 2147483648
        %v4360 = vxor.u32 %v4300, 2147483648
        %v4361 = vxor.u32 %v4301, 2147483648
        %v4362 = vxor.u32 %v4302, 2147483648
        %v4363 = vxor.u32 %v4303, 2147483648
        %v4364 = vxor.u32 %v4304, 2147483648
        %v4365 = vxor.u32 %v4305, 2147483648
        %v4366 = vxor.u32 %v4306, 2147483648
        %v4367 = vxor.u32 %v4307, 2147483648
        %v4368 = vxor.u32 %v4308, 2147483648
        %v4369 = vxor.u32 %v4309, 2147483648
        %v4370 = vxor.u32 %v4310, 2147483648
        %v4371 = vxor.u32 %v4311, 2147483648
        %v4372 = vxor.u32 %v4312, 2147483648
        %v4373 = vxor.u32 %v4313, 2147483648
        %v4374 = vxor.u32 %v4314, 2147483648
        %v4375 = vxor.u32 %v4315, 2147483648
        %v4376 = vxor.u32 %v4316, 2147483648
        %v4377 = vxor.u32 %v4317, 2147483648
        %v4378 = vxor.u32 %v4318, 2147483648
        %v4379 = vxor.u32 %v4319, 2147483648
        %v4380 = vxor.u32 %v4320, 2147483648
        %v4381 = vxor.u32 %v4321, 2147483648
        %v4382 = vxor.u32 %v4322, 2147483648
        %v4383 = vxor.u32 %v4323, 2147483648
        %v4384 = vxor.u32 %v4324, 2147483648
        %v4385 = vxor.u32 %v4325, 2147483648
        %v4386 = vxor.u32 %v4326, 2147483648
        %v4387 = vxor.u32 %v4327, 2147483648
        %v4388 = vxor.u32 %v4328, 2147483648
        %v4389 = vxor.u32 %v4329, 2147483648
        %v4390 = vxor.u32 %v4330, 2147483648
        %v4391 = vxor.u32 %v4331, 2147483648
        %v4392 = vxor.u32 %v4332, 2147483648
        %v4393 = vxor.u32 %v4333, 2147483648
        %v4394 = vxor.u32 %v4334, 2147483648
        %v4395 = vxor.u32 %v4335, 2147483648
        %v4396 = vxor.u32 %v4336, 2147483648
        %v4397 = vxor.u32 %v4337, 2147483648
        %v4398 = vxor.u32 %v4338, 2147483648
        %v4399 = vxor.u32 %v4339, 2147483648
        %v4400 = vxor.u32 %v4340, 2147483648
        %v4401 = vxor.u32 %v4341, 2147483648
        %v4402 = vxor.u32 %v4342, 2147483648
        %v4403 = vxor.u32 %v4343, 2147483648
        %v4404 = vxor.u32 %v4344, 2147483648
        %v4405 = vxor.u32 %v4345, 2147483648
        %v4406 = vxor.u32 %v4346, 2147483648
        %v4407 = vxor.u32 %v4347, 2147483648
        %v4408 = vxor.u32 %v4348, 2147483648
        %v4409 = vxor.u32 %v4349, 2147483648
        %v4410 = vxor.u32 %v4350, 2147483648
        %v4411 = vxor.u32 %v4351, 2147483648
        %v4412 = vxor.u32 %v4352, 2147483648
        %v4413 = vmul.f32 %v4353, 1.442695
        %v4414 = vpow.pop %v4413
        %v4415 = vmul.f32 %v4354, 1.442695
        %v4416 = vpow.pop %v4415
        %v4417 = vmul.f32 %v4355, 1.442695
        %v4418 = vpow.pop %v4417
        %v4419 = vmul.f32 %v4356, 1.442695
        %v4420 = vpow.pop %v4419
        %v4421 = vmul.f32 %v4357, 1.442695
        %v4422 = vpow.pop %v4421
        %v4423 = vmul.f32 %v4358, 1.442695
        %v4424 = vpow.pop %v4423
        %v4425 = vmul.f32 %v4359, 1.442695
        %v4426 = vpow.pop %v4425
        %v4427 = vmul.f32 %v4360, 1.442695
        %v4428 = vpow.pop %v4427
        %v4429 = vmul.f32 %v4361, 1.442695
        %v4430 = vpow.pop %v4429
        %v4431 = vmul.f32 %v4362, 1.442695
        %v4432 = vpow.pop %v4431
        %v4433 = vmul.f32 %v4363, 1.442695
        %v4434 = vpow.pop %v4433
        %v4435 = vmul.f32 %v4364, 1.442695
        %v4436 = vpow.pop %v4435
        %v4437 = vmul.f32 %v4365, 1.442695
        %v4438 = vpow.pop %v4437
        %v4439 = vmul.f32 %v4366, 1.442695
        %v4440 = vpow.pop %v4439
        %v4441 = vmul.f32 %v4367, 1.442695
        %v4442 = vpow.pop %v4441
        %v4443 = vmul.f32 %v4368, 1.442695
        %v4444 = vpow.pop %v4443
        %v4445 = vmul.f32 %v4369, 1.442695
        %v4446 = vpow.pop %v4445
        %v4447 = vmul.f32 %v4370, 1.442695
        %v4448 = vpow.pop %v4447
        %v4449 = vmul.f32 %v4371, 1.442695
        %v4450 = vpow.pop %v4449
        %v4451 = vmul.f32 %v4372, 1.442695
        %v4452 = vpow.pop %v4451
        %v4453 = vmul.f32 %v4373, 1.442695
        %v4454 = vpow.pop %v4453
        %v4455 = vmul.f32 %v4374, 1.442695
        %v4456 = vpow.pop %v4455
        %v4457 = vmul.f32 %v4375, 1.442695
        %v4458 = vpow.pop %v4457
        %v4459 = vmul.f32 %v4376, 1.442695
        %v4460 = vpow.pop %v4459
        %v4461 = vmul.f32 %v4377, 1.442695
        %v4462 = vpow.pop %v4461
        %v4463 = vmul.f32 %v4378, 1.442695
        %v4464 = vpow.pop %v4463
        %v4465 = vmul.f32 %v4379, 1.442695
        %v4466 = vpow.pop %v4465
        %v4467 = vmul.f32 %v4380, 1.442695
        %v4468 = vpow.pop %v4467
        %v4469 = vmul.f32 %v4381, 1.442695
        %v4470 = vpow.pop %v4469
        %v4471 = vmul.f32 %v4382, 1.442695
        %v4472 = vpow.pop %v4471
        %v4473 = vmul.f32 %v4383, 1.442695
        %v4474 = vpow.pop %v4473
        %v4475 = vmul.f32 %v4384, 1.442695
        %v4476 = vpow.pop %v4475
        %v4477 = vmul.f32 %v4385, 1.442695
        %v4478 = vpow.pop %v4477
        %v4479 = vmul.f32 %v4386, 1.442695
        %v4480 = vpow.pop %v4479
        %v4481 = vmul.f32 %v4387, 1.442695
        %v4482 = vpow.pop %v4481
        %v4483 = vmul.f32 %v4388, 1.442695
        %v4484 = vpow.pop %v4483
        %v4485 = vmul.f32 %v4389, 1.442695
        %v4486 = vpow.pop %v4485
        %v4487 = vmul.f32 %v4390, 1.442695
        %v4488 = vpow.pop %v4487
        %v4489 = vmul.f32 %v4391, 1.442695
        %v4490 = vpow.pop %v4489
        %v4491 = vmul.f32 %v4392, 1.442695
        %v4492 = vpow.pop %v4491
        %v4493 = vmul.f32 %v4393, 1.442695
        %v4494 = vpow.pop %v4493
        %v4495 = vmul.f32 %v4394, 1.442695
        %v4496 = vpow.pop %v4495
        %v4497 = vmul.f32 %v4395, 1.442695
        %v4498 = vpow.pop %v4497
        %v4499 = vmul.f32 %v4396, 1.442695
        %v4500 = vpow.pop %v4499
        %v4501 = vmul.f32 %v4397, 1.442695
        %v4502 = vpow.pop %v4501
        %v4503 = vmul.f32 %v4398, 1.442695
        %v4504 = vpow.pop %v4503
        %v4505 = vmul.f32 %v4399, 1.442695
        %v4506 = vpow.pop %v4505
        %v4507 = vmul.f32 %v4400, 1.442695
        %v4508 = vpow.pop %v4507
        %v4509 = vmul.f32 %v4401, 1.442695
        %v4510 = vpow.pop %v4509
        %v4511 = vmul.f32 %v4402, 1.442695
        %v4512 = vpow.pop %v4511
        %v4513 = vmul.f32 %v4403, 1.442695
        %v4514 = vpow.pop %v4513
        %v4515 = vmul.f32 %v4404, 1.442695
        %v4516 = vpow.pop %v4515
        %v4517 = vmul.f32 %v4405, 1.442695
        %v4518 = vpow.pop %v4517
        %v4519 = vmul.f32 %v4406, 1.442695
        %v4520 = vpow.pop %v4519
        %v4521 = vmul.f32 %v4407, 1.442695
        %v4522 = vpow.pop %v4521
        %v4523 = vmul.f32 %v4408, 1.442695
        %v4524 = vpow.pop %v4523
        %v4525 = vmul.f32 %v4409, 1.442695
        %v4526 = vpow.pop %v4525
        %v4527 = vmul.f32 %v4410, 1.442695
        %v4528 = vpow.pop %v4527
        %v4529 = vmul.f32 %v4411, 1.442695
        %v4530 = vpow.pop %v4529
        %v4531 = vmul.f32 %v4412, 1.442695
        %v4532 = vpow.pop %v4531
        %v4533 = vadd.f32 %v4414, 1.0
        %v4534 = vadd.f32 %v4416, 1.0
        %v4535 = vadd.f32 %v4418, 1.0
        %v4536 = vadd.f32 %v4420, 1.0
        %v4537 = vadd.f32 %v4422, 1.0
        %v4538 = vadd.f32 %v4424, 1.0
        %v4539 = vadd.f32 %v4426, 1.0
        %v4540 = vadd.f32 %v4428, 1.0
        %v4541 = vadd.f32 %v4430, 1.0
        %v4542 = vadd.f32 %v4432, 1.0
        %v4543 = vadd.f32 %v4434, 1.0
        %v4544 = vadd.f32 %v4436, 1.0
        %v4545 = vadd.f32 %v4438, 1.0
        %v4546 = vadd.f32 %v4440, 1.0
        %v4547 = vadd.f32 %v4442, 1.0
        %v4548 = vadd.f32 %v4444, 1.0
        %v4549 = vadd.f32 %v4446, 1.0
        %v4550 = vadd.f32 %v4448, 1.0
        %v4551 = vadd.f32 %v4450, 1.0
        %v4552 = vadd.f32 %v4452, 1.0
        %v4553 = vadd.f32 %v4454, 1.0
        %v4554 = vadd.f32 %v4456, 1.0
        %v4555 = vadd.f32 %v4458, 1.0
        %v4556 = vadd.f32 %v4460, 1.0
        %v4557 = vadd.f32 %v4462, 1.0
        %v4558 = vadd.f32 %v4464, 1.0
        %v4559 = vadd.f32 %v4466, 1.0
        %v4560 = vadd.f32 %v4468, 1.0
        %v4561 = vadd.f32 %v4470, 1.0
        %v4562 = vadd.f32 %v4472, 1.0
        %v4563 = vadd.f32 %v4474, 1.0
        %v4564 = vadd.f32 %v4476, 1.0
        %v4565 = vadd.f32 %v4478, 1.0
        %v4566 = vadd.f32 %v4480, 1.0
        %v4567 = vadd.f32 %v4482, 1.0
        %v4568 = vadd.f32 %v4484, 1.0
        %v4569 = vadd.f32 %v4486, 1.0
        %v4570 = vadd.f32 %v4488, 1.0
        %v4571 = vadd.f32 %v4490, 1.0
        %v4572 = vadd.f32 %v4492, 1.0
        %v4573 = vadd.f32 %v4494, 1.0
        %v4574 = vadd.f32 %v4496, 1.0
        %v4575 = vadd.f32 %v4498, 1.0
        %v4576 = vadd.f32 %v4500, 1.0
        %v4577 = vadd.f32 %v4502, 1.0
        %v4578 = vadd.f32 %v4504, 1.0
        %v4579 = vadd.f32 %v4506, 1.0
        %v4580 = vadd.f32 %v4508, 1.0
        %v4581 = vadd.f32 %v4510, 1.0
        %v4582 = vadd.f32 %v4512, 1.0
        %v4583 = vadd.f32 %v4514, 1.0
        %v4584 = vadd.f32 %v4516, 1.0
        %v4585 = vadd.f32 %v4518, 1.0
        %v4586 = vadd.f32 %v4520, 1.0
        %v4587 = vadd.f32 %v4522, 1.0
        %v4588 = vadd.f32 %v4524, 1.0
        %v4589 = vadd.f32 %v4526, 1.0
        %v4590 = vadd.f32 %v4528, 1.0
        %v4591 = vadd.f32 %v4530, 1.0
        %v4592 = vadd.f32 %v4532, 1.0
        %v4593 = vrcp.pop %v4533
        %v4594 = vmul.f32 1.0, %v4593
        %v4595 = vrcp.pop %v4534
        %v4596 = vmul.f32 1.0, %v4595
        %v4597 = vrcp.pop %v4535
        %v4598 = vmul.f32 1.0, %v4597
        %v4599 = vrcp.pop %v4536
        %v4600 = vmul.f32 1.0, %v4599
        %v4601 = vrcp.pop %v4537
        %v4602 = vmul.f32 1.0, %v4601
        %v4603 = vrcp.pop %v4538
        %v4604 = vmul.f32 1.0, %v4603
        %v4605 = vrcp.pop %v4539
        %v4606 = vmul.f32 1.0, %v4605
        %v4607 = vrcp.pop %v4540
        %v4608 = vmul.f32 1.0, %v4607
        %v4609 = vrcp.pop %v4541
        %v4610 = vmul.f32 1.0, %v4609
        %v4611 = vrcp.pop %v4542
        %v4612 = vmul.f32 1.0, %v4611
        %v4613 = vrcp.pop %v4543
        %v4614 = vmul.f32 1.0, %v4613
        %v4615 = vrcp.pop %v4544
        %v4616 = vmul.f32 1.0, %v4615
        %v4617 = vrcp.pop %v4545
        %v4618 = vmul.f32 1.0, %v4617
        %v4619 = vrcp.pop %v4546
        %v4620 = vmul.f32 1.0, %v4619
        %v4621 = vrcp.pop %v4547
        %v4622 = vmul.f32 1.0, %v4621
        %v4623 = vrcp.pop %v4548
        %v4624 = vmul.f32 1.0, %v4623
        %v4625 = vrcp.pop %v4549
        %v4626 = vmul.f32 1.0, %v4625
        %v4627 = vrcp.pop %v4550
        %v4628 = vmul.f32 1.0, %v4627
        %v4629 = vrcp.pop %v4551
        %v4630 = vmul.f32 1.0, %v4629
        %v4631 = vrcp.pop %v4552
        %v4632 = vmul.f32 1.0, %v4631
        %v4633 = vrcp.pop %v4553
        %v4634 = vmul.f32 1.0, %v4633
        %v4635 = vrcp.pop %v4554
        %v4636 = vmul.f32 1.0, %v4635
        %v4637 = vrcp.pop %v4555
        %v4638 = vmul.f32 1.0, %v4637
        %v4639 = vrcp.pop %v4556
        %v4640 = vmul.f32 1.0, %v4639
        %v4641 = vrcp.pop %v4557
        %v4642 = vmul.f32 1.0, %v4641
        %v4643 = vrcp.pop %v4558
        %v4644 = vmul.f32 1.0, %v4643
        %v4645 = vrcp.pop %v4559
        %v4646 = vmul.f32 1.0, %v4645
        %v4647 = vrcp.pop %v4560
        %v4648 = vmul.f32 1.0, %v4647
        %v4649 = vrcp.pop %v4561
        %v4650 = vmul.f32 1.0, %v4649
        %v4651 = vrcp.pop %v4562
        %v4652 = vmul.f32 1.0, %v4651
        %v4653 = vrcp.pop %v4563
        %v4654 = vmul.f32 1.0, %v4653
        %v4655 = vrcp.pop %v4564
        %v4656 = vmul.f32 1.0, %v4655
        %v4657 = vrcp.pop %v4565
        %v4658 = vmul.f32 1.0, %v4657
        %v4659 = vrcp.pop %v4566
        %v4660 = vmul.f32 1.0, %v4659
        %v4661 = vrcp.pop %v4567
        %v4662 = vmul.f32 1.0, %v4661
        %v4663 = vrcp.pop %v4568
        %v4664 = vmul.f32 1.0, %v4663
        %v4665 = vrcp.pop %v4569
        %v4666 = vmul.f32 1.0, %v4665
        %v4667 = vrcp.pop %v4570
        %v4668 = vmul.f32 1.0, %v4667
        %v4669 = vrcp.pop %v4571
        %v4670 = vmul.f32 1.0, %v4669
        %v4671 = vrcp.pop %v4572
        %v4672 = vmul.f32 1.0, %v4671
        %v4673 = vrcp.pop %v4573
        %v4674 = vmul.f32 1.0, %v4673
        %v4675 = vrcp.pop %v4574
        %v4676 = vmul.f32 1.0, %v4675
        %v4677 = vrcp.pop %v4575
        %v4678 = vmul.f32 1.0, %v4677
        %v4679 = vrcp.pop %v4576
        %v4680 = vmul.f32 1.0, %v4679
        %v4681 = vrcp.pop %v4577
        %v4682 = vmul.f32 1.0, %v4681
        %v4683 = vrcp.pop %v4578
        %v4684 = vmul.f32 1.0, %v4683
        %v4685 = vrcp.pop %v4579
        %v4686 = vmul.f32 1.0, %v4685
        %v4687 = vrcp.pop %v4580
        %v4688 = vmul.f32 1.0, %v4687
        %v4689 = vrcp.pop %v4581
        %v4690 = vmul.f32 1.0, %v4689
        %v4691 = vrcp.pop %v4582
        %v4692 = vmul.f32 1.0, %v4691
        %v4693 = vrcp.pop %v4583
        %v4694 = vmul.f32 1.0, %v4693
        %v4695 = vrcp.pop %v4584
        %v4696 = vmul.f32 1.0, %v4695
        %v4697 = vrcp.pop %v4585
        %v4698 = vmul.f32 1.0, %v4697
        %v4699 = vrcp.pop %v4586
        %v4700 = vmul.f32 1.0, %v4699
        %v4701 = vrcp.pop %v4587
        %v4702 = vmul.f32 1.0, %v4701
        %v4703 = vrcp.pop %v4588
        %v4704 = vmul.f32 1.0, %v4703
        %v4705 = vrcp.pop %v4589
        %v4706 = vmul.f32 1.0, %v4705
        %v4707 = vrcp.pop %v4590
        %v4708 = vmul.f32 1.0, %v4707
        %v4709 = vrcp.pop %v4591
        %v4710 = vmul.f32 1.0, %v4709
        %v4711 = vrcp.pop %v4592
        %v4712 = vmul.f32 1.0, %v4711
        %v4713 = vmul.f32 %v4293, %v4594
        %v4714 = vmul.f32 %v4294, %v4596
        %v4715 = vmul.f32 %v4295, %v4598
        %v4716 = vmul.f32 %v4296, %v4600
        %v4717 = vmul.f32 %v4297, %v4602
        %v4718 = vmul.f32 %v4298, %v4604
        %v4719 = vmul.f32 %v4299, %v4606
        %v4720 = vmul.f32 %v4300, %v4608
        %v4721 = vmul.f32 %v4301, %v4610
        %v4722 = vmul.f32 %v4302, %v4612
        %v4723 = vmul.f32 %v4303, %v4614
        %v4724 = vmul.f32 %v4304, %v4616
        %v4725 = vmul.f32 %v4305, %v4618
        %v4726 = vmul.f32 %v4306, %v4620
        %v4727 = vmul.f32 %v4307, %v4622
        %v4728 = vmul.f32 %v4308, %v4624
        %v4729 = vmul.f32 %v4309, %v4626
        %v4730 = vmul.f32 %v4310, %v4628
        %v4731 = vmul.f32 %v4311, %v4630
        %v4732 = vmul.f32 %v4312, %v4632
        %v4733 = vmul.f32 %v4313, %v4634
        %v4734 = vmul.f32 %v4314, %v4636
        %v4735 = vmul.f32 %v4315, %v4638
        %v4736 = vmul.f32 %v4316, %v4640
        %v4737 = vmul.f32 %v4317, %v4642
        %v4738 = vmul.f32 %v4318, %v4644
        %v4739 = vmul.f32 %v4319, %v4646
        %v4740 = vmul.f32 %v4320, %v4648
        %v4741 = vmul.f32 %v4321, %v4650
        %v4742 = vmul.f32 %v4322, %v4652
        %v4743 = vmul.f32 %v4323, %v4654
        %v4744 = vmul.f32 %v4324, %v4656
        %v4745 = vmul.f32 %v4325, %v4658
        %v4746 = vmul.f32 %v4326, %v4660
        %v4747 = vmul.f32 %v4327, %v4662
        %v4748 = vmul.f32 %v4328, %v4664
        %v4749 = vmul.f32 %v4329, %v4666
        %v4750 = vmul.f32 %v4330, %v4668
        %v4751 = vmul.f32 %v4331, %v4670
        %v4752 = vmul.f32 %v4332, %v4672
        %v4753 = vmul.f32 %v4333, %v4674
        %v4754 = vmul.f32 %v4334, %v4676
        %v4755 = vmul.f32 %v4335, %v4678
        %v4756 = vmul.f32 %v4336, %v4680
        %v4757 = vmul.f32 %v4337, %v4682
        %v4758 = vmul.f32 %v4338, %v4684
        %v4759 = vmul.f32 %v4339, %v4686
        %v4760 = vmul.f32 %v4340, %v4688
        %v4761 = vmul.f32 %v4341, %v4690
        %v4762 = vmul.f32 %v4342, %v4692
        %v4763 = vmul.f32 %v4343, %v4694
        %v4764 = vmul.f32 %v4344, %v4696
        %v4765 = vmul.f32 %v4345, %v4698
        %v4766 = vmul.f32 %v4346, %v4700
        %v4767 = vmul.f32 %v4347, %v4702
        %v4768 = vmul.f32 %v4348, %v4704
        %v4769 = vmul.f32 %v4349, %v4706
        %v4770 = vmul.f32 %v4350, %v4708
        %v4771 = vmul.f32 %v4351, %v4710
        %v4772 = vmul.f32 %v4352, %v4712
        %v4773 = vstv %s401
        %v4774 = vadd.s32 %v4773, 1
        %v4775 = vadd.s32 %v4773, 2
        %v4776 = vadd.s32 %v4773, 3
        %v4777 = vadd.s32 %v4773, 4
        %v4778 = vadd.s32 %v4773, 5
        %v4779 = vadd.s32 %v4773, 6
        %v4780 = vadd.s32 %v4773, 7
        %v4781 = vadd.s32 %v4773, 8
        %v4782 = vadd.s32 %v4773, 9
        %v4783 = vlaneseq
        %v4784 = vshrl.u32 %v4783, 7
        %v4785 = vadd.s32 %v4784, 8
        %v4786 = vadd.s32 %v4784, 16
        %vm4787 = vcmp.ge.s32.totalorder %v4773, 1
        %vm4788 = vcmp.ge.s32.totalorder %v4774, 1
        %vm4789 = vcmp.ge.s32.totalorder %v4775, 1
        %vm4790 = vcmp.ge.s32.totalorder %v4776, 1
        %vm4791 = vcmp.ge.s32.totalorder %v4777, 1
        %vm4792 = vcmp.ge.s32.totalorder %v4778, 1
        %vm4793 = vcmp.ge.s32.totalorder %v4779, 1
        %vm4794 = vcmp.ge.s32.totalorder %v4780, 1
        %vm4795 = vcmp.ge.s32.totalorder %v4781, 1
        %vm4796 = vcmp.ge.s32.totalorder %v4782, 1
        %vm4797 = vcmp.le.s32.totalorder %v4773, 16
        %vm4798 = vcmp.le.s32.totalorder %v4774, 16
        %vm4799 = vcmp.le.s32.totalorder %v4775, 16
        %vm4800 = vcmp.le.s32.totalorder %v4776, 16
        %vm4801 = vcmp.le.s32.totalorder %v4777, 16
        %vm4802 = vcmp.le.s32.totalorder %v4778, 16
        %vm4803 = vcmp.le.s32.totalorder %v4779, 16
        %vm4804 = vcmp.le.s32.totalorder %v4780, 16
        %vm4805 = vcmp.le.s32.totalorder %v4781, 16
        %vm4806 = vcmp.le.s32.totalorder %v4782, 16
        %vm4807 = vmand %vm4787, %vm4797
        %vm4808 = vmand %vm4788, %vm4798
        %vm4809 = vmand %vm4789, %vm4799
        %vm4810 = vmand %vm4790, %vm4800
        %vm4811 = vmand %vm4791, %vm4801
        %vm4812 = vmand %vm4792, %vm4802
        %vm4813 = vmand %vm4793, %vm4803
        %vm4814 = vmand %vm4794, %vm4804
        %vm4815 = vmand %vm4795, %vm4805
        %vm4816 = vmand %vm4796, %vm4806
        %vm4817 = vcmp.ge.s32.totalorder %v4784, 1
        %vm4818 = vcmp.ge.s32.totalorder %v4785, 1
        %vm4819 = vcmp.ge.s32.totalorder %v4786, 1
        %vm4820 = vmand %vm4807, %vm4817
        %vm4821 = vmand %vm4807, %vm4818
        %vm4822 = vmand %vm4807, %vm4819
        %vm4823 = vmand %vm4808, %vm4817
        %vm4824 = vmand %vm4808, %vm4818
        %vm4825 = vmand %vm4808, %vm4819
        %vm4826 = vmand %vm4809, %vm4817
        %vm4827 = vmand %vm4809, %vm4818
        %vm4828 = vmand %vm4809, %vm4819
        %vm4829 = vmand %vm4810, %vm4817
        %vm4830 = vmand %vm4810, %vm4818
        %vm4831 = vmand %vm4810, %vm4819
        %vm4832 = vmand %vm4811, %vm4817
        %vm4833 = vmand %vm4811, %vm4818
        %vm4834 = vmand %vm4811, %vm4819
        %vm4835 = vmand %vm4812, %vm4817
        %vm4836 = vmand %vm4812, %vm4818
        %vm4837 = vmand %vm4812, %vm4819
        %vm4838 = vmand %vm4813, %vm4817
        %vm4839 = vmand %vm4813, %vm4818
        %vm4840 = vmand %vm4813, %vm4819
        %vm4841 = vmand %vm4814, %vm4817
        %vm4842 = vmand %vm4814, %vm4818
        %vm4843 = vmand %vm4814, %vm4819
        %vm4844 = vmand %vm4815, %vm4817
        %vm4845 = vmand %vm4815, %vm4818
        %vm4846 = vmand %vm4815, %vm4819
        %vm4847 = vmand %vm4816, %vm4817
        %vm4848 = vmand %vm4816, %vm4818
        %vm4849 = vmand %vm4816, %vm4819
        %vm4850 = vcmp.le.s32.totalorder %v4784, 16
        %vm4851 = vcmp.le.s32.totalorder %v4785, 16
        %vm4852 = vcmp.le.s32.totalorder %v4786, 16
        %vm4853 = vmand %vm4820, %vm4850
        %vm4854 = vmand %vm4821, %vm4851
        %vm4855 = vmand %vm4822, %vm4852
        %vm4856 = vmand %vm4823, %vm4850
        %vm4857 = vmand %vm4824, %vm4851
        %vm4858 = vmand %vm4825, %vm4852
        %vm4859 = vmand %vm4826, %vm4850
        %vm4860 = vmand %vm4827, %vm4851
        %vm4861 = vmand %vm4828, %vm4852
        %vm4862 = vmand %vm4829, %vm4850
        %vm4863 = vmand %vm4830, %vm4851
        %vm4864 = vmand %vm4831, %vm4852
        %vm4865 = vmand %vm4832, %vm4850
        %vm4866 = vmand %vm4833, %vm4851
        %vm4867 = vmand %vm4834, %vm4852
        %vm4868 = vmand %vm4835, %vm4850
        %vm4869 = vmand %vm4836, %vm4851
        %vm4870 = vmand %vm4837, %vm4852
        %vm4871 = vmand %vm4838, %vm4850
        %vm4872 = vmand %vm4839, %vm4851
        %vm4873 = vmand %vm4840, %vm4852
        %vm4874 = vmand %vm4841, %vm4850
        %vm4875 = vmand %vm4842, %vm4851
        %vm4876 = vmand %vm4843, %vm4852
        %vm4877 = vmand %vm4844, %vm4850
        %vm4878 = vmand %vm4845, %vm4851
        %vm4879 = vmand %vm4846, %vm4852
        %vm4880 = vmand %vm4847, %vm4850
        %vm4881 = vmand %vm4848, %vm4851
        %vm4882 = vmand %vm4849, %vm4852
        %v4883 = vsel %vm4853, %v4713, 0.0
        %v4884 = vsel %vm4853, %v4714, 0.0
        %v4885 = vsel %vm4854, %v4715, 0.0
        %v4886 = vsel %vm4854, %v4716, 0.0
        %v4887 = vsel %vm4855, %v4717, 0.0
        %v4888 = vsel %vm4855, %v4718, 0.0
        %v4889 = vsel %vm4856, %v4719, 0.0
        %v4890 = vsel %vm4856, %v4720, 0.0
        %v4891 = vsel %vm4857, %v4721, 0.0
        %v4892 = vsel %vm4857, %v4722, 0.0
        %v4893 = vsel %vm4858, %v4723, 0.0
        %v4894 = vsel %vm4858, %v4724, 0.0
        %v4895 = vsel %vm4859, %v4725, 0.0
        %v4896 = vsel %vm4859, %v4726, 0.0
        %v4897 = vsel %vm4860, %v4727, 0.0
        %v4898 = vsel %vm4860, %v4728, 0.0
        %v4899 = vsel %vm4861, %v4729, 0.0
        %v4900 = vsel %vm4861, %v4730, 0.0
        %v4901 = vsel %vm4862, %v4731, 0.0
        %v4902 = vsel %vm4862, %v4732, 0.0
        %v4903 = vsel %vm4863, %v4733, 0.0
        %v4904 = vsel %vm4863, %v4734, 0.0
        %v4905 = vsel %vm4864, %v4735, 0.0
        %v4906 = vsel %vm4864, %v4736, 0.0
        %v4907 = vsel %vm4865, %v4737, 0.0
        %v4908 = vsel %vm4865, %v4738, 0.0
        %v4909 = vsel %vm4866, %v4739, 0.0
        %v4910 = vsel %vm4866, %v4740, 0.0
        %v4911 = vsel %vm4867, %v4741, 0.0
        %v4912 = vsel %vm4867, %v4742, 0.0
        %v4913 = vsel %vm4868, %v4743, 0.0
        %v4914 = vsel %vm4868, %v4744, 0.0
        %v4915 = vsel %vm4869, %v4745, 0.0
        %v4916 = vsel %vm4869, %v4746, 0.0
        %v4917 = vsel %vm4870, %v4747, 0.0
        %v4918 = vsel %vm4870, %v4748, 0.0
        %v4919 = vsel %vm4871, %v4749, 0.0
        %v4920 = vsel %vm4871, %v4750, 0.0
        %v4921 = vsel %vm4872, %v4751, 0.0
        %v4922 = vsel %vm4872, %v4752, 0.0
        %v4923 = vsel %vm4873, %v4753, 0.0
        %v4924 = vsel %vm4873, %v4754, 0.0
        %v4925 = vsel %vm4874, %v4755, 0.0
        %v4926 = vsel %vm4874, %v4756, 0.0
        %v4927 = vsel %vm4875, %v4757, 0.0
        %v4928 = vsel %vm4875, %v4758, 0.0
        %v4929 = vsel %vm4876, %v4759, 0.0
        %v4930 = vsel %vm4876, %v4760, 0.0
        %v4931 = vsel %vm4877, %v4761, 0.0
        %v4932 = vsel %vm4877, %v4762, 0.0
        %v4933 = vsel %vm4878, %v4763, 0.0
        %v4934 = vsel %vm4878, %v4764, 0.0
        %v4935 = vsel %vm4879, %v4765, 0.0
        %v4936 = vsel %vm4879, %v4766, 0.0
        %v4937 = vsel %vm4880, %v4767, 0.0
        %v4938 = vsel %vm4880, %v4768, 0.0
        %v4939 = vsel %vm4881, %v4769, 0.0
        %v4940 = vsel %vm4881, %v4770, 0.0
        %v4941 = vsel %vm4882, %v4771, 0.0
        %v4942 = vsel %vm4882, %v4772, 0.0
        %v4943 = vpack.c.bf16 %v4885, %v4883
        %v4944 = vpack.c.bf16 %v4886, %v4884
        %v4945 = vpack.c.bf16 %v4891, %v4889
        %v4946 = vpack.c.bf16 %v4892, %v4890
        %v4947 = vpack.c.bf16 %v4897, %v4895
        %v4948 = vpack.c.bf16 %v4898, %v4896
        %v4949 = vpack.c.bf16 %v4903, %v4901
        %v4950 = vpack.c.bf16 %v4904, %v4902
        %v4951 = vpack.c.bf16 %v4909, %v4907
        %v4952 = vpack.c.bf16 %v4910, %v4908
        %v4953 = vpack.c.bf16 %v4915, %v4913
        %v4954 = vpack.c.bf16 %v4916, %v4914
        %v4955 = vpack.c.bf16 %v4921, %v4919
        %v4956 = vpack.c.bf16 %v4922, %v4920
        %v4957 = vpack.c.bf16 %v4927, %v4925
        %v4958 = vpack.c.bf16 %v4928, %v4926
        %v4959 = vld [vmem:[%s4] sm:$0xff]
        %v4960 = vld [vmem:[%s4 + $0x8] sm:$0xff]
        %v4961 = vld [vmem:[%s4 + $0x10] sm:$0xff]
        %v4962 = vld [vmem:[%s4 + $0x18] sm:$0xff]
        %v4963 = vld [vmem:[%s4 + $0x20] sm:$0xff]
        %v4964 = vld [vmem:[%s4 + $0x28] sm:$0xff]
        %v4965 = vld [vmem:[%s4 + $0x30] sm:$0xff]
        %v4966 = vld [vmem:[%s4 + $0x38] sm:$0xff]
        %v4967 = vld [vmem:[%s4 + $0x40] sm:$0xff]
        %v4968 = vld [vmem:[%s4 + $0x48] sm:$0xff]
        %v4969 = vld [vmem:[%s4 + $0x50] sm:$0xff]
        %v4970 = vld [vmem:[%s4 + $0x58] sm:$0xff]
        %v4971 = vld [vmem:[%s4 + $0x60] sm:$0xff]
        %v4972 = vld [vmem:[%s4 + $0x68] sm:$0xff]
        %v4973 = vld [vmem:[%s4 + $0x70] sm:$0xff]
        %v4974 = vld [vmem:[%s4 + $0x78] sm:$0xff]
        %v4975 = vld [vmem:[%s4 + $0x80] sm:$0xff]
        %v4976 = vld [vmem:[%s4 + $0x88] sm:$0xff]
        %v4977 = vld [vmem:[%s4 + $0x90] sm:$0x33]
        %vm5026 = vcmask 1046528
        %v5027 = vrot.slane %v4883, 1
        %v5028 = vrot.slane %v4885, 1
        %v5029 = vsel %vm5026, %v5027, %v5028
        %v5030 = vrot.slane %v4884, 1
        %v5031 = vrot.slane %v4886, 1
        %v5032 = vsel %vm5026, %v5030, %v5031
        %v5033 = vrot.slane %v4887, 1
        %v5034 = vsel %vm5026, %v5028, %v5033
        %v5035 = vrot.slane %v4888, 1
        %v5036 = vsel %vm5026, %v5031, %v5035
        %v5037 = vrot.slane %v4889, 1
        %v5038 = vrot.slane %v4891, 1
        %v5039 = vsel %vm5026, %v5037, %v5038
        %v5040 = vrot.slane %v4890, 1
        %v5041 = vrot.slane %v4892, 1
        %v5042 = vsel %vm5026, %v5040, %v5041
        %v5043 = vrot.slane %v4893, 1
        %v5044 = vsel %vm5026, %v5038, %v5043
        %v5045 = vrot.slane %v4894, 1
        %v5046 = vsel %vm5026, %v5041, %v5045
        %v5047 = vrot.slane %v4895, 1
        %v5048 = vrot.slane %v4897, 1
        %v5049 = vsel %vm5026, %v5047, %v5048
        %v5050 = vrot.slane %v4896, 1
        %v5051 = vrot.slane %v4898, 1
        %v5052 = vsel %vm5026, %v5050, %v5051
        %v5053 = vrot.slane %v4899, 1
        %v5054 = vsel %vm5026, %v5048, %v5053
        %v5055 = vrot.slane %v4900, 1
        %v5056 = vsel %vm5026, %v5051, %v5055
        %v5057 = vrot.slane %v4901, 1
        %v5058 = vrot.slane %v4903, 1
        %v5059 = vsel %vm5026, %v5057, %v5058
        %v5060 = vrot.slane %v4902, 1
        %v5061 = vrot.slane %v4904, 1
        %v5062 = vsel %vm5026, %v5060, %v5061
        %v5063 = vrot.slane %v4905, 1
        %v5064 = vsel %vm5026, %v5058, %v5063
        %v5065 = vrot.slane %v4906, 1
        %v5066 = vsel %vm5026, %v5061, %v5065
        %v5067 = vrot.slane %v4907, 1
        %v5068 = vrot.slane %v4909, 1
        %v5069 = vsel %vm5026, %v5067, %v5068
        %v5070 = vrot.slane %v4908, 1
        %v5071 = vrot.slane %v4910, 1
        %v5072 = vsel %vm5026, %v5070, %v5071
        %v5073 = vrot.slane %v4911, 1
        %v5074 = vsel %vm5026, %v5068, %v5073
        %v5075 = vrot.slane %v4912, 1
        %v5076 = vsel %vm5026, %v5071, %v5075
        %v5077 = vrot.slane %v4913, 1
        %v5078 = vrot.slane %v4915, 1
        %v5079 = vsel %vm5026, %v5077, %v5078
        %v5080 = vrot.slane %v4914, 1
        %v5081 = vrot.slane %v4916, 1
        %v5082 = vsel %vm5026, %v5080, %v5081
        %v5083 = vrot.slane %v4917, 1
        %v5084 = vsel %vm5026, %v5078, %v5083
        %v5085 = vrot.slane %v4918, 1
        %v5086 = vsel %vm5026, %v5081, %v5085
        %v5087 = vrot.slane %v4919, 1
        %v5088 = vrot.slane %v4921, 1
        %v5089 = vsel %vm5026, %v5087, %v5088
        %v5090 = vrot.slane %v4920, 1
        %v5091 = vrot.slane %v4922, 1
        %v5092 = vsel %vm5026, %v5090, %v5091
        %v5093 = vrot.slane %v4923, 1
        %v5094 = vsel %vm5026, %v5088, %v5093
        %v5095 = vrot.slane %v4924, 1
        %v5096 = vsel %vm5026, %v5091, %v5095
        %v5097 = vrot.slane %v4925, 1
        %v5098 = vrot.slane %v4927, 1
        %v5099 = vsel %vm5026, %v5097, %v5098
        %v5100 = vrot.slane %v4926, 1
        %v5101 = vrot.slane %v4928, 1
        %v5102 = vsel %vm5026, %v5100, %v5101
        %v5103 = vrot.slane %v4929, 1
        %v5104 = vsel %vm5026, %v5098, %v5103
        %v5105 = vrot.slane %v4930, 1
        %v5106 = vsel %vm5026, %v5101, %v5105
        %v5139 = vpack.c.bf16 %v5034, %v5029
        %v5140 = vpack.c.bf16 %v5036, %v5032
        %v5141 = vpack.c.bf16 %v5044, %v5039
        %v5142 = vpack.c.bf16 %v5046, %v5042
        %v5143 = vpack.c.bf16 %v5054, %v5049
        %v5144 = vpack.c.bf16 %v5056, %v5052
        %v5145 = vpack.c.bf16 %v5064, %v5059
        %v5146 = vpack.c.bf16 %v5066, %v5062
        %v5147 = vpack.c.bf16 %v5074, %v5069
        %v5148 = vpack.c.bf16 %v5076, %v5072
        %v5149 = vpack.c.bf16 %v5084, %v5079
        %v5150 = vpack.c.bf16 %v5086, %v5082
        %v5151 = vpack.c.bf16 %v5094, %v5089
        %v5152 = vpack.c.bf16 %v5096, %v5092
        %v5153 = vpack.c.bf16 %v5104, %v5099
        %v5154 = vpack.c.bf16 %v5106, %v5102
        %s5155 = scalar_lea.vmem %s4, 152
        %v5156 = vld [vmem:[%s5155] sm:$0xff]
        %v5157 = vld [vmem:[%s5155 + $0x8] sm:$0xff]
        %v5158 = vld [vmem:[%s5155 + $0x10] sm:$0xff]
        %v5159 = vld [vmem:[%s5155 + $0x18] sm:$0xff]
        %v5160 = vld [vmem:[%s5155 + $0x20] sm:$0xff]
        %v5161 = vld [vmem:[%s5155 + $0x28] sm:$0xff]
        %v5162 = vld [vmem:[%s5155 + $0x30] sm:$0xff]
        %v5163 = vld [vmem:[%s5155 + $0x38] sm:$0xff]
        %v5164 = vld [vmem:[%s5155 + $0x40] sm:$0xff]
        %v5165 = vld [vmem:[%s5155 + $0x48] sm:$0xff]
        %v5166 = vld [vmem:[%s5155 + $0x50] sm:$0xff]
        %v5167 = vld [vmem:[%s5155 + $0x58] sm:$0xff]
        %v5168 = vld [vmem:[%s5155 + $0x60] sm:$0xff]
        %v5169 = vld [vmem:[%s5155 + $0x68] sm:$0xff]
        %v5170 = vld [vmem:[%s5155 + $0x70] sm:$0xff]
        %v5171 = vld [vmem:[%s5155 + $0x78] sm:$0xff]
        %v5172 = vld [vmem:[%s5155 + $0x80] sm:$0xff]
        %v5173 = vld [vmem:[%s5155 + $0x88] sm:$0xff]
        %v5174 = vld [vmem:[%s5155 + $0x90] sm:$0x33]
        %v5194 = vunpack.c.l.b16 %v5156
        %v5195 = vunpack.c.h.b16 %v5156
        %v5196 = vunpack.c.l.b16 %v5157
        %v5197 = vunpack.c.h.b16 %v5157
        %v5198 = vunpack.c.l.b16 %v5158
        %v5199 = vunpack.c.h.b16 %v5158
        %v5200 = vunpack.c.l.b16 %v5159
        %v5201 = vunpack.c.h.b16 %v5159
        %v5202 = vunpack.c.l.b16 %v5160
        %v5203 = vunpack.c.h.b16 %v5160
        %v5204 = vunpack.c.l.b16 %v5161
        %v5205 = vunpack.c.h.b16 %v5161
        %v5206 = vunpack.c.l.b16 %v5162
        %v5207 = vunpack.c.h.b16 %v5162
        %v5208 = vunpack.c.l.b16 %v5163
        %v5209 = vunpack.c.h.b16 %v5163
        %v5210 = vunpack.c.l.b16 %v5164
        %v5211 = vunpack.c.h.b16 %v5164
        %v5212 = vunpack.c.l.b16 %v5165
        %v5213 = vunpack.c.h.b16 %v5165
        %v5214 = vunpack.c.l.b16 %v5166
        %v5215 = vunpack.c.h.b16 %v5166
        %v5216 = vunpack.c.l.b16 %v5167
        %v5217 = vunpack.c.h.b16 %v5167
        %v5218 = vunpack.c.l.b16 %v5168
        %v5219 = vunpack.c.h.b16 %v5168
        %v5220 = vunpack.c.l.b16 %v5169
        %v5221 = vunpack.c.h.b16 %v5169
        %v5222 = vunpack.c.l.b16 %v5170
        %v5223 = vunpack.c.h.b16 %v5170
        %v5224 = vunpack.c.l.b16 %v5171
        %v5225 = vunpack.c.h.b16 %v5171
        %v5226 = vunpack.c.l.b16 %v5172
        %v5227 = vunpack.c.h.b16 %v5172
        %v5228 = vunpack.c.l.b16 %v5173
        %v5229 = vunpack.c.h.b16 %v5173
        %v5230 = vunpack.c.l.b16 %v5174
        %v5231 = vunpack.c.h.b16 %v5174
        %v5232 = vpack.c.b16 %v5196, %v5194
        %v5233 = vpack.c.b16 %v5197, %v5195
        %v5234 = vpack.c.b16 %v5200, %v5198
        %v5235 = vpack.c.b16 %v5201, %v5199
        %v5236 = vpack.c.b16 %v5204, %v5202
        %v5237 = vpack.c.b16 %v5205, %v5203
        %v5238 = vpack.c.b16 %v5208, %v5206
        %v5239 = vpack.c.b16 %v5209, %v5207
        %v5240 = vpack.c.b16 %v5212, %v5210
        %v5241 = vpack.c.b16 %v5213, %v5211
        %v5242 = vpack.c.b16 %v5216, %v5214
        %v5243 = vpack.c.b16 %v5217, %v5215
        %v5244 = vpack.c.b16 %v5220, %v5218
        %v5245 = vpack.c.b16 %v5221, %v5219
        %v5246 = vpack.c.b16 %v5224, %v5222
        %v5247 = vpack.c.b16 %v5225, %v5223
        %v5248 = vpack.c.b16 %v5228, %v5226
        %v5249 = vpack.c.b16 %v5229, %v5227
        %v5250 = vpack.c.b16 %v5230, %v5230
        %v5251 = vpack.c.b16 %v5231, %v5231
        %vm5270 = vcmask 154624
        %v5272 = vsel %vm5270, %v5140, 0
        %v5275 = vsel %vm5270, %v5142, 0
        %v5278 = vsel %vm5270, %v5144, 0
        %v5281 = vsel %vm5270, %v5146, 0
        %v5284 = vsel %vm5270, %v5148, 0
        %v5287 = vsel %vm5270, %v5150, 0
        %v5290 = vsel %vm5270, %v5152, 0
        %v5293 = vsel %vm5270, %v5154, 0
        %vm5295 = vcmask 1040384
        %vm5296 = vcmask 1041408
        %v5297 = vsel %vm5295, 4294967295, 65535
        %v5298 = vsel %vm5296, %v5297, 0
        %v5300 = vand.u32 %v5250, %v5298
        %v5303 = vand.u32 %v5251, %v5298
        %5305 = vmatprep.subr.bf16.mxu0 %v5247
        %5306 = vmatpush1.bf16.msra.mxu0 %v5246
        %5307 = vmatprep.subr.bf16.mxu0 %v5245
        %5308 = vmatpush1.bf16.msra.mxu0 %v5244
        %5309 = vmatprep.subr.bf16.mxu0 %v5243
        %5310 = vmatpush1.bf16.msra.mxu0 %v5242
        %5311 = vmatprep.subr.bf16.mxu0 %v5241
        %5312 = vmatpush1.bf16.msra.mxu0 %v5240
        %5313 = vmatprep.subr.bf16.mxu0 %v5239
        %5314 = vmatpush1.bf16.msra.mxu0 %v5238
        %5315 = vmatprep.subr.bf16.mxu0 %v5237
        %5316 = vmatpush1.bf16.msra.mxu0 %v5236
        %5317 = vmatprep.subr.bf16.mxu0 %v5235
        %5318 = vmatpush1.bf16.msra.mxu0 %v5234
        %5319 = vmatprep.subr.bf16.mxu0 %v5233
        %5320 = vmatpush1.bf16.msra.mxu0 %v5232
        %5321 = vmatprep.subr.bf16.mxu0 0
        %5322 = vmatpush2.bf16.msra.mxu0 0
        %5323 = vmatprep.subr.bf16.mxu0 0
        %5324 = vmatpush2.bf16.msra.mxu0 0
        %5325 = vmatprep.subr.bf16.mxu0 0
        %5326 = vmatpush2.bf16.msra.mxu0 0
        %5327 = vmatprep.subr.bf16.mxu0 0
        %5328 = vmatpush2.bf16.msra.mxu0 0
        %5329 = vmatprep.subr.bf16.mxu0 0
        %5330 = vmatpush2.bf16.msra.mxu0 0
        %5331 = vmatprep.subr.bf16.mxu0 0
        %5332 = vmatpush2.bf16.msra.mxu0 0
        %5333 = vmatprep.subr.bf16.mxu0 %v5303
        %5334 = vmatpush2.bf16.msra.mxu0 %v5300
        %5335 = vmatprep.subr.bf16.mxu0 %v5249
        %5336 = vmatpush2.bf16.msra.mxu0 %v5248
        %5337 = vmatprep.mubr.bf16.mxu0 %v5272
        %5338 = vmatmul.mubr.bf16.gmra.mxu0 %v5139
        %v5339 = vpop.f32.mrf.mxu0
        %v5340 = vadd.f32 0.0, %v5339
        %v5341 = vpop.f32.mrf.mxu0
        %v5342 = vadd.f32 0.0, %v5341
        %v5343 = vpop.f32.mrf.mxu0
        %v5344 = vadd.f32 0.0, %v5343
        %v5345 = vpop.f32.mrf.mxu0
        %v5346 = vadd.f32 0.0, %v5345
        %5347 = vmatprep.mubr.bf16.mxu0 %v5275
        %5348 = vmatmul.mubr.bf16.gmra.mxu0 %v5141
        %v5349 = vpop.f32.mrf.mxu0
        %v5350 = vadd.f32 0.0, %v5349
        %v5351 = vpop.f32.mrf.mxu0
        %v5352 = vadd.f32 0.0, %v5351
        %v5353 = vpop.f32.mrf.mxu0
        %v5354 = vadd.f32 0.0, %v5353
        %v5355 = vpop.f32.mrf.mxu0
        %v5356 = vadd.f32 0.0, %v5355
        %5357 = vmatprep.mubr.bf16.mxu0 %v5278
        %5358 = vmatmul.mubr.bf16.gmra.mxu0 %v5143
        %v5359 = vpop.f32.mrf.mxu0
        %v5360 = vadd.f32 0.0, %v5359
        %v5361 = vpop.f32.mrf.mxu0
        %v5362 = vadd.f32 0.0, %v5361
        %v5363 = vpop.f32.mrf.mxu0
        %v5364 = vadd.f32 0.0, %v5363
        %v5365 = vpop.f32.mrf.mxu0
        %v5366 = vadd.f32 0.0, %v5365
        %5367 = vmatprep.mubr.bf16.mxu0 %v5281
        %5368 = vmatmul.mubr.bf16.gmra.mxu0 %v5145
        %v5369 = vpop.f32.mrf.mxu0
        %v5370 = vadd.f32 0.0, %v5369
        %v5371 = vpop.f32.mrf.mxu0
        %v5372 = vadd.f32 0.0, %v5371
        %v5373 = vpop.f32.mrf.mxu0
        %v5374 = vadd.f32 0.0, %v5373
        %v5375 = vpop.f32.mrf.mxu0
        %v5376 = vadd.f32 0.0, %v5375
        %5377 = vmatprep.mubr.bf16.mxu0 %v5284
        %5378 = vmatmul.mubr.bf16.gmra.mxu0 %v5147
        %v5379 = vpop.f32.mrf.mxu0
        %v5380 = vadd.f32 0.0, %v5379
        %v5381 = vpop.f32.mrf.mxu0
        %v5382 = vadd.f32 0.0, %v5381
        %v5383 = vpop.f32.mrf.mxu0
        %v5384 = vadd.f32 0.0, %v5383
        %v5385 = vpop.f32.mrf.mxu0
        %v5386 = vadd.f32 0.0, %v5385
        %5387 = vmatprep.mubr.bf16.mxu0 %v5287
        %5388 = vmatmul.mubr.bf16.gmra.mxu0 %v5149
        %v5389 = vpop.f32.mrf.mxu0
        %v5390 = vadd.f32 0.0, %v5389
        %v5391 = vpop.f32.mrf.mxu0
        %v5392 = vadd.f32 0.0, %v5391
        %v5393 = vpop.f32.mrf.mxu0
        %v5394 = vadd.f32 0.0, %v5393
        %v5395 = vpop.f32.mrf.mxu0
        %v5396 = vadd.f32 0.0, %v5395
        %5397 = vmatprep.mubr.bf16.mxu0 %v5290
        %5398 = vmatmul.mubr.bf16.gmra.mxu0 %v5151
        %v5399 = vpop.f32.mrf.mxu0
        %v5400 = vadd.f32 0.0, %v5399
        %v5401 = vpop.f32.mrf.mxu0
        %v5402 = vadd.f32 0.0, %v5401
        %v5403 = vpop.f32.mrf.mxu0
        %v5404 = vadd.f32 0.0, %v5403
        %v5405 = vpop.f32.mrf.mxu0
        %v5406 = vadd.f32 0.0, %v5405
        %5407 = vmatprep.mubr.bf16.mxu0 %v5293
        %5408 = vmatmul.mubr.bf16.gmra.mxu0 %v5153
        %v5409 = vpop.f32.mrf.mxu0
        %v5410 = vadd.f32 0.0, %v5409
        %v5411 = vpop.f32.mrf.mxu0
        %v5412 = vadd.f32 0.0, %v5411
        %v5413 = vpop.f32.mrf.mxu0
        %v5414 = vadd.f32 0.0, %v5413
        %v5415 = vpop.f32.mrf.mxu0
        %v5416 = vadd.f32 0.0, %v5415
        %5417 = vdwg.mxu0
        %v5437 = vunpack.c.l.b16 %v4959
        %v5438 = vunpack.c.h.b16 %v4959
        %v5439 = vunpack.c.l.b16 %v4960
        %v5440 = vunpack.c.h.b16 %v4960
        %v5441 = vunpack.c.l.b16 %v4961
        %v5442 = vunpack.c.h.b16 %v4961
        %v5443 = vunpack.c.l.b16 %v4962
        %v5444 = vunpack.c.h.b16 %v4962
        %v5445 = vunpack.c.l.b16 %v4963
        %v5446 = vunpack.c.h.b16 %v4963
        %v5447 = vunpack.c.l.b16 %v4964
        %v5448 = vunpack.c.h.b16 %v4964
        %v5449 = vunpack.c.l.b16 %v4965
        %v5450 = vunpack.c.h.b16 %v4965
        %v5451 = vunpack.c.l.b16 %v4966
        %v5452 = vunpack.c.h.b16 %v4966
        %v5453 = vunpack.c.l.b16 %v4967
        %v5454 = vunpack.c.h.b16 %v4967
        %v5455 = vunpack.c.l.b16 %v4968
        %v5456 = vunpack.c.h.b16 %v4968
        %v5457 = vunpack.c.l.b16 %v4969
        %v5458 = vunpack.c.h.b16 %v4969
        %v5459 = vunpack.c.l.b16 %v4970
        %v5460 = vunpack.c.h.b16 %v4970
        %v5461 = vunpack.c.l.b16 %v4971
        %v5462 = vunpack.c.h.b16 %v4971
        %v5463 = vunpack.c.l.b16 %v4972
        %v5464 = vunpack.c.h.b16 %v4972
        %v5465 = vunpack.c.l.b16 %v4973
        %v5466 = vunpack.c.h.b16 %v4973
        %v5467 = vunpack.c.l.b16 %v4974
        %v5468 = vunpack.c.h.b16 %v4974
        %v5469 = vunpack.c.l.b16 %v4975
        %v5470 = vunpack.c.h.b16 %v4975
        %v5471 = vunpack.c.l.b16 %v4976
        %v5472 = vunpack.c.h.b16 %v4976
        %v5473 = vunpack.c.l.b16 %v4977
        %v5474 = vunpack.c.h.b16 %v4977
        %v5475 = vpack.c.b16 %v5439, %v5437
        %v5476 = vpack.c.b16 %v5440, %v5438
        %v5477 = vpack.c.b16 %v5443, %v5441
        %v5478 = vpack.c.b16 %v5444, %v5442
        %v5479 = vpack.c.b16 %v5447, %v5445
        %v5480 = vpack.c.b16 %v5448, %v5446
        %v5481 = vpack.c.b16 %v5451, %v5449
        %v5482 = vpack.c.b16 %v5452, %v5450
        %v5483 = vpack.c.b16 %v5455, %v5453
        %v5484 = vpack.c.b16 %v5456, %v5454
        %v5485 = vpack.c.b16 %v5459, %v5457
        %v5486 = vpack.c.b16 %v5460, %v5458
        %v5487 = vpack.c.b16 %v5463, %v5461
        %v5488 = vpack.c.b16 %v5464, %v5462
        %v5489 = vpack.c.b16 %v5467, %v5465
        %v5490 = vpack.c.b16 %v5468, %v5466
        %v5491 = vpack.c.b16 %v5471, %v5469
        %v5492 = vpack.c.b16 %v5472, %v5470
        %v5493 = vpack.c.b16 %v5473, %v5473
        %v5494 = vpack.c.b16 %v5474, %v5474
        %v5514 = vsel %vm5270, %v4944, 0
        %v5517 = vsel %vm5270, %v4946, 0
        %v5520 = vsel %vm5270, %v4948, 0
        %v5523 = vsel %vm5270, %v4950, 0
        %v5526 = vsel %vm5270, %v4952, 0
        %v5529 = vsel %vm5270, %v4954, 0
        %v5532 = vsel %vm5270, %v4956, 0
        %v5535 = vsel %vm5270, %v4958, 0
        %v5538 = vand.u32 %v5493, %v5298
        %v5541 = vand.u32 %v5494, %v5298
        %5543 = vmatprep.subr.bf16.mxu0 %v5490
        %5544 = vmatpush1.bf16.msra.mxu0 %v5489
        %5545 = vmatprep.subr.bf16.mxu0 %v5488
        %5546 = vmatpush1.bf16.msra.mxu0 %v5487
        %5547 = vmatprep.subr.bf16.mxu0 %v5486
        %5548 = vmatpush1.bf16.msra.mxu0 %v5485
        %5549 = vmatprep.subr.bf16.mxu0 %v5484
        %5550 = vmatpush1.bf16.msra.mxu0 %v5483
        %5551 = vmatprep.subr.bf16.mxu0 %v5482
        %5552 = vmatpush1.bf16.msra.mxu0 %v5481
        %5553 = vmatprep.subr.bf16.mxu0 %v5480
        %5554 = vmatpush1.bf16.msra.mxu0 %v5479
        %5555 = vmatprep.subr.bf16.mxu0 %v5478
        %5556 = vmatpush1.bf16.msra.mxu0 %v5477
        %5557 = vmatprep.subr.bf16.mxu0 %v5476
        %5558 = vmatpush1.bf16.msra.mxu0 %v5475
        %5559 = vmatprep.subr.bf16.mxu0 0
        %5560 = vmatpush2.bf16.msra.mxu0 0
        %5561 = vmatprep.subr.bf16.mxu0 0
        %5562 = vmatpush2.bf16.msra.mxu0 0
        %5563 = vmatprep.subr.bf16.mxu0 0
        %5564 = vmatpush2.bf16.msra.mxu0 0
        %5565 = vmatprep.subr.bf16.mxu0 0
        %5566 = vmatpush2.bf16.msra.mxu0 0
        %5567 = vmatprep.subr.bf16.mxu0 0
        %5568 = vmatpush2.bf16.msra.mxu0 0
        %5569 = vmatprep.subr.bf16.mxu0 0
        %5570 = vmatpush2.bf16.msra.mxu0 0
        %5571 = vmatprep.subr.bf16.mxu0 %v5541
        %5572 = vmatpush2.bf16.msra.mxu0 %v5538
        %5573 = vmatprep.subr.bf16.mxu0 %v5492
        %5574 = vmatpush2.bf16.msra.mxu0 %v5491
        %5575 = vmatprep.mubr.bf16.mxu0 %v5514
        %5576 = vmatmul.mubr.bf16.gmra.mxu0 %v4943
        %v5577 = vpop.f32.mrf.mxu0
        %v5578 = vadd.f32 %v5340, %v5577
        %v5579 = vpop.f32.mrf.mxu0
        %v5580 = vadd.f32 %v5342, %v5579
        %v5581 = vpop.f32.mrf.mxu0
        %v5582 = vadd.f32 %v5344, %v5581
        %v5583 = vpop.f32.mrf.mxu0
        %v5584 = vadd.f32 %v5346, %v5583
        %5585 = vmatprep.mubr.bf16.mxu0 %v5517
        %5586 = vmatmul.mubr.bf16.gmra.mxu0 %v4945
        %v5587 = vpop.f32.mrf.mxu0
        %v5588 = vadd.f32 %v5350, %v5587
        %v5589 = vpop.f32.mrf.mxu0
        %v5590 = vadd.f32 %v5352, %v5589
        %v5591 = vpop.f32.mrf.mxu0
        %v5592 = vadd.f32 %v5354, %v5591
        %v5593 = vpop.f32.mrf.mxu0
        %v5594 = vadd.f32 %v5356, %v5593
        %5595 = vmatprep.mubr.bf16.mxu0 %v5520
        %5596 = vmatmul.mubr.bf16.gmra.mxu0 %v4947
        %v5597 = vpop.f32.mrf.mxu0
        %v5598 = vadd.f32 %v5360, %v5597
        %v5599 = vpop.f32.mrf.mxu0
        %v5600 = vadd.f32 %v5362, %v5599
        %v5601 = vpop.f32.mrf.mxu0
        %v5602 = vadd.f32 %v5364, %v5601
        %v5603 = vpop.f32.mrf.mxu0
        %v5604 = vadd.f32 %v5366, %v5603
        %5605 = vmatprep.mubr.bf16.mxu0 %v5523
        %5606 = vmatmul.mubr.bf16.gmra.mxu0 %v4949
        %v5607 = vpop.f32.mrf.mxu0
        %v5608 = vadd.f32 %v5370, %v5607
        %v5609 = vpop.f32.mrf.mxu0
        %v5610 = vadd.f32 %v5372, %v5609
        %v5611 = vpop.f32.mrf.mxu0
        %v5612 = vadd.f32 %v5374, %v5611
        %v5613 = vpop.f32.mrf.mxu0
        %v5614 = vadd.f32 %v5376, %v5613
        %5615 = vmatprep.mubr.bf16.mxu0 %v5526
        %5616 = vmatmul.mubr.bf16.gmra.mxu0 %v4951
        %v5617 = vpop.f32.mrf.mxu0
        %v5618 = vadd.f32 %v5380, %v5617
        %v5619 = vpop.f32.mrf.mxu0
        %v5620 = vadd.f32 %v5382, %v5619
        %v5621 = vpop.f32.mrf.mxu0
        %v5622 = vadd.f32 %v5384, %v5621
        %v5623 = vpop.f32.mrf.mxu0
        %v5624 = vadd.f32 %v5386, %v5623
        %5625 = vmatprep.mubr.bf16.mxu0 %v5529
        %5626 = vmatmul.mubr.bf16.gmra.mxu0 %v4953
        %v5627 = vpop.f32.mrf.mxu0
        %v5628 = vadd.f32 %v5390, %v5627
        %v5629 = vpop.f32.mrf.mxu0
        %v5630 = vadd.f32 %v5392, %v5629
        %v5631 = vpop.f32.mrf.mxu0
        %v5632 = vadd.f32 %v5394, %v5631
        %v5633 = vpop.f32.mrf.mxu0
        %v5634 = vadd.f32 %v5396, %v5633
        %5635 = vmatprep.mubr.bf16.mxu0 %v5532
        %5636 = vmatmul.mubr.bf16.gmra.mxu0 %v4955
        %v5637 = vpop.f32.mrf.mxu0
        %v5638 = vadd.f32 %v5400, %v5637
        %v5639 = vpop.f32.mrf.mxu0
        %v5640 = vadd.f32 %v5402, %v5639
        %v5641 = vpop.f32.mrf.mxu0
        %v5642 = vadd.f32 %v5404, %v5641
        %v5643 = vpop.f32.mrf.mxu0
        %v5644 = vadd.f32 %v5406, %v5643
        %5645 = vmatprep.mubr.bf16.mxu0 %v5535
        %5646 = vmatmul.mubr.bf16.gmra.mxu0 %v4957
        %v5647 = vpop.f32.mrf.mxu0
        %v5648 = vadd.f32 %v5410, %v5647
        %v5649 = vpop.f32.mrf.mxu0
        %v5650 = vadd.f32 %v5412, %v5649
        %v5651 = vpop.f32.mrf.mxu0
        %v5652 = vadd.f32 %v5414, %v5651
        %v5653 = vpop.f32.mrf.mxu0
        %v5654 = vadd.f32 %v5416, %v5653
        %5655 = vdwg.mxu0
        %vm5656 = vcmask 1045504
        %v5657 = vrot.slane %v4883, 2
        %v5658 = vrot.slane %v4885, 2
        %v5659 = vsel %vm5656, %v5657, %v5658
        %v5660 = vrot.slane %v4884, 2
        %v5661 = vrot.slane %v4886, 2
        %v5662 = vsel %vm5656, %v5660, %v5661
        %v5663 = vrot.slane %v4887, 2
        %v5664 = vsel %vm5656, %v5658, %v5663
        %v5665 = vrot.slane %v4888, 2
        %v5666 = vsel %vm5656, %v5661, %v5665
        %v5667 = vrot.slane %v4889, 2
        %v5668 = vrot.slane %v4891, 2
        %v5669 = vsel %vm5656, %v5667, %v5668
        %v5670 = vrot.slane %v4890, 2
        %v5671 = vrot.slane %v4892, 2
        %v5672 = vsel %vm5656, %v5670, %v5671
        %v5673 = vrot.slane %v4893, 2
        %v5674 = vsel %vm5656, %v5668, %v5673
        %v5675 = vrot.slane %v4894, 2
        %v5676 = vsel %vm5656, %v5671, %v5675
        %v5677 = vrot.slane %v4895, 2
        %v5678 = vrot.slane %v4897, 2
        %v5679 = vsel %vm5656, %v5677, %v5678
        %v5680 = vrot.slane %v4896, 2
        %v5681 = vrot.slane %v4898, 2
        %v5682 = vsel %vm5656, %v5680, %v5681
        %v5683 = vrot.slane %v4899, 2
        %v5684 = vsel %vm5656, %v5678, %v5683
        %v5685 = vrot.slane %v4900, 2
        %v5686 = vsel %vm5656, %v5681, %v5685
        %v5687 = vrot.slane %v4901, 2
        %v5688 = vrot.slane %v4903, 2
        %v5689 = vsel %vm5656, %v5687, %v5688
        %v5690 = vrot.slane %v4902, 2
        %v5691 = vrot.slane %v4904, 2
        %v5692 = vsel %vm5656, %v5690, %v5691
        %v5693 = vrot.slane %v4905, 2
        %v5694 = vsel %vm5656, %v5688, %v5693
        %v5695 = vrot.slane %v4906, 2
        %v5696 = vsel %vm5656, %v5691, %v5695
        %v5697 = vrot.slane %v4907, 2
        %v5698 = vrot.slane %v4909, 2
        %v5699 = vsel %vm5656, %v5697, %v5698
        %v5700 = vrot.slane %v4908, 2
        %v5701 = vrot.slane %v4910, 2
        %v5702 = vsel %vm5656, %v5700, %v5701
        %v5703 = vrot.slane %v4911, 2
        %v5704 = vsel %vm5656, %v5698, %v5703
        %v5705 = vrot.slane %v4912, 2
        %v5706 = vsel %vm5656, %v5701, %v5705
        %v5707 = vrot.slane %v4913, 2
        %v5708 = vrot.slane %v4915, 2
        %v5709 = vsel %vm5656, %v5707, %v5708
        %v5710 = vrot.slane %v4914, 2
        %v5711 = vrot.slane %v4916, 2
        %v5712 = vsel %vm5656, %v5710, %v5711
        %v5713 = vrot.slane %v4917, 2
        %v5714 = vsel %vm5656, %v5708, %v5713
        %v5715 = vrot.slane %v4918, 2
        %v5716 = vsel %vm5656, %v5711, %v5715
        %v5717 = vrot.slane %v4919, 2
        %v5718 = vrot.slane %v4921, 2
        %v5719 = vsel %vm5656, %v5717, %v5718
        %v5720 = vrot.slane %v4920, 2
        %v5721 = vrot.slane %v4922, 2
        %v5722 = vsel %vm5656, %v5720, %v5721
        %v5723 = vrot.slane %v4923, 2
        %v5724 = vsel %vm5656, %v5718, %v5723
        %v5725 = vrot.slane %v4924, 2
        %v5726 = vsel %vm5656, %v5721, %v5725
        %v5727 = vrot.slane %v4925, 2
        %v5728 = vrot.slane %v4927, 2
        %v5729 = vsel %vm5656, %v5727, %v5728
        %v5730 = vrot.slane %v4926, 2
        %v5731 = vrot.slane %v4928, 2
        %v5732 = vsel %vm5656, %v5730, %v5731
        %v5733 = vrot.slane %v4929, 2
        %v5734 = vsel %vm5656, %v5728, %v5733
        %v5735 = vrot.slane %v4930, 2
        %v5736 = vsel %vm5656, %v5731, %v5735
        %v5769 = vpack.c.bf16 %v5664, %v5659
        %v5770 = vpack.c.bf16 %v5666, %v5662
        %v5771 = vpack.c.bf16 %v5674, %v5669
        %v5772 = vpack.c.bf16 %v5676, %v5672
        %v5773 = vpack.c.bf16 %v5684, %v5679
        %v5774 = vpack.c.bf16 %v5686, %v5682
        %v5775 = vpack.c.bf16 %v5694, %v5689
        %v5776 = vpack.c.bf16 %v5696, %v5692
        %v5777 = vpack.c.bf16 %v5704, %v5699
        %v5778 = vpack.c.bf16 %v5706, %v5702
        %v5779 = vpack.c.bf16 %v5714, %v5709
        %v5780 = vpack.c.bf16 %v5716, %v5712
        %v5781 = vpack.c.bf16 %v5724, %v5719
        %v5782 = vpack.c.bf16 %v5726, %v5722
        %v5783 = vpack.c.bf16 %v5734, %v5729
        %v5784 = vpack.c.bf16 %v5736, %v5732
        %s5785 = scalar_lea.vmem %s4, 304
        %v5786 = vld [vmem:[%s5785] sm:$0xff]
        %v5787 = vld [vmem:[%s5785 + $0x8] sm:$0xff]
        %v5788 = vld [vmem:[%s5785 + $0x10] sm:$0xff]
        %v5789 = vld [vmem:[%s5785 + $0x18] sm:$0xff]
        %v5790 = vld [vmem:[%s5785 + $0x20] sm:$0xff]
        %v5791 = vld [vmem:[%s5785 + $0x28] sm:$0xff]
        %v5792 = vld [vmem:[%s5785 + $0x30] sm:$0xff]
        %v5793 = vld [vmem:[%s5785 + $0x38] sm:$0xff]
        %v5794 = vld [vmem:[%s5785 + $0x40] sm:$0xff]
        %v5795 = vld [vmem:[%s5785 + $0x48] sm:$0xff]
        %v5796 = vld [vmem:[%s5785 + $0x50] sm:$0xff]
        %v5797 = vld [vmem:[%s5785 + $0x58] sm:$0xff]
        %v5798 = vld [vmem:[%s5785 + $0x60] sm:$0xff]
        %v5799 = vld [vmem:[%s5785 + $0x68] sm:$0xff]
        %v5800 = vld [vmem:[%s5785 + $0x70] sm:$0xff]
        %v5801 = vld [vmem:[%s5785 + $0x78] sm:$0xff]
        %v5802 = vld [vmem:[%s5785 + $0x80] sm:$0xff]
        %v5803 = vld [vmem:[%s5785 + $0x88] sm:$0xff]
        %v5804 = vld [vmem:[%s5785 + $0x90] sm:$0x33]
        %v5824 = vunpack.c.l.b16 %v5786
        %v5825 = vunpack.c.h.b16 %v5786
        %v5826 = vunpack.c.l.b16 %v5787
        %v5827 = vunpack.c.h.b16 %v5787
        %v5828 = vunpack.c.l.b16 %v5788
        %v5829 = vunpack.c.h.b16 %v5788
        %v5830 = vunpack.c.l.b16 %v5789
        %v5831 = vunpack.c.h.b16 %v5789
        %v5832 = vunpack.c.l.b16 %v5790
        %v5833 = vunpack.c.h.b16 %v5790
        %v5834 = vunpack.c.l.b16 %v5791
        %v5835 = vunpack.c.h.b16 %v5791
        %v5836 = vunpack.c.l.b16 %v5792
        %v5837 = vunpack.c.h.b16 %v5792
        %v5838 = vunpack.c.l.b16 %v5793
        %v5839 = vunpack.c.h.b16 %v5793
        %v5840 = vunpack.c.l.b16 %v5794
        %v5841 = vunpack.c.h.b16 %v5794
        %v5842 = vunpack.c.l.b16 %v5795
        %v5843 = vunpack.c.h.b16 %v5795
        %v5844 = vunpack.c.l.b16 %v5796
        %v5845 = vunpack.c.h.b16 %v5796
        %v5846 = vunpack.c.l.b16 %v5797
        %v5847 = vunpack.c.h.b16 %v5797
        %v5848 = vunpack.c.l.b16 %v5798
        %v5849 = vunpack.c.h.b16 %v5798
        %v5850 = vunpack.c.l.b16 %v5799
        %v5851 = vunpack.c.h.b16 %v5799
        %v5852 = vunpack.c.l.b16 %v5800
        %v5853 = vunpack.c.h.b16 %v5800
        %v5854 = vunpack.c.l.b16 %v5801
        %v5855 = vunpack.c.h.b16 %v5801
        %v5856 = vunpack.c.l.b16 %v5802
        %v5857 = vunpack.c.h.b16 %v5802
        %v5858 = vunpack.c.l.b16 %v5803
        %v5859 = vunpack.c.h.b16 %v5803
        %v5860 = vunpack.c.l.b16 %v5804
        %v5861 = vunpack.c.h.b16 %v5804
        %v5862 = vpack.c.b16 %v5826, %v5824
        %v5863 = vpack.c.b16 %v5827, %v5825
        %v5864 = vpack.c.b16 %v5830, %v5828
        %v5865 = vpack.c.b16 %v5831, %v5829
        %v5866 = vpack.c.b16 %v5834, %v5832
        %v5867 = vpack.c.b16 %v5835, %v5833
        %v5868 = vpack.c.b16 %v5838, %v5836
        %v5869 = vpack.c.b16 %v5839, %v5837
        %v5870 = vpack.c.b16 %v5842, %v5840
        %v5871 = vpack.c.b16 %v5843, %v5841
        %v5872 = vpack.c.b16 %v5846, %v5844
        %v5873 = vpack.c.b16 %v5847, %v5845
        %v5874 = vpack.c.b16 %v5850, %v5848
        %v5875 = vpack.c.b16 %v5851, %v5849
        %v5876 = vpack.c.b16 %v5854, %v5852
        %v5877 = vpack.c.b16 %v5855, %v5853
        %v5878 = vpack.c.b16 %v5858, %v5856
        %v5879 = vpack.c.b16 %v5859, %v5857
        %v5880 = vpack.c.b16 %v5860, %v5860
        %v5881 = vpack.c.b16 %v5861, %v5861
        %v5901 = vsel %vm5270, %v5770, 0
        %v5904 = vsel %vm5270, %v5772, 0
        %v5907 = vsel %vm5270, %v5774, 0
        %v5910 = vsel %vm5270, %v5776, 0
        %v5913 = vsel %vm5270, %v5778, 0
        %v5916 = vsel %vm5270, %v5780, 0
        %v5919 = vsel %vm5270, %v5782, 0
        %v5922 = vsel %vm5270, %v5784, 0
        %v5925 = vand.u32 %v5880, %v5298
        %v5928 = vand.u32 %v5881, %v5298
        %5930 = vmatprep.subr.bf16.mxu0 %v5877
        %5931 = vmatpush1.bf16.msra.mxu0 %v5876
        %5932 = vmatprep.subr.bf16.mxu0 %v5875
        %5933 = vmatpush1.bf16.msra.mxu0 %v5874
        %5934 = vmatprep.subr.bf16.mxu0 %v5873
        %5935 = vmatpush1.bf16.msra.mxu0 %v5872
        %5936 = vmatprep.subr.bf16.mxu0 %v5871
        %5937 = vmatpush1.bf16.msra.mxu0 %v5870
        %5938 = vmatprep.subr.bf16.mxu0 %v5869
        %5939 = vmatpush1.bf16.msra.mxu0 %v5868
        %5940 = vmatprep.subr.bf16.mxu0 %v5867
        %5941 = vmatpush1.bf16.msra.mxu0 %v5866
        %5942 = vmatprep.subr.bf16.mxu0 %v5865
        %5943 = vmatpush1.bf16.msra.mxu0 %v5864
        %5944 = vmatprep.subr.bf16.mxu0 %v5863
        %5945 = vmatpush1.bf16.msra.mxu0 %v5862
        %5946 = vmatprep.subr.bf16.mxu0 0
        %5947 = vmatpush2.bf16.msra.mxu0 0
        %5948 = vmatprep.subr.bf16.mxu0 0
        %5949 = vmatpush2.bf16.msra.mxu0 0
        %5950 = vmatprep.subr.bf16.mxu0 0
        %5951 = vmatpush2.bf16.msra.mxu0 0
        %5952 = vmatprep.subr.bf16.mxu0 0
        %5953 = vmatpush2.bf16.msra.mxu0 0
        %5954 = vmatprep.subr.bf16.mxu0 0
        %5955 = vmatpush2.bf16.msra.mxu0 0
        %5956 = vmatprep.subr.bf16.mxu0 0
        %5957 = vmatpush2.bf16.msra.mxu0 0
        %5958 = vmatprep.subr.bf16.mxu0 %v5928
        %5959 = vmatpush2.bf16.msra.mxu0 %v5925
        %5960 = vmatprep.subr.bf16.mxu0 %v5879
        %5961 = vmatpush2.bf16.msra.mxu0 %v5878
        %5962 = vmatprep.mubr.bf16.mxu0 %v5901
        %5963 = vmatmul.mubr.bf16.gmra.mxu0 %v5769
        %v5964 = vpop.f32.mrf.mxu0
        %v5965 = vadd.f32 0.0, %v5964
        %v5966 = vpop.f32.mrf.mxu0
        %v5967 = vadd.f32 0.0, %v5966
        %v5968 = vpop.f32.mrf.mxu0
        %v5969 = vadd.f32 0.0, %v5968
        %v5970 = vpop.f32.mrf.mxu0
        %v5971 = vadd.f32 0.0, %v5970
        %5972 = vmatprep.mubr.bf16.mxu0 %v5904
        %5973 = vmatmul.mubr.bf16.gmra.mxu0 %v5771
        %v5974 = vpop.f32.mrf.mxu0
        %v5975 = vadd.f32 0.0, %v5974
        %v5976 = vpop.f32.mrf.mxu0
        %v5977 = vadd.f32 0.0, %v5976
        %v5978 = vpop.f32.mrf.mxu0
        %v5979 = vadd.f32 0.0, %v5978
        %v5980 = vpop.f32.mrf.mxu0
        %v5981 = vadd.f32 0.0, %v5980
        %5982 = vmatprep.mubr.bf16.mxu0 %v5907
        %5983 = vmatmul.mubr.bf16.gmra.mxu0 %v5773
        %v5984 = vpop.f32.mrf.mxu0
        %v5985 = vadd.f32 0.0, %v5984
        %v5986 = vpop.f32.mrf.mxu0
        %v5987 = vadd.f32 0.0, %v5986
        %v5988 = vpop.f32.mrf.mxu0
        %v5989 = vadd.f32 0.0, %v5988
        %v5990 = vpop.f32.mrf.mxu0
        %v5991 = vadd.f32 0.0, %v5990
        %5992 = vmatprep.mubr.bf16.mxu0 %v5910
        %5993 = vmatmul.mubr.bf16.gmra.mxu0 %v5775
        %v5994 = vpop.f32.mrf.mxu0
        %v5995 = vadd.f32 0.0, %v5994
        %v5996 = vpop.f32.mrf.mxu0
        %v5997 = vadd.f32 0.0, %v5996
        %v5998 = vpop.f32.mrf.mxu0
        %v5999 = vadd.f32 0.0, %v5998
        %v6000 = vpop.f32.mrf.mxu0
        %v6001 = vadd.f32 0.0, %v6000
        %6002 = vmatprep.mubr.bf16.mxu0 %v5913
        %6003 = vmatmul.mubr.bf16.gmra.mxu0 %v5777
        %v6004 = vpop.f32.mrf.mxu0
        %v6005 = vadd.f32 0.0, %v6004
        %v6006 = vpop.f32.mrf.mxu0
        %v6007 = vadd.f32 0.0, %v6006
        %v6008 = vpop.f32.mrf.mxu0
        %v6009 = vadd.f32 0.0, %v6008
        %v6010 = vpop.f32.mrf.mxu0
        %v6011 = vadd.f32 0.0, %v6010
        %6012 = vmatprep.mubr.bf16.mxu0 %v5916
        %6013 = vmatmul.mubr.bf16.gmra.mxu0 %v5779
        %v6014 = vpop.f32.mrf.mxu0
        %v6015 = vadd.f32 0.0, %v6014
        %v6016 = vpop.f32.mrf.mxu0
        %v6017 = vadd.f32 0.0, %v6016
        %v6018 = vpop.f32.mrf.mxu0
        %v6019 = vadd.f32 0.0, %v6018
        %v6020 = vpop.f32.mrf.mxu0
        %v6021 = vadd.f32 0.0, %v6020
        %6022 = vmatprep.mubr.bf16.mxu0 %v5919
        %6023 = vmatmul.mubr.bf16.gmra.mxu0 %v5781
        %v6024 = vpop.f32.mrf.mxu0
        %v6025 = vadd.f32 0.0, %v6024
        %v6026 = vpop.f32.mrf.mxu0
        %v6027 = vadd.f32 0.0, %v6026
        %v6028 = vpop.f32.mrf.mxu0
        %v6029 = vadd.f32 0.0, %v6028
        %v6030 = vpop.f32.mrf.mxu0
        %v6031 = vadd.f32 0.0, %v6030
        %6032 = vmatprep.mubr.bf16.mxu0 %v5922
        %6033 = vmatmul.mubr.bf16.gmra.mxu0 %v5783
        %v6034 = vpop.f32.mrf.mxu0
        %v6035 = vadd.f32 0.0, %v6034
        %v6036 = vpop.f32.mrf.mxu0
        %v6037 = vadd.f32 0.0, %v6036
        %v6038 = vpop.f32.mrf.mxu0
        %v6039 = vadd.f32 0.0, %v6038
        %v6040 = vpop.f32.mrf.mxu0
        %v6041 = vadd.f32 0.0, %v6040
        %6042 = vdwg.mxu0
        %v6043 = vadd.f32 %v5578, %v5965
        %v6044 = vadd.f32 %v5580, %v5967
        %v6045 = vadd.f32 %v5582, %v5969
        %v6046 = vadd.f32 %v5584, %v5971
        %v6047 = vadd.f32 %v5588, %v5975
        %v6048 = vadd.f32 %v5590, %v5977
        %v6049 = vadd.f32 %v5592, %v5979
        %v6050 = vadd.f32 %v5594, %v5981
        %v6051 = vadd.f32 %v5598, %v5985
        %v6052 = vadd.f32 %v5600, %v5987
        %v6053 = vadd.f32 %v5602, %v5989
        %v6054 = vadd.f32 %v5604, %v5991
        %v6055 = vadd.f32 %v5608, %v5995
        %v6056 = vadd.f32 %v5610, %v5997
        %v6057 = vadd.f32 %v5612, %v5999
        %v6058 = vadd.f32 %v5614, %v6001
        %v6059 = vadd.f32 %v5618, %v6005
        %v6060 = vadd.f32 %v5620, %v6007
        %v6061 = vadd.f32 %v5622, %v6009
        %v6062 = vadd.f32 %v5624, %v6011
        %v6063 = vadd.f32 %v5628, %v6015
        %v6064 = vadd.f32 %v5630, %v6017
        %v6065 = vadd.f32 %v5632, %v6019
        %v6066 = vadd.f32 %v5634, %v6021
        %v6067 = vadd.f32 %v5638, %v6025
        %v6068 = vadd.f32 %v5640, %v6027
        %v6069 = vadd.f32 %v5642, %v6029
        %v6070 = vadd.f32 %v5644, %v6031
        %v6071 = vadd.f32 %v5648, %v6035
        %v6072 = vadd.f32 %v5650, %v6037
        %v6073 = vadd.f32 %v5652, %v6039
        %v6074 = vadd.f32 %v5654, %v6041
        %v6075 = vpack.c.bf16 %v4933, %v4931
        %v6076 = vpack.c.bf16 %v4934, %v4932
        %s6077 = scalar_lea.vmem %s4, 456
        %v6078 = vld [vmem:[%s6077] sm:$0xff]
        %v6079 = vld [vmem:[%s6077 + $0x8] sm:$0xff]
        %v6080 = vld [vmem:[%s6077 + $0x10] sm:$0xff]
        %v6081 = vld [vmem:[%s6077 + $0x18] sm:$0xff]
        %v6082 = vld [vmem:[%s6077 + $0x20] sm:$0xff]
        %v6083 = vld [vmem:[%s6077 + $0x28] sm:$0xff]
        %v6084 = vld [vmem:[%s6077 + $0x30] sm:$0xff]
        %v6085 = vld [vmem:[%s6077 + $0x38] sm:$0xff]
        %v6086 = vld [vmem:[%s6077 + $0x40] sm:$0xff]
        %v6087 = vld [vmem:[%s6077 + $0x48] sm:$0xff]
        %v6088 = vld [vmem:[%s6077 + $0x50] sm:$0xff]
        %v6089 = vld [vmem:[%s6077 + $0x58] sm:$0xff]
        %v6090 = vld [vmem:[%s6077 + $0x60] sm:$0xff]
        %v6091 = vld [vmem:[%s6077 + $0x68] sm:$0xff]
        %v6092 = vld [vmem:[%s6077 + $0x70] sm:$0xff]
        %v6093 = vld [vmem:[%s6077 + $0x78] sm:$0xff]
        %v6094 = vld [vmem:[%s6077 + $0x80] sm:$0xff]
        %v6095 = vld [vmem:[%s6077 + $0x88] sm:$0xff]
        %v6096 = vld [vmem:[%s6077 + $0x90] sm:$0x33]
        %v6116 = vunpack.c.l.b16 %v6078
        %v6117 = vunpack.c.h.b16 %v6078
        %v6118 = vunpack.c.l.b16 %v6079
        %v6119 = vunpack.c.h.b16 %v6079
        %v6120 = vunpack.c.l.b16 %v6080
        %v6121 = vunpack.c.h.b16 %v6080
        %v6122 = vunpack.c.l.b16 %v6081
        %v6123 = vunpack.c.h.b16 %v6081
        %v6124 = vunpack.c.l.b16 %v6082
        %v6125 = vunpack.c.h.b16 %v6082
        %v6126 = vunpack.c.l.b16 %v6083
        %v6127 = vunpack.c.h.b16 %v6083
        %v6128 = vunpack.c.l.b16 %v6084
        %v6129 = vunpack.c.h.b16 %v6084
        %v6130 = vunpack.c.l.b16 %v6085
        %v6131 = vunpack.c.h.b16 %v6085
        %v6132 = vunpack.c.l.b16 %v6086
        %v6133 = vunpack.c.h.b16 %v6086
        %v6134 = vunpack.c.l.b16 %v6087
        %v6135 = vunpack.c.h.b16 %v6087
        %v6136 = vunpack.c.l.b16 %v6088
        %v6137 = vunpack.c.h.b16 %v6088
        %v6138 = vunpack.c.l.b16 %v6089
        %v6139 = vunpack.c.h.b16 %v6089
        %v6140 = vunpack.c.l.b16 %v6090
        %v6141 = vunpack.c.h.b16 %v6090
        %v6142 = vunpack.c.l.b16 %v6091
        %v6143 = vunpack.c.h.b16 %v6091
        %v6144 = vunpack.c.l.b16 %v6092
        %v6145 = vunpack.c.h.b16 %v6092
        %v6146 = vunpack.c.l.b16 %v6093
        %v6147 = vunpack.c.h.b16 %v6093
        %v6148 = vunpack.c.l.b16 %v6094
        %v6149 = vunpack.c.h.b16 %v6094
        %v6150 = vunpack.c.l.b16 %v6095
        %v6151 = vunpack.c.h.b16 %v6095
        %v6152 = vunpack.c.l.b16 %v6096
        %v6153 = vunpack.c.h.b16 %v6096
        %v6154 = vpack.c.b16 %v6118, %v6116
        %v6155 = vpack.c.b16 %v6119, %v6117
        %v6156 = vpack.c.b16 %v6122, %v6120
        %v6157 = vpack.c.b16 %v6123, %v6121
        %v6158 = vpack.c.b16 %v6126, %v6124
        %v6159 = vpack.c.b16 %v6127, %v6125
        %v6160 = vpack.c.b16 %v6130, %v6128
        %v6161 = vpack.c.b16 %v6131, %v6129
        %v6162 = vpack.c.b16 %v6134, %v6132
        %v6163 = vpack.c.b16 %v6135, %v6133
        %v6164 = vpack.c.b16 %v6138, %v6136
        %v6165 = vpack.c.b16 %v6139, %v6137
        %v6166 = vpack.c.b16 %v6142, %v6140
        %v6167 = vpack.c.b16 %v6143, %v6141
        %v6168 = vpack.c.b16 %v6146, %v6144
        %v6169 = vpack.c.b16 %v6147, %v6145
        %v6170 = vpack.c.b16 %v6150, %v6148
        %v6171 = vpack.c.b16 %v6151, %v6149
        %v6172 = vpack.c.b16 %v6152, %v6152
        %v6173 = vpack.c.b16 %v6153, %v6153
        %v6193 = vsel %vm5270, %v6076, 0
        %v6196 = vand.u32 %v6172, %v5298
        %v6199 = vand.u32 %v6173, %v5298
        %6201 = vmatprep.subr.bf16.mxu0 %v6169
        %6202 = vmatpush1.bf16.msra.mxu0 %v6168
        %6203 = vmatprep.subr.bf16.mxu0 %v6167
        %6204 = vmatpush1.bf16.msra.mxu0 %v6166
        %6205 = vmatprep.subr.bf16.mxu0 %v6165
        %6206 = vmatpush1.bf16.msra.mxu0 %v6164
        %6207 = vmatprep.subr.bf16.mxu0 %v6163
        %6208 = vmatpush1.bf16.msra.mxu0 %v6162
        %6209 = vmatprep.subr.bf16.mxu0 %v6161
        %6210 = vmatpush1.bf16.msra.mxu0 %v6160
        %6211 = vmatprep.subr.bf16.mxu0 %v6159
        %6212 = vmatpush1.bf16.msra.mxu0 %v6158
        %6213 = vmatprep.subr.bf16.mxu0 %v6157
        %6214 = vmatpush1.bf16.msra.mxu0 %v6156
        %6215 = vmatprep.subr.bf16.mxu0 %v6155
        %6216 = vmatpush1.bf16.msra.mxu0 %v6154
        %6217 = vmatprep.subr.bf16.mxu0 0
        %6218 = vmatpush2.bf16.msra.mxu0 0
        %6219 = vmatprep.subr.bf16.mxu0 0
        %6220 = vmatpush2.bf16.msra.mxu0 0
        %6221 = vmatprep.subr.bf16.mxu0 0
        %6222 = vmatpush2.bf16.msra.mxu0 0
        %6223 = vmatprep.subr.bf16.mxu0 0
        %6224 = vmatpush2.bf16.msra.mxu0 0
        %6225 = vmatprep.subr.bf16.mxu0 0
        %6226 = vmatpush2.bf16.msra.mxu0 0
        %6227 = vmatprep.subr.bf16.mxu0 0
        %6228 = vmatpush2.bf16.msra.mxu0 0
        %6229 = vmatprep.subr.bf16.mxu0 %v6199
        %6230 = vmatpush2.bf16.msra.mxu0 %v6196
        %6231 = vmatprep.subr.bf16.mxu0 %v6171
        %6232 = vmatpush2.bf16.msra.mxu0 %v6170
        %6233 = vmatprep.mubr.bf16.mxu0 %v5517
        %6234 = vmatmul.mubr.bf16.gmra.mxu0 %v4945
        %v6235 = vpop.f32.mrf.mxu0
        %v6236 = vadd.f32 0.0, %v6235
        %v6237 = vpop.f32.mrf.mxu0
        %v6238 = vadd.f32 0.0, %v6237
        %v6239 = vpop.f32.mrf.mxu0
        %v6240 = vadd.f32 0.0, %v6239
        %v6241 = vpop.f32.mrf.mxu0
        %v6242 = vadd.f32 0.0, %v6241
        %6243 = vmatprep.mubr.bf16.mxu0 %v5520
        %6244 = vmatmul.mubr.bf16.gmra.mxu0 %v4947
        %v6245 = vpop.f32.mrf.mxu0
        %v6246 = vadd.f32 0.0, %v6245
        %v6247 = vpop.f32.mrf.mxu0
        %v6248 = vadd.f32 0.0, %v6247
        %v6249 = vpop.f32.mrf.mxu0
        %v6250 = vadd.f32 0.0, %v6249
        %v6251 = vpop.f32.mrf.mxu0
        %v6252 = vadd.f32 0.0, %v6251
        %6253 = vmatprep.mubr.bf16.mxu0 %v5523
        %6254 = vmatmul.mubr.bf16.gmra.mxu0 %v4949
        %v6255 = vpop.f32.mrf.mxu0
        %v6256 = vadd.f32 0.0, %v6255
        %v6257 = vpop.f32.mrf.mxu0
        %v6258 = vadd.f32 0.0, %v6257
        %v6259 = vpop.f32.mrf.mxu0
        %v6260 = vadd.f32 0.0, %v6259
        %v6261 = vpop.f32.mrf.mxu0
        %v6262 = vadd.f32 0.0, %v6261
        %6263 = vmatprep.mubr.bf16.mxu0 %v5526
        %6264 = vmatmul.mubr.bf16.gmra.mxu0 %v4951
        %v6265 = vpop.f32.mrf.mxu0
        %v6266 = vadd.f32 0.0, %v6265
        %v6267 = vpop.f32.mrf.mxu0
        %v6268 = vadd.f32 0.0, %v6267
        %v6269 = vpop.f32.mrf.mxu0
        %v6270 = vadd.f32 0.0, %v6269
        %v6271 = vpop.f32.mrf.mxu0
        %v6272 = vadd.f32 0.0, %v6271
        %6273 = vmatprep.mubr.bf16.mxu0 %v5529
        %6274 = vmatmul.mubr.bf16.gmra.mxu0 %v4953
        %v6275 = vpop.f32.mrf.mxu0
        %v6276 = vadd.f32 0.0, %v6275
        %v6277 = vpop.f32.mrf.mxu0
        %v6278 = vadd.f32 0.0, %v6277
        %v6279 = vpop.f32.mrf.mxu0
        %v6280 = vadd.f32 0.0, %v6279
        %v6281 = vpop.f32.mrf.mxu0
        %v6282 = vadd.f32 0.0, %v6281
        %6283 = vmatprep.mubr.bf16.mxu0 %v5532
        %6284 = vmatmul.mubr.bf16.gmra.mxu0 %v4955
        %v6285 = vpop.f32.mrf.mxu0
        %v6286 = vadd.f32 0.0, %v6285
        %v6287 = vpop.f32.mrf.mxu0
        %v6288 = vadd.f32 0.0, %v6287
        %v6289 = vpop.f32.mrf.mxu0
        %v6290 = vadd.f32 0.0, %v6289
        %v6291 = vpop.f32.mrf.mxu0
        %v6292 = vadd.f32 0.0, %v6291
        %6293 = vmatprep.mubr.bf16.mxu0 %v5535
        %6294 = vmatmul.mubr.bf16.gmra.mxu0 %v4957
        %v6295 = vpop.f32.mrf.mxu0
        %v6296 = vadd.f32 0.0, %v6295
        %v6297 = vpop.f32.mrf.mxu0
        %v6298 = vadd.f32 0.0, %v6297
        %v6299 = vpop.f32.mrf.mxu0
        %v6300 = vadd.f32 0.0, %v6299
        %v6301 = vpop.f32.mrf.mxu0
        %v6302 = vadd.f32 0.0, %v6301
        %6303 = vmatprep.mubr.bf16.mxu0 %v6193
        %6304 = vmatmul.mubr.bf16.gmra.mxu0 %v6075
        %v6305 = vpop.f32.mrf.mxu0
        %v6306 = vadd.f32 0.0, %v6305
        %v6307 = vpop.f32.mrf.mxu0
        %v6308 = vadd.f32 0.0, %v6307
        %v6309 = vpop.f32.mrf.mxu0
        %v6310 = vadd.f32 0.0, %v6309
        %v6311 = vpop.f32.mrf.mxu0
        %v6312 = vadd.f32 0.0, %v6311
        %6313 = vdwg.mxu0
        %v6314 = vadd.f32 %v6043, %v6236
        %v6315 = vadd.f32 %v6044, %v6238
        %v6316 = vadd.f32 %v6045, %v6240
        %v6317 = vadd.f32 %v6046, %v6242
        %v6318 = vadd.f32 %v6047, %v6246
        %v6319 = vadd.f32 %v6048, %v6248
        %v6320 = vadd.f32 %v6049, %v6250
        %v6321 = vadd.f32 %v6050, %v6252
        %v6322 = vadd.f32 %v6051, %v6256
        %v6323 = vadd.f32 %v6052, %v6258
        %v6324 = vadd.f32 %v6053, %v6260
        %v6325 = vadd.f32 %v6054, %v6262
        %v6326 = vadd.f32 %v6055, %v6266
        %v6327 = vadd.f32 %v6056, %v6268
        %v6328 = vadd.f32 %v6057, %v6270
        %v6329 = vadd.f32 %v6058, %v6272
        %v6330 = vadd.f32 %v6059, %v6276
        %v6331 = vadd.f32 %v6060, %v6278
        %v6332 = vadd.f32 %v6061, %v6280
        %v6333 = vadd.f32 %v6062, %v6282
        %v6334 = vadd.f32 %v6063, %v6286
        %v6335 = vadd.f32 %v6064, %v6288
        %v6336 = vadd.f32 %v6065, %v6290
        %v6337 = vadd.f32 %v6066, %v6292
        %v6338 = vadd.f32 %v6067, %v6296
        %v6339 = vadd.f32 %v6068, %v6298
        %v6340 = vadd.f32 %v6069, %v6300
        %v6341 = vadd.f32 %v6070, %v6302
        %v6342 = vadd.f32 %v6071, %v6306
        %v6343 = vadd.f32 %v6072, %v6308
        %v6344 = vadd.f32 %v6073, %v6310
        %v6345 = vadd.f32 %v6074, %v6312
        %v6352 = vrot.slane %v4931, 1
        %v6353 = vrot.slane %v4933, 1
        %v6354 = vsel %vm5026, %v6352, %v6353
        %v6355 = vrot.slane %v4932, 1
        %v6356 = vrot.slane %v4934, 1
        %v6357 = vsel %vm5026, %v6355, %v6356
        %v6358 = vrot.slane %v4935, 1
        %v6359 = vsel %vm5026, %v6353, %v6358
        %v6360 = vrot.slane %v4936, 1
        %v6361 = vsel %vm5026, %v6356, %v6360
        %v6366 = vpack.c.bf16 %v6359, %v6354
        %v6367 = vpack.c.bf16 %v6361, %v6357
        %s6368 = scalar_lea.vmem %s4, 608
        %v6369 = vld [vmem:[%s6368] sm:$0xff]
        %v6370 = vld [vmem:[%s6368 + $0x8] sm:$0xff]
        %v6371 = vld [vmem:[%s6368 + $0x10] sm:$0xff]
        %v6372 = vld [vmem:[%s6368 + $0x18] sm:$0xff]
        %v6373 = vld [vmem:[%s6368 + $0x20] sm:$0xff]
        %v6374 = vld [vmem:[%s6368 + $0x28] sm:$0xff]
        %v6375 = vld [vmem:[%s6368 + $0x30] sm:$0xff]
        %v6376 = vld [vmem:[%s6368 + $0x38] sm:$0xff]
        %v6377 = vld [vmem:[%s6368 + $0x40] sm:$0xff]
        %v6378 = vld [vmem:[%s6368 + $0x48] sm:$0xff]
        %v6379 = vld [vmem:[%s6368 + $0x50] sm:$0xff]
        %v6380 = vld [vmem:[%s6368 + $0x58] sm:$0xff]
        %v6381 = vld [vmem:[%s6368 + $0x60] sm:$0xff]
        %v6382 = vld [vmem:[%s6368 + $0x68] sm:$0xff]
        %v6383 = vld [vmem:[%s6368 + $0x70] sm:$0xff]
        %v6384 = vld [vmem:[%s6368 + $0x78] sm:$0xff]
        %v6385 = vld [vmem:[%s6368 + $0x80] sm:$0xff]
        %v6386 = vld [vmem:[%s6368 + $0x88] sm:$0xff]
        %v6387 = vld [vmem:[%s6368 + $0x90] sm:$0x33]
        %v6407 = vunpack.c.l.b16 %v6369
        %v6408 = vunpack.c.h.b16 %v6369
        %v6409 = vunpack.c.l.b16 %v6370
        %v6410 = vunpack.c.h.b16 %v6370
        %v6411 = vunpack.c.l.b16 %v6371
        %v6412 = vunpack.c.h.b16 %v6371
        %v6413 = vunpack.c.l.b16 %v6372
        %v6414 = vunpack.c.h.b16 %v6372
        %v6415 = vunpack.c.l.b16 %v6373
        %v6416 = vunpack.c.h.b16 %v6373
        %v6417 = vunpack.c.l.b16 %v6374
        %v6418 = vunpack.c.h.b16 %v6374
        %v6419 = vunpack.c.l.b16 %v6375
        %v6420 = vunpack.c.h.b16 %v6375
        %v6421 = vunpack.c.l.b16 %v6376
        %v6422 = vunpack.c.h.b16 %v6376
        %v6423 = vunpack.c.l.b16 %v6377
        %v6424 = vunpack.c.h.b16 %v6377
        %v6425 = vunpack.c.l.b16 %v6378
        %v6426 = vunpack.c.h.b16 %v6378
        %v6427 = vunpack.c.l.b16 %v6379
        %v6428 = vunpack.c.h.b16 %v6379
        %v6429 = vunpack.c.l.b16 %v6380
        %v6430 = vunpack.c.h.b16 %v6380
        %v6431 = vunpack.c.l.b16 %v6381
        %v6432 = vunpack.c.h.b16 %v6381
        %v6433 = vunpack.c.l.b16 %v6382
        %v6434 = vunpack.c.h.b16 %v6382
        %v6435 = vunpack.c.l.b16 %v6383
        %v6436 = vunpack.c.h.b16 %v6383
        %v6437 = vunpack.c.l.b16 %v6384
        %v6438 = vunpack.c.h.b16 %v6384
        %v6439 = vunpack.c.l.b16 %v6385
        %v6440 = vunpack.c.h.b16 %v6385
        %v6441 = vunpack.c.l.b16 %v6386
        %v6442 = vunpack.c.h.b16 %v6386
        %v6443 = vunpack.c.l.b16 %v6387
        %v6444 = vunpack.c.h.b16 %v6387
        %v6445 = vpack.c.b16 %v6409, %v6407
        %v6446 = vpack.c.b16 %v6410, %v6408
        %v6447 = vpack.c.b16 %v6413, %v6411
        %v6448 = vpack.c.b16 %v6414, %v6412
        %v6449 = vpack.c.b16 %v6417, %v6415
        %v6450 = vpack.c.b16 %v6418, %v6416
        %v6451 = vpack.c.b16 %v6421, %v6419
        %v6452 = vpack.c.b16 %v6422, %v6420
        %v6453 = vpack.c.b16 %v6425, %v6423
        %v6454 = vpack.c.b16 %v6426, %v6424
        %v6455 = vpack.c.b16 %v6429, %v6427
        %v6456 = vpack.c.b16 %v6430, %v6428
        %v6457 = vpack.c.b16 %v6433, %v6431
        %v6458 = vpack.c.b16 %v6434, %v6432
        %v6459 = vpack.c.b16 %v6437, %v6435
        %v6460 = vpack.c.b16 %v6438, %v6436
        %v6461 = vpack.c.b16 %v6441, %v6439
        %v6462 = vpack.c.b16 %v6442, %v6440
        %v6463 = vpack.c.b16 %v6443, %v6443
        %v6464 = vpack.c.b16 %v6444, %v6444
        %v6484 = vsel %vm5270, %v6367, 0
        %v6487 = vand.u32 %v6463, %v5298
        %v6490 = vand.u32 %v6464, %v5298
        %6492 = vmatprep.subr.bf16.mxu0 %v6460
        %6493 = vmatpush1.bf16.msra.mxu0 %v6459
        %6494 = vmatprep.subr.bf16.mxu0 %v6458
        %6495 = vmatpush1.bf16.msra.mxu0 %v6457
        %6496 = vmatprep.subr.bf16.mxu0 %v6456
        %6497 = vmatpush1.bf16.msra.mxu0 %v6455
        %6498 = vmatprep.subr.bf16.mxu0 %v6454
        %6499 = vmatpush1.bf16.msra.mxu0 %v6453
        %6500 = vmatprep.subr.bf16.mxu0 %v6452
        %6501 = vmatpush1.bf16.msra.mxu0 %v6451
        %6502 = vmatprep.subr.bf16.mxu0 %v6450
        %6503 = vmatpush1.bf16.msra.mxu0 %v6449
        %6504 = vmatprep.subr.bf16.mxu0 %v6448
        %6505 = vmatpush1.bf16.msra.mxu0 %v6447
        %6506 = vmatprep.subr.bf16.mxu0 %v6446
        %6507 = vmatpush1.bf16.msra.mxu0 %v6445
        %6508 = vmatprep.subr.bf16.mxu0 0
        %6509 = vmatpush2.bf16.msra.mxu0 0
        %6510 = vmatprep.subr.bf16.mxu0 0
        %6511 = vmatpush2.bf16.msra.mxu0 0
        %6512 = vmatprep.subr.bf16.mxu0 0
        %6513 = vmatpush2.bf16.msra.mxu0 0
        %6514 = vmatprep.subr.bf16.mxu0 0
        %6515 = vmatpush2.bf16.msra.mxu0 0
        %6516 = vmatprep.subr.bf16.mxu0 0
        %6517 = vmatpush2.bf16.msra.mxu0 0
        %6518 = vmatprep.subr.bf16.mxu0 0
        %6519 = vmatpush2.bf16.msra.mxu0 0
        %6520 = vmatprep.subr.bf16.mxu0 %v6490
        %6521 = vmatpush2.bf16.msra.mxu0 %v6487
        %6522 = vmatprep.subr.bf16.mxu0 %v6462
        %6523 = vmatpush2.bf16.msra.mxu0 %v6461
        %6524 = vmatprep.mubr.bf16.mxu0 %v5275
        %6525 = vmatmul.mubr.bf16.gmra.mxu0 %v5141
        %v6526 = vpop.f32.mrf.mxu0
        %v6527 = vadd.f32 0.0, %v6526
        %v6528 = vpop.f32.mrf.mxu0
        %v6529 = vadd.f32 0.0, %v6528
        %v6530 = vpop.f32.mrf.mxu0
        %v6531 = vadd.f32 0.0, %v6530
        %v6532 = vpop.f32.mrf.mxu0
        %v6533 = vadd.f32 0.0, %v6532
        %6534 = vmatprep.mubr.bf16.mxu0 %v5278
        %6535 = vmatmul.mubr.bf16.gmra.mxu0 %v5143
        %v6536 = vpop.f32.mrf.mxu0
        %v6537 = vadd.f32 0.0, %v6536
        %v6538 = vpop.f32.mrf.mxu0
        %v6539 = vadd.f32 0.0, %v6538
        %v6540 = vpop.f32.mrf.mxu0
        %v6541 = vadd.f32 0.0, %v6540
        %v6542 = vpop.f32.mrf.mxu0
        %v6543 = vadd.f32 0.0, %v6542
        %6544 = vmatprep.mubr.bf16.mxu0 %v5281
        %6545 = vmatmul.mubr.bf16.gmra.mxu0 %v5145
        %v6546 = vpop.f32.mrf.mxu0
        %v6547 = vadd.f32 0.0, %v6546
        %v6548 = vpop.f32.mrf.mxu0
        %v6549 = vadd.f32 0.0, %v6548
        %v6550 = vpop.f32.mrf.mxu0
        %v6551 = vadd.f32 0.0, %v6550
        %v6552 = vpop.f32.mrf.mxu0
        %v6553 = vadd.f32 0.0, %v6552
        %6554 = vmatprep.mubr.bf16.mxu0 %v5284
        %6555 = vmatmul.mubr.bf16.gmra.mxu0 %v5147
        %v6556 = vpop.f32.mrf.mxu0
        %v6557 = vadd.f32 0.0, %v6556
        %v6558 = vpop.f32.mrf.mxu0
        %v6559 = vadd.f32 0.0, %v6558
        %v6560 = vpop.f32.mrf.mxu0
        %v6561 = vadd.f32 0.0, %v6560
        %v6562 = vpop.f32.mrf.mxu0
        %v6563 = vadd.f32 0.0, %v6562
        %6564 = vmatprep.mubr.bf16.mxu0 %v5287
        %6565 = vmatmul.mubr.bf16.gmra.mxu0 %v5149
        %v6566 = vpop.f32.mrf.mxu0
        %v6567 = vadd.f32 0.0, %v6566
        %v6568 = vpop.f32.mrf.mxu0
        %v6569 = vadd.f32 0.0, %v6568
        %v6570 = vpop.f32.mrf.mxu0
        %v6571 = vadd.f32 0.0, %v6570
        %v6572 = vpop.f32.mrf.mxu0
        %v6573 = vadd.f32 0.0, %v6572
        %6574 = vmatprep.mubr.bf16.mxu0 %v5290
        %6575 = vmatmul.mubr.bf16.gmra.mxu0 %v5151
        %v6576 = vpop.f32.mrf.mxu0
        %v6577 = vadd.f32 0.0, %v6576
        %v6578 = vpop.f32.mrf.mxu0
        %v6579 = vadd.f32 0.0, %v6578
        %v6580 = vpop.f32.mrf.mxu0
        %v6581 = vadd.f32 0.0, %v6580
        %v6582 = vpop.f32.mrf.mxu0
        %v6583 = vadd.f32 0.0, %v6582
        %6584 = vmatprep.mubr.bf16.mxu0 %v5293
        %6585 = vmatmul.mubr.bf16.gmra.mxu0 %v5153
        %v6586 = vpop.f32.mrf.mxu0
        %v6587 = vadd.f32 0.0, %v6586
        %v6588 = vpop.f32.mrf.mxu0
        %v6589 = vadd.f32 0.0, %v6588
        %v6590 = vpop.f32.mrf.mxu0
        %v6591 = vadd.f32 0.0, %v6590
        %v6592 = vpop.f32.mrf.mxu0
        %v6593 = vadd.f32 0.0, %v6592
        %6594 = vmatprep.mubr.bf16.mxu0 %v6484
        %6595 = vmatmul.mubr.bf16.gmra.mxu0 %v6366
        %v6596 = vpop.f32.mrf.mxu0
        %v6597 = vadd.f32 0.0, %v6596
        %v6598 = vpop.f32.mrf.mxu0
        %v6599 = vadd.f32 0.0, %v6598
        %v6600 = vpop.f32.mrf.mxu0
        %v6601 = vadd.f32 0.0, %v6600
        %v6602 = vpop.f32.mrf.mxu0
        %v6603 = vadd.f32 0.0, %v6602
        %6604 = vdwg.mxu0
        %v6605 = vadd.f32 %v6314, %v6527
        %v6606 = vadd.f32 %v6315, %v6529
        %v6607 = vadd.f32 %v6316, %v6531
        %v6608 = vadd.f32 %v6317, %v6533
        %v6609 = vadd.f32 %v6318, %v6537
        %v6610 = vadd.f32 %v6319, %v6539
        %v6611 = vadd.f32 %v6320, %v6541
        %v6612 = vadd.f32 %v6321, %v6543
        %v6613 = vadd.f32 %v6322, %v6547
        %v6614 = vadd.f32 %v6323, %v6549
        %v6615 = vadd.f32 %v6324, %v6551
        %v6616 = vadd.f32 %v6325, %v6553
        %v6617 = vadd.f32 %v6326, %v6557
        %v6618 = vadd.f32 %v6327, %v6559
        %v6619 = vadd.f32 %v6328, %v6561
        %v6620 = vadd.f32 %v6329, %v6563
        %v6621 = vadd.f32 %v6330, %v6567
        %v6622 = vadd.f32 %v6331, %v6569
        %v6623 = vadd.f32 %v6332, %v6571
        %v6624 = vadd.f32 %v6333, %v6573
        %v6625 = vadd.f32 %v6334, %v6577
        %v6626 = vadd.f32 %v6335, %v6579
        %v6627 = vadd.f32 %v6336, %v6581
        %v6628 = vadd.f32 %v6337, %v6583
        %v6629 = vadd.f32 %v6338, %v6587
        %v6630 = vadd.f32 %v6339, %v6589
        %v6631 = vadd.f32 %v6340, %v6591
        %v6632 = vadd.f32 %v6341, %v6593
        %v6633 = vadd.f32 %v6342, %v6597
        %v6634 = vadd.f32 %v6343, %v6599
        %v6635 = vadd.f32 %v6344, %v6601
        %v6636 = vadd.f32 %v6345, %v6603
        %v6637 = vrot.slane %v4931, 2
        %v6638 = vrot.slane %v4933, 2
        %v6639 = vsel %vm5656, %v6637, %v6638
        %v6640 = vrot.slane %v4932, 2
        %v6641 = vrot.slane %v4934, 2
        %v6642 = vsel %vm5656, %v6640, %v6641
        %v6643 = vrot.slane %v4935, 2
        %v6644 = vsel %vm5656, %v6638, %v6643
        %v6645 = vrot.slane %v4936, 2
        %v6646 = vsel %vm5656, %v6641, %v6645
        %v6651 = vpack.c.bf16 %v6644, %v6639
        %v6652 = vpack.c.bf16 %v6646, %v6642
        %s6653 = scalar_lea.vmem %s4, 760
        %v6654 = vld [vmem:[%s6653] sm:$0xff]
        %v6655 = vld [vmem:[%s6653 + $0x8] sm:$0xff]
        %v6656 = vld [vmem:[%s6653 + $0x10] sm:$0xff]
        %v6657 = vld [vmem:[%s6653 + $0x18] sm:$0xff]
        %v6658 = vld [vmem:[%s6653 + $0x20] sm:$0xff]
        %v6659 = vld [vmem:[%s6653 + $0x28] sm:$0xff]
        %v6660 = vld [vmem:[%s6653 + $0x30] sm:$0xff]
        %v6661 = vld [vmem:[%s6653 + $0x38] sm:$0xff]
        %v6662 = vld [vmem:[%s6653 + $0x40] sm:$0xff]
        %v6663 = vld [vmem:[%s6653 + $0x48] sm:$0xff]
        %v6664 = vld [vmem:[%s6653 + $0x50] sm:$0xff]
        %v6665 = vld [vmem:[%s6653 + $0x58] sm:$0xff]
        %v6666 = vld [vmem:[%s6653 + $0x60] sm:$0xff]
        %v6667 = vld [vmem:[%s6653 + $0x68] sm:$0xff]
        %v6668 = vld [vmem:[%s6653 + $0x70] sm:$0xff]
        %v6669 = vld [vmem:[%s6653 + $0x78] sm:$0xff]
        %v6670 = vld [vmem:[%s6653 + $0x80] sm:$0xff]
        %v6671 = vld [vmem:[%s6653 + $0x88] sm:$0xff]
        %v6672 = vld [vmem:[%s6653 + $0x90] sm:$0x33]
        %v6692 = vunpack.c.l.b16 %v6654
        %v6693 = vunpack.c.h.b16 %v6654
        %v6694 = vunpack.c.l.b16 %v6655
        %v6695 = vunpack.c.h.b16 %v6655
        %v6696 = vunpack.c.l.b16 %v6656
        %v6697 = vunpack.c.h.b16 %v6656
        %v6698 = vunpack.c.l.b16 %v6657
        %v6699 = vunpack.c.h.b16 %v6657
        %v6700 = vunpack.c.l.b16 %v6658
        %v6701 = vunpack.c.h.b16 %v6658
        %v6702 = vunpack.c.l.b16 %v6659
        %v6703 = vunpack.c.h.b16 %v6659
        %v6704 = vunpack.c.l.b16 %v6660
        %v6705 = vunpack.c.h.b16 %v6660
        %v6706 = vunpack.c.l.b16 %v6661
        %v6707 = vunpack.c.h.b16 %v6661
        %v6708 = vunpack.c.l.b16 %v6662
        %v6709 = vunpack.c.h.b16 %v6662
        %v6710 = vunpack.c.l.b16 %v6663
        %v6711 = vunpack.c.h.b16 %v6663
        %v6712 = vunpack.c.l.b16 %v6664
        %v6713 = vunpack.c.h.b16 %v6664
        %v6714 = vunpack.c.l.b16 %v6665
        %v6715 = vunpack.c.h.b16 %v6665
        %v6716 = vunpack.c.l.b16 %v6666
        %v6717 = vunpack.c.h.b16 %v6666
        %v6718 = vunpack.c.l.b16 %v6667
        %v6719 = vunpack.c.h.b16 %v6667
        %v6720 = vunpack.c.l.b16 %v6668
        %v6721 = vunpack.c.h.b16 %v6668
        %v6722 = vunpack.c.l.b16 %v6669
        %v6723 = vunpack.c.h.b16 %v6669
        %v6724 = vunpack.c.l.b16 %v6670
        %v6725 = vunpack.c.h.b16 %v6670
        %v6726 = vunpack.c.l.b16 %v6671
        %v6727 = vunpack.c.h.b16 %v6671
        %v6728 = vunpack.c.l.b16 %v6672
        %v6729 = vunpack.c.h.b16 %v6672
        %v6730 = vpack.c.b16 %v6694, %v6692
        %v6731 = vpack.c.b16 %v6695, %v6693
        %v6732 = vpack.c.b16 %v6698, %v6696
        %v6733 = vpack.c.b16 %v6699, %v6697
        %v6734 = vpack.c.b16 %v6702, %v6700
        %v6735 = vpack.c.b16 %v6703, %v6701
        %v6736 = vpack.c.b16 %v6706, %v6704
        %v6737 = vpack.c.b16 %v6707, %v6705
        %v6738 = vpack.c.b16 %v6710, %v6708
        %v6739 = vpack.c.b16 %v6711, %v6709
        %v6740 = vpack.c.b16 %v6714, %v6712
        %v6741 = vpack.c.b16 %v6715, %v6713
        %v6742 = vpack.c.b16 %v6718, %v6716
        %v6743 = vpack.c.b16 %v6719, %v6717
        %v6744 = vpack.c.b16 %v6722, %v6720
        %v6745 = vpack.c.b16 %v6723, %v6721
        %v6746 = vpack.c.b16 %v6726, %v6724
        %v6747 = vpack.c.b16 %v6727, %v6725
        %v6748 = vpack.c.b16 %v6728, %v6728
        %v6749 = vpack.c.b16 %v6729, %v6729
        %v6769 = vsel %vm5270, %v6652, 0
        %v6772 = vand.u32 %v6748, %v5298
        %v6775 = vand.u32 %v6749, %v5298
        %6777 = vmatprep.subr.bf16.mxu0 %v6745
        %6778 = vmatpush1.bf16.msra.mxu0 %v6744
        %6779 = vmatprep.subr.bf16.mxu0 %v6743
        %6780 = vmatpush1.bf16.msra.mxu0 %v6742
        %6781 = vmatprep.subr.bf16.mxu0 %v6741
        %6782 = vmatpush1.bf16.msra.mxu0 %v6740
        %6783 = vmatprep.subr.bf16.mxu0 %v6739
        %6784 = vmatpush1.bf16.msra.mxu0 %v6738
        %6785 = vmatprep.subr.bf16.mxu0 %v6737
        %6786 = vmatpush1.bf16.msra.mxu0 %v6736
        %6787 = vmatprep.subr.bf16.mxu0 %v6735
        %6788 = vmatpush1.bf16.msra.mxu0 %v6734
        %6789 = vmatprep.subr.bf16.mxu0 %v6733
        %6790 = vmatpush1.bf16.msra.mxu0 %v6732
        %6791 = vmatprep.subr.bf16.mxu0 %v6731
        %6792 = vmatpush1.bf16.msra.mxu0 %v6730
        %6793 = vmatprep.subr.bf16.mxu0 0
        %6794 = vmatpush2.bf16.msra.mxu0 0
        %6795 = vmatprep.subr.bf16.mxu0 0
        %6796 = vmatpush2.bf16.msra.mxu0 0
        %6797 = vmatprep.subr.bf16.mxu0 0
        %6798 = vmatpush2.bf16.msra.mxu0 0
        %6799 = vmatprep.subr.bf16.mxu0 0
        %6800 = vmatpush2.bf16.msra.mxu0 0
        %6801 = vmatprep.subr.bf16.mxu0 0
        %6802 = vmatpush2.bf16.msra.mxu0 0
        %6803 = vmatprep.subr.bf16.mxu0 0
        %6804 = vmatpush2.bf16.msra.mxu0 0
        %6805 = vmatprep.subr.bf16.mxu0 %v6775
        %6806 = vmatpush2.bf16.msra.mxu0 %v6772
        %6807 = vmatprep.subr.bf16.mxu0 %v6747
        %6808 = vmatpush2.bf16.msra.mxu0 %v6746
        %6809 = vmatprep.mubr.bf16.mxu0 %v5904
        %6810 = vmatmul.mubr.bf16.gmra.mxu0 %v5771
        %v6811 = vpop.f32.mrf.mxu0
        %v6812 = vadd.f32 0.0, %v6811
        %v6813 = vpop.f32.mrf.mxu0
        %v6814 = vadd.f32 0.0, %v6813
        %v6815 = vpop.f32.mrf.mxu0
        %v6816 = vadd.f32 0.0, %v6815
        %v6817 = vpop.f32.mrf.mxu0
        %v6818 = vadd.f32 0.0, %v6817
        %6819 = vmatprep.mubr.bf16.mxu0 %v5907
        %6820 = vmatmul.mubr.bf16.gmra.mxu0 %v5773
        %v6821 = vpop.f32.mrf.mxu0
        %v6822 = vadd.f32 0.0, %v6821
        %v6823 = vpop.f32.mrf.mxu0
        %v6824 = vadd.f32 0.0, %v6823
        %v6825 = vpop.f32.mrf.mxu0
        %v6826 = vadd.f32 0.0, %v6825
        %v6827 = vpop.f32.mrf.mxu0
        %v6828 = vadd.f32 0.0, %v6827
        %6829 = vmatprep.mubr.bf16.mxu0 %v5910
        %6830 = vmatmul.mubr.bf16.gmra.mxu0 %v5775
        %v6831 = vpop.f32.mrf.mxu0
        %v6832 = vadd.f32 0.0, %v6831
        %v6833 = vpop.f32.mrf.mxu0
        %v6834 = vadd.f32 0.0, %v6833
        %v6835 = vpop.f32.mrf.mxu0
        %v6836 = vadd.f32 0.0, %v6835
        %v6837 = vpop.f32.mrf.mxu0
        %v6838 = vadd.f32 0.0, %v6837
        %6839 = vmatprep.mubr.bf16.mxu0 %v5913
        %6840 = vmatmul.mubr.bf16.gmra.mxu0 %v5777
        %v6841 = vpop.f32.mrf.mxu0
        %v6842 = vadd.f32 0.0, %v6841
        %v6843 = vpop.f32.mrf.mxu0
        %v6844 = vadd.f32 0.0, %v6843
        %v6845 = vpop.f32.mrf.mxu0
        %v6846 = vadd.f32 0.0, %v6845
        %v6847 = vpop.f32.mrf.mxu0
        %v6848 = vadd.f32 0.0, %v6847
        %6849 = vmatprep.mubr.bf16.mxu0 %v5916
        %6850 = vmatmul.mubr.bf16.gmra.mxu0 %v5779
        %v6851 = vpop.f32.mrf.mxu0
        %v6852 = vadd.f32 0.0, %v6851
        %v6853 = vpop.f32.mrf.mxu0
        %v6854 = vadd.f32 0.0, %v6853
        %v6855 = vpop.f32.mrf.mxu0
        %v6856 = vadd.f32 0.0, %v6855
        %v6857 = vpop.f32.mrf.mxu0
        %v6858 = vadd.f32 0.0, %v6857
        %6859 = vmatprep.mubr.bf16.mxu0 %v5919
        %6860 = vmatmul.mubr.bf16.gmra.mxu0 %v5781
        %v6861 = vpop.f32.mrf.mxu0
        %v6862 = vadd.f32 0.0, %v6861
        %v6863 = vpop.f32.mrf.mxu0
        %v6864 = vadd.f32 0.0, %v6863
        %v6865 = vpop.f32.mrf.mxu0
        %v6866 = vadd.f32 0.0, %v6865
        %v6867 = vpop.f32.mrf.mxu0
        %v6868 = vadd.f32 0.0, %v6867
        %6869 = vmatprep.mubr.bf16.mxu0 %v5922
        %6870 = vmatmul.mubr.bf16.gmra.mxu0 %v5783
        %v6871 = vpop.f32.mrf.mxu0
        %v6872 = vadd.f32 0.0, %v6871
        %v6873 = vpop.f32.mrf.mxu0
        %v6874 = vadd.f32 0.0, %v6873
        %v6875 = vpop.f32.mrf.mxu0
        %v6876 = vadd.f32 0.0, %v6875
        %v6877 = vpop.f32.mrf.mxu0
        %v6878 = vadd.f32 0.0, %v6877
        %6879 = vmatprep.mubr.bf16.mxu0 %v6769
        %6880 = vmatmul.mubr.bf16.gmra.mxu0 %v6651
        %v6881 = vpop.f32.mrf.mxu0
        %v6882 = vadd.f32 0.0, %v6881
        %v6883 = vpop.f32.mrf.mxu0
        %v6884 = vadd.f32 0.0, %v6883
        %v6885 = vpop.f32.mrf.mxu0
        %v6886 = vadd.f32 0.0, %v6885
        %v6887 = vpop.f32.mrf.mxu0
        %v6888 = vadd.f32 0.0, %v6887
        %6889 = vdwg.mxu0
        %v6890 = vadd.f32 %v6605, %v6812
        %v6891 = vadd.f32 %v6606, %v6814
        %v6892 = vadd.f32 %v6607, %v6816
        %v6893 = vadd.f32 %v6608, %v6818
        %v6894 = vadd.f32 %v6609, %v6822
        %v6895 = vadd.f32 %v6610, %v6824
        %v6896 = vadd.f32 %v6611, %v6826
        %v6897 = vadd.f32 %v6612, %v6828
        %v6898 = vadd.f32 %v6613, %v6832
        %v6899 = vadd.f32 %v6614, %v6834
        %v6900 = vadd.f32 %v6615, %v6836
        %v6901 = vadd.f32 %v6616, %v6838
        %v6902 = vadd.f32 %v6617, %v6842
        %v6903 = vadd.f32 %v6618, %v6844
        %v6904 = vadd.f32 %v6619, %v6846
        %v6905 = vadd.f32 %v6620, %v6848
        %v6906 = vadd.f32 %v6621, %v6852
        %v6907 = vadd.f32 %v6622, %v6854
        %v6908 = vadd.f32 %v6623, %v6856
        %v6909 = vadd.f32 %v6624, %v6858
        %v6910 = vadd.f32 %v6625, %v6862
        %v6911 = vadd.f32 %v6626, %v6864
        %v6912 = vadd.f32 %v6627, %v6866
        %v6913 = vadd.f32 %v6628, %v6868
        %v6914 = vadd.f32 %v6629, %v6872
        %v6915 = vadd.f32 %v6630, %v6874
        %v6916 = vadd.f32 %v6631, %v6876
        %v6917 = vadd.f32 %v6632, %v6878
        %v6918 = vadd.f32 %v6633, %v6882
        %v6919 = vadd.f32 %v6634, %v6884
        %v6920 = vadd.f32 %v6635, %v6886
        %v6921 = vadd.f32 %v6636, %v6888
        %v6922 = vpack.c.bf16 %v4939, %v4937
        %v6923 = vpack.c.bf16 %v4940, %v4938
        %s6924 = scalar_lea.vmem %s4, 912
        %v6925 = vld [vmem:[%s6924] sm:$0xff]
        %v6926 = vld [vmem:[%s6924 + $0x8] sm:$0xff]
        %v6927 = vld [vmem:[%s6924 + $0x10] sm:$0xff]
        %v6928 = vld [vmem:[%s6924 + $0x18] sm:$0xff]
        %v6929 = vld [vmem:[%s6924 + $0x20] sm:$0xff]
        %v6930 = vld [vmem:[%s6924 + $0x28] sm:$0xff]
        %v6931 = vld [vmem:[%s6924 + $0x30] sm:$0xff]
        %v6932 = vld [vmem:[%s6924 + $0x38] sm:$0xff]
        %v6933 = vld [vmem:[%s6924 + $0x40] sm:$0xff]
        %v6934 = vld [vmem:[%s6924 + $0x48] sm:$0xff]
        %v6935 = vld [vmem:[%s6924 + $0x50] sm:$0xff]
        %v6936 = vld [vmem:[%s6924 + $0x58] sm:$0xff]
        %v6937 = vld [vmem:[%s6924 + $0x60] sm:$0xff]
        %v6938 = vld [vmem:[%s6924 + $0x68] sm:$0xff]
        %v6939 = vld [vmem:[%s6924 + $0x70] sm:$0xff]
        %v6940 = vld [vmem:[%s6924 + $0x78] sm:$0xff]
        %v6941 = vld [vmem:[%s6924 + $0x80] sm:$0xff]
        %v6942 = vld [vmem:[%s6924 + $0x88] sm:$0xff]
        %v6943 = vld [vmem:[%s6924 + $0x90] sm:$0x33]
        %v6963 = vunpack.c.l.b16 %v6925
        %v6964 = vunpack.c.h.b16 %v6925
        %v6965 = vunpack.c.l.b16 %v6926
        %v6966 = vunpack.c.h.b16 %v6926
        %v6967 = vunpack.c.l.b16 %v6927
        %v6968 = vunpack.c.h.b16 %v6927
        %v6969 = vunpack.c.l.b16 %v6928
        %v6970 = vunpack.c.h.b16 %v6928
        %v6971 = vunpack.c.l.b16 %v6929
        %v6972 = vunpack.c.h.b16 %v6929
        %v6973 = vunpack.c.l.b16 %v6930
        %v6974 = vunpack.c.h.b16 %v6930
        %v6975 = vunpack.c.l.b16 %v6931
        %v6976 = vunpack.c.h.b16 %v6931
        %v6977 = vunpack.c.l.b16 %v6932
        %v6978 = vunpack.c.h.b16 %v6932
        %v6979 = vunpack.c.l.b16 %v6933
        %v6980 = vunpack.c.h.b16 %v6933
        %v6981 = vunpack.c.l.b16 %v6934
        %v6982 = vunpack.c.h.b16 %v6934
        %v6983 = vunpack.c.l.b16 %v6935
        %v6984 = vunpack.c.h.b16 %v6935
        %v6985 = vunpack.c.l.b16 %v6936
        %v6986 = vunpack.c.h.b16 %v6936
        %v6987 = vunpack.c.l.b16 %v6937
        %v6988 = vunpack.c.h.b16 %v6937
        %v6989 = vunpack.c.l.b16 %v6938
        %v6990 = vunpack.c.h.b16 %v6938
        %v6991 = vunpack.c.l.b16 %v6939
        %v6992 = vunpack.c.h.b16 %v6939
        %v6993 = vunpack.c.l.b16 %v6940
        %v6994 = vunpack.c.h.b16 %v6940
        %v6995 = vunpack.c.l.b16 %v6941
        %v6996 = vunpack.c.h.b16 %v6941
        %v6997 = vunpack.c.l.b16 %v6942
        %v6998 = vunpack.c.h.b16 %v6942
        %v6999 = vunpack.c.l.b16 %v6943
        %v7000 = vunpack.c.h.b16 %v6943
        %v7001 = vpack.c.b16 %v6965, %v6963
        %v7002 = vpack.c.b16 %v6966, %v6964
        %v7003 = vpack.c.b16 %v6969, %v6967
        %v7004 = vpack.c.b16 %v6970, %v6968
        %v7005 = vpack.c.b16 %v6973, %v6971
        %v7006 = vpack.c.b16 %v6974, %v6972
        %v7007 = vpack.c.b16 %v6977, %v6975
        %v7008 = vpack.c.b16 %v6978, %v6976
        %v7009 = vpack.c.b16 %v6981, %v6979
        %v7010 = vpack.c.b16 %v6982, %v6980
        %v7011 = vpack.c.b16 %v6985, %v6983
        %v7012 = vpack.c.b16 %v6986, %v6984
        %v7013 = vpack.c.b16 %v6989, %v6987
        %v7014 = vpack.c.b16 %v6990, %v6988
        %v7015 = vpack.c.b16 %v6993, %v6991
        %v7016 = vpack.c.b16 %v6994, %v6992
        %v7017 = vpack.c.b16 %v6997, %v6995
        %v7018 = vpack.c.b16 %v6998, %v6996
        %v7019 = vpack.c.b16 %v6999, %v6999
        %v7020 = vpack.c.b16 %v7000, %v7000
        %v7040 = vsel %vm5270, %v6923, 0
        %v7043 = vand.u32 %v7019, %v5298
        %v7046 = vand.u32 %v7020, %v5298
        %7048 = vmatprep.subr.bf16.mxu0 %v7016
        %7049 = vmatpush1.bf16.msra.mxu0 %v7015
        %7050 = vmatprep.subr.bf16.mxu0 %v7014
        %7051 = vmatpush1.bf16.msra.mxu0 %v7013
        %7052 = vmatprep.subr.bf16.mxu0 %v7012
        %7053 = vmatpush1.bf16.msra.mxu0 %v7011
        %7054 = vmatprep.subr.bf16.mxu0 %v7010
        %7055 = vmatpush1.bf16.msra.mxu0 %v7009
        %7056 = vmatprep.subr.bf16.mxu0 %v7008
        %7057 = vmatpush1.bf16.msra.mxu0 %v7007
        %7058 = vmatprep.subr.bf16.mxu0 %v7006
        %7059 = vmatpush1.bf16.msra.mxu0 %v7005
        %7060 = vmatprep.subr.bf16.mxu0 %v7004
        %7061 = vmatpush1.bf16.msra.mxu0 %v7003
        %7062 = vmatprep.subr.bf16.mxu0 %v7002
        %7063 = vmatpush1.bf16.msra.mxu0 %v7001
        %7064 = vmatprep.subr.bf16.mxu0 0
        %7065 = vmatpush2.bf16.msra.mxu0 0
        %7066 = vmatprep.subr.bf16.mxu0 0
        %7067 = vmatpush2.bf16.msra.mxu0 0
        %7068 = vmatprep.subr.bf16.mxu0 0
        %7069 = vmatpush2.bf16.msra.mxu0 0
        %7070 = vmatprep.subr.bf16.mxu0 0
        %7071 = vmatpush2.bf16.msra.mxu0 0
        %7072 = vmatprep.subr.bf16.mxu0 0
        %7073 = vmatpush2.bf16.msra.mxu0 0
        %7074 = vmatprep.subr.bf16.mxu0 0
        %7075 = vmatpush2.bf16.msra.mxu0 0
        %7076 = vmatprep.subr.bf16.mxu0 %v7046
        %7077 = vmatpush2.bf16.msra.mxu0 %v7043
        %7078 = vmatprep.subr.bf16.mxu0 %v7018
        %7079 = vmatpush2.bf16.msra.mxu0 %v7017
        %7080 = vmatprep.mubr.bf16.mxu0 %v5520
        %7081 = vmatmul.mubr.bf16.gmra.mxu0 %v4947
        %v7082 = vpop.f32.mrf.mxu0
        %v7083 = vadd.f32 0.0, %v7082
        %v7084 = vpop.f32.mrf.mxu0
        %v7085 = vadd.f32 0.0, %v7084
        %v7086 = vpop.f32.mrf.mxu0
        %v7087 = vadd.f32 0.0, %v7086
        %v7088 = vpop.f32.mrf.mxu0
        %v7089 = vadd.f32 0.0, %v7088
        %7090 = vmatprep.mubr.bf16.mxu0 %v5523
        %7091 = vmatmul.mubr.bf16.gmra.mxu0 %v4949
        %v7092 = vpop.f32.mrf.mxu0
        %v7093 = vadd.f32 0.0, %v7092
        %v7094 = vpop.f32.mrf.mxu0
        %v7095 = vadd.f32 0.0, %v7094
        %v7096 = vpop.f32.mrf.mxu0
        %v7097 = vadd.f32 0.0, %v7096
        %v7098 = vpop.f32.mrf.mxu0
        %v7099 = vadd.f32 0.0, %v7098
        %7100 = vmatprep.mubr.bf16.mxu0 %v5526
        %7101 = vmatmul.mubr.bf16.gmra.mxu0 %v4951
        %v7102 = vpop.f32.mrf.mxu0
        %v7103 = vadd.f32 0.0, %v7102
        %v7104 = vpop.f32.mrf.mxu0
        %v7105 = vadd.f32 0.0, %v7104
        %v7106 = vpop.f32.mrf.mxu0
        %v7107 = vadd.f32 0.0, %v7106
        %v7108 = vpop.f32.mrf.mxu0
        %v7109 = vadd.f32 0.0, %v7108
        %7110 = vmatprep.mubr.bf16.mxu0 %v5529
        %7111 = vmatmul.mubr.bf16.gmra.mxu0 %v4953
        %v7112 = vpop.f32.mrf.mxu0
        %v7113 = vadd.f32 0.0, %v7112
        %v7114 = vpop.f32.mrf.mxu0
        %v7115 = vadd.f32 0.0, %v7114
        %v7116 = vpop.f32.mrf.mxu0
        %v7117 = vadd.f32 0.0, %v7116
        %v7118 = vpop.f32.mrf.mxu0
        %v7119 = vadd.f32 0.0, %v7118
        %7120 = vmatprep.mubr.bf16.mxu0 %v5532
        %7121 = vmatmul.mubr.bf16.gmra.mxu0 %v4955
        %v7122 = vpop.f32.mrf.mxu0
        %v7123 = vadd.f32 0.0, %v7122
        %v7124 = vpop.f32.mrf.mxu0
        %v7125 = vadd.f32 0.0, %v7124
        %v7126 = vpop.f32.mrf.mxu0
        %v7127 = vadd.f32 0.0, %v7126
        %v7128 = vpop.f32.mrf.mxu0
        %v7129 = vadd.f32 0.0, %v7128
        %7130 = vmatprep.mubr.bf16.mxu0 %v5535
        %7131 = vmatmul.mubr.bf16.gmra.mxu0 %v4957
        %v7132 = vpop.f32.mrf.mxu0
        %v7133 = vadd.f32 0.0, %v7132
        %v7134 = vpop.f32.mrf.mxu0
        %v7135 = vadd.f32 0.0, %v7134
        %v7136 = vpop.f32.mrf.mxu0
        %v7137 = vadd.f32 0.0, %v7136
        %v7138 = vpop.f32.mrf.mxu0
        %v7139 = vadd.f32 0.0, %v7138
        %7140 = vmatprep.mubr.bf16.mxu0 %v6193
        %7141 = vmatmul.mubr.bf16.gmra.mxu0 %v6075
        %v7142 = vpop.f32.mrf.mxu0
        %v7143 = vadd.f32 0.0, %v7142
        %v7144 = vpop.f32.mrf.mxu0
        %v7145 = vadd.f32 0.0, %v7144
        %v7146 = vpop.f32.mrf.mxu0
        %v7147 = vadd.f32 0.0, %v7146
        %v7148 = vpop.f32.mrf.mxu0
        %v7149 = vadd.f32 0.0, %v7148
        %7150 = vmatprep.mubr.bf16.mxu0 %v7040
        %7151 = vmatmul.mubr.bf16.gmra.mxu0 %v6922
        %v7152 = vpop.f32.mrf.mxu0
        %v7153 = vadd.f32 0.0, %v7152
        %v7154 = vpop.f32.mrf.mxu0
        %v7155 = vadd.f32 0.0, %v7154
        %v7156 = vpop.f32.mrf.mxu0
        %v7157 = vadd.f32 0.0, %v7156
        %v7158 = vpop.f32.mrf.mxu0
        %v7159 = vadd.f32 0.0, %v7158
        %7160 = vdwg.mxu0
        %v7161 = vadd.f32 %v6890, %v7083
        %v7162 = vadd.f32 %v6891, %v7085
        %v7163 = vadd.f32 %v6892, %v7087
        %v7164 = vadd.f32 %v6893, %v7089
        %v7165 = vadd.f32 %v6894, %v7093
        %v7166 = vadd.f32 %v6895, %v7095
        %v7167 = vadd.f32 %v6896, %v7097
        %v7168 = vadd.f32 %v6897, %v7099
        %v7169 = vadd.f32 %v6898, %v7103
        %v7170 = vadd.f32 %v6899, %v7105
        %v7171 = vadd.f32 %v6900, %v7107
        %v7172 = vadd.f32 %v6901, %v7109
        %v7173 = vadd.f32 %v6902, %v7113
        %v7174 = vadd.f32 %v6903, %v7115
        %v7175 = vadd.f32 %v6904, %v7117
        %v7176 = vadd.f32 %v6905, %v7119
        %v7177 = vadd.f32 %v6906, %v7123
        %v7178 = vadd.f32 %v6907, %v7125
        %v7179 = vadd.f32 %v6908, %v7127
        %v7180 = vadd.f32 %v6909, %v7129
        %v7181 = vadd.f32 %v6910, %v7133
        %v7182 = vadd.f32 %v6911, %v7135
        %v7183 = vadd.f32 %v6912, %v7137
        %v7184 = vadd.f32 %v6913, %v7139
        %v7185 = vadd.f32 %v6914, %v7143
        %v7186 = vadd.f32 %v6915, %v7145
        %v7187 = vadd.f32 %v6916, %v7147
        %v7188 = vadd.f32 %v6917, %v7149
        %v7189 = vadd.f32 %v6918, %v7153
        %v7190 = vadd.f32 %v6919, %v7155
        %v7191 = vadd.f32 %v6920, %v7157
        %v7192 = vadd.f32 %v6921, %v7159
        %v7199 = vrot.slane %v4937, 1
        %v7200 = vrot.slane %v4939, 1
        %v7201 = vsel %vm5026, %v7199, %v7200
        %v7202 = vrot.slane %v4938, 1
        %v7203 = vrot.slane %v4940, 1
        %v7204 = vsel %vm5026, %v7202, %v7203
        %v7205 = vrot.slane %v4941, 1
        %v7206 = vsel %vm5026, %v7200, %v7205
        %v7207 = vrot.slane %v4942, 1
        %v7208 = vsel %vm5026, %v7203, %v7207
        %v7213 = vpack.c.bf16 %v7206, %v7201
        %v7214 = vpack.c.bf16 %v7208, %v7204
        %s7215 = scalar_lea.vmem %s4, 1064
        %v7216 = vld [vmem:[%s7215] sm:$0xff]
        %v7217 = vld [vmem:[%s7215 + $0x8] sm:$0xff]
        %v7218 = vld [vmem:[%s7215 + $0x10] sm:$0xff]
        %v7219 = vld [vmem:[%s7215 + $0x18] sm:$0xff]
        %v7220 = vld [vmem:[%s7215 + $0x20] sm:$0xff]
        %v7221 = vld [vmem:[%s7215 + $0x28] sm:$0xff]
        %v7222 = vld [vmem:[%s7215 + $0x30] sm:$0xff]
        %v7223 = vld [vmem:[%s7215 + $0x38] sm:$0xff]
        %v7224 = vld [vmem:[%s7215 + $0x40] sm:$0xff]
        %v7225 = vld [vmem:[%s7215 + $0x48] sm:$0xff]
        %v7226 = vld [vmem:[%s7215 + $0x50] sm:$0xff]
        %v7227 = vld [vmem:[%s7215 + $0x58] sm:$0xff]
        %v7228 = vld [vmem:[%s7215 + $0x60] sm:$0xff]
        %v7229 = vld [vmem:[%s7215 + $0x68] sm:$0xff]
        %v7230 = vld [vmem:[%s7215 + $0x70] sm:$0xff]
        %v7231 = vld [vmem:[%s7215 + $0x78] sm:$0xff]
        %v7232 = vld [vmem:[%s7215 + $0x80] sm:$0xff]
        %v7233 = vld [vmem:[%s7215 + $0x88] sm:$0xff]
        %v7234 = vld [vmem:[%s7215 + $0x90] sm:$0x33]
        %v7254 = vunpack.c.l.b16 %v7216
        %v7255 = vunpack.c.h.b16 %v7216
        %v7256 = vunpack.c.l.b16 %v7217
        %v7257 = vunpack.c.h.b16 %v7217
        %v7258 = vunpack.c.l.b16 %v7218
        %v7259 = vunpack.c.h.b16 %v7218
        %v7260 = vunpack.c.l.b16 %v7219
        %v7261 = vunpack.c.h.b16 %v7219
        %v7262 = vunpack.c.l.b16 %v7220
        %v7263 = vunpack.c.h.b16 %v7220
        %v7264 = vunpack.c.l.b16 %v7221
        %v7265 = vunpack.c.h.b16 %v7221
        %v7266 = vunpack.c.l.b16 %v7222
        %v7267 = vunpack.c.h.b16 %v7222
        %v7268 = vunpack.c.l.b16 %v7223
        %v7269 = vunpack.c.h.b16 %v7223
        %v7270 = vunpack.c.l.b16 %v7224
        %v7271 = vunpack.c.h.b16 %v7224
        %v7272 = vunpack.c.l.b16 %v7225
        %v7273 = vunpack.c.h.b16 %v7225
        %v7274 = vunpack.c.l.b16 %v7226
        %v7275 = vunpack.c.h.b16 %v7226
        %v7276 = vunpack.c.l.b16 %v7227
        %v7277 = vunpack.c.h.b16 %v7227
        %v7278 = vunpack.c.l.b16 %v7228
        %v7279 = vunpack.c.h.b16 %v7228
        %v7280 = vunpack.c.l.b16 %v7229
        %v7281 = vunpack.c.h.b16 %v7229
        %v7282 = vunpack.c.l.b16 %v7230
        %v7283 = vunpack.c.h.b16 %v7230
        %v7284 = vunpack.c.l.b16 %v7231
        %v7285 = vunpack.c.h.b16 %v7231
        %v7286 = vunpack.c.l.b16 %v7232
        %v7287 = vunpack.c.h.b16 %v7232
        %v7288 = vunpack.c.l.b16 %v7233
        %v7289 = vunpack.c.h.b16 %v7233
        %v7290 = vunpack.c.l.b16 %v7234
        %v7291 = vunpack.c.h.b16 %v7234
        %v7292 = vpack.c.b16 %v7256, %v7254
        %v7293 = vpack.c.b16 %v7257, %v7255
        %v7294 = vpack.c.b16 %v7260, %v7258
        %v7295 = vpack.c.b16 %v7261, %v7259
        %v7296 = vpack.c.b16 %v7264, %v7262
        %v7297 = vpack.c.b16 %v7265, %v7263
        %v7298 = vpack.c.b16 %v7268, %v7266
        %v7299 = vpack.c.b16 %v7269, %v7267
        %v7300 = vpack.c.b16 %v7272, %v7270
        %v7301 = vpack.c.b16 %v7273, %v7271
        %v7302 = vpack.c.b16 %v7276, %v7274
        %v7303 = vpack.c.b16 %v7277, %v7275
        %v7304 = vpack.c.b16 %v7280, %v7278
        %v7305 = vpack.c.b16 %v7281, %v7279
        %v7306 = vpack.c.b16 %v7284, %v7282
        %v7307 = vpack.c.b16 %v7285, %v7283
        %v7308 = vpack.c.b16 %v7288, %v7286
        %v7309 = vpack.c.b16 %v7289, %v7287
        %v7310 = vpack.c.b16 %v7290, %v7290
        %v7311 = vpack.c.b16 %v7291, %v7291
        %v7331 = vsel %vm5270, %v7214, 0
        %v7334 = vand.u32 %v7310, %v5298
        %v7337 = vand.u32 %v7311, %v5298
        %7339 = vmatprep.subr.bf16.mxu0 %v7307
        %7340 = vmatpush1.bf16.msra.mxu0 %v7306
        %7341 = vmatprep.subr.bf16.mxu0 %v7305
        %7342 = vmatpush1.bf16.msra.mxu0 %v7304
        %7343 = vmatprep.subr.bf16.mxu0 %v7303
        %7344 = vmatpush1.bf16.msra.mxu0 %v7302
        %7345 = vmatprep.subr.bf16.mxu0 %v7301
        %7346 = vmatpush1.bf16.msra.mxu0 %v7300
        %7347 = vmatprep.subr.bf16.mxu0 %v7299
        %7348 = vmatpush1.bf16.msra.mxu0 %v7298
        %7349 = vmatprep.subr.bf16.mxu0 %v7297
        %7350 = vmatpush1.bf16.msra.mxu0 %v7296
        %7351 = vmatprep.subr.bf16.mxu0 %v7295
        %7352 = vmatpush1.bf16.msra.mxu0 %v7294
        %7353 = vmatprep.subr.bf16.mxu0 %v7293
        %7354 = vmatpush1.bf16.msra.mxu0 %v7292
        %7355 = vmatprep.subr.bf16.mxu0 0
        %7356 = vmatpush2.bf16.msra.mxu0 0
        %7357 = vmatprep.subr.bf16.mxu0 0
        %7358 = vmatpush2.bf16.msra.mxu0 0
        %7359 = vmatprep.subr.bf16.mxu0 0
        %7360 = vmatpush2.bf16.msra.mxu0 0
        %7361 = vmatprep.subr.bf16.mxu0 0
        %7362 = vmatpush2.bf16.msra.mxu0 0
        %7363 = vmatprep.subr.bf16.mxu0 0
        %7364 = vmatpush2.bf16.msra.mxu0 0
        %7365 = vmatprep.subr.bf16.mxu0 0
        %7366 = vmatpush2.bf16.msra.mxu0 0
        %7367 = vmatprep.subr.bf16.mxu0 %v7337
        %7368 = vmatpush2.bf16.msra.mxu0 %v7334
        %7369 = vmatprep.subr.bf16.mxu0 %v7309
        %7370 = vmatpush2.bf16.msra.mxu0 %v7308
        %7371 = vmatprep.mubr.bf16.mxu0 %v5278
        %7372 = vmatmul.mubr.bf16.gmra.mxu0 %v5143
        %v7373 = vpop.f32.mrf.mxu0
        %v7374 = vadd.f32 0.0, %v7373
        %v7375 = vpop.f32.mrf.mxu0
        %v7376 = vadd.f32 0.0, %v7375
        %v7377 = vpop.f32.mrf.mxu0
        %v7378 = vadd.f32 0.0, %v7377
        %v7379 = vpop.f32.mrf.mxu0
        %v7380 = vadd.f32 0.0, %v7379
        %7381 = vmatprep.mubr.bf16.mxu0 %v5281
        %7382 = vmatmul.mubr.bf16.gmra.mxu0 %v5145
        %v7383 = vpop.f32.mrf.mxu0
        %v7384 = vadd.f32 0.0, %v7383
        %v7385 = vpop.f32.mrf.mxu0
        %v7386 = vadd.f32 0.0, %v7385
        %v7387 = vpop.f32.mrf.mxu0
        %v7388 = vadd.f32 0.0, %v7387
        %v7389 = vpop.f32.mrf.mxu0
        %v7390 = vadd.f32 0.0, %v7389
        %7391 = vmatprep.mubr.bf16.mxu0 %v5284
        %7392 = vmatmul.mubr.bf16.gmra.mxu0 %v5147
        %v7393 = vpop.f32.mrf.mxu0
        %v7394 = vadd.f32 0.0, %v7393
        %v7395 = vpop.f32.mrf.mxu0
        %v7396 = vadd.f32 0.0, %v7395
        %v7397 = vpop.f32.mrf.mxu0
        %v7398 = vadd.f32 0.0, %v7397
        %v7399 = vpop.f32.mrf.mxu0
        %v7400 = vadd.f32 0.0, %v7399
        %7401 = vmatprep.mubr.bf16.mxu0 %v5287
        %7402 = vmatmul.mubr.bf16.gmra.mxu0 %v5149
        %v7403 = vpop.f32.mrf.mxu0
        %v7404 = vadd.f32 0.0, %v7403
        %v7405 = vpop.f32.mrf.mxu0
        %v7406 = vadd.f32 0.0, %v7405
        %v7407 = vpop.f32.mrf.mxu0
        %v7408 = vadd.f32 0.0, %v7407
        %v7409 = vpop.f32.mrf.mxu0
        %v7410 = vadd.f32 0.0, %v7409
        %7411 = vmatprep.mubr.bf16.mxu0 %v5290
        %7412 = vmatmul.mubr.bf16.gmra.mxu0 %v5151
        %v7413 = vpop.f32.mrf.mxu0
        %v7414 = vadd.f32 0.0, %v7413
        %v7415 = vpop.f32.mrf.mxu0
        %v7416 = vadd.f32 0.0, %v7415
        %v7417 = vpop.f32.mrf.mxu0
        %v7418 = vadd.f32 0.0, %v7417
        %v7419 = vpop.f32.mrf.mxu0
        %v7420 = vadd.f32 0.0, %v7419
        %7421 = vmatprep.mubr.bf16.mxu0 %v5293
        %7422 = vmatmul.mubr.bf16.gmra.mxu0 %v5153
        %v7423 = vpop.f32.mrf.mxu0
        %v7424 = vadd.f32 0.0, %v7423
        %v7425 = vpop.f32.mrf.mxu0
        %v7426 = vadd.f32 0.0, %v7425
        %v7427 = vpop.f32.mrf.mxu0
        %v7428 = vadd.f32 0.0, %v7427
        %v7429 = vpop.f32.mrf.mxu0
        %v7430 = vadd.f32 0.0, %v7429
        %7431 = vmatprep.mubr.bf16.mxu0 %v6484
        %7432 = vmatmul.mubr.bf16.gmra.mxu0 %v6366
        %v7433 = vpop.f32.mrf.mxu0
        %v7434 = vadd.f32 0.0, %v7433
        %v7435 = vpop.f32.mrf.mxu0
        %v7436 = vadd.f32 0.0, %v7435
        %v7437 = vpop.f32.mrf.mxu0
        %v7438 = vadd.f32 0.0, %v7437
        %v7439 = vpop.f32.mrf.mxu0
        %v7440 = vadd.f32 0.0, %v7439
        %7441 = vmatprep.mubr.bf16.mxu0 %v7331
        %7442 = vmatmul.mubr.bf16.gmra.mxu0 %v7213
        %v7443 = vpop.f32.mrf.mxu0
        %v7444 = vadd.f32 0.0, %v7443
        %v7445 = vpop.f32.mrf.mxu0
        %v7446 = vadd.f32 0.0, %v7445
        %v7447 = vpop.f32.mrf.mxu0
        %v7448 = vadd.f32 0.0, %v7447
        %v7449 = vpop.f32.mrf.mxu0
        %v7450 = vadd.f32 0.0, %v7449
        %7451 = vdwg.mxu0
        %v7452 = vadd.f32 %v7161, %v7374
        %v7453 = vadd.f32 %v7162, %v7376
        %v7454 = vadd.f32 %v7163, %v7378
        %v7455 = vadd.f32 %v7164, %v7380
        %v7456 = vadd.f32 %v7165, %v7384
        %v7457 = vadd.f32 %v7166, %v7386
        %v7458 = vadd.f32 %v7167, %v7388
        %v7459 = vadd.f32 %v7168, %v7390
        %v7460 = vadd.f32 %v7169, %v7394
        %v7461 = vadd.f32 %v7170, %v7396
        %v7462 = vadd.f32 %v7171, %v7398
        %v7463 = vadd.f32 %v7172, %v7400
        %v7464 = vadd.f32 %v7173, %v7404
        %v7465 = vadd.f32 %v7174, %v7406
        %v7466 = vadd.f32 %v7175, %v7408
        %v7467 = vadd.f32 %v7176, %v7410
        %v7468 = vadd.f32 %v7177, %v7414
        %v7469 = vadd.f32 %v7178, %v7416
        %v7470 = vadd.f32 %v7179, %v7418
        %v7471 = vadd.f32 %v7180, %v7420
        %v7472 = vadd.f32 %v7181, %v7424
        %v7473 = vadd.f32 %v7182, %v7426
        %v7474 = vadd.f32 %v7183, %v7428
        %v7475 = vadd.f32 %v7184, %v7430
        %v7476 = vadd.f32 %v7185, %v7434
        %v7477 = vadd.f32 %v7186, %v7436
        %v7478 = vadd.f32 %v7187, %v7438
        %v7479 = vadd.f32 %v7188, %v7440
        %v7480 = vadd.f32 %v7189, %v7444
        %v7481 = vadd.f32 %v7190, %v7446
        %v7482 = vadd.f32 %v7191, %v7448
        %v7483 = vadd.f32 %v7192, %v7450
        %v7484 = vrot.slane %v4937, 2
        %v7485 = vrot.slane %v4939, 2
        %v7486 = vsel %vm5656, %v7484, %v7485
        %v7487 = vrot.slane %v4938, 2
        %v7488 = vrot.slane %v4940, 2
        %v7489 = vsel %vm5656, %v7487, %v7488
        %v7490 = vrot.slane %v4941, 2
        %v7491 = vsel %vm5656, %v7485, %v7490
        %v7492 = vrot.slane %v4942, 2
        %v7493 = vsel %vm5656, %v7488, %v7492
        %v7498 = vpack.c.bf16 %v7491, %v7486
        %v7499 = vpack.c.bf16 %v7493, %v7489
        %s7500 = scalar_lea.vmem %s4, 1216
        %v7501 = vld [vmem:[%s7500] sm:$0xff]
        %v7502 = vld [vmem:[%s7500 + $0x8] sm:$0xff]
        %v7503 = vld [vmem:[%s7500 + $0x10] sm:$0xff]
        %v7504 = vld [vmem:[%s7500 + $0x18] sm:$0xff]
        %v7505 = vld [vmem:[%s7500 + $0x20] sm:$0xff]
        %v7506 = vld [vmem:[%s7500 + $0x28] sm:$0xff]
        %v7507 = vld [vmem:[%s7500 + $0x30] sm:$0xff]
        %v7508 = vld [vmem:[%s7500 + $0x38] sm:$0xff]
        %v7509 = vld [vmem:[%s7500 + $0x40] sm:$0xff]
        %v7510 = vld [vmem:[%s7500 + $0x48] sm:$0xff]
        %v7511 = vld [vmem:[%s7500 + $0x50] sm:$0xff]
        %v7512 = vld [vmem:[%s7500 + $0x58] sm:$0xff]
        %v7513 = vld [vmem:[%s7500 + $0x60] sm:$0xff]
        %v7514 = vld [vmem:[%s7500 + $0x68] sm:$0xff]
        %v7515 = vld [vmem:[%s7500 + $0x70] sm:$0xff]
        %v7516 = vld [vmem:[%s7500 + $0x78] sm:$0xff]
        %v7517 = vld [vmem:[%s7500 + $0x80] sm:$0xff]
        %v7518 = vld [vmem:[%s7500 + $0x88] sm:$0xff]
        %v7519 = vld [vmem:[%s7500 + $0x90] sm:$0x33]
        %v7539 = vunpack.c.l.b16 %v7501
        %v7540 = vunpack.c.h.b16 %v7501
        %v7541 = vunpack.c.l.b16 %v7502
        %v7542 = vunpack.c.h.b16 %v7502
        %v7543 = vunpack.c.l.b16 %v7503
        %v7544 = vunpack.c.h.b16 %v7503
        %v7545 = vunpack.c.l.b16 %v7504
        %v7546 = vunpack.c.h.b16 %v7504
        %v7547 = vunpack.c.l.b16 %v7505
        %v7548 = vunpack.c.h.b16 %v7505
        %v7549 = vunpack.c.l.b16 %v7506
        %v7550 = vunpack.c.h.b16 %v7506
        %v7551 = vunpack.c.l.b16 %v7507
        %v7552 = vunpack.c.h.b16 %v7507
        %v7553 = vunpack.c.l.b16 %v7508
        %v7554 = vunpack.c.h.b16 %v7508
        %v7555 = vunpack.c.l.b16 %v7509
        %v7556 = vunpack.c.h.b16 %v7509
        %v7557 = vunpack.c.l.b16 %v7510
        %v7558 = vunpack.c.h.b16 %v7510
        %v7559 = vunpack.c.l.b16 %v7511
        %v7560 = vunpack.c.h.b16 %v7511
        %v7561 = vunpack.c.l.b16 %v7512
        %v7562 = vunpack.c.h.b16 %v7512
        %v7563 = vunpack.c.l.b16 %v7513
        %v7564 = vunpack.c.h.b16 %v7513
        %v7565 = vunpack.c.l.b16 %v7514
        %v7566 = vunpack.c.h.b16 %v7514
        %v7567 = vunpack.c.l.b16 %v7515
        %v7568 = vunpack.c.h.b16 %v7515
        %v7569 = vunpack.c.l.b16 %v7516
        %v7570 = vunpack.c.h.b16 %v7516
        %v7571 = vunpack.c.l.b16 %v7517
        %v7572 = vunpack.c.h.b16 %v7517
        %v7573 = vunpack.c.l.b16 %v7518
        %v7574 = vunpack.c.h.b16 %v7518
        %v7575 = vunpack.c.l.b16 %v7519
        %v7576 = vunpack.c.h.b16 %v7519
        %v7577 = vpack.c.b16 %v7541, %v7539
        %v7578 = vpack.c.b16 %v7542, %v7540
        %v7579 = vpack.c.b16 %v7545, %v7543
        %v7580 = vpack.c.b16 %v7546, %v7544
        %v7581 = vpack.c.b16 %v7549, %v7547
        %v7582 = vpack.c.b16 %v7550, %v7548
        %v7583 = vpack.c.b16 %v7553, %v7551
        %v7584 = vpack.c.b16 %v7554, %v7552
        %v7585 = vpack.c.b16 %v7557, %v7555
        %v7586 = vpack.c.b16 %v7558, %v7556
        %v7587 = vpack.c.b16 %v7561, %v7559
        %v7588 = vpack.c.b16 %v7562, %v7560
        %v7589 = vpack.c.b16 %v7565, %v7563
        %v7590 = vpack.c.b16 %v7566, %v7564
        %v7591 = vpack.c.b16 %v7569, %v7567
        %v7592 = vpack.c.b16 %v7570, %v7568
        %v7593 = vpack.c.b16 %v7573, %v7571
        %v7594 = vpack.c.b16 %v7574, %v7572
        %v7595 = vpack.c.b16 %v7575, %v7575
        %v7596 = vpack.c.b16 %v7576, %v7576
        %v7616 = vsel %vm5270, %v7499, 0
        %v7619 = vand.u32 %v7595, %v5298
        %v7622 = vand.u32 %v7596, %v5298
        %7624 = vmatprep.subr.bf16.mxu0 %v7592
        %7625 = vmatpush1.bf16.msra.mxu0 %v7591
        %7626 = vmatprep.subr.bf16.mxu0 %v7590
        %7627 = vmatpush1.bf16.msra.mxu0 %v7589
        %7628 = vmatprep.subr.bf16.mxu0 %v7588
        %7629 = vmatpush1.bf16.msra.mxu0 %v7587
        %7630 = vmatprep.subr.bf16.mxu0 %v7586
        %7631 = vmatpush1.bf16.msra.mxu0 %v7585
        %7632 = vmatprep.subr.bf16.mxu0 %v7584
        %7633 = vmatpush1.bf16.msra.mxu0 %v7583
        %7634 = vmatprep.subr.bf16.mxu0 %v7582
        %7635 = vmatpush1.bf16.msra.mxu0 %v7581
        %7636 = vmatprep.subr.bf16.mxu0 %v7580
        %7637 = vmatpush1.bf16.msra.mxu0 %v7579
        %7638 = vmatprep.subr.bf16.mxu0 %v7578
        %7639 = vmatpush1.bf16.msra.mxu0 %v7577
        %7640 = vmatprep.subr.bf16.mxu0 0
        %7641 = vmatpush2.bf16.msra.mxu0 0
        %7642 = vmatprep.subr.bf16.mxu0 0
        %7643 = vmatpush2.bf16.msra.mxu0 0
        %7644 = vmatprep.subr.bf16.mxu0 0
        %7645 = vmatpush2.bf16.msra.mxu0 0
        %7646 = vmatprep.subr.bf16.mxu0 0
        %7647 = vmatpush2.bf16.msra.mxu0 0
        %7648 = vmatprep.subr.bf16.mxu0 0
        %7649 = vmatpush2.bf16.msra.mxu0 0
        %7650 = vmatprep.subr.bf16.mxu0 0
        %7651 = vmatpush2.bf16.msra.mxu0 0
        %7652 = vmatprep.subr.bf16.mxu0 %v7622
        %7653 = vmatpush2.bf16.msra.mxu0 %v7619
        %7654 = vmatprep.subr.bf16.mxu0 %v7594
        %7655 = vmatpush2.bf16.msra.mxu0 %v7593
        %7656 = vmatprep.mubr.bf16.mxu0 %v5907
        %7657 = vmatmul.mubr.bf16.gmra.mxu0 %v5773
        %v7658 = vpop.f32.mrf.mxu0
        %v7659 = vadd.f32 0.0, %v7658
        %v7660 = vpop.f32.mrf.mxu0
        %v7661 = vadd.f32 0.0, %v7660
        %v7662 = vpop.f32.mrf.mxu0
        %v7663 = vadd.f32 0.0, %v7662
        %v7664 = vpop.f32.mrf.mxu0
        %v7665 = vadd.f32 0.0, %v7664
        %7666 = vmatprep.mubr.bf16.mxu0 %v5910
        %7667 = vmatmul.mubr.bf16.gmra.mxu0 %v5775
        %v7668 = vpop.f32.mrf.mxu0
        %v7669 = vadd.f32 0.0, %v7668
        %v7670 = vpop.f32.mrf.mxu0
        %v7671 = vadd.f32 0.0, %v7670
        %v7672 = vpop.f32.mrf.mxu0
        %v7673 = vadd.f32 0.0, %v7672
        %v7674 = vpop.f32.mrf.mxu0
        %v7675 = vadd.f32 0.0, %v7674
        %7676 = vmatprep.mubr.bf16.mxu0 %v5913
        %7677 = vmatmul.mubr.bf16.gmra.mxu0 %v5777
        %v7678 = vpop.f32.mrf.mxu0
        %v7679 = vadd.f32 0.0, %v7678
        %v7680 = vpop.f32.mrf.mxu0
        %v7681 = vadd.f32 0.0, %v7680
        %v7682 = vpop.f32.mrf.mxu0
        %v7683 = vadd.f32 0.0, %v7682
        %v7684 = vpop.f32.mrf.mxu0
        %v7685 = vadd.f32 0.0, %v7684
        %7686 = vmatprep.mubr.bf16.mxu0 %v5916
        %7687 = vmatmul.mubr.bf16.gmra.mxu0 %v5779
        %v7688 = vpop.f32.mrf.mxu0
        %v7689 = vadd.f32 0.0, %v7688
        %v7690 = vpop.f32.mrf.mxu0
        %v7691 = vadd.f32 0.0, %v7690
        %v7692 = vpop.f32.mrf.mxu0
        %v7693 = vadd.f32 0.0, %v7692
        %v7694 = vpop.f32.mrf.mxu0
        %v7695 = vadd.f32 0.0, %v7694
        %7696 = vmatprep.mubr.bf16.mxu0 %v5919
        %7697 = vmatmul.mubr.bf16.gmra.mxu0 %v5781
        %v7698 = vpop.f32.mrf.mxu0
        %v7699 = vadd.f32 0.0, %v7698
        %v7700 = vpop.f32.mrf.mxu0
        %v7701 = vadd.f32 0.0, %v7700
        %v7702 = vpop.f32.mrf.mxu0
        %v7703 = vadd.f32 0.0, %v7702
        %v7704 = vpop.f32.mrf.mxu0
        %v7705 = vadd.f32 0.0, %v7704
        %7706 = vmatprep.mubr.bf16.mxu0 %v5922
        %7707 = vmatmul.mubr.bf16.gmra.mxu0 %v5783
        %v7708 = vpop.f32.mrf.mxu0
        %v7709 = vadd.f32 0.0, %v7708
        %v7710 = vpop.f32.mrf.mxu0
        %v7711 = vadd.f32 0.0, %v7710
        %v7712 = vpop.f32.mrf.mxu0
        %v7713 = vadd.f32 0.0, %v7712
        %v7714 = vpop.f32.mrf.mxu0
        %v7715 = vadd.f32 0.0, %v7714
        %7716 = vmatprep.mubr.bf16.mxu0 %v6769
        %7717 = vmatmul.mubr.bf16.gmra.mxu0 %v6651
        %v7718 = vpop.f32.mrf.mxu0
        %v7719 = vadd.f32 0.0, %v7718
        %v7720 = vpop.f32.mrf.mxu0
        %v7721 = vadd.f32 0.0, %v7720
        %v7722 = vpop.f32.mrf.mxu0
        %v7723 = vadd.f32 0.0, %v7722
        %v7724 = vpop.f32.mrf.mxu0
        %v7725 = vadd.f32 0.0, %v7724
        %7726 = vmatprep.mubr.bf16.mxu0 %v7616
        %7727 = vmatmul.mubr.bf16.gmra.mxu0 %v7498
        %v7728 = vpop.f32.mrf.mxu0
        %v7729 = vadd.f32 0.0, %v7728
        %v7730 = vpop.f32.mrf.mxu0
        %v7731 = vadd.f32 0.0, %v7730
        %v7732 = vpop.f32.mrf.mxu0
        %v7733 = vadd.f32 0.0, %v7732
        %v7734 = vpop.f32.mrf.mxu0
        %v7735 = vadd.f32 0.0, %v7734
        %7736 = vdwg.mxu0
        %v7737 = vadd.f32 %v7452, %v7659
        %v7738 = vadd.f32 %v7453, %v7661
        %v7739 = vadd.f32 %v7454, %v7663
        %v7740 = vadd.f32 %v7455, %v7665
        %v7741 = vadd.f32 %v7456, %v7669
        %v7742 = vadd.f32 %v7457, %v7671
        %v7743 = vadd.f32 %v7458, %v7673
        %v7744 = vadd.f32 %v7459, %v7675
        %v7745 = vadd.f32 %v7460, %v7679
        %v7746 = vadd.f32 %v7461, %v7681
        %v7747 = vadd.f32 %v7462, %v7683
        %v7748 = vadd.f32 %v7463, %v7685
        %v7749 = vadd.f32 %v7464, %v7689
        %v7750 = vadd.f32 %v7465, %v7691
        %v7751 = vadd.f32 %v7466, %v7693
        %v7752 = vadd.f32 %v7467, %v7695
        %v7753 = vadd.f32 %v7468, %v7699
        %v7754 = vadd.f32 %v7469, %v7701
        %v7755 = vadd.f32 %v7470, %v7703
        %v7756 = vadd.f32 %v7471, %v7705
        %v7757 = vadd.f32 %v7472, %v7709
        %v7758 = vadd.f32 %v7473, %v7711
        %v7759 = vadd.f32 %v7474, %v7713
        %v7760 = vadd.f32 %v7475, %v7715
        %v7761 = vadd.f32 %v7476, %v7719
        %v7762 = vadd.f32 %v7477, %v7721
        %v7763 = vadd.f32 %v7478, %v7723
        %v7764 = vadd.f32 %v7479, %v7725
        %v7765 = vadd.f32 %v7480, %v7729
        %v7766 = vadd.f32 %v7481, %v7731
        %v7767 = vadd.f32 %v7482, %v7733
        %v7768 = vadd.f32 %v7483, %v7735
        %v7769 = vld [vmem:[%s5] sm:$0x3]
        %v7771 = vlaneseq
        %v7772 = vshrl.u32 %v7771, 7
        %v7773 = vsub.s32 0, %v7772
        %v7774 = vrot.slane %v7769, %v7773
        %v7775 = vlaneseq
        %v7776 = vshrl.u32 %v7775, 7
        %v7777 = vsub.s32 1, %v7776
        %v7778 = vrot.slane %v7769, %v7777
        %v7781 = vmul.f32 %v7737, %v7774
        %v7782 = vmul.f32 %v7738, %v7778
        %v7783 = vmul.f32 %v7739, %v7774
        %v7784 = vmul.f32 %v7740, %v7778
        %v7785 = vmul.f32 %v7741, %v7774
        %v7786 = vmul.f32 %v7742, %v7778
        %v7787 = vmul.f32 %v7743, %v7774
        %v7788 = vmul.f32 %v7744, %v7778
        %v7789 = vmul.f32 %v7745, %v7774
        %v7790 = vmul.f32 %v7746, %v7778
        %v7791 = vmul.f32 %v7747, %v7774
        %v7792 = vmul.f32 %v7748, %v7778
        %v7793 = vmul.f32 %v7749, %v7774
        %v7794 = vmul.f32 %v7750, %v7778
        %v7795 = vmul.f32 %v7751, %v7774
        %v7796 = vmul.f32 %v7752, %v7778
        %v7797 = vmul.f32 %v7753, %v7774
        %v7798 = vmul.f32 %v7754, %v7778
        %v7799 = vmul.f32 %v7755, %v7774
        %v7800 = vmul.f32 %v7756, %v7778
        %v7801 = vmul.f32 %v7757, %v7774
        %v7802 = vmul.f32 %v7758, %v7778
        %v7803 = vmul.f32 %v7759, %v7774
        %v7804 = vmul.f32 %v7760, %v7778
        %v7805 = vmul.f32 %v7761, %v7774
        %v7806 = vmul.f32 %v7762, %v7778
        %v7807 = vmul.f32 %v7763, %v7774
        %v7808 = vmul.f32 %v7764, %v7778
        %v7809 = vmul.f32 %v7765, %v7774
        %v7810 = vmul.f32 %v7766, %v7778
        %v7811 = vmul.f32 %v7767, %v7774
        %v7812 = vmul.f32 %v7768, %v7778
        %v7813 = vld [vmem:[%s6] sm:$0x3]
        %v7815 = vlaneseq
        %v7816 = vshrl.u32 %v7815, 7
        %v7817 = vsub.s32 0, %v7816
        %v7818 = vrot.slane %v7813, %v7817
        %v7819 = vlaneseq
        %v7820 = vshrl.u32 %v7819, 7
        %v7821 = vsub.s32 1, %v7820
        %v7822 = vrot.slane %v7813, %v7821
        %v7825 = vadd.f32 %v7781, %v7818
        %v7826 = vadd.f32 %v7782, %v7822
        %v7827 = vadd.f32 %v7783, %v7818
        %v7828 = vadd.f32 %v7784, %v7822
        %v7829 = vadd.f32 %v7785, %v7818
        %v7830 = vadd.f32 %v7786, %v7822
        %v7831 = vadd.f32 %v7787, %v7818
        %v7832 = vadd.f32 %v7788, %v7822
        %v7833 = vadd.f32 %v7789, %v7818
        %v7834 = vadd.f32 %v7790, %v7822
        %v7835 = vadd.f32 %v7791, %v7818
        %v7836 = vadd.f32 %v7792, %v7822
        %v7837 = vadd.f32 %v7793, %v7818
        %v7838 = vadd.f32 %v7794, %v7822
        %v7839 = vadd.f32 %v7795, %v7818
        %v7840 = vadd.f32 %v7796, %v7822
        %v7841 = vadd.f32 %v7797, %v7818
        %v7842 = vadd.f32 %v7798, %v7822
        %v7843 = vadd.f32 %v7799, %v7818
        %v7844 = vadd.f32 %v7800, %v7822
        %v7845 = vadd.f32 %v7801, %v7818
        %v7846 = vadd.f32 %v7802, %v7822
        %v7847 = vadd.f32 %v7803, %v7818
        %v7848 = vadd.f32 %v7804, %v7822
        %v7849 = vadd.f32 %v7805, %v7818
        %v7850 = vadd.f32 %v7806, %v7822
        %v7851 = vadd.f32 %v7807, %v7818
        %v7852 = vadd.f32 %v7808, %v7822
        %v7853 = vadd.f32 %v7809, %v7818
        %v7854 = vadd.f32 %v7810, %v7822
        %v7855 = vadd.f32 %v7811, %v7818
        %v7856 = vadd.f32 %v7812, %v7822
        %v7857 = vxor.u32 %v7825, 2147483648
        %v7858 = vxor.u32 %v7826, 2147483648
        %v7859 = vxor.u32 %v7827, 2147483648
        %v7860 = vxor.u32 %v7828, 2147483648
        %v7861 = vxor.u32 %v7829, 2147483648
        %v7862 = vxor.u32 %v7830, 2147483648
        %v7863 = vxor.u32 %v7831, 2147483648
        %v7864 = vxor.u32 %v7832, 2147483648
        %v7865 = vxor.u32 %v7833, 2147483648
        %v7866 = vxor.u32 %v7834, 2147483648
        %v7867 = vxor.u32 %v7835, 2147483648
        %v7868 = vxor.u32 %v7836, 2147483648
        %v7869 = vxor.u32 %v7837, 2147483648
        %v7870 = vxor.u32 %v7838, 2147483648
        %v7871 = vxor.u32 %v7839, 2147483648
        %v7872 = vxor.u32 %v7840, 2147483648
        %v7873 = vxor.u32 %v7841, 2147483648
        %v7874 = vxor.u32 %v7842, 2147483648
        %v7875 = vxor.u32 %v7843, 2147483648
        %v7876 = vxor.u32 %v7844, 2147483648
        %v7877 = vxor.u32 %v7845, 2147483648
        %v7878 = vxor.u32 %v7846, 2147483648
        %v7879 = vxor.u32 %v7847, 2147483648
        %v7880 = vxor.u32 %v7848, 2147483648
        %v7881 = vxor.u32 %v7849, 2147483648
        %v7882 = vxor.u32 %v7850, 2147483648
        %v7883 = vxor.u32 %v7851, 2147483648
        %v7884 = vxor.u32 %v7852, 2147483648
        %v7885 = vxor.u32 %v7853, 2147483648
        %v7886 = vxor.u32 %v7854, 2147483648
        %v7887 = vxor.u32 %v7855, 2147483648
        %v7888 = vxor.u32 %v7856, 2147483648
        %v7889 = vmul.f32 %v7857, 1.442695
        %v7890 = vpow.pop %v7889
        %v7891 = vmul.f32 %v7858, 1.442695
        %v7892 = vpow.pop %v7891
        %v7893 = vmul.f32 %v7859, 1.442695
        %v7894 = vpow.pop %v7893
        %v7895 = vmul.f32 %v7860, 1.442695
        %v7896 = vpow.pop %v7895
        %v7897 = vmul.f32 %v7861, 1.442695
        %v7898 = vpow.pop %v7897
        %v7899 = vmul.f32 %v7862, 1.442695
        %v7900 = vpow.pop %v7899
        %v7901 = vmul.f32 %v7863, 1.442695
        %v7902 = vpow.pop %v7901
        %v7903 = vmul.f32 %v7864, 1.442695
        %v7904 = vpow.pop %v7903
        %v7905 = vmul.f32 %v7865, 1.442695
        %v7906 = vpow.pop %v7905
        %v7907 = vmul.f32 %v7866, 1.442695
        %v7908 = vpow.pop %v7907
        %v7909 = vmul.f32 %v7867, 1.442695
        %v7910 = vpow.pop %v7909
        %v7911 = vmul.f32 %v7868, 1.442695
        %v7912 = vpow.pop %v7911
        %v7913 = vmul.f32 %v7869, 1.442695
        %v7914 = vpow.pop %v7913
        %v7915 = vmul.f32 %v7870, 1.442695
        %v7916 = vpow.pop %v7915
        %v7917 = vmul.f32 %v7871, 1.442695
        %v7918 = vpow.pop %v7917
        %v7919 = vmul.f32 %v7872, 1.442695
        %v7920 = vpow.pop %v7919
        %v7921 = vmul.f32 %v7873, 1.442695
        %v7922 = vpow.pop %v7921
        %v7923 = vmul.f32 %v7874, 1.442695
        %v7924 = vpow.pop %v7923
        %v7925 = vmul.f32 %v7875, 1.442695
        %v7926 = vpow.pop %v7925
        %v7927 = vmul.f32 %v7876, 1.442695
        %v7928 = vpow.pop %v7927
        %v7929 = vmul.f32 %v7877, 1.442695
        %v7930 = vpow.pop %v7929
        %v7931 = vmul.f32 %v7878, 1.442695
        %v7932 = vpow.pop %v7931
        %v7933 = vmul.f32 %v7879, 1.442695
        %v7934 = vpow.pop %v7933
        %v7935 = vmul.f32 %v7880, 1.442695
        %v7936 = vpow.pop %v7935
        %v7937 = vmul.f32 %v7881, 1.442695
        %v7938 = vpow.pop %v7937
        %v7939 = vmul.f32 %v7882, 1.442695
        %v7940 = vpow.pop %v7939
        %v7941 = vmul.f32 %v7883, 1.442695
        %v7942 = vpow.pop %v7941
        %v7943 = vmul.f32 %v7884, 1.442695
        %v7944 = vpow.pop %v7943
        %v7945 = vmul.f32 %v7885, 1.442695
        %v7946 = vpow.pop %v7945
        %v7947 = vmul.f32 %v7886, 1.442695
        %v7948 = vpow.pop %v7947
        %v7949 = vmul.f32 %v7887, 1.442695
        %v7950 = vpow.pop %v7949
        %v7951 = vmul.f32 %v7888, 1.442695
        %v7952 = vpow.pop %v7951
        %v7953 = vadd.f32 %v7890, 1.0
        %v7954 = vadd.f32 %v7892, 1.0
        %v7955 = vadd.f32 %v7894, 1.0
        %v7956 = vadd.f32 %v7896, 1.0
        %v7957 = vadd.f32 %v7898, 1.0
        %v7958 = vadd.f32 %v7900, 1.0
        %v7959 = vadd.f32 %v7902, 1.0
        %v7960 = vadd.f32 %v7904, 1.0
        %v7961 = vadd.f32 %v7906, 1.0
        %v7962 = vadd.f32 %v7908, 1.0
        %v7963 = vadd.f32 %v7910, 1.0
        %v7964 = vadd.f32 %v7912, 1.0
        %v7965 = vadd.f32 %v7914, 1.0
        %v7966 = vadd.f32 %v7916, 1.0
        %v7967 = vadd.f32 %v7918, 1.0
        %v7968 = vadd.f32 %v7920, 1.0
        %v7969 = vadd.f32 %v7922, 1.0
        %v7970 = vadd.f32 %v7924, 1.0
        %v7971 = vadd.f32 %v7926, 1.0
        %v7972 = vadd.f32 %v7928, 1.0
        %v7973 = vadd.f32 %v7930, 1.0
        %v7974 = vadd.f32 %v7932, 1.0
        %v7975 = vadd.f32 %v7934, 1.0
        %v7976 = vadd.f32 %v7936, 1.0
        %v7977 = vadd.f32 %v7938, 1.0
        %v7978 = vadd.f32 %v7940, 1.0
        %v7979 = vadd.f32 %v7942, 1.0
        %v7980 = vadd.f32 %v7944, 1.0
        %v7981 = vadd.f32 %v7946, 1.0
        %v7982 = vadd.f32 %v7948, 1.0
        %v7983 = vadd.f32 %v7950, 1.0
        %v7984 = vadd.f32 %v7952, 1.0
        %v7985 = vrcp.pop %v7953
        %v7986 = vmul.f32 1.0, %v7985
        %v7987 = vrcp.pop %v7954
        %v7988 = vmul.f32 1.0, %v7987
        %v7989 = vrcp.pop %v7955
        %v7990 = vmul.f32 1.0, %v7989
        %v7991 = vrcp.pop %v7956
        %v7992 = vmul.f32 1.0, %v7991
        %v7993 = vrcp.pop %v7957
        %v7994 = vmul.f32 1.0, %v7993
        %v7995 = vrcp.pop %v7958
        %v7996 = vmul.f32 1.0, %v7995
        %v7997 = vrcp.pop %v7959
        %v7998 = vmul.f32 1.0, %v7997
        %v7999 = vrcp.pop %v7960
        %v8000 = vmul.f32 1.0, %v7999
        %v8001 = vrcp.pop %v7961
        %v8002 = vmul.f32 1.0, %v8001
        %v8003 = vrcp.pop %v7962
        %v8004 = vmul.f32 1.0, %v8003
        %v8005 = vrcp.pop %v7963
        %v8006 = vmul.f32 1.0, %v8005
        %v8007 = vrcp.pop %v7964
        %v8008 = vmul.f32 1.0, %v8007
        %v8009 = vrcp.pop %v7965
        %v8010 = vmul.f32 1.0, %v8009
        %v8011 = vrcp.pop %v7966
        %v8012 = vmul.f32 1.0, %v8011
        %v8013 = vrcp.pop %v7967
        %v8014 = vmul.f32 1.0, %v8013
        %v8015 = vrcp.pop %v7968
        %v8016 = vmul.f32 1.0, %v8015
        %v8017 = vrcp.pop %v7969
        %v8018 = vmul.f32 1.0, %v8017
        %v8019 = vrcp.pop %v7970
        %v8020 = vmul.f32 1.0, %v8019
        %v8021 = vrcp.pop %v7971
        %v8022 = vmul.f32 1.0, %v8021
        %v8023 = vrcp.pop %v7972
        %v8024 = vmul.f32 1.0, %v8023
        %v8025 = vrcp.pop %v7973
        %v8026 = vmul.f32 1.0, %v8025
        %v8027 = vrcp.pop %v7974
        %v8028 = vmul.f32 1.0, %v8027
        %v8029 = vrcp.pop %v7975
        %v8030 = vmul.f32 1.0, %v8029
        %v8031 = vrcp.pop %v7976
        %v8032 = vmul.f32 1.0, %v8031
        %v8033 = vrcp.pop %v7977
        %v8034 = vmul.f32 1.0, %v8033
        %v8035 = vrcp.pop %v7978
        %v8036 = vmul.f32 1.0, %v8035
        %v8037 = vrcp.pop %v7979
        %v8038 = vmul.f32 1.0, %v8037
        %v8039 = vrcp.pop %v7980
        %v8040 = vmul.f32 1.0, %v8039
        %v8041 = vrcp.pop %v7981
        %v8042 = vmul.f32 1.0, %v8041
        %v8043 = vrcp.pop %v7982
        %v8044 = vmul.f32 1.0, %v8043
        %v8045 = vrcp.pop %v7983
        %v8046 = vmul.f32 1.0, %v8045
        %v8047 = vrcp.pop %v7984
        %v8048 = vmul.f32 1.0, %v8047
        %v8049 = vmul.f32 %v7825, %v7986
        %v8050 = vmul.f32 %v7826, %v7988
        %v8051 = vmul.f32 %v7827, %v7990
        %v8052 = vmul.f32 %v7828, %v7992
        %v8053 = vmul.f32 %v7829, %v7994
        %v8054 = vmul.f32 %v7830, %v7996
        %v8055 = vmul.f32 %v7831, %v7998
        %v8056 = vmul.f32 %v7832, %v8000
        %v8057 = vmul.f32 %v7833, %v8002
        %v8058 = vmul.f32 %v7834, %v8004
        %v8059 = vmul.f32 %v7835, %v8006
        %v8060 = vmul.f32 %v7836, %v8008
        %v8061 = vmul.f32 %v7837, %v8010
        %v8062 = vmul.f32 %v7838, %v8012
        %v8063 = vmul.f32 %v7839, %v8014
        %v8064 = vmul.f32 %v7840, %v8016
        %v8065 = vmul.f32 %v7841, %v8018
        %v8066 = vmul.f32 %v7842, %v8020
        %v8067 = vmul.f32 %v7843, %v8022
        %v8068 = vmul.f32 %v7844, %v8024
        %v8069 = vmul.f32 %v7845, %v8026
        %v8070 = vmul.f32 %v7846, %v8028
        %v8071 = vmul.f32 %v7847, %v8030
        %v8072 = vmul.f32 %v7848, %v8032
        %v8073 = vmul.f32 %v7849, %v8034
        %v8074 = vmul.f32 %v7850, %v8036
        %v8075 = vmul.f32 %v7851, %v8038
        %v8076 = vmul.f32 %v7852, %v8040
        %v8077 = vmul.f32 %v7853, %v8042
        %v8078 = vmul.f32 %v7854, %v8044
        %v8079 = vmul.f32 %v7855, %v8046
        %v8080 = vmul.f32 %v7856, %v8048
        %v8081 = vpack.c.bf16 %v8051, %v8049
        %v8082 = vpack.c.bf16 %v8052, %v8050
        %v8083 = vpack.c.bf16 %v8055, %v8053
        %v8084 = vpack.c.bf16 %v8056, %v8054
        %v8085 = vpack.c.bf16 %v8059, %v8057
        %v8086 = vpack.c.bf16 %v8060, %v8058
        %v8087 = vpack.c.bf16 %v8063, %v8061
        %v8088 = vpack.c.bf16 %v8064, %v8062
        %v8089 = vpack.c.bf16 %v8067, %v8065
        %v8090 = vpack.c.bf16 %v8068, %v8066
        %v8091 = vpack.c.bf16 %v8071, %v8069
        %v8092 = vpack.c.bf16 %v8072, %v8070
        %v8093 = vpack.c.bf16 %v8075, %v8073
        %v8094 = vpack.c.bf16 %v8076, %v8074
        %v8095 = vpack.c.bf16 %v8079, %v8077
        %v8096 = vpack.c.bf16 %v8080, %v8078
        %v8097 = vld [vmem:[%s7] sm:$0xf]
        %v8098 = vld [vmem:[%s7 + $0x4] sm:$0xf]
        %v8099 = vld [vmem:[%s7 + $0x8] sm:$0xf]
        %v8100 = vld [vmem:[%s7 + $0xc] sm:$0xf]
        %v8101 = vld [vmem:[%s7 + $0x10] sm:$0xf]
        %v8102 = vld [vmem:[%s7 + $0x14] sm:$0xf]
        %v8103 = vld [vmem:[%s7 + $0x18] sm:$0xf]
        %v8104 = vld [vmem:[%s7 + $0x1c] sm:$0xf]
        %v8105 = vld [vmem:[%s7 + $0x20] sm:$0xf]
        %v8106 = vld [vmem:[%s7 + $0x24] sm:$0xf]
        %v8107 = vld [vmem:[%s7 + $0x28] sm:$0xf]
        %v8108 = vld [vmem:[%s7 + $0x2c] sm:$0xf]
        %v8109 = vld [vmem:[%s7 + $0x30] sm:$0xf]
        %v8110 = vld [vmem:[%s7 + $0x34] sm:$0xf]
        %v8111 = vld [vmem:[%s7 + $0x38] sm:$0xf]
        %v8112 = vld [vmem:[%s7 + $0x3c] sm:$0xf]
        %v8113 = vld [vmem:[%s7 + $0x40] sm:$0xf]
        %v8114 = vld [vmem:[%s7 + $0x44] sm:$0xf]
        %v8115 = vld [vmem:[%s7 + $0x48] sm:$0x3]
        %v8116 = vld [vmem:[%s8] sm:$0xff]
        %v8117 = vld [vmem:[%s8 + $0x8] sm:$0xff]
        %v8118 = vld [vmem:[%s8 + $0x10] sm:$0xff]
        %v8119 = vld [vmem:[%s8 + $0x18] sm:$0xff]
        %v8120 = vld [vmem:[%s8 + $0x20] sm:$0xff]
        %v8121 = vld [vmem:[%s8 + $0x28] sm:$0xff]
        %v8122 = vld [vmem:[%s8 + $0x30] sm:$0xff]
        %v8123 = vld [vmem:[%s8 + $0x38] sm:$0xff]
        %v8124 = vld [vmem:[%s8 + $0x40] sm:$0xff]
        %v8125 = vld [vmem:[%s8 + $0x48] sm:$0xff]
        %v8126 = vld [vmem:[%s8 + $0x50] sm:$0xff]
        %v8127 = vld [vmem:[%s8 + $0x58] sm:$0xff]
        %v8128 = vld [vmem:[%s8 + $0x60] sm:$0xff]
        %v8129 = vld [vmem:[%s8 + $0x68] sm:$0xff]
        %v8130 = vld [vmem:[%s8 + $0x70] sm:$0xff]
        %v8131 = vld [vmem:[%s8 + $0x78] sm:$0xff]
        %8133 = vset.pattern.permute.xlu0 0
        %8134 = vperm.xlu0 %8133, %v8116
        %v8135 = vpop.permute.xlu0 %8134
        %8138 = vset.pattern.permute.xlu0 0
        %8139 = vperm.xlu0 %8138, %v8117
        %v8140 = vpop.permute.xlu0 %8139
        %8143 = vset.pattern.permute.xlu0 0
        %8144 = vperm.xlu0 %8143, %v8118
        %v8145 = vpop.permute.xlu0 %8144
        %8148 = vset.pattern.permute.xlu0 0
        %8149 = vperm.xlu0 %8148, %v8119
        %v8150 = vpop.permute.xlu0 %8149
        %8153 = vset.pattern.permute.xlu0 0
        %8154 = vperm.xlu0 %8153, %v8120
        %v8155 = vpop.permute.xlu0 %8154
        %8158 = vset.pattern.permute.xlu0 0
        %8159 = vperm.xlu0 %8158, %v8121
        %v8160 = vpop.permute.xlu0 %8159
        %8163 = vset.pattern.permute.xlu0 0
        %8164 = vperm.xlu0 %8163, %v8122
        %v8165 = vpop.permute.xlu0 %8164
        %8168 = vset.pattern.permute.xlu0 0
        %8169 = vperm.xlu0 %8168, %v8123
        %v8170 = vpop.permute.xlu0 %8169
        %8173 = vset.pattern.permute.xlu0 0
        %8174 = vperm.xlu0 %8173, %v8124
        %v8175 = vpop.permute.xlu0 %8174
        %8178 = vset.pattern.permute.xlu0 0
        %8179 = vperm.xlu0 %8178, %v8125
        %v8180 = vpop.permute.xlu0 %8179
        %8183 = vset.pattern.permute.xlu0 0
        %8184 = vperm.xlu0 %8183, %v8126
        %v8185 = vpop.permute.xlu0 %8184
        %8188 = vset.pattern.permute.xlu0 0
        %8189 = vperm.xlu0 %8188, %v8127
        %v8190 = vpop.permute.xlu0 %8189
        %8193 = vset.pattern.permute.xlu0 0
        %8194 = vperm.xlu0 %8193, %v8128
        %v8195 = vpop.permute.xlu0 %8194
        %8198 = vset.pattern.permute.xlu0 0
        %8199 = vperm.xlu0 %8198, %v8129
        %v8200 = vpop.permute.xlu0 %8199
        %8203 = vset.pattern.permute.xlu0 0
        %8204 = vperm.xlu0 %8203, %v8130
        %v8205 = vpop.permute.xlu0 %8204
        %8208 = vset.pattern.permute.xlu0 0
        %8209 = vperm.xlu0 %8208, %v8131
        %v8210 = vpop.permute.xlu0 %8209
        %v8231 = vunpack.c.l.b16 %v8097
        %v8232 = vunpack.c.l.b16 %v8098
        %v8233 = vunpack.c.l.b16 %v8099
        %v8234 = vunpack.c.l.b16 %v8100
        %v8235 = vunpack.c.l.b16 %v8101
        %v8236 = vunpack.c.l.b16 %v8102
        %v8237 = vunpack.c.l.b16 %v8103
        %v8238 = vunpack.c.l.b16 %v8104
        %v8239 = vunpack.c.l.b16 %v8105
        %v8240 = vunpack.c.l.b16 %v8106
        %v8241 = vunpack.c.l.b16 %v8107
        %v8242 = vunpack.c.l.b16 %v8108
        %v8243 = vunpack.c.l.b16 %v8109
        %v8244 = vunpack.c.l.b16 %v8110
        %v8245 = vunpack.c.l.b16 %v8111
        %v8246 = vunpack.c.l.b16 %v8112
        %v8247 = vunpack.c.l.b16 %v8113
        %v8248 = vunpack.c.l.b16 %v8114
        %v8249 = vunpack.c.l.b16 %v8115
        %v8250 = vpack.c.b16 %v8232, %v8231
        %v8251 = vpack.c.b16 %v8234, %v8233
        %v8252 = vpack.c.b16 %v8236, %v8235
        %v8253 = vpack.c.b16 %v8238, %v8237
        %v8254 = vpack.c.b16 %v8240, %v8239
        %v8255 = vpack.c.b16 %v8242, %v8241
        %v8256 = vpack.c.b16 %v8244, %v8243
        %v8257 = vpack.c.b16 %v8246, %v8245
        %v8258 = vpack.c.b16 %v8248, %v8247
        %v8259 = vpack.c.b16 %v8249, %v8249
        %8270 = vxpose.xlu0.c.b16.start [1/8] %v8250, 128
        %8271 = vxpose.xlu0.c.b16.cont [2/8] %v8251, 128
        %8272 = vxpose.xlu0.c.b16.cont [3/8] %v8252, 128
        %8273 = vxpose.xlu0.c.b16.cont [4/8] %v8253, 128
        %8274 = vxpose.xlu0.c.b16.cont [5/8] %v8254, 128
        %8275 = vxpose.xlu0.c.b16.cont [6/8] %v8255, 128
        %8276 = vxpose.xlu0.c.b16.cont [7/8] %v8256, 128
        %8277 = vxpose.xlu0.c.b16.end [8/8] %v8257, 128
        %v8278 = vpop.trf.xlu0
        %v8279 = vpop.trf.xlu0
        %v8280 = vpop.trf.xlu0
        %v8281 = vpop.trf.xlu0
        %v8282 = vpop.trf.xlu0
        %v8283 = vpop.trf.xlu0
        %v8284 = vpop.trf.xlu0
        %v8285 = vpop.trf.xlu0
        %8286 = vxpose.xlu0.c.b16.start [1/8] %v8258, 128
        %8287 = vxpose.xlu0.c.b16.cont [2/8] %v8259, 128
        %8288 = vxpose.xlu0.c.b16.cont [3/8] 0, 128
        %8289 = vxpose.xlu0.c.b16.cont [4/8] 0, 128
        %8290 = vxpose.xlu0.c.b16.cont [5/8] 0, 128
        %8291 = vxpose.xlu0.c.b16.cont [6/8] 0, 128
        %8292 = vxpose.xlu0.c.b16.cont [7/8] 0, 128
        %8293 = vxpose.xlu0.c.b16.end [8/8] 0, 128
        %v8294 = vpop.trf.xlu0
        %v8295 = vpop.trf.xlu0
        %v8296 = vpop.trf.xlu0
        %v8297 = vpop.trf.xlu0
        %v8298 = vpop.trf.xlu0
        %v8299 = vpop.trf.xlu0
        %v8300 = vpop.trf.xlu0
        %v8301 = vpop.trf.xlu0
        %v8303 = vsel %vm5270, %v8294, 0
        %v8306 = vsel %vm5270, %v8295, 0
        %v8309 = vsel %vm5270, %v8296, 0
        %v8312 = vsel %vm5270, %v8297, 0
        %v8315 = vsel %vm5270, %v8298, 0
        %v8318 = vsel %vm5270, %v8299, 0
        %v8321 = vsel %vm5270, %v8300, 0
        %v8324 = vsel %vm5270, %v8301, 0
        %v8327 = vsel %vm5270, %v8082, 0
        %v8330 = vsel %vm5270, %v8084, 0
        %v8333 = vsel %vm5270, %v8086, 0
        %v8336 = vsel %vm5270, %v8088, 0
        %v8339 = vsel %vm5270, %v8090, 0
        %v8342 = vsel %vm5270, %v8092, 0
        %v8345 = vsel %vm5270, %v8094, 0
        %v8348 = vsel %vm5270, %v8096, 0
        %8350 = vmatprep.subr.bf16.mxu0 %v8348
        %8351 = vmatpush1.bf16.xpose.msra.mxu0 %v8095
        %8352 = vmatprep.subr.bf16.mxu0 %v8345
        %8353 = vmatpush1.bf16.xpose.msra.mxu0 %v8093
        %8354 = vmatprep.subr.bf16.mxu0 %v8342
        %8355 = vmatpush1.bf16.xpose.msra.mxu0 %v8091
        %8356 = vmatprep.subr.bf16.mxu0 %v8339
        %8357 = vmatpush1.bf16.xpose.msra.mxu0 %v8089
        %8358 = vmatprep.subr.bf16.mxu0 %v8336
        %8359 = vmatpush1.bf16.xpose.msra.mxu0 %v8087
        %8360 = vmatprep.subr.bf16.mxu0 %v8333
        %8361 = vmatpush1.bf16.xpose.msra.mxu0 %v8085
        %8362 = vmatprep.subr.bf16.mxu0 %v8330
        %8363 = vmatpush1.bf16.xpose.msra.mxu0 %v8083
        %8364 = vmatprep.subr.bf16.mxu0 %v8327
        %8365 = vmatpush1.bf16.xpose.msra.mxu0 %v8081
        %8366 = vmatprep.subr.bf16.mxu0 0
        %8367 = vmatpush2.bf16.xpose.msra.mxu0 0
        %8368 = vmatprep.subr.bf16.mxu0 0
        %8369 = vmatpush2.bf16.xpose.msra.mxu0 0
        %8370 = vmatprep.subr.bf16.mxu0 0
        %8371 = vmatpush2.bf16.xpose.msra.mxu0 0
        %8372 = vmatprep.subr.bf16.mxu0 0
        %8373 = vmatpush2.bf16.xpose.msra.mxu0 0
        %8374 = vmatprep.subr.bf16.mxu0 0
        %8375 = vmatpush2.bf16.xpose.msra.mxu0 0
        %8376 = vmatprep.subr.bf16.mxu0 0
        %8377 = vmatpush2.bf16.xpose.msra.mxu0 0
        %8378 = vmatprep.subr.bf16.mxu0 0
        %8379 = vmatpush2.bf16.xpose.msra.mxu0 0
        %8380 = vmatprep.subr.bf16.mxu0 0
        %8381 = vmatpush2.bf16.xpose.msra.mxu0 0
        %8382 = vmatprep.mubr.bf16.mxu0 %v8303
        %8383 = vmatmul.mubr.bf16.gmra.mxu0 %v8278
        %v8384 = vpop.f32.mrf.mxu0
        %v8385 = vadd.f32 %v8135, %v8384
        %v8386 = vpop.f32.mrf.mxu0
        %v8387 = vpop.f32.mrf.mxu0
        %v8388 = vadd.f32 %v8140, %v8387
        %v8389 = vpop.f32.mrf.mxu0
        %8390 = vmatprep.mubr.bf16.mxu0 %v8306
        %8391 = vmatmul.mubr.bf16.gmra.mxu0 %v8279
        %v8392 = vpop.f32.mrf.mxu0
        %v8393 = vadd.f32 %v8145, %v8392
        %v8394 = vpop.f32.mrf.mxu0
        %v8395 = vpop.f32.mrf.mxu0
        %v8396 = vadd.f32 %v8150, %v8395
        %v8397 = vpop.f32.mrf.mxu0
        %8398 = vmatprep.mubr.bf16.mxu0 %v8309
        %8399 = vmatmul.mubr.bf16.gmra.mxu0 %v8280
        %v8400 = vpop.f32.mrf.mxu0
        %v8401 = vadd.f32 %v8155, %v8400
        %v8402 = vpop.f32.mrf.mxu0
        %v8403 = vpop.f32.mrf.mxu0
        %v8404 = vadd.f32 %v8160, %v8403
        %v8405 = vpop.f32.mrf.mxu0
        %8406 = vmatprep.mubr.bf16.mxu0 %v8312
        %8407 = vmatmul.mubr.bf16.gmra.mxu0 %v8281
        %v8408 = vpop.f32.mrf.mxu0
        %v8409 = vadd.f32 %v8165, %v8408
        %v8410 = vpop.f32.mrf.mxu0
        %v8411 = vpop.f32.mrf.mxu0
        %v8412 = vadd.f32 %v8170, %v8411
        %v8413 = vpop.f32.mrf.mxu0
        %8414 = vmatprep.mubr.bf16.mxu0 %v8315
        %8415 = vmatmul.mubr.bf16.gmra.mxu0 %v8282
        %v8416 = vpop.f32.mrf.mxu0
        %v8417 = vadd.f32 %v8175, %v8416
        %v8418 = vpop.f32.mrf.mxu0
        %v8419 = vpop.f32.mrf.mxu0
        %v8420 = vadd.f32 %v8180, %v8419
        %v8421 = vpop.f32.mrf.mxu0
        %8422 = vmatprep.mubr.bf16.mxu0 %v8318
        %8423 = vmatmul.mubr.bf16.gmra.mxu0 %v8283
        %v8424 = vpop.f32.mrf.mxu0
        %v8425 = vadd.f32 %v8185, %v8424
        %v8426 = vpop.f32.mrf.mxu0
        %v8427 = vpop.f32.mrf.mxu0
        %v8428 = vadd.f32 %v8190, %v8427
        %v8429 = vpop.f32.mrf.mxu0
        %8430 = vmatprep.mubr.bf16.mxu0 %v8321
        %8431 = vmatmul.mubr.bf16.gmra.mxu0 %v8284
        %v8432 = vpop.f32.mrf.mxu0
        %v8433 = vadd.f32 %v8195, %v8432
        %v8434 = vpop.f32.mrf.mxu0
        %v8435 = vpop.f32.mrf.mxu0
        %v8436 = vadd.f32 %v8200, %v8435
        %v8437 = vpop.f32.mrf.mxu0
        %8438 = vmatprep.mubr.bf16.mxu0 %v8324
        %8439 = vmatmul.mubr.bf16.gmra.mxu0 %v8285
        %v8440 = vpop.f32.mrf.mxu0
        %v8441 = vadd.f32 %v8205, %v8440
        %v8442 = vpop.f32.mrf.mxu0
        %v8443 = vpop.f32.mrf.mxu0
        %v8444 = vadd.f32 %v8210, %v8443
        %v8445 = vpop.f32.mrf.mxu0
        %8446 = vdwg.mxu0
        %v8447 = vpack.c.bf16 %v8388, %v8385
        %v8448 = vpack.c.bf16 %v8396, %v8393
        %v8449 = vpack.c.bf16 %v8404, %v8401
        %v8450 = vpack.c.bf16 %v8412, %v8409
        %v8451 = vpack.c.bf16 %v8420, %v8417
        %v8452 = vpack.c.bf16 %v8428, %v8425
        %v8453 = vpack.c.bf16 %v8436, %v8433
        %v8454 = vpack.c.bf16 %v8444, %v8441
        %v8463 = vunpack.c.l.b16 %v8447
        %v8464 = vunpack.c.h.b16 %v8447
        %v8465 = vunpack.c.l.b16 %v8448
        %v8466 = vunpack.c.h.b16 %v8448
        %v8467 = vunpack.c.l.b16 %v8449
        %v8468 = vunpack.c.h.b16 %v8449
        %v8469 = vunpack.c.l.b16 %v8450
        %v8470 = vunpack.c.h.b16 %v8450
        %v8471 = vunpack.c.l.b16 %v8451
        %v8472 = vunpack.c.h.b16 %v8451
        %v8473 = vunpack.c.l.b16 %v8452
        %v8474 = vunpack.c.h.b16 %v8452
        %v8475 = vunpack.c.l.b16 %v8453
        %v8476 = vunpack.c.h.b16 %v8453
        %v8477 = vunpack.c.l.b16 %v8454
        %v8478 = vunpack.c.h.b16 %v8454
        %v8479 = vpack.c.b16 %v8463, %v8463
        %v8480 = vpack.c.b16 %v8464, %v8464
        %v8481 = vpack.c.b16 %v8465, %v8465
        %v8482 = vpack.c.b16 %v8466, %v8466
        %v8483 = vpack.c.b16 %v8467, %v8467
        %v8484 = vpack.c.b16 %v8468, %v8468
        %v8485 = vpack.c.b16 %v8469, %v8469
        %v8486 = vpack.c.b16 %v8470, %v8470
        %v8487 = vpack.c.b16 %v8471, %v8471
        %v8488 = vpack.c.b16 %v8472, %v8472
        %v8489 = vpack.c.b16 %v8473, %v8473
        %v8490 = vpack.c.b16 %v8474, %v8474
        %v8491 = vpack.c.b16 %v8475, %v8475
        %v8492 = vpack.c.b16 %v8476, %v8476
        %v8493 = vpack.c.b16 %v8477, %v8477
        %v8494 = vpack.c.b16 %v8478, %v8478
        %8511 = vst [vmem:[%s387] sm:$0xf] %v8479
        %8512 = vst [vmem:[%s387 + $0x4] sm:$0xf] %v8480
        %8513 = vst [vmem:[%s387 + $0x8] sm:$0xf] %v8481
        %8514 = vst [vmem:[%s387 + $0xc] sm:$0xf] %v8482
        %8515 = vst [vmem:[%s387 + $0x10] sm:$0xf] %v8483
        %8516 = vst [vmem:[%s387 + $0x14] sm:$0xf] %v8484
        %8517 = vst [vmem:[%s387 + $0x18] sm:$0xf] %v8485
        %8518 = vst [vmem:[%s387 + $0x1c] sm:$0xf] %v8486
        %8519 = vst [vmem:[%s387 + $0x20] sm:$0xf] %v8487
        %8520 = vst [vmem:[%s387 + $0x24] sm:$0xf] %v8488
        %8521 = vst [vmem:[%s387 + $0x28] sm:$0xf] %v8489
        %8522 = vst [vmem:[%s387 + $0x2c] sm:$0xf] %v8490
        %8523 = vst [vmem:[%s387 + $0x30] sm:$0xf] %v8491
        %8524 = vst [vmem:[%s387 + $0x34] sm:$0xf] %v8492
        %8525 = vst [vmem:[%s387 + $0x38] sm:$0xf] %v8493
        %8526 = vst [vmem:[%s387 + $0x3c] sm:$0xf] %v8494
        %8527 = vst [vmem:[%s394] sm:$0xff] %v8385
        %8528 = vst [vmem:[%s394 + $0x8] sm:$0xff] %v8388
        %8529 = vst [vmem:[%s394 + $0x10] sm:$0xff] %v8393
        %8530 = vst [vmem:[%s394 + $0x18] sm:$0xff] %v8396
        %8531 = vst [vmem:[%s394 + $0x20] sm:$0xff] %v8401
        %8532 = vst [vmem:[%s394 + $0x28] sm:$0xff] %v8404
        %8533 = vst [vmem:[%s394 + $0x30] sm:$0xff] %v8409
        %8534 = vst [vmem:[%s394 + $0x38] sm:$0xff] %v8412
        %8535 = vst [vmem:[%s394 + $0x40] sm:$0xff] %v8417
        %s8536 = sand.u32 %s245, 1
        %s8537 = scalar_lea.sflag [#allocation4], %s8536
        %s8538 = sand.u32 %s245, 1
        %s8539 = smul.addr %s8538, 64
        %s8540 = scalar_lea.vmem [#allocation5], %s8539
        %s8541 = sand.u32 %s273, 1
        %s8542 = scalar_lea.sflag [#allocation7], %s8541
        %s8543 = sand.u32 %s273, 1
        %s8544 = smul.addr %s8543, 72
        %s8545 = scalar_lea.vmem [#allocation6], %s8544
        // Predicated region
        $region61: #{tpu_custom_call.1} parent=55 // pred_check
          %p8546 = pneg %p255
        $region62: #{tpu_custom_call.1} parent=55 // pred_check_branch
          %8548 = sbr.rel (%p8546) target = $region64
        $region63: #{tpu_custom_call.1} parent=55 // pred_region
          %s8550 = ssub.s32 1024, 1024
          %8551 = vsyncadd %s8537, %s8550
          %s8552 = smul.addr %s33, 32
          %s8553 = sadd.s32 %s34, %s8552
          %s8554 = smul.addr %s8553, 64
          %s8555 = scalar_lea.hbm %s9, %s8554
          %s8556 = sshll.u32 %s8540, 4
          %s8557 = int_to_ptr.vmem [resolvable:$true] %s8556
          %8562 = dma.vmem_to_hbm [thread:$0]  %s8557, 1024, %s8555, %s8537, 64, 128, 4
        $region64: #{tpu_custom_call.1} parent=55 // pred_fallthru
          _
        // Predicated region
        $region65: #{tpu_custom_call.1} parent=55 // pred_check
          %p8563 = pneg %p283
        $region66: #{tpu_custom_call.1} parent=55 // pred_check_branch
          %8565 = sbr.rel (%p8563) target = $region68
        $region67: #{tpu_custom_call.1} parent=55 // pred_region
          %s8567 = ssub.s32 1152, 1152
          %8568 = vsyncadd %s8542, %s8567
          %s8569 = smul.addr %s33, 18
          %s8570 = sadd.s32 %s34, %s8569
          %s8571 = smul.addr %s8570, 128
          %s8572 = scalar_lea.hbm %s10, %s8571
          %s8573 = sshll.u32 %s8545, 4
          %s8574 = int_to_ptr.vmem [resolvable:$true] %s8573
          %8579 = dma.vmem_to_hbm [thread:$0]  %s8574, 1152, %s8572, %s8542, 128, 256, 8
        $region68: #{tpu_custom_call.1} parent=55 // pred_fallthru
          _
      $region56: #{tpu_custom_call.1} parent=5 // pred_fallthru
        _
      %p8580 = scmp.le.s32.totalorder 2, %s24
      // Predicated region
      $region69: #{tpu_custom_call.1} parent=5 // pred_check
        %p8581 = pneg %p8580
      $region70: #{tpu_custom_call.1} parent=5 // pred_check_branch
        %8583 = sbr.rel (%p8581) target = $region72
      $region71: #{tpu_custom_call.1} parent=5 // pred_region
        %s8584 = ssub.s32 %s24, 2
        // Predicated region
        $region73: #{tpu_custom_call.1} parent=71 // pred_check
          %p8585 = pneg %p261
        $region74: #{tpu_custom_call.1} parent=71 // pred_check_branch
          %8587 = sbr.rel (%p8585) target = $region76
        $region75: #{tpu_custom_call.1} parent=71 // pred_region
          %s8588 = sand.u32 %s246, 1
          %s8589 = scalar_lea.sflag [#allocation4], %s8588
          %s8590 = sand.u32 %s246, 1
          %s8591 = smul.addr %s8590, 64
          %s8592 = scalar_lea.vmem [#allocation5], %s8591
          %8593 = dma.done %s8589, 1024
        $region76: #{tpu_custom_call.1} parent=71 // pred_fallthru
          _
        // Predicated region
        $region77: #{tpu_custom_call.1} parent=71 // pred_check
          %p8594 = pneg %p289
        $region78: #{tpu_custom_call.1} parent=71 // pred_check_branch
          %8596 = sbr.rel (%p8594) target = $region80
        $region79: #{tpu_custom_call.1} parent=71 // pred_region
          %s8597 = sand.u32 %s274, 1
          %s8598 = scalar_lea.sflag [#allocation7], %s8597
          %s8599 = sand.u32 %s274, 1
          %s8600 = smul.addr %s8599, 72
          %s8601 = scalar_lea.vmem [#allocation6], %s8600
          %8602 = dma.done %s8598, 1152
        $region80: #{tpu_custom_call.1} parent=71 // pred_fallthru
          _
      $region72: #{tpu_custom_call.1} parent=5 // pred_fallthru
        _
    $region6: #{tpu_custom_call.1} parent=1 // loop_footer
      %s28 = sadd.s32 1, %s24
    $region7: #{tpu_custom_call.1} parent=1 // loop_footer_branch
      %23 = sbr.rel target = $region3
    $region8: #{tpu_custom_call.1} parent=1 // loop_exit
      _
    %8603 = vsyncpa [#allocation3], 1
    %s8604 = scalar_lea.sflag [#allocation3], 1
    %8605 = vsyncpa %s8604, 1
    %8606 = vsyncpa [#allocation4], 1
    %s8607 = scalar_lea.sflag [#allocation4], 1
    %8608 = vsyncpa %s8607, 1
    %8609 = vsyncpa [#allocation7], 1
    %s8610 = scalar_lea.sflag [#allocation7], 1
    %8611 = vsyncpa %s8610, 1

</llo_original>
